<compile_context>
chip_gen: v5e
topology: v5e:2x2
jax: 0.10.0
libtpu: 0.0.40
codegen_flags: <defaults>
</compile_context>

<pallas_src>
import functools

import jax
import jax.numpy as jnp
from jax.experimental import pallas as pl
from jax.experimental.pallas import tpu as pltpu

EPS = 1e-5
ACT_DTYPE = jnp.bfloat16


def _round_up(x, m):
    return (x + m - 1) // m * m


def _cparams(n_grid_dims=1):
    return pltpu.CompilerParams(
        dimension_semantics=("parallel",) * n_grid_dims,
        vmem_limit_bytes=48 * 1024 * 1024,
    )


# --------------------------------------------------------------------------
# Pallas kernels
# --------------------------------------------------------------------------
def _mm_kernel(x_ref, w_ref, b_ref, o_ref, *, relu):
    y = jnp.dot(x_ref[...], w_ref[...], preferred_element_type=jnp.float32)
    y = y + b_ref[...]
    if relu:
        y = jnp.maximum(y, 0.0)
    o_ref[...] = y.astype(o_ref.dtype)


def matmul_bias_relu(x2d, w, b, *, out_dtype=ACT_DTYPE, tm=512):
    """x2d: [M, K] @ w: [K, Cout] + b: [1, Cout], ReLU.  Row-tiled on the MXU."""
    M, K = x2d.shape
    Cout = w.shape[1]
    tm = min(tm, _round_up(M, 8))
    Mp = _round_up(M, tm)
    if Mp != M:
        x2d = jnp.pad(x2d, ((0, Mp - M), (0, 0)))
    out = pl.pallas_call(
        functools.partial(_mm_kernel, relu=True),
        out_shape=jax.ShapeDtypeStruct((Mp, Cout), out_dtype),
        grid=(Mp // tm,),
        in_specs=[
            pl.BlockSpec((tm, K), lambda i: (i, 0)),
            pl.BlockSpec((K, Cout), lambda i: (0, 0)),
            pl.BlockSpec((1, Cout), lambda i: (0, 0)),
        ],
        out_specs=pl.BlockSpec((tm, Cout), lambda i: (i, 0)),
        compiler_params=_cparams(1),
    )(x2d, w, b)
    return out[:M] if Mp != M else out


def _dwsep_kernel(*refs, taps, m, do_pw):
    """Fused depthwise-3x3(+BN+ReLU) [+ pointwise-1x1(+BN+ReLU)] for one image.

    planes_ref : (P, L, Cin) flattened zero-padded activation (P=1, stride 1)
                 or its 4 parity planes (P=4, stride 2).  The 9 depthwise taps
                 are contiguous row slices planes[p, off:off+m, :] with static
                 (p, off) metadata -- no im2col tensor is ever materialized.
    """
    if do_pw:
        planes_ref, wdw_ref, bdw_ref, wpw_ref, bpw_ref, o_ref = refs
    else:
        planes_ref, wdw_ref, bdw_ref, o_ref = refs

    cin = bdw_ref.shape[1]
    wdw = wdw_ref[...]                                   # (9, 1, Cin) f32
    # Start the accumulator from the folded BN bias -> saves one (m,Cin) add.
    acc = jnp.broadcast_to(bdw_ref[...], (m, cin)).astype(jnp.float32)
    for k, (plane, off) in enumerate(taps):
        tap = planes_ref[plane, off:off + m, :].astype(jnp.float32)
        acc = acc + tap * wdw[k]
    y = jnp.maximum(acc, 0.0)                            # dw + BN + ReLU (f32)

    if do_pw:
        z = jnp.dot(y.astype(wpw_ref.dtype), wpw_ref[...],
                    preferred_element_type=jnp.float32)
        z = jnp.maximum(z + bpw_ref[...], 0.0)           # pw + BN + ReLU
        o_ref[...] = z.astype(o_ref.dtype)
    else:
        o_ref[...] = y.astype(o_ref.dtype)


def fused_dwsep(planes, w_dw, b_dw, w_pw, b_pw, *, taps, m, out_c,
                out_dtype=ACT_DTYPE):
    """planes: [N, P, L, Cin] -> [N, m, out_c] (garbage border rows/cols
    included; the caller slices out the valid region)."""
    N, P, L, C = planes.shape
    do_pw = w_pw is not None

    in_specs = [
        pl.BlockSpec((None, P, L, C), lambda i: (i, 0, 0, 0)),
        pl.BlockSpec((9, 1, C), lambda i: (0, 0, 0)),
        pl.BlockSpec((1, C), lambda i: (0, 0)),
    ]
    args = [planes, w_dw, b_dw]
    if do_pw:
        in_specs += [
            pl.BlockSpec((C, out_c), lambda i: (0, 0)),
            pl.BlockSpec((1, out_c), lambda i: (0, 0)),
        ]
        args += [w_pw, b_pw]

    return pl.pallas_call(
        functools.partial(_dwsep_kernel, taps=taps, m=m, do_pw=do_pw),
        out_shape=jax.ShapeDtypeStruct((N, m, out_c), out_dtype),
        grid=(N,),
        in_specs=in_specs,
        out_specs=pl.BlockSpec((None, m, out_c), lambda i: (i, 0, 0)),
        compiler_params=_cparams(1),
    )(*args)


def _pool_kernel(x_ref, o_ref):
    o_ref[...] = jnp.mean(x_ref[...].astype(jnp.float32), axis=1, keepdims=True)


def global_avg_pool(x):
    """x: [N, HW, C] -> [N, 1, C] (f32)."""
    N, HW, C = x.shape
    return pl.pallas_call(
        _pool_kernel,
        out_shape=jax.ShapeDtypeStruct((N, 1, C), jnp.float32),
        grid=(N,),
        in_specs=[pl.BlockSpec((1, HW, C), lambda i: (i, 0, 0))],
        out_specs=pl.BlockSpec((1, 1, C), lambda i: (i, 0, 0)),
        compiler_params=_cparams(1),
    )(x)


# --------------------------------------------------------------------------
# JAX glue (layout prep, BN folding, layer wiring)
# --------------------------------------------------------------------------
def _fold_bn(bn):
    s = bn["gamma"] / jnp.sqrt(bn["var"] + EPS)
    t = bn["beta"] - bn["mean"] * s
    return s, t


def _extract_taps(x, stride):
    """x: [N,H,W,C] -> ([9,N,Ho,Wo,C], Ho, Wo) for a 3x3 pad=1 conv.
    Only used for the 3-channel first layer (im2col blowup is tiny there)."""
    N, H, W, C = x.shape
    xp = jnp.pad(x, ((0, 0), (1, 1), (1, 1), (0, 0)))
    Ho = (H + 2 - 3) // stride + 1
    Wo = (W + 2 - 3) // stride + 1
    taps = []
    for ky in range(3):
        for kx in range(3):
            v = jax.lax.slice(
                xp,
                (0, ky, kx, 0),
                (N, ky + (Ho - 1) * stride + 1, kx + (Wo - 1) * stride + 1, C),
                (1, stride, stride, 1),
            )
            taps.append(v)
    return jnp.stack(taps, axis=0), Ho, Wo


def _build_planes(x, stride):
    """Flatten (and, for stride 2, parity-split) the zero-padded activation so
    the 9 depthwise taps become contiguous, statically-offset row slices.

    Returns (planes [N,P,L,C], taps [(plane, row_off)]*9, m, m_out, Ho, Wo, Wq):
    the kernel produces m_out rows per image (m valid rows of width Wq, of
    which Wo columns are valid; the rest is discarded by the caller)."""
    N, H, W, C = x.shape
    if stride == 1:
        Ho, Wo = H, W
        Wq = W + 2                                       # padded width
        m = H * Wq
        m_out = _round_up(m, 8)
        xp = jnp.pad(x, ((0, 0), (1, 1), (1, 1), (0, 0)))
        flat = xp.reshape(N, (H + 2) * Wq, C)
        flat = jnp.pad(flat, ((0, 0), (1, 1 + (m_out - m)), (0, 0)))  # guards
        planes = flat[:, None, :, :]                     # (N, 1, L, C)
        taps = tuple((0, ky * Wq + kx) for ky in range(3) for kx in range(3))
    else:
        Ho = (H - 1) // 2 + 1
        Wo = (W - 1) // 2 + 1
        Hq, Wq = Ho + 1, Wo + 1
        m = Ho * Wq
        m_out = _round_up(m, 8)
        xp = jnp.pad(x, ((0, 0), (1, 2 * Hq - H - 1), (1, 2 * Wq - W - 1), (0, 0)))
        planes = jnp.stack(
            [xp[:, a::2, b::2, :].reshape(N, Hq * Wq, C)
             for a in (0, 1) for b in (0, 1)],
            axis=1)                                      # (N, 4, Hq*Wq, C)
        planes = jnp.pad(planes,
                         ((0, 0), (0, 0), (0, 2 + (m_out - m)), (0, 0)))
        taps = tuple(((ky % 2) * 2 + (kx % 2), (ky // 2) * Wq + (kx // 2))
                     for ky in range(3) for kx in range(3))
    return planes, taps, m, m_out, Ho, Wo, Wq


def first_layer(x, p):
    """Conv2d(3, C0, k=3, s=2, p=1) + BN + ReLU via im2col + matmul kernel."""
    N = x.shape[0]
    taps, Ho, Wo = _extract_taps(x, stride=2)                    # [9,N,Ho,Wo,3]
    patches = jnp.transpose(taps, (1, 2, 3, 0, 4)).reshape(N * Ho * Wo, 27)
    s, t = _fold_bn(p["bn"])
    w = jnp.transpose(p["w"], (2, 3, 1, 0)).reshape(27, -1) * s[None, :]
    b = (p["b"] * s + t)[None, :]
    y = matmul_bias_relu(patches.astype(ACT_DTYPE), w.astype(ACT_DTYPE),
                         b.astype(jnp.float32))
    return y.reshape(N, Ho, Wo, -1)


def dw_sep_block(x, p, stride_dw, consider_pw=True):
    N, H, W, C = x.shape
    planes, taps, m, m_out, Ho, Wo, Wq = _build_planes(x, stride_dw)

    s, t = _fold_bn(p["dw_bn"])
    w_dw = (jnp.transpose(p["dw_w"][:, 0], (1, 2, 0)).reshape(9, 1, C)
            * s[None, None, :]).astype(jnp.float32)
    b_dw = ((p["dw_b"] * s + t)[None, :]).astype(jnp.float32)

    if consider_pw:
        s2, t2 = _fold_bn(p["pw_bn"])
        cout = p["pw_w"].shape[0]
        w_pw = (jnp.transpose(p["pw_w"][:, :, 0, 0], (1, 0))
                * s2[None, :]).astype(ACT_DTYPE)
        b_pw = ((p["pw_b"] * s2 + t2)[None, :]).astype(jnp.float32)
        out = fused_dwsep(planes, w_dw, b_dw, w_pw, b_pw,
                          taps=taps, m=m_out, out_c=cout)
    else:
        cout = C
        out = fused_dwsep(planes, w_dw, b_dw, None, None,
                          taps=taps, m=m_out, out_c=cout)

    out = out[:, :m, :].reshape(N, m // Wq, Wq, cout)
    if stride_dw == 1:
        out = out[:, :, 1:W + 1, :]          # drop garbage border columns
    else:
        out = out[:, :, :Wo, :]
    return out                                # (N, Ho, Wo, cout), bf16


# (stride_dw per consecutive DepthwiseSeperableConv block, as in the PyTorch module)
BLOCK_STRIDES = [1, 2, 1, 2, 1, 2, 1, 1, 1, 1, 1, 2]


def mobilenet_forward(x_nchw, params):
    x = jnp.transpose(x_nchw, (0, 2, 3, 1)).astype(jnp.float32)   # NCHW -> NHWC
    x = first_layer(x, params["first"])
    for p, s_dw in zip(params["blocks"], BLOCK_STRIDES):
        x = dw_sep_block(x, p, s_dw, consider_pw=True)
    x = dw_sep_block(x, params["last"], stride_dw=2, consider_pw=False)
    N, Ho, Wo, C = x.shape
    pooled = global_avg_pool(x.reshape(N, Ho * Wo, C))            # [N,1,C] f32
    return jnp.transpose(pooled.reshape(N, 1, 1, C), (0, 3, 1, 2))  # [N,C,1,1]


# --------------------------------------------------------------------------
# Deterministic parameter initialization (synthetic — no checkpoint load)
# --------------------------------------------------------------------------
def _conv_init(key, shape, fan_in):
    return jax.random.normal(key, shape, jnp.float32) / jnp.sqrt(float(fan_in))


def _bn_init(key, c):
    k1, k2, k3, k4 = jax.random.split(key, 4)
    return dict(
        gamma=jax.random.uniform(k1, (c,), jnp.float32, 0.5, 1.5),
        beta=jax.random.normal(k2, (c,), jnp.float32) * 0.1,
        mean=jax.random.normal(k3, (c,), jnp.float32) * 0.1,
        var=jax.random.uniform(k4, (c,), jnp.float32, 0.5, 1.5),
    )


def _init_block(key, cin, cout):
    k = jax.random.split(key, 6)
    return dict(
        dw_w=_conv_init(k[0], (cin, 1, 3, 3), 9),
        dw_b=jax.random.normal(k[1], (cin,), jnp.float32) * 0.05,
        dw_bn=_bn_init(k[2], cin),
        pw_w=_conv_init(k[3], (cout, cin, 1, 1), cin),
        pw_b=jax.random.normal(k[4], (cout,), jnp.float32) * 0.05,
        pw_bn=_bn_init(k[5], cout),
    )


def init_params(key, alpha=1.0):
    c = lambda n: int(n * alpha)
    io = [(c(32), c(64)), (c(64), c(128)), (c(128), c(128)), (c(128), c(256)),
          (c(256), c(256)), (c(256), c(512)), (c(512), c(512)), (c(512), c(512)),
          (c(512), c(512)), (c(512), c(512)), (c(512), c(512)), (c(512), c(1024))]
    keys = jax.random.split(key, len(io) + 2)
    kf, kl = keys[0], keys[1]
    kf1, kf2, kf3 = jax.random.split(kf, 3)
    first = dict(
        w=_conv_init(kf1, (c(32), 3, 3, 3), 27),
        b=jax.random.normal(kf2, (c(32),), jnp.float32) * 0.05,
        bn=_bn_init(kf3, c(32)),
    )
    blocks = [_init_block(keys[2 + i], cin, cout) for i, (cin, cout) in enumerate(io)]
    last = _init_block(kl, c(1024), c(1024))  # pw params exist but unused (consider_pw=False)
    return dict(first=first, blocks=blocks, last=last)


# --------------------------------------------------------------------------
if __name__ == "__main__":
    alpha = 0.25          # MobileNet width multiplier -> small channel counts
    key = jax.random.PRNGKey(0)
    kx, kp = jax.random.split(key)

    x = jax.random.normal(kx, (2, 3, 32, 32), jnp.float32)   # NCHW, like PyTorch
    params = init_params(kp, alpha=alpha)

    fwd = jax.jit(mobilenet_forward)
    out = jax.block_until_ready(fwd(x, params))

    assert out.shape == (2, int(1024 * alpha), 1, 1), out.shape
    assert bool(jnp.all(jnp.isfinite(out)))
    print("KERNEL_OK")
</pallas_src>

<mosaic_0001>
module attributes {stable_mosaic.version = 11 : i64} {
  func.func @_mm_kernel(%arg0: i32, %arg1: memref<512x27xbf16, #tpu.memory_space<vmem>>, %arg2: memref<27x8xbf16, #tpu.memory_space<vmem>>, %arg3: memref<1x8xf32, #tpu.memory_space<vmem>>, %arg4: memref<512x8xbf16, #tpu.memory_space<vmem>>) attributes {dimension_semantics = [#tpu.dimension_semantics<parallel>], iteration_bounds = array<i64: 1>, scalar_prefetch = 0 : i64, scratch_operands = 0 : i64, tpu.core_type = #tpu.core_type<tc>, window_params = [{transform_indices = @transform_0, window_bounds = array<i64: 512, 27>}, {pipeline_mode = #tpu.pipeline_mode<synchronous>, transform_indices = @transform_1, window_bounds = array<i64: 27, 8>}, {pipeline_mode = #tpu.pipeline_mode<synchronous>, transform_indices = @transform_2, window_bounds = array<i64: 1, 8>}, {transform_indices = @transform_3, window_bounds = array<i64: 512, 8>}]} {
    %c0 = arith.constant 0 : index
    %c0_0 = arith.constant 0 : index
    %0 = vector.load %arg1[%c0, %c0_0] : memref<512x27xbf16, #tpu.memory_space<vmem>>, vector<512x27xbf16>
    %c0_1 = arith.constant 0 : index
    %c0_2 = arith.constant 0 : index
    %1 = vector.load %arg2[%c0_1, %c0_2] : memref<27x8xbf16, #tpu.memory_space<vmem>>, vector<27x8xbf16>
    %cst = arith.constant dense<0.000000e+00> : vector<512x8xf32>
    %2 = tpu.matmul %0, %1, %cst {dimension_numbers = #tpu.dot_dimension_numbers<[1], [0], [0], [1], [0, 0, 1, 1], [], []>} : vector<512x27xbf16>, vector<27x8xbf16>, vector<512x8xf32> -> vector<512x8xf32>
    %c0_3 = arith.constant 0 : index
    %c0_4 = arith.constant 0 : index
    %3 = vector.load %arg3[%c0_3, %c0_4] : memref<1x8xf32, #tpu.memory_space<vmem>>, vector<1x8xf32>
    %4 = vector.broadcast %3 : vector<1x8xf32> to vector<512x8xf32>
    %5 = arith.addf %2, %4 : vector<512x8xf32>
    %cst_5 = arith.constant 0.000000e+00 : f32
    %6 = vector.broadcast %cst_5 : f32 to vector<512x8xf32>
    %7 = arith.maximumf %5, %6 : vector<512x8xf32>
    %8 = arith.truncf %7 : vector<512x8xf32> to vector<512x8xbf16>
    %c0_6 = arith.constant 0 : index
    %c0_7 = arith.constant 0 : index
    %9 = vector.load %arg4[%c0_6, %c0_7] : memref<512x8xbf16, #tpu.memory_space<vmem>>, vector<512x8xbf16>
    tpu.vector_store %arg4[%c0_6, %c0_7], %8 {strides = array<i32>} : memref<512x8xbf16, #tpu.memory_space<vmem>>, vector<512x8xbf16>,
    return
  }
  func.func @transform_0(%arg0: i32) -> (i32, i32) {
    %c0_i32 = arith.constant 0 : i32
    %c0_i32_0 = arith.constant 0 : i32
    return %arg0, %c0_i32 : i32, i32
  }
  func.func @transform_1(%arg0: i32) -> (i32, i32) {
    %c0_i32 = arith.constant 0 : i32
    %c0_i32_0 = arith.constant 0 : i32
    %c0_i32_1 = arith.constant 0 : i32
    return %c0_i32, %c0_i32_0 : i32, i32
  }
  func.func @transform_2(%arg0: i32) -> (i32, i32) {
    %c0_i32 = arith.constant 0 : i32
    %c0_i32_0 = arith.constant 0 : i32
    %c0_i32_1 = arith.constant 0 : i32
    return %c0_i32, %c0_i32_0 : i32, i32
  }
  func.func @transform_3(%arg0: i32) -> (i32, i32) {
    %c0_i32 = arith.constant 0 : i32
    %c0_i32_0 = arith.constant 0 : i32
    return %arg0, %c0_i32 : i32, i32
  }
}

module attributes {stable_mosaic.version = 11 : i64} {
  func.func @_dwsep_kernel(%arg0: i32, %arg1: memref<1x1x326x8xbf16, #tpu.memory_space<vmem>>, %arg2: memref<9x1x8xf32, #tpu.memory_space<vmem>>, %arg3: memref<1x8xf32, #tpu.memory_space<vmem>>, %arg4: memref<8x16xbf16, #tpu.memory_space<vmem>>, %arg5: memref<1x16xf32, #tpu.memory_space<vmem>>, %arg6: memref<1x288x16xbf16, #tpu.memory_space<vmem>>) attributes {dimension_semantics = [#tpu.dimension_semantics<parallel>], iteration_bounds = array<i64: 2>, scalar_prefetch = 0 : i64, scratch_operands = 0 : i64, tpu.core_type = #tpu.core_type<tc>, window_params = [{transform_indices = @transform_0, window_bounds = array<i64: 1, 1, 326, 8>}, {pipeline_mode = #tpu.pipeline_mode<synchronous>, transform_indices = @transform_1, window_bounds = array<i64: 9, 1, 8>}, {pipeline_mode = #tpu.pipeline_mode<synchronous>, transform_indices = @transform_2, window_bounds = array<i64: 1, 8>}, {pipeline_mode = #tpu.pipeline_mode<synchronous>, transform_indices = @transform_3, window_bounds = array<i64: 8, 16>}, {pipeline_mode = #tpu.pipeline_mode<synchronous>, transform_indices = @transform_4, window_bounds = array<i64: 1, 16>}, {transform_indices = @transform_5, window_bounds = array<i64: 1, 288, 16>}]} {
    %c0 = arith.constant 0 : index
    %c0_0 = arith.constant 0 : index
    %c0_1 = arith.constant 0 : index
    %0 = vector.load %arg2[%c0, %c0_0, %c0_1] : memref<9x1x8xf32, #tpu.memory_space<vmem>>, vector<9x1x8xf32>
    %c0_2 = arith.constant 0 : index
    %c0_3 = arith.constant 0 : index
    %1 = vector.load %arg3[%c0_2, %c0_3] : memref<1x8xf32, #tpu.memory_space<vmem>>, vector<1x8xf32>
    %2 = vector.shape_cast %1 : vector<1x8xf32> to vector<1x8xf32>
    %3 = vector.broadcast %2 : vector<1x8xf32> to vector<288x8xf32>
    %c0_4 = arith.constant 0 : index
    %c0_5 = arith.constant 0 : index
    %c0_6 = arith.constant 0 : index
    %c0_7 = arith.constant 0 : index
    %4 = vector.load %arg1[%c0_4, %c0_5, %c0_6, %c0_7] : memref<1x1x326x8xbf16, #tpu.memory_space<vmem>>, vector<1x1x288x8xbf16>
    %5 = vector.shape_cast %4 : vector<1x1x288x8xbf16> to vector<288x8xbf16>
    %6 = arith.extf %5 : vector<288x8xbf16> to vector<288x8xf32>
    %7 = vector.extract_strided_slice %0 {offsets = [0, 0, 0], sizes = [1, 1, 8], strides = [1, 1, 1]} : vector<9x1x8xf32> to vector<1x1x8xf32>
    %8 = vector.shape_cast %7 : vector<1x1x8xf32> to vector<1x8xf32>
    %9 = vector.broadcast %8 : vector<1x8xf32> to vector<288x8xf32>
    %10 = arith.mulf %6, %9 : vector<288x8xf32>
    %11 = arith.addf %3, %10 : vector<288x8xf32>
    %c0_8 = arith.constant 0 : index
    %c0_9 = arith.constant 0 : index
    %c1 = arith.constant 1 : index
    %c0_10 = arith.constant 0 : index
    %12 = vector.load %arg1[%c0_8, %c0_9, %c1, %c0_10] : memref<1x1x326x8xbf16, #tpu.memory_space<vmem>>, vector<1x1x288x8xbf16>
    %13 = vector.shape_cast %12 : vector<1x1x288x8xbf16> to vector<288x8xbf16>
    %14 = arith.extf %13 : vector<288x8xbf16> to vector<288x8xf32>
    %15 = vector.extract_strided_slice %0 {offsets = [1, 0, 0], sizes = [1, 1, 8], strides = [1, 1, 1]} : vector<9x1x8xf32> to vector<1x1x8xf32>
    %16 = vector.shape_cast %15 : vector<1x1x8xf32> to vector<1x8xf32>
    %17 = vector.broadcast %16 : vector<1x8xf32> to vector<288x8xf32>
    %18 = arith.mulf %14, %17 : vector<288x8xf32>
    %19 = arith.addf %11, %18 : vector<288x8xf32>
    %c0_11 = arith.constant 0 : index
    %c0_12 = arith.constant 0 : index
    %c2 = arith.constant 2 : index
    %c0_13 = arith.constant 0 : index
    %20 = vector.load %arg1[%c0_11, %c0_12, %c2, %c0_13] : memref<1x1x326x8xbf16, #tpu.memory_space<vmem>>, vector<1x1x288x8xbf16>
    %21 = vector.shape_cast %20 : vector<1x1x288x8xbf16> to vector<288x8xbf16>
    %22 = arith.extf %21 : vector<288x8xbf16> to vector<288x8xf32>
    %23 = vector.extract_strided_slice %0 {offsets = [2, 0, 0], sizes = [1, 1, 8], strides = [1, 1, 1]} : vector<9x1x8xf32> to vector<1x1x8xf32>
    %24 = vector.shape_cast %23 : vector<1x1x8xf32> to vector<1x8xf32>
    %25 = vector.broadcast %24 : vector<1x8xf32> to vector<288x8xf32>
    %26 = arith.mulf %22, %25 : vector<288x8xf32>
    %27 = arith.addf %19, %26 : vector<288x8xf32>
    %c0_14 = arith.constant 0 : index
    %c0_15 = arith.constant 0 : index
    %c18 = arith.constant 18 : index
    %c0_16 = arith.constant 0 : index
    %28 = vector.load %arg1[%c0_14, %c0_15, %c18, %c0_16] : memref<1x1x326x8xbf16, #tpu.memory_space<vmem>>, vector<1x1x288x8xbf16>
    %29 = vector.shape_cast %28 : vector<1x1x288x8xbf16> to vector<288x8xbf16>
    %30 = arith.extf %29 : vector<288x8xbf16> to vector<288x8xf32>
    %31 = vector.extract_strided_slice %0 {offsets = [3, 0, 0], sizes = [1, 1, 8], strides = [1, 1, 1]} : vector<9x1x8xf32> to vector<1x1x8xf32>
    %32 = vector.shape_cast %31 : vector<1x1x8xf32> to vector<1x8xf32>
    %33 = vector.broadcast %32 : vector<1x8xf32> to vector<288x8xf32>
    %34 = arith.mulf %30, %33 : vector<288x8xf32>
    %35 = arith.addf %27, %34 : vector<288x8xf32>
    %c0_17 = arith.constant 0 : index
    %c0_18 = arith.constant 0 : index
    %c19 = arith.constant 19 : index
    %c0_19 = arith.constant 0 : index
    %36 = vector.load %arg1[%c0_17, %c0_18, %c19, %c0_19] : memref<1x1x326x8xbf16, #tpu.memory_space<vmem>>, vector<1x1x288x8xbf16>
    %37 = vector.shape_cast %36 : vector<1x1x288x8xbf16> to vector<288x8xbf16>
    %38 = arith.extf %37 : vector<288x8xbf16> to vector<288x8xf32>
    %39 = vector.extract_strided_slice %0 {offsets = [4, 0, 0], sizes = [1, 1, 8], strides = [1, 1, 1]} : vector<9x1x8xf32> to vector<1x1x8xf32>
    %40 = vector.shape_cast %39 : vector<1x1x8xf32> to vector<1x8xf32>
    %41 = vector.broadcast %40 : vector<1x8xf32> to vector<288x8xf32>
    %42 = arith.mulf %38, %41 : vector<288x8xf32>
    %43 = arith.addf %35, %42 : vector<288x8xf32>
    %c0_20 = arith.constant 0 : index
    %c0_21 = arith.constant 0 : index
    %c20 = arith.constant 20 : index
    %c0_22 = arith.constant 0 : index
    %44 = vector.load %arg1[%c0_20, %c0_21, %c20, %c0_22] : memref<1x1x326x8xbf16, #tpu.memory_space<vmem>>, vector<1x1x288x8xbf16>
    %45 = vector.shape_cast %44 : vector<1x1x288x8xbf16> to vector<288x8xbf16>
    %46 = arith.extf %45 : vector<288x8xbf16> to vector<288x8xf32>
    %47 = vector.extract_strided_slice %0 {offsets = [5, 0, 0], sizes = [1, 1, 8], strides = [1, 1, 1]} : vector<9x1x8xf32> to vector<1x1x8xf32>
    %48 = vector.shape_cast %47 : vector<1x1x8xf32> to vector<1x8xf32>
    %49 = vector.broadcast %48 : vector<1x8xf32> to vector<288x8xf32>
    %50 = arith.mulf %46, %49 : vector<288x8xf32>
    %51 = arith.addf %43, %50 : vector<288x8xf32>
    %c0_23 = arith.constant 0 : index
    %c0_24 = arith.constant 0 : index
    %c36 = arith.constant 36 : index
    %c0_25 = arith.constant 0 : index
    %52 = vector.load %arg1[%c0_23, %c0_24, %c36, %c0_25] : memref<1x1x326x8xbf16, #tpu.memory_space<vmem>>, vector<1x1x288x8xbf16>
    %53 = vector.shape_cast %52 : vector<1x1x288x8xbf16> to vector<288x8xbf16>
    %54 = arith.extf %53 : vector<288x8xbf16> to vector<288x8xf32>
    %55 = vector.extract_strided_slice %0 {offsets = [6, 0, 0], sizes = [1, 1, 8], strides = [1, 1, 1]} : vector<9x1x8xf32> to vector<1x1x8xf32>
    %56 = vector.shape_cast %55 : vector<1x1x8xf32> to vector<1x8xf32>
    %57 = vector.broadcast %56 : vector<1x8xf32> to vector<288x8xf32>
    %58 = arith.mulf %54, %57 : vector<288x8xf32>
    %59 = arith.addf %51, %58 : vector<288x8xf32>
    %c0_26 = arith.constant 0 : index
    %c0_27 = arith.constant 0 : index
    %c37 = arith.constant 37 : index
    %c0_28 = arith.constant 0 : index
    %60 = vector.load %arg1[%c0_26, %c0_27, %c37, %c0_28] : memref<1x1x326x8xbf16, #tpu.memory_space<vmem>>, vector<1x1x288x8xbf16>
    %61 = vector.shape_cast %60 : vector<1x1x288x8xbf16> to vector<288x8xbf16>
    %62 = arith.extf %61 : vector<288x8xbf16> to vector<288x8xf32>
    %63 = vector.extract_strided_slice %0 {offsets = [7, 0, 0], sizes = [1, 1, 8], strides = [1, 1, 1]} : vector<9x1x8xf32> to vector<1x1x8xf32>
    %64 = vector.shape_cast %63 : vector<1x1x8xf32> to vector<1x8xf32>
    %65 = vector.broadcast %64 : vector<1x8xf32> to vector<288x8xf32>
    %66 = arith.mulf %62, %65 : vector<288x8xf32>
    %67 = arith.addf %59, %66 : vector<288x8xf32>
    %c0_29 = arith.constant 0 : index
    %c0_30 = arith.constant 0 : index
    %c38 = arith.constant 38 : index
    %c0_31 = arith.constant 0 : index
    %68 = vector.load %arg1[%c0_29, %c0_30, %c38, %c0_31] : memref<1x1x326x8xbf16, #tpu.memory_space<vmem>>, vector<1x1x288x8xbf16>
    %69 = vector.shape_cast %68 : vector<1x1x288x8xbf16> to vector<288x8xbf16>
    %70 = arith.extf %69 : vector<288x8xbf16> to vector<288x8xf32>
    %71 = vector.extract_strided_slice %0 {offsets = [8, 0, 0], sizes = [1, 1, 8], strides = [1, 1, 1]} : vector<9x1x8xf32> to vector<1x1x8xf32>
    %72 = vector.shape_cast %71 : vector<1x1x8xf32> to vector<1x8xf32>
    %73 = vector.broadcast %72 : vector<1x8xf32> to vector<288x8xf32>
    %74 = arith.mulf %70, %73 : vector<288x8xf32>
    %75 = arith.addf %67, %74 : vector<288x8xf32>
    %cst = arith.constant 0.000000e+00 : f32
    %76 = vector.broadcast %cst : f32 to vector<288x8xf32>
    %77 = arith.maximumf %75, %76 : vector<288x8xf32>
    %78 = arith.truncf %77 : vector<288x8xf32> to vector<288x8xbf16>
    %c0_32 = arith.constant 0 : index
    %c0_33 = arith.constant 0 : index
    %79 = vector.load %arg4[%c0_32, %c0_33] : memref<8x16xbf16, #tpu.memory_space<vmem>>, vector<8x16xbf16>
    %cst_34 = arith.constant dense<0.000000e+00> : vector<288x16xf32>
    %80 = tpu.matmul %78, %79, %cst_34 {dimension_numbers = #tpu.dot_dimension_numbers<[1], [0], [0], [1], [0, 0, 1, 1], [], []>} : vector<288x8xbf16>, vector<8x16xbf16>, vector<288x16xf32> -> vector<288x16xf32>
    %c0_35 = arith.constant 0 : index
    %c0_36 = arith.constant 0 : index
    %81 = vector.load %arg5[%c0_35, %c0_36] : memref<1x16xf32, #tpu.memory_space<vmem>>, vector<1x16xf32>
    %82 = vector.broadcast %81 : vector<1x16xf32> to vector<288x16xf32>
    %83 = arith.addf %80, %82 : vector<288x16xf32>
    %cst_37 = arith.constant 0.000000e+00 : f32
    %84 = vector.broadcast %cst_37 : f32 to vector<288x16xf32>
    %85 = arith.maximumf %83, %84 : vector<288x16xf32>
    %86 = arith.truncf %85 : vector<288x16xf32> to vector<288x16xbf16>
    %c0_38 = arith.constant 0 : index
    %c0_39 = arith.constant 0 : index
    %c0_40 = arith.constant 0 : index
    %87 = vector.load %arg6[%c0_38, %c0_39, %c0_40] : memref<1x288x16xbf16, #tpu.memory_space<vmem>>, vector<1x288x16xbf16>
    %88 = vector.shape_cast %87 : vector<1x288x16xbf16> to vector<288x16xbf16>
    %89 = vector.shape_cast %86 : vector<288x16xbf16> to vector<1x288x16xbf16>
    tpu.vector_store %arg6[%c0_38, %c0_39, %c0_40], %89 {strides = array<i32>} : memref<1x288x16xbf16, #tpu.memory_space<vmem>>, vector<1x288x16xbf16>,
    return
  }
  func.func @transform_0(%arg0: i32) -> (i32, i32, i32, i32) {
    %c0_i32 = arith.constant 0 : i32
    %c0_i32_0 = arith.constant 0 : i32
    %c0_i32_1 = arith.constant 0 : i32
    %c0_i32_2 = arith.constant 0 : i32
    return %arg0, %c0_i32, %c0_i32_0, %c0_i32_1 : i32, i32, i32, i32
  }
  func.func @transform_1(%arg0: i32) -> (i32, i32, i32) {
    %c0_i32 = arith.constant 0 : i32
    %c0_i32_0 = arith.constant 0 : i32
    %c0_i32_1 = arith.constant 0 : i32
    %c0_i32_2 = arith.constant 0 : i32
    return %c0_i32, %c0_i32_0, %c0_i32_1 : i32, i32, i32
  }
  func.func @transform_2(%arg0: i32) -> (i32, i32) {
    %c0_i32 = arith.constant 0 : i32
    %c0_i32_0 = arith.constant 0 : i32
    %c0_i32_1 = arith.constant 0 : i32
    return %c0_i32, %c0_i32_0 : i32, i32
  }
  func.func @transform_3(%arg0: i32) -> (i32, i32) {
    %c0_i32 = arith.constant 0 : i32
    %c0_i32_0 = arith.constant 0 : i32
    %c0_i32_1 = arith.constant 0 : i32
    return %c0_i32, %c0_i32_0 : i32, i32
  }
  func.func @transform_4(%arg0: i32) -> (i32, i32) {
    %c0_i32 = arith.constant 0 : i32
    %c0_i32_0 = arith.constant 0 : i32
    %c0_i32_1 = arith.constant 0 : i32
    return %c0_i32, %c0_i32_0 : i32, i32
  }
  func.func @transform_5(%arg0: i32) -> (i32, i32, i32) {
    %c0_i32 = arith.constant 0 : i32
    %c0_i32_0 = arith.constant 0 : i32
    %c0_i32_1 = arith.constant 0 : i32
    return %arg0, %c0_i32, %c0_i32_0 : i32, i32, i32
  }
}

module attributes {stable_mosaic.version = 11 : i64} {
  func.func @_dwsep_kernel(%arg0: i32, %arg1: memref<1x4x83x16xbf16, #tpu.memory_space<vmem>>, %arg2: memref<9x1x16xf32, #tpu.memory_space<vmem>>, %arg3: memref<1x16xf32, #tpu.memory_space<vmem>>, %arg4: memref<16x32xbf16, #tpu.memory_space<vmem>>, %arg5: memref<1x32xf32, #tpu.memory_space<vmem>>, %arg6: memref<1x72x32xbf16, #tpu.memory_space<vmem>>) attributes {dimension_semantics = [#tpu.dimension_semantics<parallel>], iteration_bounds = array<i64: 2>, scalar_prefetch = 0 : i64, scratch_operands = 0 : i64, tpu.core_type = #tpu.core_type<tc>, window_params = [{transform_indices = @transform_0, window_bounds = array<i64: 1, 4, 83, 16>}, {pipeline_mode = #tpu.pipeline_mode<synchronous>, transform_indices = @transform_1, window_bounds = array<i64: 9, 1, 16>}, {pipeline_mode = #tpu.pipeline_mode<synchronous>, transform_indices = @transform_2, window_bounds = array<i64: 1, 16>}, {pipeline_mode = #tpu.pipeline_mode<synchronous>, transform_indices = @transform_3, window_bounds = array<i64: 16, 32>}, {pipeline_mode = #tpu.pipeline_mode<synchronous>, transform_indices = @transform_4, window_bounds = array<i64: 1, 32>}, {transform_indices = @transform_5, window_bounds = array<i64: 1, 72, 32>}]} {
    %c0 = arith.constant 0 : index
    %c0_0 = arith.constant 0 : index
    %c0_1 = arith.constant 0 : index
    %0 = vector.load %arg2[%c0, %c0_0, %c0_1] : memref<9x1x16xf32, #tpu.memory_space<vmem>>, vector<9x1x16xf32>
    %c0_2 = arith.constant 0 : index
    %c0_3 = arith.constant 0 : index
    %1 = vector.load %arg3[%c0_2, %c0_3] : memref<1x16xf32, #tpu.memory_space<vmem>>, vector<1x16xf32>
    %2 = vector.shape_cast %1 : vector<1x16xf32> to vector<1x16xf32>
    %3 = vector.broadcast %2 : vector<1x16xf32> to vector<72x16xf32>
    %c0_4 = arith.constant 0 : index
    %c0_5 = arith.constant 0 : index
    %c0_6 = arith.constant 0 : index
    %c0_7 = arith.constant 0 : index
    %4 = vector.load %arg1[%c0_4, %c0_5, %c0_6, %c0_7] : memref<1x4x83x16xbf16, #tpu.memory_space<vmem>>, vector<1x1x72x16xbf16>
    %5 = vector.shape_cast %4 : vector<1x1x72x16xbf16> to vector<72x16xbf16>
    %6 = arith.extf %5 : vector<72x16xbf16> to vector<72x16xf32>
    %7 = vector.extract_strided_slice %0 {offsets = [0, 0, 0], sizes = [1, 1, 16], strides = [1, 1, 1]} : vector<9x1x16xf32> to vector<1x1x16xf32>
    %8 = vector.shape_cast %7 : vector<1x1x16xf32> to vector<1x16xf32>
    %9 = vector.broadcast %8 : vector<1x16xf32> to vector<72x16xf32>
    %10 = arith.mulf %6, %9 : vector<72x16xf32>
    %11 = arith.addf %3, %10 : vector<72x16xf32>
    %c0_8 = arith.constant 0 : index
    %c1 = arith.constant 1 : index
    %c0_9 = arith.constant 0 : index
    %c0_10 = arith.constant 0 : index
    %12 = vector.load %arg1[%c0_8, %c1, %c0_9, %c0_10] : memref<1x4x83x16xbf16, #tpu.memory_space<vmem>>, vector<1x1x72x16xbf16>
    %13 = vector.shape_cast %12 : vector<1x1x72x16xbf16> to vector<72x16xbf16>
    %14 = arith.extf %13 : vector<72x16xbf16> to vector<72x16xf32>
    %15 = vector.extract_strided_slice %0 {offsets = [1, 0, 0], sizes = [1, 1, 16], strides = [1, 1, 1]} : vector<9x1x16xf32> to vector<1x1x16xf32>
    %16 = vector.shape_cast %15 : vector<1x1x16xf32> to vector<1x16xf32>
    %17 = vector.broadcast %16 : vector<1x16xf32> to vector<72x16xf32>
    %18 = arith.mulf %14, %17 : vector<72x16xf32>
    %19 = arith.addf %11, %18 : vector<72x16xf32>
    %c0_11 = arith.constant 0 : index
    %c0_12 = arith.constant 0 : index
    %c1_13 = arith.constant 1 : index
    %c0_14 = arith.constant 0 : index
    %20 = vector.load %arg1[%c0_11, %c0_12, %c1_13, %c0_14] : memref<1x4x83x16xbf16, #tpu.memory_space<vmem>>, vector<1x1x72x16xbf16>
    %21 = vector.shape_cast %20 : vector<1x1x72x16xbf16> to vector<72x16xbf16>
    %22 = arith.extf %21 : vector<72x16xbf16> to vector<72x16xf32>
    %23 = vector.extract_strided_slice %0 {offsets = [2, 0, 0], sizes = [1, 1, 16], strides = [1, 1, 1]} : vector<9x1x16xf32> to vector<1x1x16xf32>
    %24 = vector.shape_cast %23 : vector<1x1x16xf32> to vector<1x16xf32>
    %25 = vector.broadcast %24 : vector<1x16xf32> to vector<72x16xf32>
    %26 = arith.mulf %22, %25 : vector<72x16xf32>
    %27 = arith.addf %19, %26 : vector<72x16xf32>
    %c0_15 = arith.constant 0 : index
    %c2 = arith.constant 2 : index
    %c0_16 = arith.constant 0 : index
    %c0_17 = arith.constant 0 : index
    %28 = vector.load %arg1[%c0_15, %c2, %c0_16, %c0_17] : memref<1x4x83x16xbf16, #tpu.memory_space<vmem>>, vector<1x1x72x16xbf16>
    %29 = vector.shape_cast %28 : vector<1x1x72x16xbf16> to vector<72x16xbf16>
    %30 = arith.extf %29 : vector<72x16xbf16> to vector<72x16xf32>
    %31 = vector.extract_strided_slice %0 {offsets = [3, 0, 0], sizes = [1, 1, 16], strides = [1, 1, 1]} : vector<9x1x16xf32> to vector<1x1x16xf32>
    %32 = vector.shape_cast %31 : vector<1x1x16xf32> to vector<1x16xf32>
    %33 = vector.broadcast %32 : vector<1x16xf32> to vector<72x16xf32>
    %34 = arith.mulf %30, %33 : vector<72x16xf32>
    %35 = arith.addf %27, %34 : vector<72x16xf32>
    %c0_18 = arith.constant 0 : index
    %c3 = arith.constant 3 : index
    %c0_19 = arith.constant 0 : index
    %c0_20 = arith.constant 0 : index
    %36 = vector.load %arg1[%c0_18, %c3, %c0_19, %c0_20] : memref<1x4x83x16xbf16, #tpu.memory_space<vmem>>, vector<1x1x72x16xbf16>
    %37 = vector.shape_cast %36 : vector<1x1x72x16xbf16> to vector<72x16xbf16>
    %38 = arith.extf %37 : vector<72x16xbf16> to vector<72x16xf32>
    %39 = vector.extract_strided_slice %0 {offsets = [4, 0, 0], sizes = [1, 1, 16], strides = [1, 1, 1]} : vector<9x1x16xf32> to vector<1x1x16xf32>
    %40 = vector.shape_cast %39 : vector<1x1x16xf32> to vector<1x16xf32>
    %41 = vector.broadcast %40 : vector<1x16xf32> to vector<72x16xf32>
    %42 = arith.mulf %38, %41 : vector<72x16xf32>
    %43 = arith.addf %35, %42 : vector<72x16xf32>
    %c0_21 = arith.constant 0 : index
    %c2_22 = arith.constant 2 : index
    %c1_23 = arith.constant 1 : index
    %c0_24 = arith.constant 0 : index
    %44 = vector.load %arg1[%c0_21, %c2_22, %c1_23, %c0_24] : memref<1x4x83x16xbf16, #tpu.memory_space<vmem>>, vector<1x1x72x16xbf16>
    %45 = vector.shape_cast %44 : vector<1x1x72x16xbf16> to vector<72x16xbf16>
    %46 = arith.extf %45 : vector<72x16xbf16> to vector<72x16xf32>
    %47 = vector.extract_strided_slice %0 {offsets = [5, 0, 0], sizes = [1, 1, 16], strides = [1, 1, 1]} : vector<9x1x16xf32> to vector<1x1x16xf32>
    %48 = vector.shape_cast %47 : vector<1x1x16xf32> to vector<1x16xf32>
    %49 = vector.broadcast %48 : vector<1x16xf32> to vector<72x16xf32>
    %50 = arith.mulf %46, %49 : vector<72x16xf32>
    %51 = arith.addf %43, %50 : vector<72x16xf32>
    %c0_25 = arith.constant 0 : index
    %c0_26 = arith.constant 0 : index
    %c9 = arith.constant 9 : index
    %c0_27 = arith.constant 0 : index
    %52 = vector.load %arg1[%c0_25, %c0_26, %c9, %c0_27] : memref<1x4x83x16xbf16, #tpu.memory_space<vmem>>, vector<1x1x72x16xbf16>
    %53 = vector.shape_cast %52 : vector<1x1x72x16xbf16> to vector<72x16xbf16>
    %54 = arith.extf %53 : vector<72x16xbf16> to vector<72x16xf32>
    %55 = vector.extract_strided_slice %0 {offsets = [6, 0, 0], sizes = [1, 1, 16], strides = [1, 1, 1]} : vector<9x1x16xf32> to vector<1x1x16xf32>
    %56 = vector.shape_cast %55 : vector<1x1x16xf32> to vector<1x16xf32>
    %57 = vector.broadcast %56 : vector<1x16xf32> to vector<72x16xf32>
    %58 = arith.mulf %54, %57 : vector<72x16xf32>
    %59 = arith.addf %51, %58 : vector<72x16xf32>
    %c0_28 = arith.constant 0 : index
    %c1_29 = arith.constant 1 : index
    %c9_30 = arith.constant 9 : index
    %c0_31 = arith.constant 0 : index
    %60 = vector.load %arg1[%c0_28, %c1_29, %c9_30, %c0_31] : memref<1x4x83x16xbf16, #tpu.memory_space<vmem>>, vector<1x1x72x16xbf16>
    %61 = vector.shape_cast %60 : vector<1x1x72x16xbf16> to vector<72x16xbf16>
    %62 = arith.extf %61 : vector<72x16xbf16> to vector<72x16xf32>
    %63 = vector.extract_strided_slice %0 {offsets = [7, 0, 0], sizes = [1, 1, 16], strides = [1, 1, 1]} : vector<9x1x16xf32> to vector<1x1x16xf32>
    %64 = vector.shape_cast %63 : vector<1x1x16xf32> to vector<1x16xf32>
    %65 = vector.broadcast %64 : vector<1x16xf32> to vector<72x16xf32>
    %66 = arith.mulf %62, %65 : vector<72x16xf32>
    %67 = arith.addf %59, %66 : vector<72x16xf32>
    %c0_32 = arith.constant 0 : index
    %c0_33 = arith.constant 0 : index
    %c10 = arith.constant 10 : index
    %c0_34 = arith.constant 0 : index
    %68 = vector.load %arg1[%c0_32, %c0_33, %c10, %c0_34] : memref<1x4x83x16xbf16, #tpu.memory_space<vmem>>, vector<1x1x72x16xbf16>
    %69 = vector.shape_cast %68 : vector<1x1x72x16xbf16> to vector<72x16xbf16>
    %70 = arith.extf %69 : vector<72x16xbf16> to vector<72x16xf32>
    %71 = vector.extract_strided_slice %0 {offsets = [8, 0, 0], sizes = [1, 1, 16], strides = [1, 1, 1]} : vector<9x1x16xf32> to vector<1x1x16xf32>
    %72 = vector.shape_cast %71 : vector<1x1x16xf32> to vector<1x16xf32>
    %73 = vector.broadcast %72 : vector<1x16xf32> to vector<72x16xf32>
    %74 = arith.mulf %70, %73 : vector<72x16xf32>
    %75 = arith.addf %67, %74 : vector<72x16xf32>
    %cst = arith.constant 0.000000e+00 : f32
    %76 = vector.broadcast %cst : f32 to vector<72x16xf32>
    %77 = arith.maximumf %75, %76 : vector<72x16xf32>
    %78 = arith.truncf %77 : vector<72x16xf32> to vector<72x16xbf16>
    %c0_35 = arith.constant 0 : index
    %c0_36 = arith.constant 0 : index
    %79 = vector.load %arg4[%c0_35, %c0_36] : memref<16x32xbf16, #tpu.memory_space<vmem>>, vector<16x32xbf16>
    %cst_37 = arith.constant dense<0.000000e+00> : vector<72x32xf32>
    %80 = tpu.matmul %78, %79, %cst_37 {dimension_numbers = #tpu.dot_dimension_numbers<[1], [0], [0], [1], [0, 0, 1, 1], [], []>} : vector<72x16xbf16>, vector<16x32xbf16>, vector<72x32xf32> -> vector<72x32xf32>
    %c0_38 = arith.constant 0 : index
    %c0_39 = arith.constant 0 : index
    %81 = vector.load %arg5[%c0_38, %c0_39] : memref<1x32xf32, #tpu.memory_space<vmem>>, vector<1x32xf32>
    %82 = vector.broadcast %81 : vector<1x32xf32> to vector<72x32xf32>
    %83 = arith.addf %80, %82 : vector<72x32xf32>
    %cst_40 = arith.constant 0.000000e+00 : f32
    %84 = vector.broadcast %cst_40 : f32 to vector<72x32xf32>
    %85 = arith.maximumf %83, %84 : vector<72x32xf32>
    %86 = arith.truncf %85 : vector<72x32xf32> to vector<72x32xbf16>
    %c0_41 = arith.constant 0 : index
    %c0_42 = arith.constant 0 : index
    %c0_43 = arith.constant 0 : index
    %87 = vector.load %arg6[%c0_41, %c0_42, %c0_43] : memref<1x72x32xbf16, #tpu.memory_space<vmem>>, vector<1x72x32xbf16>
    %88 = vector.shape_cast %87 : vector<1x72x32xbf16> to vector<72x32xbf16>
    %89 = vector.shape_cast %86 : vector<72x32xbf16> to vector<1x72x32xbf16>
    tpu.vector_store %arg6[%c0_41, %c0_42, %c0_43], %89 {strides = array<i32>} : memref<1x72x32xbf16, #tpu.memory_space<vmem>>, vector<1x72x32xbf16>,
    return
  }
  func.func @transform_0(%arg0: i32) -> (i32, i32, i32, i32) {
    %c0_i32 = arith.constant 0 : i32
    %c0_i32_0 = arith.constant 0 : i32
    %c0_i32_1 = arith.constant 0 : i32
    %c0_i32_2 = arith.constant 0 : i32
    return %arg0, %c0_i32, %c0_i32_0, %c0_i32_1 : i32, i32, i32, i32
  }
  func.func @transform_1(%arg0: i32) -> (i32, i32, i32) {
    %c0_i32 = arith.constant 0 : i32
    %c0_i32_0 = arith.constant 0 : i32
    %c0_i32_1 = arith.constant 0 : i32
    %c0_i32_2 = arith.constant 0 : i32
    return %c0_i32, %c0_i32_0, %c0_i32_1 : i32, i32, i32
  }
  func.func @transform_2(%arg0: i32) -> (i32, i32) {
    %c0_i32 = arith.constant 0 : i32
    %c0_i32_0 = arith.constant 0 : i32
    %c0_i32_1 = arith.constant 0 : i32
    return %c0_i32, %c0_i32_0 : i32, i32
  }
  func.func @transform_3(%arg0: i32) -> (i32, i32) {
    %c0_i32 = arith.constant 0 : i32
    %c0_i32_0 = arith.constant 0 : i32
    %c0_i32_1 = arith.constant 0 : i32
    return %c0_i32, %c0_i32_0 : i32, i32
  }
  func.func @transform_4(%arg0: i32) -> (i32, i32) {
    %c0_i32 = arith.constant 0 : i32
    %c0_i32_0 = arith.constant 0 : i32
    %c0_i32_1 = arith.constant 0 : i32
    return %c0_i32, %c0_i32_0 : i32, i32
  }
  func.func @transform_5(%arg0: i32) -> (i32, i32, i32) {
    %c0_i32 = arith.constant 0 : i32
    %c0_i32_0 = arith.constant 0 : i32
    %c0_i32_1 = arith.constant 0 : i32
    return %arg0, %c0_i32, %c0_i32_0 : i32, i32, i32
  }
}

module attributes {stable_mosaic.version = 11 : i64} {
  func.func @_dwsep_kernel(%arg0: i32, %arg1: memref<1x1x102x32xbf16, #tpu.memory_space<vmem>>, %arg2: memref<9x1x32xf32, #tpu.memory_space<vmem>>, %arg3: memref<1x32xf32, #tpu.memory_space<vmem>>, %arg4: memref<32x32xbf16, #tpu.memory_space<vmem>>, %arg5: memref<1x32xf32, #tpu.memory_space<vmem>>, %arg6: memref<1x80x32xbf16, #tpu.memory_space<vmem>>) attributes {dimension_semantics = [#tpu.dimension_semantics<parallel>], iteration_bounds = array<i64: 2>, scalar_prefetch = 0 : i64, scratch_operands = 0 : i64, tpu.core_type = #tpu.core_type<tc>, window_params = [{transform_indices = @transform_0, window_bounds = array<i64: 1, 1, 102, 32>}, {pipeline_mode = #tpu.pipeline_mode<synchronous>, transform_indices = @transform_1, window_bounds = array<i64: 9, 1, 32>}, {pipeline_mode = #tpu.pipeline_mode<synchronous>, transform_indices = @transform_2, window_bounds = array<i64: 1, 32>}, {pipeline_mode = #tpu.pipeline_mode<synchronous>, transform_indices = @transform_3, window_bounds = array<i64: 32, 32>}, {pipeline_mode = #tpu.pipeline_mode<synchronous>, transform_indices = @transform_4, window_bounds = array<i64: 1, 32>}, {transform_indices = @transform_5, window_bounds = array<i64: 1, 80, 32>}]} {
    %c0 = arith.constant 0 : index
    %c0_0 = arith.constant 0 : index
    %c0_1 = arith.constant 0 : index
    %0 = vector.load %arg2[%c0, %c0_0, %c0_1] : memref<9x1x32xf32, #tpu.memory_space<vmem>>, vector<9x1x32xf32>
    %c0_2 = arith.constant 0 : index
    %c0_3 = arith.constant 0 : index
    %1 = vector.load %arg3[%c0_2, %c0_3] : memref<1x32xf32, #tpu.memory_space<vmem>>, vector<1x32xf32>
    %2 = vector.shape_cast %1 : vector<1x32xf32> to vector<1x32xf32>
    %3 = vector.broadcast %2 : vector<1x32xf32> to vector<80x32xf32>
    %c0_4 = arith.constant 0 : index
    %c0_5 = arith.constant 0 : index
    %c0_6 = arith.constant 0 : index
    %c0_7 = arith.constant 0 : index
    %4 = vector.load %arg1[%c0_4, %c0_5, %c0_6, %c0_7] : memref<1x1x102x32xbf16, #tpu.memory_space<vmem>>, vector<1x1x80x32xbf16>
    %5 = vector.shape_cast %4 : vector<1x1x80x32xbf16> to vector<80x32xbf16>
    %6 = arith.extf %5 : vector<80x32xbf16> to vector<80x32xf32>
    %7 = vector.extract_strided_slice %0 {offsets = [0, 0, 0], sizes = [1, 1, 32], strides = [1, 1, 1]} : vector<9x1x32xf32> to vector<1x1x32xf32>
    %8 = vector.shape_cast %7 : vector<1x1x32xf32> to vector<1x32xf32>
    %9 = vector.broadcast %8 : vector<1x32xf32> to vector<80x32xf32>
    %10 = arith.mulf %6, %9 : vector<80x32xf32>
    %11 = arith.addf %3, %10 : vector<80x32xf32>
    %c0_8 = arith.constant 0 : index
    %c0_9 = arith.constant 0 : index
    %c1 = arith.constant 1 : index
    %c0_10 = arith.constant 0 : index
    %12 = vector.load %arg1[%c0_8, %c0_9, %c1, %c0_10] : memref<1x1x102x32xbf16, #tpu.memory_space<vmem>>, vector<1x1x80x32xbf16>
    %13 = vector.shape_cast %12 : vector<1x1x80x32xbf16> to vector<80x32xbf16>
    %14 = arith.extf %13 : vector<80x32xbf16> to vector<80x32xf32>
    %15 = vector.extract_strided_slice %0 {offsets = [1, 0, 0], sizes = [1, 1, 32], strides = [1, 1, 1]} : vector<9x1x32xf32> to vector<1x1x32xf32>
    %16 = vector.shape_cast %15 : vector<1x1x32xf32> to vector<1x32xf32>
    %17 = vector.broadcast %16 : vector<1x32xf32> to vector<80x32xf32>
    %18 = arith.mulf %14, %17 : vector<80x32xf32>
    %19 = arith.addf %11, %18 : vector<80x32xf32>
    %c0_11 = arith.constant 0 : index
    %c0_12 = arith.constant 0 : index
    %c2 = arith.constant 2 : index
    %c0_13 = arith.constant 0 : index
    %20 = vector.load %arg1[%c0_11, %c0_12, %c2, %c0_13] : memref<1x1x102x32xbf16, #tpu.memory_space<vmem>>, vector<1x1x80x32xbf16>
    %21 = vector.shape_cast %20 : vector<1x1x80x32xbf16> to vector<80x32xbf16>
    %22 = arith.extf %21 : vector<80x32xbf16> to vector<80x32xf32>
    %23 = vector.extract_strided_slice %0 {offsets = [2, 0, 0], sizes = [1, 1, 32], strides = [1, 1, 1]} : vector<9x1x32xf32> to vector<1x1x32xf32>
    %24 = vector.shape_cast %23 : vector<1x1x32xf32> to vector<1x32xf32>
    %25 = vector.broadcast %24 : vector<1x32xf32> to vector<80x32xf32>
    %26 = arith.mulf %22, %25 : vector<80x32xf32>
    %27 = arith.addf %19, %26 : vector<80x32xf32>
    %c0_14 = arith.constant 0 : index
    %c0_15 = arith.constant 0 : index
    %c10 = arith.constant 10 : index
    %c0_16 = arith.constant 0 : index
    %28 = vector.load %arg1[%c0_14, %c0_15, %c10, %c0_16] : memref<1x1x102x32xbf16, #tpu.memory_space<vmem>>, vector<1x1x80x32xbf16>
    %29 = vector.shape_cast %28 : vector<1x1x80x32xbf16> to vector<80x32xbf16>
    %30 = arith.extf %29 : vector<80x32xbf16> to vector<80x32xf32>
    %31 = vector.extract_strided_slice %0 {offsets = [3, 0, 0], sizes = [1, 1, 32], strides = [1, 1, 1]} : vector<9x1x32xf32> to vector<1x1x32xf32>
    %32 = vector.shape_cast %31 : vector<1x1x32xf32> to vector<1x32xf32>
    %33 = vector.broadcast %32 : vector<1x32xf32> to vector<80x32xf32>
    %34 = arith.mulf %30, %33 : vector<80x32xf32>
    %35 = arith.addf %27, %34 : vector<80x32xf32>
    %c0_17 = arith.constant 0 : index
    %c0_18 = arith.constant 0 : index
    %c11 = arith.constant 11 : index
    %c0_19 = arith.constant 0 : index
    %36 = vector.load %arg1[%c0_17, %c0_18, %c11, %c0_19] : memref<1x1x102x32xbf16, #tpu.memory_space<vmem>>, vector<1x1x80x32xbf16>
    %37 = vector.shape_cast %36 : vector<1x1x80x32xbf16> to vector<80x32xbf16>
    %38 = arith.extf %37 : vector<80x32xbf16> to vector<80x32xf32>
    %39 = vector.extract_strided_slice %0 {offsets = [4, 0, 0], sizes = [1, 1, 32], strides = [1, 1, 1]} : vector<9x1x32xf32> to vector<1x1x32xf32>
    %40 = vector.shape_cast %39 : vector<1x1x32xf32> to vector<1x32xf32>
    %41 = vector.broadcast %40 : vector<1x32xf32> to vector<80x32xf32>
    %42 = arith.mulf %38, %41 : vector<80x32xf32>
    %43 = arith.addf %35, %42 : vector<80x32xf32>
    %c0_20 = arith.constant 0 : index
    %c0_21 = arith.constant 0 : index
    %c12 = arith.constant 12 : index
    %c0_22 = arith.constant 0 : index
    %44 = vector.load %arg1[%c0_20, %c0_21, %c12, %c0_22] : memref<1x1x102x32xbf16, #tpu.memory_space<vmem>>, vector<1x1x80x32xbf16>
    %45 = vector.shape_cast %44 : vector<1x1x80x32xbf16> to vector<80x32xbf16>
    %46 = arith.extf %45 : vector<80x32xbf16> to vector<80x32xf32>
    %47 = vector.extract_strided_slice %0 {offsets = [5, 0, 0], sizes = [1, 1, 32], strides = [1, 1, 1]} : vector<9x1x32xf32> to vector<1x1x32xf32>
    %48 = vector.shape_cast %47 : vector<1x1x32xf32> to vector<1x32xf32>
    %49 = vector.broadcast %48 : vector<1x32xf32> to vector<80x32xf32>
    %50 = arith.mulf %46, %49 : vector<80x32xf32>
    %51 = arith.addf %43, %50 : vector<80x32xf32>
    %c0_23 = arith.constant 0 : index
    %c0_24 = arith.constant 0 : index
    %c20 = arith.constant 20 : index
    %c0_25 = arith.constant 0 : index
    %52 = vector.load %arg1[%c0_23, %c0_24, %c20, %c0_25] : memref<1x1x102x32xbf16, #tpu.memory_space<vmem>>, vector<1x1x80x32xbf16>
    %53 = vector.shape_cast %52 : vector<1x1x80x32xbf16> to vector<80x32xbf16>
    %54 = arith.extf %53 : vector<80x32xbf16> to vector<80x32xf32>
    %55 = vector.extract_strided_slice %0 {offsets = [6, 0, 0], sizes = [1, 1, 32], strides = [1, 1, 1]} : vector<9x1x32xf32> to vector<1x1x32xf32>
    %56 = vector.shape_cast %55 : vector<1x1x32xf32> to vector<1x32xf32>
    %57 = vector.broadcast %56 : vector<1x32xf32> to vector<80x32xf32>
    %58 = arith.mulf %54, %57 : vector<80x32xf32>
    %59 = arith.addf %51, %58 : vector<80x32xf32>
    %c0_26 = arith.constant 0 : index
    %c0_27 = arith.constant 0 : index
    %c21 = arith.constant 21 : index
    %c0_28 = arith.constant 0 : index
    %60 = vector.load %arg1[%c0_26, %c0_27, %c21, %c0_28] : memref<1x1x102x32xbf16, #tpu.memory_space<vmem>>, vector<1x1x80x32xbf16>
    %61 = vector.shape_cast %60 : vector<1x1x80x32xbf16> to vector<80x32xbf16>
    %62 = arith.extf %61 : vector<80x32xbf16> to vector<80x32xf32>
    %63 = vector.extract_strided_slice %0 {offsets = [7, 0, 0], sizes = [1, 1, 32], strides = [1, 1, 1]} : vector<9x1x32xf32> to vector<1x1x32xf32>
    %64 = vector.shape_cast %63 : vector<1x1x32xf32> to vector<1x32xf32>
    %65 = vector.broadcast %64 : vector<1x32xf32> to vector<80x32xf32>
    %66 = arith.mulf %62, %65 : vector<80x32xf32>
    %67 = arith.addf %59, %66 : vector<80x32xf32>
    %c0_29 = arith.constant 0 : index
    %c0_30 = arith.constant 0 : index
    %c22 = arith.constant 22 : index
    %c0_31 = arith.constant 0 : index
    %68 = vector.load %arg1[%c0_29, %c0_30, %c22, %c0_31] : memref<1x1x102x32xbf16, #tpu.memory_space<vmem>>, vector<1x1x80x32xbf16>
    %69 = vector.shape_cast %68 : vector<1x1x80x32xbf16> to vector<80x32xbf16>
    %70 = arith.extf %69 : vector<80x32xbf16> to vector<80x32xf32>
    %71 = vector.extract_strided_slice %0 {offsets = [8, 0, 0], sizes = [1, 1, 32], strides = [1, 1, 1]} : vector<9x1x32xf32> to vector<1x1x32xf32>
    %72 = vector.shape_cast %71 : vector<1x1x32xf32> to vector<1x32xf32>
    %73 = vector.broadcast %72 : vector<1x32xf32> to vector<80x32xf32>
    %74 = arith.mulf %70, %73 : vector<80x32xf32>
    %75 = arith.addf %67, %74 : vector<80x32xf32>
    %cst = arith.constant 0.000000e+00 : f32
    %76 = vector.broadcast %cst : f32 to vector<80x32xf32>
    %77 = arith.maximumf %75, %76 : vector<80x32xf32>
    %78 = arith.truncf %77 : vector<80x32xf32> to vector<80x32xbf16>
    %c0_32 = arith.constant 0 : index
    %c0_33 = arith.constant 0 : index
    %79 = vector.load %arg4[%c0_32, %c0_33] : memref<32x32xbf16, #tpu.memory_space<vmem>>, vector<32x32xbf16>
    %cst_34 = arith.constant dense<0.000000e+00> : vector<80x32xf32>
    %80 = tpu.matmul %78, %79, %cst_34 {dimension_numbers = #tpu.dot_dimension_numbers<[1], [0], [0], [1], [0, 0, 1, 1], [], []>} : vector<80x32xbf16>, vector<32x32xbf16>, vector<80x32xf32> -> vector<80x32xf32>
    %c0_35 = arith.constant 0 : index
    %c0_36 = arith.constant 0 : index
    %81 = vector.load %arg5[%c0_35, %c0_36] : memref<1x32xf32, #tpu.memory_space<vmem>>, vector<1x32xf32>
    %82 = vector.broadcast %81 : vector<1x32xf32> to vector<80x32xf32>
    %83 = arith.addf %80, %82 : vector<80x32xf32>
    %cst_37 = arith.constant 0.000000e+00 : f32
    %84 = vector.broadcast %cst_37 : f32 to vector<80x32xf32>
    %85 = arith.maximumf %83, %84 : vector<80x32xf32>
    %86 = arith.truncf %85 : vector<80x32xf32> to vector<80x32xbf16>
    %c0_38 = arith.constant 0 : index
    %c0_39 = arith.constant 0 : index
    %c0_40 = arith.constant 0 : index
    %87 = vector.load %arg6[%c0_38, %c0_39, %c0_40] : memref<1x80x32xbf16, #tpu.memory_space<vmem>>, vector<1x80x32xbf16>
    %88 = vector.shape_cast %87 : vector<1x80x32xbf16> to vector<80x32xbf16>
    %89 = vector.shape_cast %86 : vector<80x32xbf16> to vector<1x80x32xbf16>
    tpu.vector_store %arg6[%c0_38, %c0_39, %c0_40], %89 {strides = array<i32>} : memref<1x80x32xbf16, #tpu.memory_space<vmem>>, vector<1x80x32xbf16>,
    return
  }
  func.func @transform_0(%arg0: i32) -> (i32, i32, i32, i32) {
    %c0_i32 = arith.constant 0 : i32
    %c0_i32_0 = arith.constant 0 : i32
    %c0_i32_1 = arith.constant 0 : i32
    %c0_i32_2 = arith.constant 0 : i32
    return %arg0, %c0_i32, %c0_i32_0, %c0_i32_1 : i32, i32, i32, i32
  }
  func.func @transform_1(%arg0: i32) -> (i32, i32, i32) {
    %c0_i32 = arith.constant 0 : i32
    %c0_i32_0 = arith.constant 0 : i32
    %c0_i32_1 = arith.constant 0 : i32
    %c0_i32_2 = arith.constant 0 : i32
    return %c0_i32, %c0_i32_0, %c0_i32_1 : i32, i32, i32
  }
  func.func @transform_2(%arg0: i32) -> (i32, i32) {
    %c0_i32 = arith.constant 0 : i32
    %c0_i32_0 = arith.constant 0 : i32
    %c0_i32_1 = arith.constant 0 : i32
    return %c0_i32, %c0_i32_0 : i32, i32
  }
  func.func @transform_3(%arg0: i32) -> (i32, i32) {
    %c0_i32 = arith.constant 0 : i32
    %c0_i32_0 = arith.constant 0 : i32
    %c0_i32_1 = arith.constant 0 : i32
    return %c0_i32, %c0_i32_0 : i32, i32
  }
  func.func @transform_4(%arg0: i32) -> (i32, i32) {
    %c0_i32 = arith.constant 0 : i32
    %c0_i32_0 = arith.constant 0 : i32
    %c0_i32_1 = arith.constant 0 : i32
    return %c0_i32, %c0_i32_0 : i32, i32
  }
  func.func @transform_5(%arg0: i32) -> (i32, i32, i32) {
    %c0_i32 = arith.constant 0 : i32
    %c0_i32_0 = arith.constant 0 : i32
    %c0_i32_1 = arith.constant 0 : i32
    return %arg0, %c0_i32, %c0_i32_0 : i32, i32, i32
  }
}

module attributes {stable_mosaic.version = 11 : i64} {
  func.func @_dwsep_kernel(%arg0: i32, %arg1: memref<1x4x31x32xbf16, #tpu.memory_space<vmem>>, %arg2: memref<9x1x32xf32, #tpu.memory_space<vmem>>, %arg3: memref<1x32xf32, #tpu.memory_space<vmem>>, %arg4: memref<32x64xbf16, #tpu.memory_space<vmem>>, %arg5: memref<1x64xf32, #tpu.memory_space<vmem>>, %arg6: memref<1x24x64xbf16, #tpu.memory_space<vmem>>) attributes {dimension_semantics = [#tpu.dimension_semantics<parallel>], iteration_bounds = array<i64: 2>, scalar_prefetch = 0 : i64, scratch_operands = 0 : i64, tpu.core_type = #tpu.core_type<tc>, window_params = [{transform_indices = @transform_0, window_bounds = array<i64: 1, 4, 31, 32>}, {pipeline_mode = #tpu.pipeline_mode<synchronous>, transform_indices = @transform_1, window_bounds = array<i64: 9, 1, 32>}, {pipeline_mode = #tpu.pipeline_mode<synchronous>, transform_indices = @transform_2, window_bounds = array<i64: 1, 32>}, {pipeline_mode = #tpu.pipeline_mode<synchronous>, transform_indices = @transform_3, window_bounds = array<i64: 32, 64>}, {pipeline_mode = #tpu.pipeline_mode<synchronous>, transform_indices = @transform_4, window_bounds = array<i64: 1, 64>}, {transform_indices = @transform_5, window_bounds = array<i64: 1, 24, 64>}]} {
    %c0 = arith.constant 0 : index
    %c0_0 = arith.constant 0 : index
    %c0_1 = arith.constant 0 : index
    %0 = vector.load %arg2[%c0, %c0_0, %c0_1] : memref<9x1x32xf32, #tpu.memory_space<vmem>>, vector<9x1x32xf32>
    %c0_2 = arith.constant 0 : index
    %c0_3 = arith.constant 0 : index
    %1 = vector.load %arg3[%c0_2, %c0_3] : memref<1x32xf32, #tpu.memory_space<vmem>>, vector<1x32xf32>
    %2 = vector.shape_cast %1 : vector<1x32xf32> to vector<1x32xf32>
    %3 = vector.broadcast %2 : vector<1x32xf32> to vector<24x32xf32>
    %c0_4 = arith.constant 0 : index
    %c0_5 = arith.constant 0 : index
    %c0_6 = arith.constant 0 : index
    %c0_7 = arith.constant 0 : index
    %4 = vector.load %arg1[%c0_4, %c0_5, %c0_6, %c0_7] : memref<1x4x31x32xbf16, #tpu.memory_space<vmem>>, vector<1x1x24x32xbf16>
    %5 = vector.shape_cast %4 : vector<1x1x24x32xbf16> to vector<24x32xbf16>
    %6 = arith.extf %5 : vector<24x32xbf16> to vector<24x32xf32>
    %7 = vector.extract_strided_slice %0 {offsets = [0, 0, 0], sizes = [1, 1, 32], strides = [1, 1, 1]} : vector<9x1x32xf32> to vector<1x1x32xf32>
    %8 = vector.shape_cast %7 : vector<1x1x32xf32> to vector<1x32xf32>
    %9 = vector.broadcast %8 : vector<1x32xf32> to vector<24x32xf32>
    %10 = arith.mulf %6, %9 : vector<24x32xf32>
    %11 = arith.addf %3, %10 : vector<24x32xf32>
    %c0_8 = arith.constant 0 : index
    %c1 = arith.constant 1 : index
    %c0_9 = arith.constant 0 : index
    %c0_10 = arith.constant 0 : index
    %12 = vector.load %arg1[%c0_8, %c1, %c0_9, %c0_10] : memref<1x4x31x32xbf16, #tpu.memory_space<vmem>>, vector<1x1x24x32xbf16>
    %13 = vector.shape_cast %12 : vector<1x1x24x32xbf16> to vector<24x32xbf16>
    %14 = arith.extf %13 : vector<24x32xbf16> to vector<24x32xf32>
    %15 = vector.extract_strided_slice %0 {offsets = [1, 0, 0], sizes = [1, 1, 32], strides = [1, 1, 1]} : vector<9x1x32xf32> to vector<1x1x32xf32>
    %16 = vector.shape_cast %15 : vector<1x1x32xf32> to vector<1x32xf32>
    %17 = vector.broadcast %16 : vector<1x32xf32> to vector<24x32xf32>
    %18 = arith.mulf %14, %17 : vector<24x32xf32>
    %19 = arith.addf %11, %18 : vector<24x32xf32>
    %c0_11 = arith.constant 0 : index
    %c0_12 = arith.constant 0 : index
    %c1_13 = arith.constant 1 : index
    %c0_14 = arith.constant 0 : index
    %20 = vector.load %arg1[%c0_11, %c0_12, %c1_13, %c0_14] : memref<1x4x31x32xbf16, #tpu.memory_space<vmem>>, vector<1x1x24x32xbf16>
    %21 = vector.shape_cast %20 : vector<1x1x24x32xbf16> to vector<24x32xbf16>
    %22 = arith.extf %21 : vector<24x32xbf16> to vector<24x32xf32>
    %23 = vector.extract_strided_slice %0 {offsets = [2, 0, 0], sizes = [1, 1, 32], strides = [1, 1, 1]} : vector<9x1x32xf32> to vector<1x1x32xf32>
    %24 = vector.shape_cast %23 : vector<1x1x32xf32> to vector<1x32xf32>
    %25 = vector.broadcast %24 : vector<1x32xf32> to vector<24x32xf32>
    %26 = arith.mulf %22, %25 : vector<24x32xf32>
    %27 = arith.addf %19, %26 : vector<24x32xf32>
    %c0_15 = arith.constant 0 : index
    %c2 = arith.constant 2 : index
    %c0_16 = arith.constant 0 : index
    %c0_17 = arith.constant 0 : index
    %28 = vector.load %arg1[%c0_15, %c2, %c0_16, %c0_17] : memref<1x4x31x32xbf16, #tpu.memory_space<vmem>>, vector<1x1x24x32xbf16>
    %29 = vector.shape_cast %28 : vector<1x1x24x32xbf16> to vector<24x32xbf16>
    %30 = arith.extf %29 : vector<24x32xbf16> to vector<24x32xf32>
    %31 = vector.extract_strided_slice %0 {offsets = [3, 0, 0], sizes = [1, 1, 32], strides = [1, 1, 1]} : vector<9x1x32xf32> to vector<1x1x32xf32>
    %32 = vector.shape_cast %31 : vector<1x1x32xf32> to vector<1x32xf32>
    %33 = vector.broadcast %32 : vector<1x32xf32> to vector<24x32xf32>
    %34 = arith.mulf %30, %33 : vector<24x32xf32>
    %35 = arith.addf %27, %34 : vector<24x32xf32>
    %c0_18 = arith.constant 0 : index
    %c3 = arith.constant 3 : index
    %c0_19 = arith.constant 0 : index
    %c0_20 = arith.constant 0 : index
    %36 = vector.load %arg1[%c0_18, %c3, %c0_19, %c0_20] : memref<1x4x31x32xbf16, #tpu.memory_space<vmem>>, vector<1x1x24x32xbf16>
    %37 = vector.shape_cast %36 : vector<1x1x24x32xbf16> to vector<24x32xbf16>
    %38 = arith.extf %37 : vector<24x32xbf16> to vector<24x32xf32>
    %39 = vector.extract_strided_slice %0 {offsets = [4, 0, 0], sizes = [1, 1, 32], strides = [1, 1, 1]} : vector<9x1x32xf32> to vector<1x1x32xf32>
    %40 = vector.shape_cast %39 : vector<1x1x32xf32> to vector<1x32xf32>
    %41 = vector.broadcast %40 : vector<1x32xf32> to vector<24x32xf32>
    %42 = arith.mulf %38, %41 : vector<24x32xf32>
    %43 = arith.addf %35, %42 : vector<24x32xf32>
    %c0_21 = arith.constant 0 : index
    %c2_22 = arith.constant 2 : index
    %c1_23 = arith.constant 1 : index
    %c0_24 = arith.constant 0 : index
    %44 = vector.load %arg1[%c0_21, %c2_22, %c1_23, %c0_24] : memref<1x4x31x32xbf16, #tpu.memory_space<vmem>>, vector<1x1x24x32xbf16>
    %45 = vector.shape_cast %44 : vector<1x1x24x32xbf16> to vector<24x32xbf16>
    %46 = arith.extf %45 : vector<24x32xbf16> to vector<24x32xf32>
    %47 = vector.extract_strided_slice %0 {offsets = [5, 0, 0], sizes = [1, 1, 32], strides = [1, 1, 1]} : vector<9x1x32xf32> to vector<1x1x32xf32>
    %48 = vector.shape_cast %47 : vector<1x1x32xf32> to vector<1x32xf32>
    %49 = vector.broadcast %48 : vector<1x32xf32> to vector<24x32xf32>
    %50 = arith.mulf %46, %49 : vector<24x32xf32>
    %51 = arith.addf %43, %50 : vector<24x32xf32>
    %c0_25 = arith.constant 0 : index
    %c0_26 = arith.constant 0 : index
    %c5 = arith.constant 5 : index
    %c0_27 = arith.constant 0 : index
    %52 = vector.load %arg1[%c0_25, %c0_26, %c5, %c0_27] : memref<1x4x31x32xbf16, #tpu.memory_space<vmem>>, vector<1x1x24x32xbf16>
    %53 = vector.shape_cast %52 : vector<1x1x24x32xbf16> to vector<24x32xbf16>
    %54 = arith.extf %53 : vector<24x32xbf16> to vector<24x32xf32>
    %55 = vector.extract_strided_slice %0 {offsets = [6, 0, 0], sizes = [1, 1, 32], strides = [1, 1, 1]} : vector<9x1x32xf32> to vector<1x1x32xf32>
    %56 = vector.shape_cast %55 : vector<1x1x32xf32> to vector<1x32xf32>
    %57 = vector.broadcast %56 : vector<1x32xf32> to vector<24x32xf32>
    %58 = arith.mulf %54, %57 : vector<24x32xf32>
    %59 = arith.addf %51, %58 : vector<24x32xf32>
    %c0_28 = arith.constant 0 : index
    %c1_29 = arith.constant 1 : index
    %c5_30 = arith.constant 5 : index
    %c0_31 = arith.constant 0 : index
    %60 = vector.load %arg1[%c0_28, %c1_29, %c5_30, %c0_31] : memref<1x4x31x32xbf16, #tpu.memory_space<vmem>>, vector<1x1x24x32xbf16>
    %61 = vector.shape_cast %60 : vector<1x1x24x32xbf16> to vector<24x32xbf16>
    %62 = arith.extf %61 : vector<24x32xbf16> to vector<24x32xf32>
    %63 = vector.extract_strided_slice %0 {offsets = [7, 0, 0], sizes = [1, 1, 32], strides = [1, 1, 1]} : vector<9x1x32xf32> to vector<1x1x32xf32>
    %64 = vector.shape_cast %63 : vector<1x1x32xf32> to vector<1x32xf32>
    %65 = vector.broadcast %64 : vector<1x32xf32> to vector<24x32xf32>
    %66 = arith.mulf %62, %65 : vector<24x32xf32>
    %67 = arith.addf %59, %66 : vector<24x32xf32>
    %c0_32 = arith.constant 0 : index
    %c0_33 = arith.constant 0 : index
    %c6 = arith.constant 6 : index
    %c0_34 = arith.constant 0 : index
    %68 = vector.load %arg1[%c0_32, %c0_33, %c6, %c0_34] : memref<1x4x31x32xbf16, #tpu.memory_space<vmem>>, vector<1x1x24x32xbf16>
    %69 = vector.shape_cast %68 : vector<1x1x24x32xbf16> to vector<24x32xbf16>
    %70 = arith.extf %69 : vector<24x32xbf16> to vector<24x32xf32>
    %71 = vector.extract_strided_slice %0 {offsets = [8, 0, 0], sizes = [1, 1, 32], strides = [1, 1, 1]} : vector<9x1x32xf32> to vector<1x1x32xf32>
    %72 = vector.shape_cast %71 : vector<1x1x32xf32> to vector<1x32xf32>
    %73 = vector.broadcast %72 : vector<1x32xf32> to vector<24x32xf32>
    %74 = arith.mulf %70, %73 : vector<24x32xf32>
    %75 = arith.addf %67, %74 : vector<24x32xf32>
    %cst = arith.constant 0.000000e+00 : f32
    %76 = vector.broadcast %cst : f32 to vector<24x32xf32>
    %77 = arith.maximumf %75, %76 : vector<24x32xf32>
    %78 = arith.truncf %77 : vector<24x32xf32> to vector<24x32xbf16>
    %c0_35 = arith.constant 0 : index
    %c0_36 = arith.constant 0 : index
    %79 = vector.load %arg4[%c0_35, %c0_36] : memref<32x64xbf16, #tpu.memory_space<vmem>>, vector<32x64xbf16>
    %cst_37 = arith.constant dense<0.000000e+00> : vector<24x64xf32>
    %80 = tpu.matmul %78, %79, %cst_37 {dimension_numbers = #tpu.dot_dimension_numbers<[1], [0], [0], [1], [0, 0, 1, 1], [], []>} : vector<24x32xbf16>, vector<32x64xbf16>, vector<24x64xf32> -> vector<24x64xf32>
    %c0_38 = arith.constant 0 : index
    %c0_39 = arith.constant 0 : index
    %81 = vector.load %arg5[%c0_38, %c0_39] : memref<1x64xf32, #tpu.memory_space<vmem>>, vector<1x64xf32>
    %82 = vector.broadcast %81 : vector<1x64xf32> to vector<24x64xf32>
    %83 = arith.addf %80, %82 : vector<24x64xf32>
    %cst_40 = arith.constant 0.000000e+00 : f32
    %84 = vector.broadcast %cst_40 : f32 to vector<24x64xf32>
    %85 = arith.maximumf %83, %84 : vector<24x64xf32>
    %86 = arith.truncf %85 : vector<24x64xf32> to vector<24x64xbf16>
    %c0_41 = arith.constant 0 : index
    %c0_42 = arith.constant 0 : index
    %c0_43 = arith.constant 0 : index
    %87 = vector.load %arg6[%c0_41, %c0_42, %c0_43] : memref<1x24x64xbf16, #tpu.memory_space<vmem>>, vector<1x24x64xbf16>
    %88 = vector.shape_cast %87 : vector<1x24x64xbf16> to vector<24x64xbf16>
    %89 = vector.shape_cast %86 : vector<24x64xbf16> to vector<1x24x64xbf16>
    tpu.vector_store %arg6[%c0_41, %c0_42, %c0_43], %89 {strides = array<i32>} : memref<1x24x64xbf16, #tpu.memory_space<vmem>>, vector<1x24x64xbf16>,
    return
  }
  func.func @transform_0(%arg0: i32) -> (i32, i32, i32, i32) {
    %c0_i32 = arith.constant 0 : i32
    %c0_i32_0 = arith.constant 0 : i32
    %c0_i32_1 = arith.constant 0 : i32
    %c0_i32_2 = arith.constant 0 : i32
    return %arg0, %c0_i32, %c0_i32_0, %c0_i32_1 : i32, i32, i32, i32
  }
  func.func @transform_1(%arg0: i32) -> (i32, i32, i32) {
    %c0_i32 = arith.constant 0 : i32
    %c0_i32_0 = arith.constant 0 : i32
    %c0_i32_1 = arith.constant 0 : i32
    %c0_i32_2 = arith.constant 0 : i32
    return %c0_i32, %c0_i32_0, %c0_i32_1 : i32, i32, i32
  }
  func.func @transform_2(%arg0: i32) -> (i32, i32) {
    %c0_i32 = arith.constant 0 : i32
    %c0_i32_0 = arith.constant 0 : i32
    %c0_i32_1 = arith.constant 0 : i32
    return %c0_i32, %c0_i32_0 : i32, i32
  }
  func.func @transform_3(%arg0: i32) -> (i32, i32) {
    %c0_i32 = arith.constant 0 : i32
    %c0_i32_0 = arith.constant 0 : i32
    %c0_i32_1 = arith.constant 0 : i32
    return %c0_i32, %c0_i32_0 : i32, i32
  }
  func.func @transform_4(%arg0: i32) -> (i32, i32) {
    %c0_i32 = arith.constant 0 : i32
    %c0_i32_0 = arith.constant 0 : i32
    %c0_i32_1 = arith.constant 0 : i32
    return %c0_i32, %c0_i32_0 : i32, i32
  }
  func.func @transform_5(%arg0: i32) -> (i32, i32, i32) {
    %c0_i32 = arith.constant 0 : i32
    %c0_i32_0 = arith.constant 0 : i32
    %c0_i32_1 = arith.constant 0 : i32
    return %arg0, %c0_i32, %c0_i32_0 : i32, i32, i32
  }
}

module attributes {stable_mosaic.version = 11 : i64} {
  func.func @_dwsep_kernel(%arg0: i32, %arg1: memref<1x1x38x64xbf16, #tpu.memory_space<vmem>>, %arg2: memref<9x1x64xf32, #tpu.memory_space<vmem>>, %arg3: memref<1x64xf32, #tpu.memory_space<vmem>>, %arg4: memref<64x64xbf16, #tpu.memory_space<vmem>>, %arg5: memref<1x64xf32, #tpu.memory_space<vmem>>, %arg6: memref<1x24x64xbf16, #tpu.memory_space<vmem>>) attributes {dimension_semantics = [#tpu.dimension_semantics<parallel>], iteration_bounds = array<i64: 2>, scalar_prefetch = 0 : i64, scratch_operands = 0 : i64, tpu.core_type = #tpu.core_type<tc>, window_params = [{transform_indices = @transform_0, window_bounds = array<i64: 1, 1, 38, 64>}, {pipeline_mode = #tpu.pipeline_mode<synchronous>, transform_indices = @transform_1, window_bounds = array<i64: 9, 1, 64>}, {pipeline_mode = #tpu.pipeline_mode<synchronous>, transform_indices = @transform_2, window_bounds = array<i64: 1, 64>}, {pipeline_mode = #tpu.pipeline_mode<synchronous>, transform_indices = @transform_3, window_bounds = array<i64: 64, 64>}, {pipeline_mode = #tpu.pipeline_mode<synchronous>, transform_indices = @transform_4, window_bounds = array<i64: 1, 64>}, {transform_indices = @transform_5, window_bounds = array<i64: 1, 24, 64>}]} {
    %c0 = arith.constant 0 : index
    %c0_0 = arith.constant 0 : index
    %c0_1 = arith.constant 0 : index
    %0 = vector.load %arg2[%c0, %c0_0, %c0_1] : memref<9x1x64xf32, #tpu.memory_space<vmem>>, vector<9x1x64xf32>
    %c0_2 = arith.constant 0 : index
    %c0_3 = arith.constant 0 : index
    %1 = vector.load %arg3[%c0_2, %c0_3] : memref<1x64xf32, #tpu.memory_space<vmem>>, vector<1x64xf32>
    %2 = vector.shape_cast %1 : vector<1x64xf32> to vector<1x64xf32>
    %3 = vector.broadcast %2 : vector<1x64xf32> to vector<24x64xf32>
    %c0_4 = arith.constant 0 : index
    %c0_5 = arith.constant 0 : index
    %c0_6 = arith.constant 0 : index
    %c0_7 = arith.constant 0 : index
    %4 = vector.load %arg1[%c0_4, %c0_5, %c0_6, %c0_7] : memref<1x1x38x64xbf16, #tpu.memory_space<vmem>>, vector<1x1x24x64xbf16>
    %5 = vector.shape_cast %4 : vector<1x1x24x64xbf16> to vector<24x64xbf16>
    %6 = arith.extf %5 : vector<24x64xbf16> to vector<24x64xf32>
    %7 = vector.extract_strided_slice %0 {offsets = [0, 0, 0], sizes = [1, 1, 64], strides = [1, 1, 1]} : vector<9x1x64xf32> to vector<1x1x64xf32>
    %8 = vector.shape_cast %7 : vector<1x1x64xf32> to vector<1x64xf32>
    %9 = vector.broadcast %8 : vector<1x64xf32> to vector<24x64xf32>
    %10 = arith.mulf %6, %9 : vector<24x64xf32>
    %11 = arith.addf %3, %10 : vector<24x64xf32>
    %c0_8 = arith.constant 0 : index
    %c0_9 = arith.constant 0 : index
    %c1 = arith.constant 1 : index
    %c0_10 = arith.constant 0 : index
    %12 = vector.load %arg1[%c0_8, %c0_9, %c1, %c0_10] : memref<1x1x38x64xbf16, #tpu.memory_space<vmem>>, vector<1x1x24x64xbf16>
    %13 = vector.shape_cast %12 : vector<1x1x24x64xbf16> to vector<24x64xbf16>
    %14 = arith.extf %13 : vector<24x64xbf16> to vector<24x64xf32>
    %15 = vector.extract_strided_slice %0 {offsets = [1, 0, 0], sizes = [1, 1, 64], strides = [1, 1, 1]} : vector<9x1x64xf32> to vector<1x1x64xf32>
    %16 = vector.shape_cast %15 : vector<1x1x64xf32> to vector<1x64xf32>
    %17 = vector.broadcast %16 : vector<1x64xf32> to vector<24x64xf32>
    %18 = arith.mulf %14, %17 : vector<24x64xf32>
    %19 = arith.addf %11, %18 : vector<24x64xf32>
    %c0_11 = arith.constant 0 : index
    %c0_12 = arith.constant 0 : index
    %c2 = arith.constant 2 : index
    %c0_13 = arith.constant 0 : index
    %20 = vector.load %arg1[%c0_11, %c0_12, %c2, %c0_13] : memref<1x1x38x64xbf16, #tpu.memory_space<vmem>>, vector<1x1x24x64xbf16>
    %21 = vector.shape_cast %20 : vector<1x1x24x64xbf16> to vector<24x64xbf16>
    %22 = arith.extf %21 : vector<24x64xbf16> to vector<24x64xf32>
    %23 = vector.extract_strided_slice %0 {offsets = [2, 0, 0], sizes = [1, 1, 64], strides = [1, 1, 1]} : vector<9x1x64xf32> to vector<1x1x64xf32>
    %24 = vector.shape_cast %23 : vector<1x1x64xf32> to vector<1x64xf32>
    %25 = vector.broadcast %24 : vector<1x64xf32> to vector<24x64xf32>
    %26 = arith.mulf %22, %25 : vector<24x64xf32>
    %27 = arith.addf %19, %26 : vector<24x64xf32>
    %c0_14 = arith.constant 0 : index
    %c0_15 = arith.constant 0 : index
    %c6 = arith.constant 6 : index
    %c0_16 = arith.constant 0 : index
    %28 = vector.load %arg1[%c0_14, %c0_15, %c6, %c0_16] : memref<1x1x38x64xbf16, #tpu.memory_space<vmem>>, vector<1x1x24x64xbf16>
    %29 = vector.shape_cast %28 : vector<1x1x24x64xbf16> to vector<24x64xbf16>
    %30 = arith.extf %29 : vector<24x64xbf16> to vector<24x64xf32>
    %31 = vector.extract_strided_slice %0 {offsets = [3, 0, 0], sizes = [1, 1, 64], strides = [1, 1, 1]} : vector<9x1x64xf32> to vector<1x1x64xf32>
    %32 = vector.shape_cast %31 : vector<1x1x64xf32> to vector<1x64xf32>
    %33 = vector.broadcast %32 : vector<1x64xf32> to vector<24x64xf32>
    %34 = arith.mulf %30, %33 : vector<24x64xf32>
    %35 = arith.addf %27, %34 : vector<24x64xf32>
    %c0_17 = arith.constant 0 : index
    %c0_18 = arith.constant 0 : index
    %c7 = arith.constant 7 : index
    %c0_19 = arith.constant 0 : index
    %36 = vector.load %arg1[%c0_17, %c0_18, %c7, %c0_19] : memref<1x1x38x64xbf16, #tpu.memory_space<vmem>>, vector<1x1x24x64xbf16>
    %37 = vector.shape_cast %36 : vector<1x1x24x64xbf16> to vector<24x64xbf16>
    %38 = arith.extf %37 : vector<24x64xbf16> to vector<24x64xf32>
    %39 = vector.extract_strided_slice %0 {offsets = [4, 0, 0], sizes = [1, 1, 64], strides = [1, 1, 1]} : vector<9x1x64xf32> to vector<1x1x64xf32>
    %40 = vector.shape_cast %39 : vector<1x1x64xf32> to vector<1x64xf32>
    %41 = vector.broadcast %40 : vector<1x64xf32> to vector<24x64xf32>
    %42 = arith.mulf %38, %41 : vector<24x64xf32>
    %43 = arith.addf %35, %42 : vector<24x64xf32>
    %c0_20 = arith.constant 0 : index
    %c0_21 = arith.constant 0 : index
    %c8 = arith.constant 8 : index
    %c0_22 = arith.constant 0 : index
    %44 = vector.load %arg1[%c0_20, %c0_21, %c8, %c0_22] : memref<1x1x38x64xbf16, #tpu.memory_space<vmem>>, vector<1x1x24x64xbf16>
    %45 = vector.shape_cast %44 : vector<1x1x24x64xbf16> to vector<24x64xbf16>
    %46 = arith.extf %45 : vector<24x64xbf16> to vector<24x64xf32>
    %47 = vector.extract_strided_slice %0 {offsets = [5, 0, 0], sizes = [1, 1, 64], strides = [1, 1, 1]} : vector<9x1x64xf32> to vector<1x1x64xf32>
    %48 = vector.shape_cast %47 : vector<1x1x64xf32> to vector<1x64xf32>
    %49 = vector.broadcast %48 : vector<1x64xf32> to vector<24x64xf32>
    %50 = arith.mulf %46, %49 : vector<24x64xf32>
    %51 = arith.addf %43, %50 : vector<24x64xf32>
    %c0_23 = arith.constant 0 : index
    %c0_24 = arith.constant 0 : index
    %c12 = arith.constant 12 : index
    %c0_25 = arith.constant 0 : index
    %52 = vector.load %arg1[%c0_23, %c0_24, %c12, %c0_25] : memref<1x1x38x64xbf16, #tpu.memory_space<vmem>>, vector<1x1x24x64xbf16>
    %53 = vector.shape_cast %52 : vector<1x1x24x64xbf16> to vector<24x64xbf16>
    %54 = arith.extf %53 : vector<24x64xbf16> to vector<24x64xf32>
    %55 = vector.extract_strided_slice %0 {offsets = [6, 0, 0], sizes = [1, 1, 64], strides = [1, 1, 1]} : vector<9x1x64xf32> to vector<1x1x64xf32>
    %56 = vector.shape_cast %55 : vector<1x1x64xf32> to vector<1x64xf32>
    %57 = vector.broadcast %56 : vector<1x64xf32> to vector<24x64xf32>
    %58 = arith.mulf %54, %57 : vector<24x64xf32>
    %59 = arith.addf %51, %58 : vector<24x64xf32>
    %c0_26 = arith.constant 0 : index
    %c0_27 = arith.constant 0 : index
    %c13 = arith.constant 13 : index
    %c0_28 = arith.constant 0 : index
    %60 = vector.load %arg1[%c0_26, %c0_27, %c13, %c0_28] : memref<1x1x38x64xbf16, #tpu.memory_space<vmem>>, vector<1x1x24x64xbf16>
    %61 = vector.shape_cast %60 : vector<1x1x24x64xbf16> to vector<24x64xbf16>
    %62 = arith.extf %61 : vector<24x64xbf16> to vector<24x64xf32>
    %63 = vector.extract_strided_slice %0 {offsets = [7, 0, 0], sizes = [1, 1, 64], strides = [1, 1, 1]} : vector<9x1x64xf32> to vector<1x1x64xf32>
    %64 = vector.shape_cast %63 : vector<1x1x64xf32> to vector<1x64xf32>
    %65 = vector.broadcast %64 : vector<1x64xf32> to vector<24x64xf32>
    %66 = arith.mulf %62, %65 : vector<24x64xf32>
    %67 = arith.addf %59, %66 : vector<24x64xf32>
    %c0_29 = arith.constant 0 : index
    %c0_30 = arith.constant 0 : index
    %c14 = arith.constant 14 : index
    %c0_31 = arith.constant 0 : index
    %68 = vector.load %arg1[%c0_29, %c0_30, %c14, %c0_31] : memref<1x1x38x64xbf16, #tpu.memory_space<vmem>>, vector<1x1x24x64xbf16>
    %69 = vector.shape_cast %68 : vector<1x1x24x64xbf16> to vector<24x64xbf16>
    %70 = arith.extf %69 : vector<24x64xbf16> to vector<24x64xf32>
    %71 = vector.extract_strided_slice %0 {offsets = [8, 0, 0], sizes = [1, 1, 64], strides = [1, 1, 1]} : vector<9x1x64xf32> to vector<1x1x64xf32>
    %72 = vector.shape_cast %71 : vector<1x1x64xf32> to vector<1x64xf32>
    %73 = vector.broadcast %72 : vector<1x64xf32> to vector<24x64xf32>
    %74 = arith.mulf %70, %73 : vector<24x64xf32>
    %75 = arith.addf %67, %74 : vector<24x64xf32>
    %cst = arith.constant 0.000000e+00 : f32
    %76 = vector.broadcast %cst : f32 to vector<24x64xf32>
    %77 = arith.maximumf %75, %76 : vector<24x64xf32>
    %78 = arith.truncf %77 : vector<24x64xf32> to vector<24x64xbf16>
    %c0_32 = arith.constant 0 : index
    %c0_33 = arith.constant 0 : index
    %79 = vector.load %arg4[%c0_32, %c0_33] : memref<64x64xbf16, #tpu.memory_space<vmem>>, vector<64x64xbf16>
    %cst_34 = arith.constant dense<0.000000e+00> : vector<24x64xf32>
    %80 = tpu.matmul %78, %79, %cst_34 {dimension_numbers = #tpu.dot_dimension_numbers<[1], [0], [0], [1], [0, 0, 1, 1], [], []>} : vector<24x64xbf16>, vector<64x64xbf16>, vector<24x64xf32> -> vector<24x64xf32>
    %c0_35 = arith.constant 0 : index
    %c0_36 = arith.constant 0 : index
    %81 = vector.load %arg5[%c0_35, %c0_36] : memref<1x64xf32, #tpu.memory_space<vmem>>, vector<1x64xf32>
    %82 = vector.broadcast %81 : vector<1x64xf32> to vector<24x64xf32>
    %83 = arith.addf %80, %82 : vector<24x64xf32>
    %cst_37 = arith.constant 0.000000e+00 : f32
    %84 = vector.broadcast %cst_37 : f32 to vector<24x64xf32>
    %85 = arith.maximumf %83, %84 : vector<24x64xf32>
    %86 = arith.truncf %85 : vector<24x64xf32> to vector<24x64xbf16>
    %c0_38 = arith.constant 0 : index
    %c0_39 = arith.constant 0 : index
    %c0_40 = arith.constant 0 : index
    %87 = vector.load %arg6[%c0_38, %c0_39, %c0_40] : memref<1x24x64xbf16, #tpu.memory_space<vmem>>, vector<1x24x64xbf16>
    %88 = vector.shape_cast %87 : vector<1x24x64xbf16> to vector<24x64xbf16>
    %89 = vector.shape_cast %86 : vector<24x64xbf16> to vector<1x24x64xbf16>
    tpu.vector_store %arg6[%c0_38, %c0_39, %c0_40], %89 {strides = array<i32>} : memref<1x24x64xbf16, #tpu.memory_space<vmem>>, vector<1x24x64xbf16>,
    return
  }
  func.func @transform_0(%arg0: i32) -> (i32, i32, i32, i32) {
    %c0_i32 = arith.constant 0 : i32
    %c0_i32_0 = arith.constant 0 : i32
    %c0_i32_1 = arith.constant 0 : i32
    %c0_i32_2 = arith.constant 0 : i32
    return %arg0, %c0_i32, %c0_i32_0, %c0_i32_1 : i32, i32, i32, i32
  }
  func.func @transform_1(%arg0: i32) -> (i32, i32, i32) {
    %c0_i32 = arith.constant 0 : i32
    %c0_i32_0 = arith.constant 0 : i32
    %c0_i32_1 = arith.constant 0 : i32
    %c0_i32_2 = arith.constant 0 : i32
    return %c0_i32, %c0_i32_0, %c0_i32_1 : i32, i32, i32
  }
  func.func @transform_2(%arg0: i32) -> (i32, i32) {
    %c0_i32 = arith.constant 0 : i32
    %c0_i32_0 = arith.constant 0 : i32
    %c0_i32_1 = arith.constant 0 : i32
    return %c0_i32, %c0_i32_0 : i32, i32
  }
  func.func @transform_3(%arg0: i32) -> (i32, i32) {
    %c0_i32 = arith.constant 0 : i32
    %c0_i32_0 = arith.constant 0 : i32
    %c0_i32_1 = arith.constant 0 : i32
    return %c0_i32, %c0_i32_0 : i32, i32
  }
  func.func @transform_4(%arg0: i32) -> (i32, i32) {
    %c0_i32 = arith.constant 0 : i32
    %c0_i32_0 = arith.constant 0 : i32
    %c0_i32_1 = arith.constant 0 : i32
    return %c0_i32, %c0_i32_0 : i32, i32
  }
  func.func @transform_5(%arg0: i32) -> (i32, i32, i32) {
    %c0_i32 = arith.constant 0 : i32
    %c0_i32_0 = arith.constant 0 : i32
    %c0_i32_1 = arith.constant 0 : i32
    return %arg0, %c0_i32, %c0_i32_0 : i32, i32, i32
  }
}

module attributes {stable_mosaic.version = 11 : i64} {
  func.func @_dwsep_kernel(%arg0: i32, %arg1: memref<1x4x13x64xbf16, #tpu.memory_space<vmem>>, %arg2: memref<9x1x64xf32, #tpu.memory_space<vmem>>, %arg3: memref<1x64xf32, #tpu.memory_space<vmem>>, %arg4: memref<64x128xbf16, #tpu.memory_space<vmem>>, %arg5: memref<1x128xf32, #tpu.memory_space<vmem>>, %arg6: memref<1x8x128xbf16, #tpu.memory_space<vmem>>) attributes {dimension_semantics = [#tpu.dimension_semantics<parallel>], iteration_bounds = array<i64: 2>, scalar_prefetch = 0 : i64, scratch_operands = 0 : i64, tpu.core_type = #tpu.core_type<tc>, window_params = [{transform_indices = @transform_0, window_bounds = array<i64: 1, 4, 13, 64>}, {pipeline_mode = #tpu.pipeline_mode<synchronous>, transform_indices = @transform_1, window_bounds = array<i64: 9, 1, 64>}, {pipeline_mode = #tpu.pipeline_mode<synchronous>, transform_indices = @transform_2, window_bounds = array<i64: 1, 64>}, {pipeline_mode = #tpu.pipeline_mode<synchronous>, transform_indices = @transform_3, window_bounds = array<i64: 64, 128>}, {pipeline_mode = #tpu.pipeline_mode<synchronous>, transform_indices = @transform_4, window_bounds = array<i64: 1, 128>}, {transform_indices = @transform_5, window_bounds = array<i64: 1, 8, 128>}]} {
    %c0 = arith.constant 0 : index
    %c0_0 = arith.constant 0 : index
    %c0_1 = arith.constant 0 : index
    %0 = vector.load %arg2[%c0, %c0_0, %c0_1] : memref<9x1x64xf32, #tpu.memory_space<vmem>>, vector<9x1x64xf32>
    %c0_2 = arith.constant 0 : index
    %c0_3 = arith.constant 0 : index
    %1 = vector.load %arg3[%c0_2, %c0_3] : memref<1x64xf32, #tpu.memory_space<vmem>>, vector<1x64xf32>
    %2 = vector.shape_cast %1 : vector<1x64xf32> to vector<1x64xf32>
    %3 = vector.broadcast %2 : vector<1x64xf32> to vector<8x64xf32>
    %c0_4 = arith.constant 0 : index
    %c0_5 = arith.constant 0 : index
    %c0_6 = arith.constant 0 : index
    %c0_7 = arith.constant 0 : index
    %4 = vector.load %arg1[%c0_4, %c0_5, %c0_6, %c0_7] : memref<1x4x13x64xbf16, #tpu.memory_space<vmem>>, vector<1x1x8x64xbf16>
    %5 = vector.shape_cast %4 : vector<1x1x8x64xbf16> to vector<8x64xbf16>
    %6 = arith.extf %5 : vector<8x64xbf16> to vector<8x64xf32>
    %7 = vector.extract_strided_slice %0 {offsets = [0, 0, 0], sizes = [1, 1, 64], strides = [1, 1, 1]} : vector<9x1x64xf32> to vector<1x1x64xf32>
    %8 = vector.shape_cast %7 : vector<1x1x64xf32> to vector<1x64xf32>
    %9 = vector.broadcast %8 : vector<1x64xf32> to vector<8x64xf32>
    %10 = arith.mulf %6, %9 : vector<8x64xf32>
    %11 = arith.addf %3, %10 : vector<8x64xf32>
    %c0_8 = arith.constant 0 : index
    %c1 = arith.constant 1 : index
    %c0_9 = arith.constant 0 : index
    %c0_10 = arith.constant 0 : index
    %12 = vector.load %arg1[%c0_8, %c1, %c0_9, %c0_10] : memref<1x4x13x64xbf16, #tpu.memory_space<vmem>>, vector<1x1x8x64xbf16>
    %13 = vector.shape_cast %12 : vector<1x1x8x64xbf16> to vector<8x64xbf16>
    %14 = arith.extf %13 : vector<8x64xbf16> to vector<8x64xf32>
    %15 = vector.extract_strided_slice %0 {offsets = [1, 0, 0], sizes = [1, 1, 64], strides = [1, 1, 1]} : vector<9x1x64xf32> to vector<1x1x64xf32>
    %16 = vector.shape_cast %15 : vector<1x1x64xf32> to vector<1x64xf32>
    %17 = vector.broadcast %16 : vector<1x64xf32> to vector<8x64xf32>
    %18 = arith.mulf %14, %17 : vector<8x64xf32>
    %19 = arith.addf %11, %18 : vector<8x64xf32>
    %c0_11 = arith.constant 0 : index
    %c0_12 = arith.constant 0 : index
    %c1_13 = arith.constant 1 : index
    %c0_14 = arith.constant 0 : index
    %20 = vector.load %arg1[%c0_11, %c0_12, %c1_13, %c0_14] : memref<1x4x13x64xbf16, #tpu.memory_space<vmem>>, vector<1x1x8x64xbf16>
    %21 = vector.shape_cast %20 : vector<1x1x8x64xbf16> to vector<8x64xbf16>
    %22 = arith.extf %21 : vector<8x64xbf16> to vector<8x64xf32>
    %23 = vector.extract_strided_slice %0 {offsets = [2, 0, 0], sizes = [1, 1, 64], strides = [1, 1, 1]} : vector<9x1x64xf32> to vector<1x1x64xf32>
    %24 = vector.shape_cast %23 : vector<1x1x64xf32> to vector<1x64xf32>
    %25 = vector.broadcast %24 : vector<1x64xf32> to vector<8x64xf32>
    %26 = arith.mulf %22, %25 : vector<8x64xf32>
    %27 = arith.addf %19, %26 : vector<8x64xf32>
    %c0_15 = arith.constant 0 : index
    %c2 = arith.constant 2 : index
    %c0_16 = arith.constant 0 : index
    %c0_17 = arith.constant 0 : index
    %28 = vector.load %arg1[%c0_15, %c2, %c0_16, %c0_17] : memref<1x4x13x64xbf16, #tpu.memory_space<vmem>>, vector<1x1x8x64xbf16>
    %29 = vector.shape_cast %28 : vector<1x1x8x64xbf16> to vector<8x64xbf16>
    %30 = arith.extf %29 : vector<8x64xbf16> to vector<8x64xf32>
    %31 = vector.extract_strided_slice %0 {offsets = [3, 0, 0], sizes = [1, 1, 64], strides = [1, 1, 1]} : vector<9x1x64xf32> to vector<1x1x64xf32>
    %32 = vector.shape_cast %31 : vector<1x1x64xf32> to vector<1x64xf32>
    %33 = vector.broadcast %32 : vector<1x64xf32> to vector<8x64xf32>
    %34 = arith.mulf %30, %33 : vector<8x64xf32>
    %35 = arith.addf %27, %34 : vector<8x64xf32>
    %c0_18 = arith.constant 0 : index
    %c3 = arith.constant 3 : index
    %c0_19 = arith.constant 0 : index
    %c0_20 = arith.constant 0 : index
    %36 = vector.load %arg1[%c0_18, %c3, %c0_19, %c0_20] : memref<1x4x13x64xbf16, #tpu.memory_space<vmem>>, vector<1x1x8x64xbf16>
    %37 = vector.shape_cast %36 : vector<1x1x8x64xbf16> to vector<8x64xbf16>
    %38 = arith.extf %37 : vector<8x64xbf16> to vector<8x64xf32>
    %39 = vector.extract_strided_slice %0 {offsets = [4, 0, 0], sizes = [1, 1, 64], strides = [1, 1, 1]} : vector<9x1x64xf32> to vector<1x1x64xf32>
    %40 = vector.shape_cast %39 : vector<1x1x64xf32> to vector<1x64xf32>
    %41 = vector.broadcast %40 : vector<1x64xf32> to vector<8x64xf32>
    %42 = arith.mulf %38, %41 : vector<8x64xf32>
    %43 = arith.addf %35, %42 : vector<8x64xf32>
    %c0_21 = arith.constant 0 : index
    %c2_22 = arith.constant 2 : index
    %c1_23 = arith.constant 1 : index
    %c0_24 = arith.constant 0 : index
    %44 = vector.load %arg1[%c0_21, %c2_22, %c1_23, %c0_24] : memref<1x4x13x64xbf16, #tpu.memory_space<vmem>>, vector<1x1x8x64xbf16>
    %45 = vector.shape_cast %44 : vector<1x1x8x64xbf16> to vector<8x64xbf16>
    %46 = arith.extf %45 : vector<8x64xbf16> to vector<8x64xf32>
    %47 = vector.extract_strided_slice %0 {offsets = [5, 0, 0], sizes = [1, 1, 64], strides = [1, 1, 1]} : vector<9x1x64xf32> to vector<1x1x64xf32>
    %48 = vector.shape_cast %47 : vector<1x1x64xf32> to vector<1x64xf32>
    %49 = vector.broadcast %48 : vector<1x64xf32> to vector<8x64xf32>
    %50 = arith.mulf %46, %49 : vector<8x64xf32>
    %51 = arith.addf %43, %50 : vector<8x64xf32>
    %c0_25 = arith.constant 0 : index
    %c0_26 = arith.constant 0 : index
    %c3_27 = arith.constant 3 : index
    %c0_28 = arith.constant 0 : index
    %52 = vector.load %arg1[%c0_25, %c0_26, %c3_27, %c0_28] : memref<1x4x13x64xbf16, #tpu.memory_space<vmem>>, vector<1x1x8x64xbf16>
    %53 = vector.shape_cast %52 : vector<1x1x8x64xbf16> to vector<8x64xbf16>
    %54 = arith.extf %53 : vector<8x64xbf16> to vector<8x64xf32>
    %55 = vector.extract_strided_slice %0 {offsets = [6, 0, 0], sizes = [1, 1, 64], strides = [1, 1, 1]} : vector<9x1x64xf32> to vector<1x1x64xf32>
    %56 = vector.shape_cast %55 : vector<1x1x64xf32> to vector<1x64xf32>
    %57 = vector.broadcast %56 : vector<1x64xf32> to vector<8x64xf32>
    %58 = arith.mulf %54, %57 : vector<8x64xf32>
    %59 = arith.addf %51, %58 : vector<8x64xf32>
    %c0_29 = arith.constant 0 : index
    %c1_30 = arith.constant 1 : index
    %c3_31 = arith.constant 3 : index
    %c0_32 = arith.constant 0 : index
    %60 = vector.load %arg1[%c0_29, %c1_30, %c3_31, %c0_32] : memref<1x4x13x64xbf16, #tpu.memory_space<vmem>>, vector<1x1x8x64xbf16>
    %61 = vector.shape_cast %60 : vector<1x1x8x64xbf16> to vector<8x64xbf16>
    %62 = arith.extf %61 : vector<8x64xbf16> to vector<8x64xf32>
    %63 = vector.extract_strided_slice %0 {offsets = [7, 0, 0], sizes = [1, 1, 64], strides = [1, 1, 1]} : vector<9x1x64xf32> to vector<1x1x64xf32>
    %64 = vector.shape_cast %63 : vector<1x1x64xf32> to vector<1x64xf32>
    %65 = vector.broadcast %64 : vector<1x64xf32> to vector<8x64xf32>
    %66 = arith.mulf %62, %65 : vector<8x64xf32>
    %67 = arith.addf %59, %66 : vector<8x64xf32>
    %c0_33 = arith.constant 0 : index
    %c0_34 = arith.constant 0 : index
    %c4 = arith.constant 4 : index
    %c0_35 = arith.constant 0 : index
    %68 = vector.load %arg1[%c0_33, %c0_34, %c4, %c0_35] : memref<1x4x13x64xbf16, #tpu.memory_space<vmem>>, vector<1x1x8x64xbf16>
    %69 = vector.shape_cast %68 : vector<1x1x8x64xbf16> to vector<8x64xbf16>
    %70 = arith.extf %69 : vector<8x64xbf16> to vector<8x64xf32>
    %71 = vector.extract_strided_slice %0 {offsets = [8, 0, 0], sizes = [1, 1, 64], strides = [1, 1, 1]} : vector<9x1x64xf32> to vector<1x1x64xf32>
    %72 = vector.shape_cast %71 : vector<1x1x64xf32> to vector<1x64xf32>
    %73 = vector.broadcast %72 : vector<1x64xf32> to vector<8x64xf32>
    %74 = arith.mulf %70, %73 : vector<8x64xf32>
    %75 = arith.addf %67, %74 : vector<8x64xf32>
    %cst = arith.constant 0.000000e+00 : f32
    %76 = vector.broadcast %cst : f32 to vector<8x64xf32>
    %77 = arith.maximumf %75, %76 : vector<8x64xf32>
    %78 = arith.truncf %77 : vector<8x64xf32> to vector<8x64xbf16>
    %c0_36 = arith.constant 0 : index
    %c0_37 = arith.constant 0 : index
    %79 = vector.load %arg4[%c0_36, %c0_37] : memref<64x128xbf16, #tpu.memory_space<vmem>>, vector<64x128xbf16>
    %cst_38 = arith.constant dense<0.000000e+00> : vector<8x128xf32>
    %80 = tpu.matmul %78, %79, %cst_38 {dimension_numbers = #tpu.dot_dimension_numbers<[1], [0], [0], [1], [0, 0, 1, 1], [], []>} : vector<8x64xbf16>, vector<64x128xbf16>, vector<8x128xf32> -> vector<8x128xf32>
    %c0_39 = arith.constant 0 : index
    %c0_40 = arith.constant 0 : index
    %81 = vector.load %arg5[%c0_39, %c0_40] : memref<1x128xf32, #tpu.memory_space<vmem>>, vector<1x128xf32>
    %82 = vector.broadcast %81 : vector<1x128xf32> to vector<8x128xf32>
    %83 = arith.addf %80, %82 : vector<8x128xf32>
    %cst_41 = arith.constant 0.000000e+00 : f32
    %84 = vector.broadcast %cst_41 : f32 to vector<8x128xf32>
    %85 = arith.maximumf %83, %84 : vector<8x128xf32>
    %86 = arith.truncf %85 : vector<8x128xf32> to vector<8x128xbf16>
    %c0_42 = arith.constant 0 : index
    %c0_43 = arith.constant 0 : index
    %c0_44 = arith.constant 0 : index
    %87 = vector.load %arg6[%c0_42, %c0_43, %c0_44] : memref<1x8x128xbf16, #tpu.memory_space<vmem>>, vector<1x8x128xbf16>
    %88 = vector.shape_cast %87 : vector<1x8x128xbf16> to vector<8x128xbf16>
    %89 = vector.shape_cast %86 : vector<8x128xbf16> to vector<1x8x128xbf16>
    tpu.vector_store %arg6[%c0_42, %c0_43, %c0_44], %89 {strides = array<i32>} : memref<1x8x128xbf16, #tpu.memory_space<vmem>>, vector<1x8x128xbf16>,
    return
  }
  func.func @transform_0(%arg0: i32) -> (i32, i32, i32, i32) {
    %c0_i32 = arith.constant 0 : i32
    %c0_i32_0 = arith.constant 0 : i32
    %c0_i32_1 = arith.constant 0 : i32
    %c0_i32_2 = arith.constant 0 : i32
    return %arg0, %c0_i32, %c0_i32_0, %c0_i32_1 : i32, i32, i32, i32
  }
  func.func @transform_1(%arg0: i32) -> (i32, i32, i32) {
    %c0_i32 = arith.constant 0 : i32
    %c0_i32_0 = arith.constant 0 : i32
    %c0_i32_1 = arith.constant 0 : i32
    %c0_i32_2 = arith.constant 0 : i32
    return %c0_i32, %c0_i32_0, %c0_i32_1 : i32, i32, i32
  }
  func.func @transform_2(%arg0: i32) -> (i32, i32) {
    %c0_i32 = arith.constant 0 : i32
    %c0_i32_0 = arith.constant 0 : i32
    %c0_i32_1 = arith.constant 0 : i32
    return %c0_i32, %c0_i32_0 : i32, i32
  }
  func.func @transform_3(%arg0: i32) -> (i32, i32) {
    %c0_i32 = arith.constant 0 : i32
    %c0_i32_0 = arith.constant 0 : i32
    %c0_i32_1 = arith.constant 0 : i32
    return %c0_i32, %c0_i32_0 : i32, i32
  }
  func.func @transform_4(%arg0: i32) -> (i32, i32) {
    %c0_i32 = arith.constant 0 : i32
    %c0_i32_0 = arith.constant 0 : i32
    %c0_i32_1 = arith.constant 0 : i32
    return %c0_i32, %c0_i32_0 : i32, i32
  }
  func.func @transform_5(%arg0: i32) -> (i32, i32, i32) {
    %c0_i32 = arith.constant 0 : i32
    %c0_i32_0 = arith.constant 0 : i32
    %c0_i32_1 = arith.constant 0 : i32
    return %arg0, %c0_i32, %c0_i32_0 : i32, i32, i32
  }
}

module attributes {stable_mosaic.version = 11 : i64} {
  func.func @_dwsep_kernel(%arg0: i32, %arg1: memref<1x1x18x128xbf16, #tpu.memory_space<vmem>>, %arg2: memref<9x1x128xf32, #tpu.memory_space<vmem>>, %arg3: memref<1x128xf32, #tpu.memory_space<vmem>>, %arg4: memref<128x128xbf16, #tpu.memory_space<vmem>>, %arg5: memref<1x128xf32, #tpu.memory_space<vmem>>, %arg6: memref<1x8x128xbf16, #tpu.memory_space<vmem>>) attributes {dimension_semantics = [#tpu.dimension_semantics<parallel>], iteration_bounds = array<i64: 2>, scalar_prefetch = 0 : i64, scratch_operands = 0 : i64, tpu.core_type = #tpu.core_type<tc>, window_params = [{transform_indices = @transform_0, window_bounds = array<i64: 1, 1, 18, 128>}, {pipeline_mode = #tpu.pipeline_mode<synchronous>, transform_indices = @transform_1, window_bounds = array<i64: 9, 1, 128>}, {pipeline_mode = #tpu.pipeline_mode<synchronous>, transform_indices = @transform_2, window_bounds = array<i64: 1, 128>}, {pipeline_mode = #tpu.pipeline_mode<synchronous>, transform_indices = @transform_3, window_bounds = array<i64: 128, 128>}, {pipeline_mode = #tpu.pipeline_mode<synchronous>, transform_indices = @transform_4, window_bounds = array<i64: 1, 128>}, {transform_indices = @transform_5, window_bounds = array<i64: 1, 8, 128>}]} {
    %c0 = arith.constant 0 : index
    %c0_0 = arith.constant 0 : index
    %c0_1 = arith.constant 0 : index
    %0 = vector.load %arg2[%c0, %c0_0, %c0_1] : memref<9x1x128xf32, #tpu.memory_space<vmem>>, vector<9x1x128xf32>
    %c0_2 = arith.constant 0 : index
    %c0_3 = arith.constant 0 : index
    %1 = vector.load %arg3[%c0_2, %c0_3] : memref<1x128xf32, #tpu.memory_space<vmem>>, vector<1x128xf32>
    %2 = vector.shape_cast %1 : vector<1x128xf32> to vector<1x128xf32>
    %3 = vector.broadcast %2 : vector<1x128xf32> to vector<8x128xf32>
    %c0_4 = arith.constant 0 : index
    %c0_5 = arith.constant 0 : index
    %c0_6 = arith.constant 0 : index
    %c0_7 = arith.constant 0 : index
    %4 = vector.load %arg1[%c0_4, %c0_5, %c0_6, %c0_7] : memref<1x1x18x128xbf16, #tpu.memory_space<vmem>>, vector<1x1x8x128xbf16>
    %5 = vector.shape_cast %4 : vector<1x1x8x128xbf16> to vector<8x128xbf16>
    %6 = arith.extf %5 : vector<8x128xbf16> to vector<8x128xf32>
    %7 = vector.extract_strided_slice %0 {offsets = [0, 0, 0], sizes = [1, 1, 128], strides = [1, 1, 1]} : vector<9x1x128xf32> to vector<1x1x128xf32>
    %8 = vector.shape_cast %7 : vector<1x1x128xf32> to vector<1x128xf32>
    %9 = vector.broadcast %8 : vector<1x128xf32> to vector<8x128xf32>
    %10 = arith.mulf %6, %9 : vector<8x128xf32>
    %11 = arith.addf %3, %10 : vector<8x128xf32>
    %c0_8 = arith.constant 0 : index
    %c0_9 = arith.constant 0 : index
    %c1 = arith.constant 1 : index
    %c0_10 = arith.constant 0 : index
    %12 = vector.load %arg1[%c0_8, %c0_9, %c1, %c0_10] : memref<1x1x18x128xbf16, #tpu.memory_space<vmem>>, vector<1x1x8x128xbf16>
    %13 = vector.shape_cast %12 : vector<1x1x8x128xbf16> to vector<8x128xbf16>
    %14 = arith.extf %13 : vector<8x128xbf16> to vector<8x128xf32>
    %15 = vector.extract_strided_slice %0 {offsets = [1, 0, 0], sizes = [1, 1, 128], strides = [1, 1, 1]} : vector<9x1x128xf32> to vector<1x1x128xf32>
    %16 = vector.shape_cast %15 : vector<1x1x128xf32> to vector<1x128xf32>
    %17 = vector.broadcast %16 : vector<1x128xf32> to vector<8x128xf32>
    %18 = arith.mulf %14, %17 : vector<8x128xf32>
    %19 = arith.addf %11, %18 : vector<8x128xf32>
    %c0_11 = arith.constant 0 : index
    %c0_12 = arith.constant 0 : index
    %c2 = arith.constant 2 : index
    %c0_13 = arith.constant 0 : index
    %20 = vector.load %arg1[%c0_11, %c0_12, %c2, %c0_13] : memref<1x1x18x128xbf16, #tpu.memory_space<vmem>>, vector<1x1x8x128xbf16>
    %21 = vector.shape_cast %20 : vector<1x1x8x128xbf16> to vector<8x128xbf16>
    %22 = arith.extf %21 : vector<8x128xbf16> to vector<8x128xf32>
    %23 = vector.extract_strided_slice %0 {offsets = [2, 0, 0], sizes = [1, 1, 128], strides = [1, 1, 1]} : vector<9x1x128xf32> to vector<1x1x128xf32>
    %24 = vector.shape_cast %23 : vector<1x1x128xf32> to vector<1x128xf32>
    %25 = vector.broadcast %24 : vector<1x128xf32> to vector<8x128xf32>
    %26 = arith.mulf %22, %25 : vector<8x128xf32>
    %27 = arith.addf %19, %26 : vector<8x128xf32>
    %c0_14 = arith.constant 0 : index
    %c0_15 = arith.constant 0 : index
    %c4 = arith.constant 4 : index
    %c0_16 = arith.constant 0 : index
    %28 = vector.load %arg1[%c0_14, %c0_15, %c4, %c0_16] : memref<1x1x18x128xbf16, #tpu.memory_space<vmem>>, vector<1x1x8x128xbf16>
    %29 = vector.shape_cast %28 : vector<1x1x8x128xbf16> to vector<8x128xbf16>
    %30 = arith.extf %29 : vector<8x128xbf16> to vector<8x128xf32>
    %31 = vector.extract_strided_slice %0 {offsets = [3, 0, 0], sizes = [1, 1, 128], strides = [1, 1, 1]} : vector<9x1x128xf32> to vector<1x1x128xf32>
    %32 = vector.shape_cast %31 : vector<1x1x128xf32> to vector<1x128xf32>
    %33 = vector.broadcast %32 : vector<1x128xf32> to vector<8x128xf32>
    %34 = arith.mulf %30, %33 : vector<8x128xf32>
    %35 = arith.addf %27, %34 : vector<8x128xf32>
    %c0_17 = arith.constant 0 : index
    %c0_18 = arith.constant 0 : index
    %c5 = arith.constant 5 : index
    %c0_19 = arith.constant 0 : index
    %36 = vector.load %arg1[%c0_17, %c0_18, %c5, %c0_19] : memref<1x1x18x128xbf16, #tpu.memory_space<vmem>>, vector<1x1x8x128xbf16>
    %37 = vector.shape_cast %36 : vector<1x1x8x128xbf16> to vector<8x128xbf16>
    %38 = arith.extf %37 : vector<8x128xbf16> to vector<8x128xf32>
    %39 = vector.extract_strided_slice %0 {offsets = [4, 0, 0], sizes = [1, 1, 128], strides = [1, 1, 1]} : vector<9x1x128xf32> to vector<1x1x128xf32>
    %40 = vector.shape_cast %39 : vector<1x1x128xf32> to vector<1x128xf32>
    %41 = vector.broadcast %40 : vector<1x128xf32> to vector<8x128xf32>
    %42 = arith.mulf %38, %41 : vector<8x128xf32>
    %43 = arith.addf %35, %42 : vector<8x128xf32>
    %c0_20 = arith.constant 0 : index
    %c0_21 = arith.constant 0 : index
    %c6 = arith.constant 6 : index
    %c0_22 = arith.constant 0 : index
    %44 = vector.load %arg1[%c0_20, %c0_21, %c6, %c0_22] : memref<1x1x18x128xbf16, #tpu.memory_space<vmem>>, vector<1x1x8x128xbf16>
    %45 = vector.shape_cast %44 : vector<1x1x8x128xbf16> to vector<8x128xbf16>
    %46 = arith.extf %45 : vector<8x128xbf16> to vector<8x128xf32>
    %47 = vector.extract_strided_slice %0 {offsets = [5, 0, 0], sizes = [1, 1, 128], strides = [1, 1, 1]} : vector<9x1x128xf32> to vector<1x1x128xf32>
    %48 = vector.shape_cast %47 : vector<1x1x128xf32> to vector<1x128xf32>
    %49 = vector.broadcast %48 : vector<1x128xf32> to vector<8x128xf32>
    %50 = arith.mulf %46, %49 : vector<8x128xf32>
    %51 = arith.addf %43, %50 : vector<8x128xf32>
    %c0_23 = arith.constant 0 : index
    %c0_24 = arith.constant 0 : index
    %c8 = arith.constant 8 : index
    %c0_25 = arith.constant 0 : index
    %52 = vector.load %arg1[%c0_23, %c0_24, %c8, %c0_25] : memref<1x1x18x128xbf16, #tpu.memory_space<vmem>>, vector<1x1x8x128xbf16>
    %53 = vector.shape_cast %52 : vector<1x1x8x128xbf16> to vector<8x128xbf16>
    %54 = arith.extf %53 : vector<8x128xbf16> to vector<8x128xf32>
    %55 = vector.extract_strided_slice %0 {offsets = [6, 0, 0], sizes = [1, 1, 128], strides = [1, 1, 1]} : vector<9x1x128xf32> to vector<1x1x128xf32>
    %56 = vector.shape_cast %55 : vector<1x1x128xf32> to vector<1x128xf32>
    %57 = vector.broadcast %56 : vector<1x128xf32> to vector<8x128xf32>
    %58 = arith.mulf %54, %57 : vector<8x128xf32>
    %59 = arith.addf %51, %58 : vector<8x128xf32>
    %c0_26 = arith.constant 0 : index
    %c0_27 = arith.constant 0 : index
    %c9 = arith.constant 9 : index
    %c0_28 = arith.constant 0 : index
    %60 = vector.load %arg1[%c0_26, %c0_27, %c9, %c0_28] : memref<1x1x18x128xbf16, #tpu.memory_space<vmem>>, vector<1x1x8x128xbf16>
    %61 = vector.shape_cast %60 : vector<1x1x8x128xbf16> to vector<8x128xbf16>
    %62 = arith.extf %61 : vector<8x128xbf16> to vector<8x128xf32>
    %63 = vector.extract_strided_slice %0 {offsets = [7, 0, 0], sizes = [1, 1, 128], strides = [1, 1, 1]} : vector<9x1x128xf32> to vector<1x1x128xf32>
    %64 = vector.shape_cast %63 : vector<1x1x128xf32> to vector<1x128xf32>
    %65 = vector.broadcast %64 : vector<1x128xf32> to vector<8x128xf32>
    %66 = arith.mulf %62, %65 : vector<8x128xf32>
    %67 = arith.addf %59, %66 : vector<8x128xf32>
    %c0_29 = arith.constant 0 : index
    %c0_30 = arith.constant 0 : index
    %c10 = arith.constant 10 : index
    %c0_31 = arith.constant 0 : index
    %68 = vector.load %arg1[%c0_29, %c0_30, %c10, %c0_31] : memref<1x1x18x128xbf16, #tpu.memory_space<vmem>>, vector<1x1x8x128xbf16>
    %69 = vector.shape_cast %68 : vector<1x1x8x128xbf16> to vector<8x128xbf16>
    %70 = arith.extf %69 : vector<8x128xbf16> to vector<8x128xf32>
    %71 = vector.extract_strided_slice %0 {offsets = [8, 0, 0], sizes = [1, 1, 128], strides = [1, 1, 1]} : vector<9x1x128xf32> to vector<1x1x128xf32>
    %72 = vector.shape_cast %71 : vector<1x1x128xf32> to vector<1x128xf32>
    %73 = vector.broadcast %72 : vector<1x128xf32> to vector<8x128xf32>
    %74 = arith.mulf %70, %73 : vector<8x128xf32>
    %75 = arith.addf %67, %74 : vector<8x128xf32>
    %cst = arith.constant 0.000000e+00 : f32
    %76 = vector.broadcast %cst : f32 to vector<8x128xf32>
    %77 = arith.maximumf %75, %76 : vector<8x128xf32>
    %78 = arith.truncf %77 : vector<8x128xf32> to vector<8x128xbf16>
    %c0_32 = arith.constant 0 : index
    %c0_33 = arith.constant 0 : index
    %79 = vector.load %arg4[%c0_32, %c0_33] : memref<128x128xbf16, #tpu.memory_space<vmem>>, vector<128x128xbf16>
    %cst_34 = arith.constant dense<0.000000e+00> : vector<8x128xf32>
    %80 = tpu.matmul %78, %79, %cst_34 {dimension_numbers = #tpu.dot_dimension_numbers<[1], [0], [0], [1], [0, 0, 1, 1], [], []>} : vector<8x128xbf16>, vector<128x128xbf16>, vector<8x128xf32> -> vector<8x128xf32>
    %c0_35 = arith.constant 0 : index
    %c0_36 = arith.constant 0 : index
    %81 = vector.load %arg5[%c0_35, %c0_36] : memref<1x128xf32, #tpu.memory_space<vmem>>, vector<1x128xf32>
    %82 = vector.broadcast %81 : vector<1x128xf32> to vector<8x128xf32>
    %83 = arith.addf %80, %82 : vector<8x128xf32>
    %cst_37 = arith.constant 0.000000e+00 : f32
    %84 = vector.broadcast %cst_37 : f32 to vector<8x128xf32>
    %85 = arith.maximumf %83, %84 : vector<8x128xf32>
    %86 = arith.truncf %85 : vector<8x128xf32> to vector<8x128xbf16>
    %c0_38 = arith.constant 0 : index
    %c0_39 = arith.constant 0 : index
    %c0_40 = arith.constant 0 : index
    %87 = vector.load %arg6[%c0_38, %c0_39, %c0_40] : memref<1x8x128xbf16, #tpu.memory_space<vmem>>, vector<1x8x128xbf16>
    %88 = vector.shape_cast %87 : vector<1x8x128xbf16> to vector<8x128xbf16>
    %89 = vector.shape_cast %86 : vector<8x128xbf16> to vector<1x8x128xbf16>
    tpu.vector_store %arg6[%c0_38, %c0_39, %c0_40], %89 {strides = array<i32>} : memref<1x8x128xbf16, #tpu.memory_space<vmem>>, vector<1x8x128xbf16>,
    return
  }
  func.func @transform_0(%arg0: i32) -> (i32, i32, i32, i32) {
    %c0_i32 = arith.constant 0 : i32
    %c0_i32_0 = arith.constant 0 : i32
    %c0_i32_1 = arith.constant 0 : i32
    %c0_i32_2 = arith.constant 0 : i32
    return %arg0, %c0_i32, %c0_i32_0, %c0_i32_1 : i32, i32, i32, i32
  }
  func.func @transform_1(%arg0: i32) -> (i32, i32, i32) {
    %c0_i32 = arith.constant 0 : i32
    %c0_i32_0 = arith.constant 0 : i32
    %c0_i32_1 = arith.constant 0 : i32
    %c0_i32_2 = arith.constant 0 : i32
    return %c0_i32, %c0_i32_0, %c0_i32_1 : i32, i32, i32
  }
  func.func @transform_2(%arg0: i32) -> (i32, i32) {
    %c0_i32 = arith.constant 0 : i32
    %c0_i32_0 = arith.constant 0 : i32
    %c0_i32_1 = arith.constant 0 : i32
    return %c0_i32, %c0_i32_0 : i32, i32
  }
  func.func @transform_3(%arg0: i32) -> (i32, i32) {
    %c0_i32 = arith.constant 0 : i32
    %c0_i32_0 = arith.constant 0 : i32
    %c0_i32_1 = arith.constant 0 : i32
    return %c0_i32, %c0_i32_0 : i32, i32
  }
  func.func @transform_4(%arg0: i32) -> (i32, i32) {
    %c0_i32 = arith.constant 0 : i32
    %c0_i32_0 = arith.constant 0 : i32
    %c0_i32_1 = arith.constant 0 : i32
    return %c0_i32, %c0_i32_0 : i32, i32
  }
  func.func @transform_5(%arg0: i32) -> (i32, i32, i32) {
    %c0_i32 = arith.constant 0 : i32
    %c0_i32_0 = arith.constant 0 : i32
    %c0_i32_1 = arith.constant 0 : i32
    return %arg0, %c0_i32, %c0_i32_0 : i32, i32, i32
  }
}

module attributes {stable_mosaic.version = 11 : i64} {
  func.func @_dwsep_kernel(%arg0: i32, %arg1: memref<1x4x12x128xbf16, #tpu.memory_space<vmem>>, %arg2: memref<9x1x128xf32, #tpu.memory_space<vmem>>, %arg3: memref<1x128xf32, #tpu.memory_space<vmem>>, %arg4: memref<128x256xbf16, #tpu.memory_space<vmem>>, %arg5: memref<1x256xf32, #tpu.memory_space<vmem>>, %arg6: memref<1x8x256xbf16, #tpu.memory_space<vmem>>) attributes {dimension_semantics = [#tpu.dimension_semantics<parallel>], iteration_bounds = array<i64: 2>, scalar_prefetch = 0 : i64, scratch_operands = 0 : i64, tpu.core_type = #tpu.core_type<tc>, window_params = [{transform_indices = @transform_0, window_bounds = array<i64: 1, 4, 12, 128>}, {pipeline_mode = #tpu.pipeline_mode<synchronous>, transform_indices = @transform_1, window_bounds = array<i64: 9, 1, 128>}, {pipeline_mode = #tpu.pipeline_mode<synchronous>, transform_indices = @transform_2, window_bounds = array<i64: 1, 128>}, {pipeline_mode = #tpu.pipeline_mode<synchronous>, transform_indices = @transform_3, window_bounds = array<i64: 128, 256>}, {pipeline_mode = #tpu.pipeline_mode<synchronous>, transform_indices = @transform_4, window_bounds = array<i64: 1, 256>}, {transform_indices = @transform_5, window_bounds = array<i64: 1, 8, 256>}]} {
    %c0 = arith.constant 0 : index
    %c0_0 = arith.constant 0 : index
    %c0_1 = arith.constant 0 : index
    %0 = vector.load %arg2[%c0, %c0_0, %c0_1] : memref<9x1x128xf32, #tpu.memory_space<vmem>>, vector<9x1x128xf32>
    %c0_2 = arith.constant 0 : index
    %c0_3 = arith.constant 0 : index
    %1 = vector.load %arg3[%c0_2, %c0_3] : memref<1x128xf32, #tpu.memory_space<vmem>>, vector<1x128xf32>
    %2 = vector.shape_cast %1 : vector<1x128xf32> to vector<1x128xf32>
    %3 = vector.broadcast %2 : vector<1x128xf32> to vector<8x128xf32>
    %c0_4 = arith.constant 0 : index
    %c0_5 = arith.constant 0 : index
    %c0_6 = arith.constant 0 : index
    %c0_7 = arith.constant 0 : index
    %4 = vector.load %arg1[%c0_4, %c0_5, %c0_6, %c0_7] : memref<1x4x12x128xbf16, #tpu.memory_space<vmem>>, vector<1x1x8x128xbf16>
    %5 = vector.shape_cast %4 : vector<1x1x8x128xbf16> to vector<8x128xbf16>
    %6 = arith.extf %5 : vector<8x128xbf16> to vector<8x128xf32>
    %7 = vector.extract_strided_slice %0 {offsets = [0, 0, 0], sizes = [1, 1, 128], strides = [1, 1, 1]} : vector<9x1x128xf32> to vector<1x1x128xf32>
    %8 = vector.shape_cast %7 : vector<1x1x128xf32> to vector<1x128xf32>
    %9 = vector.broadcast %8 : vector<1x128xf32> to vector<8x128xf32>
    %10 = arith.mulf %6, %9 : vector<8x128xf32>
    %11 = arith.addf %3, %10 : vector<8x128xf32>
    %c0_8 = arith.constant 0 : index
    %c1 = arith.constant 1 : index
    %c0_9 = arith.constant 0 : index
    %c0_10 = arith.constant 0 : index
    %12 = vector.load %arg1[%c0_8, %c1, %c0_9, %c0_10] : memref<1x4x12x128xbf16, #tpu.memory_space<vmem>>, vector<1x1x8x128xbf16>
    %13 = vector.shape_cast %12 : vector<1x1x8x128xbf16> to vector<8x128xbf16>
    %14 = arith.extf %13 : vector<8x128xbf16> to vector<8x128xf32>
    %15 = vector.extract_strided_slice %0 {offsets = [1, 0, 0], sizes = [1, 1, 128], strides = [1, 1, 1]} : vector<9x1x128xf32> to vector<1x1x128xf32>
    %16 = vector.shape_cast %15 : vector<1x1x128xf32> to vector<1x128xf32>
    %17 = vector.broadcast %16 : vector<1x128xf32> to vector<8x128xf32>
    %18 = arith.mulf %14, %17 : vector<8x128xf32>
    %19 = arith.addf %11, %18 : vector<8x128xf32>
    %c0_11 = arith.constant 0 : index
    %c0_12 = arith.constant 0 : index
    %c1_13 = arith.constant 1 : index
    %c0_14 = arith.constant 0 : index
    %20 = vector.load %arg1[%c0_11, %c0_12, %c1_13, %c0_14] : memref<1x4x12x128xbf16, #tpu.memory_space<vmem>>, vector<1x1x8x128xbf16>
    %21 = vector.shape_cast %20 : vector<1x1x8x128xbf16> to vector<8x128xbf16>
    %22 = arith.extf %21 : vector<8x128xbf16> to vector<8x128xf32>
    %23 = vector.extract_strided_slice %0 {offsets = [2, 0, 0], sizes = [1, 1, 128], strides = [1, 1, 1]} : vector<9x1x128xf32> to vector<1x1x128xf32>
    %24 = vector.shape_cast %23 : vector<1x1x128xf32> to vector<1x128xf32>
    %25 = vector.broadcast %24 : vector<1x128xf32> to vector<8x128xf32>
    %26 = arith.mulf %22, %25 : vector<8x128xf32>
    %27 = arith.addf %19, %26 : vector<8x128xf32>
    %c0_15 = arith.constant 0 : index
    %c2 = arith.constant 2 : index
    %c0_16 = arith.constant 0 : index
    %c0_17 = arith.constant 0 : index
    %28 = vector.load %arg1[%c0_15, %c2, %c0_16, %c0_17] : memref<1x4x12x128xbf16, #tpu.memory_space<vmem>>, vector<1x1x8x128xbf16>
    %29 = vector.shape_cast %28 : vector<1x1x8x128xbf16> to vector<8x128xbf16>
    %30 = arith.extf %29 : vector<8x128xbf16> to vector<8x128xf32>
    %31 = vector.extract_strided_slice %0 {offsets = [3, 0, 0], sizes = [1, 1, 128], strides = [1, 1, 1]} : vector<9x1x128xf32> to vector<1x1x128xf32>
    %32 = vector.shape_cast %31 : vector<1x1x128xf32> to vector<1x128xf32>
    %33 = vector.broadcast %32 : vector<1x128xf32> to vector<8x128xf32>
    %34 = arith.mulf %30, %33 : vector<8x128xf32>
    %35 = arith.addf %27, %34 : vector<8x128xf32>
    %c0_18 = arith.constant 0 : index
    %c3 = arith.constant 3 : index
    %c0_19 = arith.constant 0 : index
    %c0_20 = arith.constant 0 : index
    %36 = vector.load %arg1[%c0_18, %c3, %c0_19, %c0_20] : memref<1x4x12x128xbf16, #tpu.memory_space<vmem>>, vector<1x1x8x128xbf16>
    %37 = vector.shape_cast %36 : vector<1x1x8x128xbf16> to vector<8x128xbf16>
    %38 = arith.extf %37 : vector<8x128xbf16> to vector<8x128xf32>
    %39 = vector.extract_strided_slice %0 {offsets = [4, 0, 0], sizes = [1, 1, 128], strides = [1, 1, 1]} : vector<9x1x128xf32> to vector<1x1x128xf32>
    %40 = vector.shape_cast %39 : vector<1x1x128xf32> to vector<1x128xf32>
    %41 = vector.broadcast %40 : vector<1x128xf32> to vector<8x128xf32>
    %42 = arith.mulf %38, %41 : vector<8x128xf32>
    %43 = arith.addf %35, %42 : vector<8x128xf32>
    %c0_21 = arith.constant 0 : index
    %c2_22 = arith.constant 2 : index
    %c1_23 = arith.constant 1 : index
    %c0_24 = arith.constant 0 : index
    %44 = vector.load %arg1[%c0_21, %c2_22, %c1_23, %c0_24] : memref<1x4x12x128xbf16, #tpu.memory_space<vmem>>, vector<1x1x8x128xbf16>
    %45 = vector.shape_cast %44 : vector<1x1x8x128xbf16> to vector<8x128xbf16>
    %46 = arith.extf %45 : vector<8x128xbf16> to vector<8x128xf32>
    %47 = vector.extract_strided_slice %0 {offsets = [5, 0, 0], sizes = [1, 1, 128], strides = [1, 1, 1]} : vector<9x1x128xf32> to vector<1x1x128xf32>
    %48 = vector.shape_cast %47 : vector<1x1x128xf32> to vector<1x128xf32>
    %49 = vector.broadcast %48 : vector<1x128xf32> to vector<8x128xf32>
    %50 = arith.mulf %46, %49 : vector<8x128xf32>
    %51 = arith.addf %43, %50 : vector<8x128xf32>
    %c0_25 = arith.constant 0 : index
    %c0_26 = arith.constant 0 : index
    %c2_27 = arith.constant 2 : index
    %c0_28 = arith.constant 0 : index
    %52 = vector.load %arg1[%c0_25, %c0_26, %c2_27, %c0_28] : memref<1x4x12x128xbf16, #tpu.memory_space<vmem>>, vector<1x1x8x128xbf16>
    %53 = vector.shape_cast %52 : vector<1x1x8x128xbf16> to vector<8x128xbf16>
    %54 = arith.extf %53 : vector<8x128xbf16> to vector<8x128xf32>
    %55 = vector.extract_strided_slice %0 {offsets = [6, 0, 0], sizes = [1, 1, 128], strides = [1, 1, 1]} : vector<9x1x128xf32> to vector<1x1x128xf32>
    %56 = vector.shape_cast %55 : vector<1x1x128xf32> to vector<1x128xf32>
    %57 = vector.broadcast %56 : vector<1x128xf32> to vector<8x128xf32>
    %58 = arith.mulf %54, %57 : vector<8x128xf32>
    %59 = arith.addf %51, %58 : vector<8x128xf32>
    %c0_29 = arith.constant 0 : index
    %c1_30 = arith.constant 1 : index
    %c2_31 = arith.constant 2 : index
    %c0_32 = arith.constant 0 : index
    %60 = vector.load %arg1[%c0_29, %c1_30, %c2_31, %c0_32] : memref<1x4x12x128xbf16, #tpu.memory_space<vmem>>, vector<1x1x8x128xbf16>
    %61 = vector.shape_cast %60 : vector<1x1x8x128xbf16> to vector<8x128xbf16>
    %62 = arith.extf %61 : vector<8x128xbf16> to vector<8x128xf32>
    %63 = vector.extract_strided_slice %0 {offsets = [7, 0, 0], sizes = [1, 1, 128], strides = [1, 1, 1]} : vector<9x1x128xf32> to vector<1x1x128xf32>
    %64 = vector.shape_cast %63 : vector<1x1x128xf32> to vector<1x128xf32>
    %65 = vector.broadcast %64 : vector<1x128xf32> to vector<8x128xf32>
    %66 = arith.mulf %62, %65 : vector<8x128xf32>
    %67 = arith.addf %59, %66 : vector<8x128xf32>
    %c0_33 = arith.constant 0 : index
    %c0_34 = arith.constant 0 : index
    %c3_35 = arith.constant 3 : index
    %c0_36 = arith.constant 0 : index
    %68 = vector.load %arg1[%c0_33, %c0_34, %c3_35, %c0_36] : memref<1x4x12x128xbf16, #tpu.memory_space<vmem>>, vector<1x1x8x128xbf16>
    %69 = vector.shape_cast %68 : vector<1x1x8x128xbf16> to vector<8x128xbf16>
    %70 = arith.extf %69 : vector<8x128xbf16> to vector<8x128xf32>
    %71 = vector.extract_strided_slice %0 {offsets = [8, 0, 0], sizes = [1, 1, 128], strides = [1, 1, 1]} : vector<9x1x128xf32> to vector<1x1x128xf32>
    %72 = vector.shape_cast %71 : vector<1x1x128xf32> to vector<1x128xf32>
    %73 = vector.broadcast %72 : vector<1x128xf32> to vector<8x128xf32>
    %74 = arith.mulf %70, %73 : vector<8x128xf32>
    %75 = arith.addf %67, %74 : vector<8x128xf32>
    %cst = arith.constant 0.000000e+00 : f32
    %76 = vector.broadcast %cst : f32 to vector<8x128xf32>
    %77 = arith.maximumf %75, %76 : vector<8x128xf32>
    %78 = arith.truncf %77 : vector<8x128xf32> to vector<8x128xbf16>
    %c0_37 = arith.constant 0 : index
    %c0_38 = arith.constant 0 : index
    %79 = vector.load %arg4[%c0_37, %c0_38] : memref<128x256xbf16, #tpu.memory_space<vmem>>, vector<128x256xbf16>
    %cst_39 = arith.constant dense<0.000000e+00> : vector<8x256xf32>
    %80 = tpu.matmul %78, %79, %cst_39 {dimension_numbers = #tpu.dot_dimension_numbers<[1], [0], [0], [1], [0, 0, 1, 1], [], []>} : vector<8x128xbf16>, vector<128x256xbf16>, vector<8x256xf32> -> vector<8x256xf32>
    %c0_40 = arith.constant 0 : index
    %c0_41 = arith.constant 0 : index
    %81 = vector.load %arg5[%c0_40, %c0_41] : memref<1x256xf32, #tpu.memory_space<vmem>>, vector<1x256xf32>
    %82 = vector.broadcast %81 : vector<1x256xf32> to vector<8x256xf32>
    %83 = arith.addf %80, %82 : vector<8x256xf32>
    %cst_42 = arith.constant 0.000000e+00 : f32
    %84 = vector.broadcast %cst_42 : f32 to vector<8x256xf32>
    %85 = arith.maximumf %83, %84 : vector<8x256xf32>
    %86 = arith.truncf %85 : vector<8x256xf32> to vector<8x256xbf16>
    %c0_43 = arith.constant 0 : index
    %c0_44 = arith.constant 0 : index
    %c0_45 = arith.constant 0 : index
    %87 = vector.load %arg6[%c0_43, %c0_44, %c0_45] : memref<1x8x256xbf16, #tpu.memory_space<vmem>>, vector<1x8x256xbf16>
    %88 = vector.shape_cast %87 : vector<1x8x256xbf16> to vector<8x256xbf16>
    %89 = vector.shape_cast %86 : vector<8x256xbf16> to vector<1x8x256xbf16>
    tpu.vector_store %arg6[%c0_43, %c0_44, %c0_45], %89 {strides = array<i32>} : memref<1x8x256xbf16, #tpu.memory_space<vmem>>, vector<1x8x256xbf16>,
    return
  }
  func.func @transform_0(%arg0: i32) -> (i32, i32, i32, i32) {
    %c0_i32 = arith.constant 0 : i32
    %c0_i32_0 = arith.constant 0 : i32
    %c0_i32_1 = arith.constant 0 : i32
    %c0_i32_2 = arith.constant 0 : i32
    return %arg0, %c0_i32, %c0_i32_0, %c0_i32_1 : i32, i32, i32, i32
  }
  func.func @transform_1(%arg0: i32) -> (i32, i32, i32) {
    %c0_i32 = arith.constant 0 : i32
    %c0_i32_0 = arith.constant 0 : i32
    %c0_i32_1 = arith.constant 0 : i32
    %c0_i32_2 = arith.constant 0 : i32
    return %c0_i32, %c0_i32_0, %c0_i32_1 : i32, i32, i32
  }
  func.func @transform_2(%arg0: i32) -> (i32, i32) {
    %c0_i32 = arith.constant 0 : i32
    %c0_i32_0 = arith.constant 0 : i32
    %c0_i32_1 = arith.constant 0 : i32
    return %c0_i32, %c0_i32_0 : i32, i32
  }
  func.func @transform_3(%arg0: i32) -> (i32, i32) {
    %c0_i32 = arith.constant 0 : i32
    %c0_i32_0 = arith.constant 0 : i32
    %c0_i32_1 = arith.constant 0 : i32
    return %c0_i32, %c0_i32_0 : i32, i32
  }
  func.func @transform_4(%arg0: i32) -> (i32, i32) {
    %c0_i32 = arith.constant 0 : i32
    %c0_i32_0 = arith.constant 0 : i32
    %c0_i32_1 = arith.constant 0 : i32
    return %c0_i32, %c0_i32_0 : i32, i32
  }
  func.func @transform_5(%arg0: i32) -> (i32, i32, i32) {
    %c0_i32 = arith.constant 0 : i32
    %c0_i32_0 = arith.constant 0 : i32
    %c0_i32_1 = arith.constant 0 : i32
    return %arg0, %c0_i32, %c0_i32_0 : i32, i32, i32
  }
}

module attributes {stable_mosaic.version = 11 : i64} {
  func.func @_dwsep_kernel(%arg0: i32, %arg1: memref<1x4x12x256xbf16, #tpu.memory_space<vmem>>, %arg2: memref<9x1x256xf32, #tpu.memory_space<vmem>>, %arg3: memref<1x256xf32, #tpu.memory_space<vmem>>, %arg4: memref<1x8x256xbf16, #tpu.memory_space<vmem>>) attributes {dimension_semantics = [#tpu.dimension_semantics<parallel>], iteration_bounds = array<i64: 2>, scalar_prefetch = 0 : i64, scratch_operands = 0 : i64, tpu.core_type = #tpu.core_type<tc>, window_params = [{transform_indices = @transform_0, window_bounds = array<i64: 1, 4, 12, 256>}, {pipeline_mode = #tpu.pipeline_mode<synchronous>, transform_indices = @transform_1, window_bounds = array<i64: 9, 1, 256>}, {pipeline_mode = #tpu.pipeline_mode<synchronous>, transform_indices = @transform_2, window_bounds = array<i64: 1, 256>}, {transform_indices = @transform_3, window_bounds = array<i64: 1, 8, 256>}]} {
    %c0 = arith.constant 0 : index
    %c0_0 = arith.constant 0 : index
    %c0_1 = arith.constant 0 : index
    %0 = vector.load %arg2[%c0, %c0_0, %c0_1] : memref<9x1x256xf32, #tpu.memory_space<vmem>>, vector<9x1x256xf32>
    %c0_2 = arith.constant 0 : index
    %c0_3 = arith.constant 0 : index
    %1 = vector.load %arg3[%c0_2, %c0_3] : memref<1x256xf32, #tpu.memory_space<vmem>>, vector<1x256xf32>
    %2 = vector.shape_cast %1 : vector<1x256xf32> to vector<1x256xf32>
    %3 = vector.broadcast %2 : vector<1x256xf32> to vector<8x256xf32>
    %c0_4 = arith.constant 0 : index
    %c0_5 = arith.constant 0 : index
    %c0_6 = arith.constant 0 : index
    %c0_7 = arith.constant 0 : index
    %4 = vector.load %arg1[%c0_4, %c0_5, %c0_6, %c0_7] : memref<1x4x12x256xbf16, #tpu.memory_space<vmem>>, vector<1x1x8x256xbf16>
    %5 = vector.shape_cast %4 : vector<1x1x8x256xbf16> to vector<8x256xbf16>
    %6 = arith.extf %5 : vector<8x256xbf16> to vector<8x256xf32>
    %7 = vector.extract_strided_slice %0 {offsets = [0, 0, 0], sizes = [1, 1, 256], strides = [1, 1, 1]} : vector<9x1x256xf32> to vector<1x1x256xf32>
    %8 = vector.shape_cast %7 : vector<1x1x256xf32> to vector<1x256xf32>
    %9 = vector.broadcast %8 : vector<1x256xf32> to vector<8x256xf32>
    %10 = arith.mulf %6, %9 : vector<8x256xf32>
    %11 = arith.addf %3, %10 : vector<8x256xf32>
    %c0_8 = arith.constant 0 : index
    %c1 = arith.constant 1 : index
    %c0_9 = arith.constant 0 : index
    %c0_10 = arith.constant 0 : index
    %12 = vector.load %arg1[%c0_8, %c1, %c0_9, %c0_10] : memref<1x4x12x256xbf16, #tpu.memory_space<vmem>>, vector<1x1x8x256xbf16>
    %13 = vector.shape_cast %12 : vector<1x1x8x256xbf16> to vector<8x256xbf16>
    %14 = arith.extf %13 : vector<8x256xbf16> to vector<8x256xf32>
    %15 = vector.extract_strided_slice %0 {offsets = [1, 0, 0], sizes = [1, 1, 256], strides = [1, 1, 1]} : vector<9x1x256xf32> to vector<1x1x256xf32>
    %16 = vector.shape_cast %15 : vector<1x1x256xf32> to vector<1x256xf32>
    %17 = vector.broadcast %16 : vector<1x256xf32> to vector<8x256xf32>
    %18 = arith.mulf %14, %17 : vector<8x256xf32>
    %19 = arith.addf %11, %18 : vector<8x256xf32>
    %c0_11 = arith.constant 0 : index
    %c0_12 = arith.constant 0 : index
    %c1_13 = arith.constant 1 : index
    %c0_14 = arith.constant 0 : index
    %20 = vector.load %arg1[%c0_11, %c0_12, %c1_13, %c0_14] : memref<1x4x12x256xbf16, #tpu.memory_space<vmem>>, vector<1x1x8x256xbf16>
    %21 = vector.shape_cast %20 : vector<1x1x8x256xbf16> to vector<8x256xbf16>
    %22 = arith.extf %21 : vector<8x256xbf16> to vector<8x256xf32>
    %23 = vector.extract_strided_slice %0 {offsets = [2, 0, 0], sizes = [1, 1, 256], strides = [1, 1, 1]} : vector<9x1x256xf32> to vector<1x1x256xf32>
    %24 = vector.shape_cast %23 : vector<1x1x256xf32> to vector<1x256xf32>
    %25 = vector.broadcast %24 : vector<1x256xf32> to vector<8x256xf32>
    %26 = arith.mulf %22, %25 : vector<8x256xf32>
    %27 = arith.addf %19, %26 : vector<8x256xf32>
    %c0_15 = arith.constant 0 : index
    %c2 = arith.constant 2 : index
    %c0_16 = arith.constant 0 : index
    %c0_17 = arith.constant 0 : index
    %28 = vector.load %arg1[%c0_15, %c2, %c0_16, %c0_17] : memref<1x4x12x256xbf16, #tpu.memory_space<vmem>>, vector<1x1x8x256xbf16>
    %29 = vector.shape_cast %28 : vector<1x1x8x256xbf16> to vector<8x256xbf16>
    %30 = arith.extf %29 : vector<8x256xbf16> to vector<8x256xf32>
    %31 = vector.extract_strided_slice %0 {offsets = [3, 0, 0], sizes = [1, 1, 256], strides = [1, 1, 1]} : vector<9x1x256xf32> to vector<1x1x256xf32>
    %32 = vector.shape_cast %31 : vector<1x1x256xf32> to vector<1x256xf32>
    %33 = vector.broadcast %32 : vector<1x256xf32> to vector<8x256xf32>
    %34 = arith.mulf %30, %33 : vector<8x256xf32>
    %35 = arith.addf %27, %34 : vector<8x256xf32>
    %c0_18 = arith.constant 0 : index
    %c3 = arith.constant 3 : index
    %c0_19 = arith.constant 0 : index
    %c0_20 = arith.constant 0 : index
    %36 = vector.load %arg1[%c0_18, %c3, %c0_19, %c0_20] : memref<1x4x12x256xbf16, #tpu.memory_space<vmem>>, vector<1x1x8x256xbf16>
    %37 = vector.shape_cast %36 : vector<1x1x8x256xbf16> to vector<8x256xbf16>
    %38 = arith.extf %37 : vector<8x256xbf16> to vector<8x256xf32>
    %39 = vector.extract_strided_slice %0 {offsets = [4, 0, 0], sizes = [1, 1, 256], strides = [1, 1, 1]} : vector<9x1x256xf32> to vector<1x1x256xf32>
    %40 = vector.shape_cast %39 : vector<1x1x256xf32> to vector<1x256xf32>
    %41 = vector.broadcast %40 : vector<1x256xf32> to vector<8x256xf32>
    %42 = arith.mulf %38, %41 : vector<8x256xf32>
    %43 = arith.addf %35, %42 : vector<8x256xf32>
    %c0_21 = arith.constant 0 : index
    %c2_22 = arith.constant 2 : index
    %c1_23 = arith.constant 1 : index
    %c0_24 = arith.constant 0 : index
    %44 = vector.load %arg1[%c0_21, %c2_22, %c1_23, %c0_24] : memref<1x4x12x256xbf16, #tpu.memory_space<vmem>>, vector<1x1x8x256xbf16>
    %45 = vector.shape_cast %44 : vector<1x1x8x256xbf16> to vector<8x256xbf16>
    %46 = arith.extf %45 : vector<8x256xbf16> to vector<8x256xf32>
    %47 = vector.extract_strided_slice %0 {offsets = [5, 0, 0], sizes = [1, 1, 256], strides = [1, 1, 1]} : vector<9x1x256xf32> to vector<1x1x256xf32>
    %48 = vector.shape_cast %47 : vector<1x1x256xf32> to vector<1x256xf32>
    %49 = vector.broadcast %48 : vector<1x256xf32> to vector<8x256xf32>
    %50 = arith.mulf %46, %49 : vector<8x256xf32>
    %51 = arith.addf %43, %50 : vector<8x256xf32>
    %c0_25 = arith.constant 0 : index
    %c0_26 = arith.constant 0 : index
    %c2_27 = arith.constant 2 : index
    %c0_28 = arith.constant 0 : index
    %52 = vector.load %arg1[%c0_25, %c0_26, %c2_27, %c0_28] : memref<1x4x12x256xbf16, #tpu.memory_space<vmem>>, vector<1x1x8x256xbf16>
    %53 = vector.shape_cast %52 : vector<1x1x8x256xbf16> to vector<8x256xbf16>
    %54 = arith.extf %53 : vector<8x256xbf16> to vector<8x256xf32>
    %55 = vector.extract_strided_slice %0 {offsets = [6, 0, 0], sizes = [1, 1, 256], strides = [1, 1, 1]} : vector<9x1x256xf32> to vector<1x1x256xf32>
    %56 = vector.shape_cast %55 : vector<1x1x256xf32> to vector<1x256xf32>
    %57 = vector.broadcast %56 : vector<1x256xf32> to vector<8x256xf32>
    %58 = arith.mulf %54, %57 : vector<8x256xf32>
    %59 = arith.addf %51, %58 : vector<8x256xf32>
    %c0_29 = arith.constant 0 : index
    %c1_30 = arith.constant 1 : index
    %c2_31 = arith.constant 2 : index
    %c0_32 = arith.constant 0 : index
    %60 = vector.load %arg1[%c0_29, %c1_30, %c2_31, %c0_32] : memref<1x4x12x256xbf16, #tpu.memory_space<vmem>>, vector<1x1x8x256xbf16>
    %61 = vector.shape_cast %60 : vector<1x1x8x256xbf16> to vector<8x256xbf16>
    %62 = arith.extf %61 : vector<8x256xbf16> to vector<8x256xf32>
    %63 = vector.extract_strided_slice %0 {offsets = [7, 0, 0], sizes = [1, 1, 256], strides = [1, 1, 1]} : vector<9x1x256xf32> to vector<1x1x256xf32>
    %64 = vector.shape_cast %63 : vector<1x1x256xf32> to vector<1x256xf32>
    %65 = vector.broadcast %64 : vector<1x256xf32> to vector<8x256xf32>
    %66 = arith.mulf %62, %65 : vector<8x256xf32>
    %67 = arith.addf %59, %66 : vector<8x256xf32>
    %c0_33 = arith.constant 0 : index
    %c0_34 = arith.constant 0 : index
    %c3_35 = arith.constant 3 : index
    %c0_36 = arith.constant 0 : index
    %68 = vector.load %arg1[%c0_33, %c0_34, %c3_35, %c0_36] : memref<1x4x12x256xbf16, #tpu.memory_space<vmem>>, vector<1x1x8x256xbf16>
    %69 = vector.shape_cast %68 : vector<1x1x8x256xbf16> to vector<8x256xbf16>
    %70 = arith.extf %69 : vector<8x256xbf16> to vector<8x256xf32>
    %71 = vector.extract_strided_slice %0 {offsets = [8, 0, 0], sizes = [1, 1, 256], strides = [1, 1, 1]} : vector<9x1x256xf32> to vector<1x1x256xf32>
    %72 = vector.shape_cast %71 : vector<1x1x256xf32> to vector<1x256xf32>
    %73 = vector.broadcast %72 : vector<1x256xf32> to vector<8x256xf32>
    %74 = arith.mulf %70, %73 : vector<8x256xf32>
    %75 = arith.addf %67, %74 : vector<8x256xf32>
    %cst = arith.constant 0.000000e+00 : f32
    %76 = vector.broadcast %cst : f32 to vector<8x256xf32>
    %77 = arith.maximumf %75, %76 : vector<8x256xf32>
    %78 = arith.truncf %77 : vector<8x256xf32> to vector<8x256xbf16>
    %c0_37 = arith.constant 0 : index
    %c0_38 = arith.constant 0 : index
    %c0_39 = arith.constant 0 : index
    %79 = vector.load %arg4[%c0_37, %c0_38, %c0_39] : memref<1x8x256xbf16, #tpu.memory_space<vmem>>, vector<1x8x256xbf16>
    %80 = vector.shape_cast %79 : vector<1x8x256xbf16> to vector<8x256xbf16>
    %81 = vector.shape_cast %78 : vector<8x256xbf16> to vector<1x8x256xbf16>
    tpu.vector_store %arg4[%c0_37, %c0_38, %c0_39], %81 {strides = array<i32>} : memref<1x8x256xbf16, #tpu.memory_space<vmem>>, vector<1x8x256xbf16>,
    return
  }
  func.func @transform_0(%arg0: i32) -> (i32, i32, i32, i32) {
    %c0_i32 = arith.constant 0 : i32
    %c0_i32_0 = arith.constant 0 : i32
    %c0_i32_1 = arith.constant 0 : i32
    %c0_i32_2 = arith.constant 0 : i32
    return %arg0, %c0_i32, %c0_i32_0, %c0_i32_1 : i32, i32, i32, i32
  }
  func.func @transform_1(%arg0: i32) -> (i32, i32, i32) {
    %c0_i32 = arith.constant 0 : i32
    %c0_i32_0 = arith.constant 0 : i32
    %c0_i32_1 = arith.constant 0 : i32
    %c0_i32_2 = arith.constant 0 : i32
    return %c0_i32, %c0_i32_0, %c0_i32_1 : i32, i32, i32
  }
  func.func @transform_2(%arg0: i32) -> (i32, i32) {
    %c0_i32 = arith.constant 0 : i32
    %c0_i32_0 = arith.constant 0 : i32
    %c0_i32_1 = arith.constant 0 : i32
    return %c0_i32, %c0_i32_0 : i32, i32
  }
  func.func @transform_3(%arg0: i32) -> (i32, i32, i32) {
    %c0_i32 = arith.constant 0 : i32
    %c0_i32_0 = arith.constant 0 : i32
    %c0_i32_1 = arith.constant 0 : i32
    return %arg0, %c0_i32, %c0_i32_0 : i32, i32, i32
  }
}

module attributes {stable_mosaic.version = 11 : i64} {
  func.func @_pool_kernel(%arg0: i32, %arg1: memref<1x1x256xbf16, #tpu.memory_space<vmem>>, %arg2: memref<1x1x256xf32, #tpu.memory_space<vmem>>) attributes {dimension_semantics = [#tpu.dimension_semantics<parallel>], iteration_bounds = array<i64: 2>, scalar_prefetch = 0 : i64, scratch_operands = 0 : i64, tpu.core_type = #tpu.core_type<tc>, window_params = [{transform_indices = @transform_0, window_bounds = array<i64: 1, 1, 256>}, {transform_indices = @transform_1, window_bounds = array<i64: 1, 1, 256>}]} {
    %c0 = arith.constant 0 : index
    %c0_0 = arith.constant 0 : index
    %c0_1 = arith.constant 0 : index
    %0 = vector.load %arg1[%c0, %c0_0, %c0_1] : memref<1x1x256xbf16, #tpu.memory_space<vmem>>, vector<1x1x256xbf16>
    %1 = arith.extf %0 : vector<1x1x256xbf16> to vector<1x1x256xf32>
    %cst = arith.constant dense<0.000000e+00> : vector<1x256xf32>
    %2 = vector.multi_reduction <add>, %1, %cst [1] : vector<1x1x256xf32> to vector<1x256xf32>
    %3 = vector.shape_cast %2 : vector<1x256xf32> to vector<1x1x256xf32>
    %cst_2 = arith.constant 1.000000e+00 : f32
    %4 = vector.broadcast %cst_2 : f32 to vector<1x1x256xf32>
    %5 = arith.divf %3, %4 : vector<1x1x256xf32>
    %c0_3 = arith.constant 0 : index
    %c0_4 = arith.constant 0 : index
    %c0_5 = arith.constant 0 : index
    %6 = vector.load %arg2[%c0_3, %c0_4, %c0_5] : memref<1x1x256xf32, #tpu.memory_space<vmem>>, vector<1x1x256xf32>
    tpu.vector_store %arg2[%c0_3, %c0_4, %c0_5], %5 {strides = array<i32>} : memref<1x1x256xf32, #tpu.memory_space<vmem>>, vector<1x1x256xf32>,
    return
  }
  func.func @transform_0(%arg0: i32) -> (i32, i32, i32) {
    %c0_i32 = arith.constant 0 : i32
    %c0_i32_0 = arith.constant 0 : i32
    %c0_i32_1 = arith.constant 0 : i32
    return %arg0, %c0_i32, %c0_i32_0 : i32, i32, i32
  }
  func.func @transform_1(%arg0: i32) -> (i32, i32, i32) {
    %c0_i32 = arith.constant 0 : i32
    %c0_i32_0 = arith.constant 0 : i32
    %c0_i32_1 = arith.constant 0 : i32
    return %arg0, %c0_i32, %c0_i32_0 : i32, i32, i32
  }
}

</mosaic_0001>

<llo_original>
// kernel: mobilenet_forward.15
$region0: #{mobilenet_forward.15}
  #allocation0 [shape = 'u32[]', space=smem, size = 0x4, offset = 0x4, fixed_abs, tag = 'smem constant byte address 0x4 - core index']
  #allocation1 [shape = 'u32[72,128]{1,0:T(1,128)}', space=vmem, size = 0x9000, scoped, tag = 'internal scratch']
  %s0 = inlined_call_operand.vmem [shape: bf16[512,27], index: 0, kind: input, shape index: {}]
  %s1 = inlined_call_operand.vmem [shape: bf16[27,8], index: 1, kind: input, shape index: {}]
  %s2 = inlined_call_operand.vmem [shape: f32[1,8], index: 2, kind: input, shape index: {}]
  %s3 = inlined_call_operand.vmem [shape: bf16[512,8], index: 3, kind: output, shape index: {}]
  %s4 = sld [smem:[#allocation0]]
  $region22: #{mobilenet_forward.15} parent=0
    _
  %s6 = ssub.s32 1, %s4
  %s7 = scalar_select 0, %s6, %s4
  // Predicated region
  $region2: #{mobilenet_forward.15} parent=0 // pred_check
    _
  $region3: #{mobilenet_forward.15} parent=0 // pred_check_branch
    %9 = sbr.rel (0) target = $region5
  $region4: #{mobilenet_forward.15} parent=0 // pred_region
    _
  $region5: #{mobilenet_forward.15} parent=0 // pred_fallthru
    _
  // Predicated region
  $region6: #{mobilenet_forward.15} parent=0 // pred_check
    _
  $region7: #{mobilenet_forward.15} parent=0 // pred_check_branch
    %11 = sbr.rel (0) target = $region9
  $region8: #{mobilenet_forward.15} parent=0 // pred_region
    _
  $region9: #{mobilenet_forward.15} parent=0 // pred_fallthru
    _
  // Predicated region
  $region10: #{mobilenet_forward.15} parent=0 // pred_check
    _
  $region11: #{mobilenet_forward.15} parent=0 // pred_check_branch
    %13 = sbr.rel (0) target = $region13
  $region12: #{mobilenet_forward.15} parent=0 // pred_region
    _
  $region13: #{mobilenet_forward.15} parent=0 // pred_fallthru
    _
  %v15 = vld [vmem:[%s0] sm:$0xf]
  %v16 = vld [vmem:[%s0 + $0x4] sm:$0xf]
  %v17 = vld [vmem:[%s0 + $0x8] sm:$0xf]
  %v18 = vld [vmem:[%s0 + $0xc] sm:$0xf]
  %v19 = vld [vmem:[%s0 + $0x10] sm:$0xf]
  %v20 = vld [vmem:[%s0 + $0x14] sm:$0xf]
  %v21 = vld [vmem:[%s0 + $0x18] sm:$0xf]
  %v22 = vld [vmem:[%s0 + $0x1c] sm:$0xf]
  %v23 = vld [vmem:[%s0 + $0x20] sm:$0xf]
  %v24 = vld [vmem:[%s0 + $0x24] sm:$0xf]
  %v25 = vld [vmem:[%s0 + $0x28] sm:$0xf]
  %v26 = vld [vmem:[%s0 + $0x2c] sm:$0xf]
  %v27 = vld [vmem:[%s0 + $0x30] sm:$0xf]
  %v28 = vld [vmem:[%s0 + $0x34] sm:$0xf]
  %v29 = vld [vmem:[%s0 + $0x38] sm:$0xf]
  %v30 = vld [vmem:[%s0 + $0x3c] sm:$0xf]
  %v31 = vld [vmem:[%s0 + $0x40] sm:$0xf]
  %v32 = vld [vmem:[%s0 + $0x44] sm:$0xf]
  %v33 = vld [vmem:[%s0 + $0x48] sm:$0xf]
  %v34 = vld [vmem:[%s0 + $0x4c] sm:$0xf]
  %v35 = vld [vmem:[%s0 + $0x50] sm:$0xf]
  %v36 = vld [vmem:[%s0 + $0x54] sm:$0xf]
  %v37 = vld [vmem:[%s0 + $0x58] sm:$0xf]
  %v38 = vld [vmem:[%s0 + $0x5c] sm:$0xf]
  %v39 = vld [vmem:[%s0 + $0x60] sm:$0xf]
  %v40 = vld [vmem:[%s0 + $0x64] sm:$0xf]
  %v41 = vld [vmem:[%s0 + $0x68] sm:$0xf]
  %v42 = vld [vmem:[%s0 + $0x6c] sm:$0xf]
  %v43 = vld [vmem:[%s0 + $0x70] sm:$0xf]
  %v44 = vld [vmem:[%s0 + $0x74] sm:$0xf]
  %v45 = vld [vmem:[%s0 + $0x78] sm:$0xf]
  %v46 = vld [vmem:[%s0 + $0x7c] sm:$0xf]
  %v47 = vld [vmem:[%s0 + $0x80] sm:$0xf]
  %v48 = vld [vmem:[%s0 + $0x84] sm:$0xf]
  %v49 = vld [vmem:[%s0 + $0x88] sm:$0xf]
  %v50 = vld [vmem:[%s0 + $0x8c] sm:$0xf]
  %v51 = vld [vmem:[%s0 + $0x90] sm:$0xf]
  %v52 = vld [vmem:[%s0 + $0x94] sm:$0xf]
  %v53 = vld [vmem:[%s0 + $0x98] sm:$0xf]
  %v54 = vld [vmem:[%s0 + $0x9c] sm:$0xf]
  %v55 = vld [vmem:[%s0 + $0xa0] sm:$0xf]
  %v56 = vld [vmem:[%s0 + $0xa4] sm:$0xf]
  %v57 = vld [vmem:[%s0 + $0xa8] sm:$0xf]
  %v58 = vld [vmem:[%s0 + $0xac] sm:$0xf]
  %v59 = vld [vmem:[%s0 + $0xb0] sm:$0xf]
  %v60 = vld [vmem:[%s0 + $0xb4] sm:$0xf]
  %v61 = vld [vmem:[%s0 + $0xb8] sm:$0xf]
  %v62 = vld [vmem:[%s0 + $0xbc] sm:$0xf]
  %v63 = vld [vmem:[%s0 + $0xc0] sm:$0xf]
  %v64 = vld [vmem:[%s0 + $0xc4] sm:$0xf]
  %v65 = vld [vmem:[%s0 + $0xc8] sm:$0xf]
  %v66 = vld [vmem:[%s0 + $0xcc] sm:$0xf]
  %v67 = vld [vmem:[%s0 + $0xd0] sm:$0xf]
  %v68 = vld [vmem:[%s0 + $0xd4] sm:$0xf]
  %v69 = vld [vmem:[%s0 + $0xd8] sm:$0xf]
  %v70 = vld [vmem:[%s0 + $0xdc] sm:$0xf]
  %v71 = vld [vmem:[%s0 + $0xe0] sm:$0xf]
  %v72 = vld [vmem:[%s0 + $0xe4] sm:$0xf]
  %v73 = vld [vmem:[%s0 + $0xe8] sm:$0xf]
  %v74 = vld [vmem:[%s0 + $0xec] sm:$0xf]
  %v75 = vld [vmem:[%s0 + $0xf0] sm:$0xf]
  %v76 = vld [vmem:[%s0 + $0xf4] sm:$0xf]
  %v77 = vld [vmem:[%s0 + $0xf8] sm:$0xf]
  %v78 = vld [vmem:[%s0 + $0xfc] sm:$0xf]
  %v79 = vld [vmem:[%s1] sm:$0xf]
  %v80 = vld [vmem:[%s1 + $0x4] sm:$0xf]
  %v81 = vld [vmem:[%s1 + $0x8] sm:$0xf]
  %v82 = vld [vmem:[%s1 + $0xc] sm:$0x3]
  %v83 = vld [vmem:[%s2] sm:$0x1]
  %v85 = vperm.slane %v83, 0
  %v151 = vunpack.c.l.b16 %v15
  %v152 = vunpack.c.l.b16 %v16
  %v153 = vunpack.c.l.b16 %v17
  %v154 = vunpack.c.l.b16 %v18
  %v155 = vunpack.c.l.b16 %v19
  %v156 = vunpack.c.l.b16 %v20
  %v157 = vunpack.c.l.b16 %v21
  %v158 = vunpack.c.l.b16 %v22
  %v159 = vunpack.c.l.b16 %v23
  %v160 = vunpack.c.l.b16 %v24
  %v161 = vunpack.c.l.b16 %v25
  %v162 = vunpack.c.l.b16 %v26
  %v163 = vunpack.c.l.b16 %v27
  %v164 = vunpack.c.l.b16 %v28
  %v165 = vunpack.c.l.b16 %v29
  %v166 = vunpack.c.l.b16 %v30
  %v167 = vunpack.c.l.b16 %v31
  %v168 = vunpack.c.l.b16 %v32
  %v169 = vunpack.c.l.b16 %v33
  %v170 = vunpack.c.l.b16 %v34
  %v171 = vunpack.c.l.b16 %v35
  %v172 = vunpack.c.l.b16 %v36
  %v173 = vunpack.c.l.b16 %v37
  %v174 = vunpack.c.l.b16 %v38
  %v175 = vunpack.c.l.b16 %v39
  %v176 = vunpack.c.l.b16 %v40
  %v177 = vunpack.c.l.b16 %v41
  %v178 = vunpack.c.l.b16 %v42
  %v179 = vunpack.c.l.b16 %v43
  %v180 = vunpack.c.l.b16 %v44
  %v181 = vunpack.c.l.b16 %v45
  %v182 = vunpack.c.l.b16 %v46
  %v183 = vunpack.c.l.b16 %v47
  %v184 = vunpack.c.l.b16 %v48
  %v185 = vunpack.c.l.b16 %v49
  %v186 = vunpack.c.l.b16 %v50
  %v187 = vunpack.c.l.b16 %v51
  %v188 = vunpack.c.l.b16 %v52
  %v189 = vunpack.c.l.b16 %v53
  %v190 = vunpack.c.l.b16 %v54
  %v191 = vunpack.c.l.b16 %v55
  %v192 = vunpack.c.l.b16 %v56
  %v193 = vunpack.c.l.b16 %v57
  %v194 = vunpack.c.l.b16 %v58
  %v195 = vunpack.c.l.b16 %v59
  %v196 = vunpack.c.l.b16 %v60
  %v197 = vunpack.c.l.b16 %v61
  %v198 = vunpack.c.l.b16 %v62
  %v199 = vunpack.c.l.b16 %v63
  %v200 = vunpack.c.l.b16 %v64
  %v201 = vunpack.c.l.b16 %v65
  %v202 = vunpack.c.l.b16 %v66
  %v203 = vunpack.c.l.b16 %v67
  %v204 = vunpack.c.l.b16 %v68
  %v205 = vunpack.c.l.b16 %v69
  %v206 = vunpack.c.l.b16 %v70
  %v207 = vunpack.c.l.b16 %v71
  %v208 = vunpack.c.l.b16 %v72
  %v209 = vunpack.c.l.b16 %v73
  %v210 = vunpack.c.l.b16 %v74
  %v211 = vunpack.c.l.b16 %v75
  %v212 = vunpack.c.l.b16 %v76
  %v213 = vunpack.c.l.b16 %v77
  %v214 = vunpack.c.l.b16 %v78
  %v215 = vpack.c.b16 %v152, %v151
  %v216 = vpack.c.b16 %v154, %v153
  %v217 = vpack.c.b16 %v156, %v155
  %v218 = vpack.c.b16 %v158, %v157
  %v219 = vpack.c.b16 %v160, %v159
  %v220 = vpack.c.b16 %v162, %v161
  %v221 = vpack.c.b16 %v164, %v163
  %v222 = vpack.c.b16 %v166, %v165
  %v223 = vpack.c.b16 %v168, %v167
  %v224 = vpack.c.b16 %v170, %v169
  %v225 = vpack.c.b16 %v172, %v171
  %v226 = vpack.c.b16 %v174, %v173
  %v227 = vpack.c.b16 %v176, %v175
  %v228 = vpack.c.b16 %v178, %v177
  %v229 = vpack.c.b16 %v180, %v179
  %v230 = vpack.c.b16 %v182, %v181
  %v231 = vpack.c.b16 %v184, %v183
  %v232 = vpack.c.b16 %v186, %v185
  %v233 = vpack.c.b16 %v188, %v187
  %v234 = vpack.c.b16 %v190, %v189
  %v235 = vpack.c.b16 %v192, %v191
  %v236 = vpack.c.b16 %v194, %v193
  %v237 = vpack.c.b16 %v196, %v195
  %v238 = vpack.c.b16 %v198, %v197
  %v239 = vpack.c.b16 %v200, %v199
  %v240 = vpack.c.b16 %v202, %v201
  %v241 = vpack.c.b16 %v204, %v203
  %v242 = vpack.c.b16 %v206, %v205
  %v243 = vpack.c.b16 %v208, %v207
  %v244 = vpack.c.b16 %v210, %v209
  %v245 = vpack.c.b16 %v212, %v211
  %v246 = vpack.c.b16 %v214, %v213
  %v251 = vunpack.c.l.b16 %v79
  %v252 = vunpack.c.l.b16 %v80
  %v253 = vunpack.c.l.b16 %v81
  %v254 = vunpack.c.l.b16 %v82
  %v255 = vpack.c.b16 %v252, %v251
  %v256 = vpack.c.b16 %v254, %v253
  %vm258 = vcmask 220160
  %v260 = vsel %vm258, %v215, 0
  %v263 = vsel %vm258, %v216, 0
  %v266 = vsel %vm258, %v217, 0
  %v269 = vsel %vm258, %v218, 0
  %v272 = vsel %vm258, %v219, 0
  %v275 = vsel %vm258, %v220, 0
  %v278 = vsel %vm258, %v221, 0
  %v281 = vsel %vm258, %v222, 0
  %v284 = vsel %vm258, %v223, 0
  %v287 = vsel %vm258, %v224, 0
  %v290 = vsel %vm258, %v225, 0
  %v293 = vsel %vm258, %v226, 0
  %v296 = vsel %vm258, %v227, 0
  %v299 = vsel %vm258, %v228, 0
  %v302 = vsel %vm258, %v229, 0
  %v305 = vsel %vm258, %v230, 0
  %v308 = vsel %vm258, %v231, 0
  %v311 = vsel %vm258, %v232, 0
  %v314 = vsel %vm258, %v233, 0
  %v317 = vsel %vm258, %v234, 0
  %v320 = vsel %vm258, %v235, 0
  %v323 = vsel %vm258, %v236, 0
  %v326 = vsel %vm258, %v237, 0
  %v329 = vsel %vm258, %v238, 0
  %v332 = vsel %vm258, %v239, 0
  %v335 = vsel %vm258, %v240, 0
  %v338 = vsel %vm258, %v241, 0
  %v341 = vsel %vm258, %v242, 0
  %v344 = vsel %vm258, %v243, 0
  %v347 = vsel %vm258, %v244, 0
  %v350 = vsel %vm258, %v245, 0
  %v353 = vsel %vm258, %v246, 0
  %vm355 = vcmask 1044480
  %vm356 = vcmask 1045504
  %v357 = vsel %vm355, 4294967295, 65535
  %v358 = vsel %vm356, %v357, 0
  %v360 = vand.u32 %v256, %v358
  %362 = vmatpush.bf16.msra.mxu0 0
  %363 = vmatpush.bf16.msra.mxu0 0
  %364 = vmatpush.bf16.msra.mxu0 0
  %365 = vmatpush.bf16.msra.mxu0 0
  %366 = vmatpush.bf16.msra.mxu0 0
  %367 = vmatpush.bf16.msra.mxu0 0
  %368 = vmatpush.bf16.msra.mxu0 %v360
  %369 = vmatpush.bf16.msra.mxu0 %v255
  %370 = vmatmul.bf16.gmra.mxu0 %v260
  %v371 = vpop.f32.mrf.mxu0
  %v372 = vadd.f32 %v85, %v371
  %v373 = vpop.f32.mrf.mxu0
  %v374 = vadd.f32 %v85, %v373
  %375 = vmatmul.bf16.gmra.mxu0 %v263
  %v376 = vpop.f32.mrf.mxu0
  %v377 = vadd.f32 %v85, %v376
  %v378 = vpop.f32.mrf.mxu0
  %v379 = vadd.f32 %v85, %v378
  %380 = vmatmul.bf16.gmra.mxu0 %v266
  %v381 = vpop.f32.mrf.mxu0
  %v382 = vadd.f32 %v85, %v381
  %v383 = vpop.f32.mrf.mxu0
  %v384 = vadd.f32 %v85, %v383
  %385 = vmatmul.bf16.gmra.mxu0 %v269
  %v386 = vpop.f32.mrf.mxu0
  %v387 = vadd.f32 %v85, %v386
  %v388 = vpop.f32.mrf.mxu0
  %v389 = vadd.f32 %v85, %v388
  %390 = vmatmul.bf16.gmra.mxu0 %v272
  %v391 = vpop.f32.mrf.mxu0
  %v392 = vadd.f32 %v85, %v391
  %v393 = vpop.f32.mrf.mxu0
  %v394 = vadd.f32 %v85, %v393
  %395 = vmatmul.bf16.gmra.mxu0 %v275
  %v396 = vpop.f32.mrf.mxu0
  %v397 = vadd.f32 %v85, %v396
  %v398 = vpop.f32.mrf.mxu0
  %v399 = vadd.f32 %v85, %v398
  %400 = vmatmul.bf16.gmra.mxu0 %v278
  %v401 = vpop.f32.mrf.mxu0
  %v402 = vadd.f32 %v85, %v401
  %v403 = vpop.f32.mrf.mxu0
  %v404 = vadd.f32 %v85, %v403
  %405 = vmatmul.bf16.gmra.mxu0 %v281
  %v406 = vpop.f32.mrf.mxu0
  %v407 = vadd.f32 %v85, %v406
  %v408 = vpop.f32.mrf.mxu0
  %v409 = vadd.f32 %v85, %v408
  %410 = vmatmul.bf16.gmra.mxu0 %v284
  %v411 = vpop.f32.mrf.mxu0
  %v412 = vadd.f32 %v85, %v411
  %v413 = vpop.f32.mrf.mxu0
  %v414 = vadd.f32 %v85, %v413
  %415 = vmatmul.bf16.gmra.mxu0 %v287
  %v416 = vpop.f32.mrf.mxu0
  %v417 = vadd.f32 %v85, %v416
  %v418 = vpop.f32.mrf.mxu0
  %v419 = vadd.f32 %v85, %v418
  %420 = vmatmul.bf16.gmra.mxu0 %v290
  %v421 = vpop.f32.mrf.mxu0
  %v422 = vadd.f32 %v85, %v421
  %v423 = vpop.f32.mrf.mxu0
  %v424 = vadd.f32 %v85, %v423
  %425 = vmatmul.bf16.gmra.mxu0 %v293
  %v426 = vpop.f32.mrf.mxu0
  %v427 = vadd.f32 %v85, %v426
  %v428 = vpop.f32.mrf.mxu0
  %v429 = vadd.f32 %v85, %v428
  %430 = vmatmul.bf16.gmra.mxu0 %v296
  %v431 = vpop.f32.mrf.mxu0
  %v432 = vadd.f32 %v85, %v431
  %v433 = vpop.f32.mrf.mxu0
  %v434 = vadd.f32 %v85, %v433
  %435 = vmatmul.bf16.gmra.mxu0 %v299
  %v436 = vpop.f32.mrf.mxu0
  %v437 = vadd.f32 %v85, %v436
  %v438 = vpop.f32.mrf.mxu0
  %v439 = vadd.f32 %v85, %v438
  %440 = vmatmul.bf16.gmra.mxu0 %v302
  %v441 = vpop.f32.mrf.mxu0
  %v442 = vadd.f32 %v85, %v441
  %v443 = vpop.f32.mrf.mxu0
  %v444 = vadd.f32 %v85, %v443
  %445 = vmatmul.bf16.gmra.mxu0 %v305
  %v446 = vpop.f32.mrf.mxu0
  %v447 = vadd.f32 %v85, %v446
  %v448 = vpop.f32.mrf.mxu0
  %v449 = vadd.f32 %v85, %v448
  %450 = vmatmul.bf16.gmra.mxu0 %v308
  %v451 = vpop.f32.mrf.mxu0
  %v452 = vadd.f32 %v85, %v451
  %v453 = vpop.f32.mrf.mxu0
  %v454 = vadd.f32 %v85, %v453
  %455 = vmatmul.bf16.gmra.mxu0 %v311
  %v456 = vpop.f32.mrf.mxu0
  %v457 = vadd.f32 %v85, %v456
  %v458 = vpop.f32.mrf.mxu0
  %v459 = vadd.f32 %v85, %v458
  %460 = vmatmul.bf16.gmra.mxu0 %v314
  %v461 = vpop.f32.mrf.mxu0
  %v462 = vadd.f32 %v85, %v461
  %v463 = vpop.f32.mrf.mxu0
  %v464 = vadd.f32 %v85, %v463
  %465 = vmatmul.bf16.gmra.mxu0 %v317
  %v466 = vpop.f32.mrf.mxu0
  %v467 = vadd.f32 %v85, %v466
  %v468 = vpop.f32.mrf.mxu0
  %v469 = vadd.f32 %v85, %v468
  %470 = vmatmul.bf16.gmra.mxu0 %v320
  %v471 = vpop.f32.mrf.mxu0
  %v472 = vadd.f32 %v85, %v471
  %v473 = vpop.f32.mrf.mxu0
  %v474 = vadd.f32 %v85, %v473
  %475 = vmatmul.bf16.gmra.mxu0 %v323
  %v476 = vpop.f32.mrf.mxu0
  %v477 = vadd.f32 %v85, %v476
  %v478 = vpop.f32.mrf.mxu0
  %v479 = vadd.f32 %v85, %v478
  %480 = vmatmul.bf16.gmra.mxu0 %v326
  %v481 = vpop.f32.mrf.mxu0
  %v482 = vadd.f32 %v85, %v481
  %v483 = vpop.f32.mrf.mxu0
  %v484 = vadd.f32 %v85, %v483
  %485 = vmatmul.bf16.gmra.mxu0 %v329
  %v486 = vpop.f32.mrf.mxu0
  %v487 = vadd.f32 %v85, %v486
  %v488 = vpop.f32.mrf.mxu0
  %v489 = vadd.f32 %v85, %v488
  %490 = vmatmul.bf16.gmra.mxu0 %v332
  %v491 = vpop.f32.mrf.mxu0
  %v492 = vadd.f32 %v85, %v491
  %v493 = vpop.f32.mrf.mxu0
  %v494 = vadd.f32 %v85, %v493
  %495 = vmatmul.bf16.gmra.mxu0 %v335
  %v496 = vpop.f32.mrf.mxu0
  %v497 = vadd.f32 %v85, %v496
  %v498 = vpop.f32.mrf.mxu0
  %v499 = vadd.f32 %v85, %v498
  %500 = vmatmul.bf16.gmra.mxu0 %v338
  %v501 = vpop.f32.mrf.mxu0
  %v502 = vadd.f32 %v85, %v501
  %v503 = vpop.f32.mrf.mxu0
  %v504 = vadd.f32 %v85, %v503
  %505 = vmatmul.bf16.gmra.mxu0 %v341
  %v506 = vpop.f32.mrf.mxu0
  %v507 = vadd.f32 %v85, %v506
  %v508 = vpop.f32.mrf.mxu0
  %v509 = vadd.f32 %v85, %v508
  %510 = vmatmul.bf16.gmra.mxu0 %v344
  %v511 = vpop.f32.mrf.mxu0
  %v512 = vadd.f32 %v85, %v511
  %v513 = vpop.f32.mrf.mxu0
  %v514 = vadd.f32 %v85, %v513
  %515 = vmatmul.bf16.gmra.mxu0 %v347
  %v516 = vpop.f32.mrf.mxu0
  %v517 = vadd.f32 %v85, %v516
  %v518 = vpop.f32.mrf.mxu0
  %v519 = vadd.f32 %v85, %v518
  %520 = vmatmul.bf16.gmra.mxu0 %v350
  %v521 = vpop.f32.mrf.mxu0
  %v522 = vadd.f32 %v85, %v521
  %v523 = vpop.f32.mrf.mxu0
  %v524 = vadd.f32 %v85, %v523
  %525 = vmatmul.bf16.gmra.mxu0 %v353
  %v526 = vpop.f32.mrf.mxu0
  %v527 = vadd.f32 %v85, %v526
  %v528 = vpop.f32.mrf.mxu0
  %v529 = vadd.f32 %v85, %v528
  %530 = vdwg.mxu0
  %v531 = vmax.f32 %v372, 0.0
  %v532 = vmax.f32 %v374, 0.0
  %v533 = vmax.f32 %v377, 0.0
  %v534 = vmax.f32 %v379, 0.0
  %v535 = vmax.f32 %v382, 0.0
  %v536 = vmax.f32 %v384, 0.0
  %v537 = vmax.f32 %v387, 0.0
  %v538 = vmax.f32 %v389, 0.0
  %v539 = vmax.f32 %v392, 0.0
  %v540 = vmax.f32 %v394, 0.0
  %v541 = vmax.f32 %v397, 0.0
  %v542 = vmax.f32 %v399, 0.0
  %v543 = vmax.f32 %v402, 0.0
  %v544 = vmax.f32 %v404, 0.0
  %v545 = vmax.f32 %v407, 0.0
  %v546 = vmax.f32 %v409, 0.0
  %v547 = vmax.f32 %v412, 0.0
  %v548 = vmax.f32 %v414, 0.0
  %v549 = vmax.f32 %v417, 0.0
  %v550 = vmax.f32 %v419, 0.0
  %v551 = vmax.f32 %v422, 0.0
  %v552 = vmax.f32 %v424, 0.0
  %v553 = vmax.f32 %v427, 0.0
  %v554 = vmax.f32 %v429, 0.0
  %v555 = vmax.f32 %v432, 0.0
  %v556 = vmax.f32 %v434, 0.0
  %v557 = vmax.f32 %v437, 0.0
  %v558 = vmax.f32 %v439, 0.0
  %v559 = vmax.f32 %v442, 0.0
  %v560 = vmax.f32 %v444, 0.0
  %v561 = vmax.f32 %v447, 0.0
  %v562 = vmax.f32 %v449, 0.0
  %v563 = vmax.f32 %v452, 0.0
  %v564 = vmax.f32 %v454, 0.0
  %v565 = vmax.f32 %v457, 0.0
  %v566 = vmax.f32 %v459, 0.0
  %v567 = vmax.f32 %v462, 0.0
  %v568 = vmax.f32 %v464, 0.0
  %v569 = vmax.f32 %v467, 0.0
  %v570 = vmax.f32 %v469, 0.0
  %v571 = vmax.f32 %v472, 0.0
  %v572 = vmax.f32 %v474, 0.0
  %v573 = vmax.f32 %v477, 0.0
  %v574 = vmax.f32 %v479, 0.0
  %v575 = vmax.f32 %v482, 0.0
  %v576 = vmax.f32 %v484, 0.0
  %v577 = vmax.f32 %v487, 0.0
  %v578 = vmax.f32 %v489, 0.0
  %v579 = vmax.f32 %v492, 0.0
  %v580 = vmax.f32 %v494, 0.0
  %v581 = vmax.f32 %v497, 0.0
  %v582 = vmax.f32 %v499, 0.0
  %v583 = vmax.f32 %v502, 0.0
  %v584 = vmax.f32 %v504, 0.0
  %v585 = vmax.f32 %v507, 0.0
  %v586 = vmax.f32 %v509, 0.0
  %v587 = vmax.f32 %v512, 0.0
  %v588 = vmax.f32 %v514, 0.0
  %v589 = vmax.f32 %v517, 0.0
  %v590 = vmax.f32 %v519, 0.0
  %v591 = vmax.f32 %v522, 0.0
  %v592 = vmax.f32 %v524, 0.0
  %v593 = vmax.f32 %v527, 0.0
  %v594 = vmax.f32 %v529, 0.0
  %v595 = vpack.c.bf16 %v531, %v531
  %v596 = vpack.c.bf16 %v532, %v532
  %v597 = vpack.c.bf16 %v533, %v533
  %v598 = vpack.c.bf16 %v534, %v534
  %v599 = vpack.c.bf16 %v535, %v535
  %v600 = vpack.c.bf16 %v536, %v536
  %v601 = vpack.c.bf16 %v537, %v537
  %v602 = vpack.c.bf16 %v538, %v538
  %v603 = vpack.c.bf16 %v539, %v539
  %v604 = vpack.c.bf16 %v540, %v540
  %v605 = vpack.c.bf16 %v541, %v541
  %v606 = vpack.c.bf16 %v542, %v542
  %v607 = vpack.c.bf16 %v543, %v543
  %v608 = vpack.c.bf16 %v544, %v544
  %v609 = vpack.c.bf16 %v545, %v545
  %v610 = vpack.c.bf16 %v546, %v546
  %v611 = vpack.c.bf16 %v547, %v547
  %v612 = vpack.c.bf16 %v548, %v548
  %v613 = vpack.c.bf16 %v549, %v549
  %v614 = vpack.c.bf16 %v550, %v550
  %v615 = vpack.c.bf16 %v551, %v551
  %v616 = vpack.c.bf16 %v552, %v552
  %v617 = vpack.c.bf16 %v553, %v553
  %v618 = vpack.c.bf16 %v554, %v554
  %v619 = vpack.c.bf16 %v555, %v555
  %v620 = vpack.c.bf16 %v556, %v556
  %v621 = vpack.c.bf16 %v557, %v557
  %v622 = vpack.c.bf16 %v558, %v558
  %v623 = vpack.c.bf16 %v559, %v559
  %v624 = vpack.c.bf16 %v560, %v560
  %v625 = vpack.c.bf16 %v561, %v561
  %v626 = vpack.c.bf16 %v562, %v562
  %v627 = vpack.c.bf16 %v563, %v563
  %v628 = vpack.c.bf16 %v564, %v564
  %v629 = vpack.c.bf16 %v565, %v565
  %v630 = vpack.c.bf16 %v566, %v566
  %v631 = vpack.c.bf16 %v567, %v567
  %v632 = vpack.c.bf16 %v568, %v568
  %v633 = vpack.c.bf16 %v569, %v569
  %v634 = vpack.c.bf16 %v570, %v570
  %v635 = vpack.c.bf16 %v571, %v571
  %v636 = vpack.c.bf16 %v572, %v572
  %v637 = vpack.c.bf16 %v573, %v573
  %v638 = vpack.c.bf16 %v574, %v574
  %v639 = vpack.c.bf16 %v575, %v575
  %v640 = vpack.c.bf16 %v576, %v576
  %v641 = vpack.c.bf16 %v577, %v577
  %v642 = vpack.c.bf16 %v578, %v578
  %v643 = vpack.c.bf16 %v579, %v579
  %v644 = vpack.c.bf16 %v580, %v580
  %v645 = vpack.c.bf16 %v581, %v581
  %v646 = vpack.c.bf16 %v582, %v582
  %v647 = vpack.c.bf16 %v583, %v583
  %v648 = vpack.c.bf16 %v584, %v584
  %v649 = vpack.c.bf16 %v585, %v585
  %v650 = vpack.c.bf16 %v586, %v586
  %v651 = vpack.c.bf16 %v587, %v587
  %v652 = vpack.c.bf16 %v588, %v588
  %v653 = vpack.c.bf16 %v589, %v589
  %v654 = vpack.c.bf16 %v590, %v590
  %v655 = vpack.c.bf16 %v591, %v591
  %v656 = vpack.c.bf16 %v592, %v592
  %v657 = vpack.c.bf16 %v593, %v593
  %v658 = vpack.c.bf16 %v594, %v594
  %vm659 = vcmask 60416
  %660 = vst.msk [vmem:[%s3] sm:$0xf] %vm659, %v595
  %661 = vst.msk [vmem:[%s3 + $0x4] sm:$0xf] %vm659, %v596
  %662 = vst.msk [vmem:[%s3 + $0x8] sm:$0xf] %vm659, %v597
  %663 = vst.msk [vmem:[%s3 + $0xc] sm:$0xf] %vm659, %v598
  %664 = vst.msk [vmem:[%s3 + $0x10] sm:$0xf] %vm659, %v599
  %665 = vst.msk [vmem:[%s3 + $0x14] sm:$0xf] %vm659, %v600
  %666 = vst.msk [vmem:[%s3 + $0x18] sm:$0xf] %vm659, %v601
  %667 = vst.msk [vmem:[%s3 + $0x1c] sm:$0xf] %vm659, %v602
  %668 = vst.msk [vmem:[%s3 + $0x20] sm:$0xf] %vm659, %v603
  %669 = vst.msk [vmem:[%s3 + $0x24] sm:$0xf] %vm659, %v604
  %670 = vst.msk [vmem:[%s3 + $0x28] sm:$0xf] %vm659, %v605
  %671 = vst.msk [vmem:[%s3 + $0x2c] sm:$0xf] %vm659, %v606
  %672 = vst.msk [vmem:[%s3 + $0x30] sm:$0xf] %vm659, %v607
  %673 = vst.msk [vmem:[%s3 + $0x34] sm:$0xf] %vm659, %v608
  %674 = vst.msk [vmem:[%s3 + $0x38] sm:$0xf] %vm659, %v609
  %675 = vst.msk [vmem:[%s3 + $0x3c] sm:$0xf] %vm659, %v610
  %676 = vst.msk [vmem:[%s3 + $0x40] sm:$0xf] %vm659, %v611
  %677 = vst.msk [vmem:[%s3 + $0x44] sm:$0xf] %vm659, %v612
  %678 = vst.msk [vmem:[%s3 + $0x48] sm:$0xf] %vm659, %v613
  %679 = vst.msk [vmem:[%s3 + $0x4c] sm:$0xf] %vm659, %v614
  %680 = vst.msk [vmem:[%s3 + $0x50] sm:$0xf] %vm659, %v615
  %681 = vst.msk [vmem:[%s3 + $0x54] sm:$0xf] %vm659, %v616
  %682 = vst.msk [vmem:[%s3 + $0x58] sm:$0xf] %vm659, %v617
  %683 = vst.msk [vmem:[%s3 + $0x5c] sm:$0xf] %vm659, %v618
  %684 = vst.msk [vmem:[%s3 + $0x60] sm:$0xf] %vm659, %v619
  %685 = vst.msk [vmem:[%s3 + $0x64] sm:$0xf] %vm659, %v620
  %686 = vst.msk [vmem:[%s3 + $0x68] sm:$0xf] %vm659, %v621
  %687 = vst.msk [vmem:[%s3 + $0x6c] sm:$0xf] %vm659, %v622
  %688 = vst.msk [vmem:[%s3 + $0x70] sm:$0xf] %vm659, %v623
  %689 = vst.msk [vmem:[%s3 + $0x74] sm:$0xf] %vm659, %v624
  %690 = vst.msk [vmem:[%s3 + $0x78] sm:$0xf] %vm659, %v625
  %691 = vst.msk [vmem:[%s3 + $0x7c] sm:$0xf] %vm659, %v626
  %692 = vst.msk [vmem:[%s3 + $0x80] sm:$0xf] %vm659, %v627
  %693 = vst.msk [vmem:[%s3 + $0x84] sm:$0xf] %vm659, %v628
  %694 = vst.msk [vmem:[%s3 + $0x88] sm:$0xf] %vm659, %v629
  %695 = vst.msk [vmem:[%s3 + $0x8c] sm:$0xf] %vm659, %v630
  %696 = vst.msk [vmem:[%s3 + $0x90] sm:$0xf] %vm659, %v631
  %697 = vst.msk [vmem:[%s3 + $0x94] sm:$0xf] %vm659, %v632
  %698 = vst.msk [vmem:[%s3 + $0x98] sm:$0xf] %vm659, %v633
  %699 = vst.msk [vmem:[%s3 + $0x9c] sm:$0xf] %vm659, %v634
  %700 = vst.msk [vmem:[%s3 + $0xa0] sm:$0xf] %vm659, %v635
  %701 = vst.msk [vmem:[%s3 + $0xa4] sm:$0xf] %vm659, %v636
  %702 = vst.msk [vmem:[%s3 + $0xa8] sm:$0xf] %vm659, %v637
  %703 = vst.msk [vmem:[%s3 + $0xac] sm:$0xf] %vm659, %v638
  %704 = vst.msk [vmem:[%s3 + $0xb0] sm:$0xf] %vm659, %v639
  %705 = vst.msk [vmem:[%s3 + $0xb4] sm:$0xf] %vm659, %v640
  %706 = vst.msk [vmem:[%s3 + $0xb8] sm:$0xf] %vm659, %v641
  %707 = vst.msk [vmem:[%s3 + $0xbc] sm:$0xf] %vm659, %v642
  %708 = vst.msk [vmem:[%s3 + $0xc0] sm:$0xf] %vm659, %v643
  %709 = vst.msk [vmem:[%s3 + $0xc4] sm:$0xf] %vm659, %v644
  %710 = vst.msk [vmem:[%s3 + $0xc8] sm:$0xf] %vm659, %v645
  %711 = vst.msk [vmem:[%s3 + $0xcc] sm:$0xf] %vm659, %v646
  %712 = vst.msk [vmem:[%s3 + $0xd0] sm:$0xf] %vm659, %v647
  %713 = vst.msk [vmem:[%s3 + $0xd4] sm:$0xf] %vm659, %v648
  %714 = vst.msk [vmem:[%s3 + $0xd8] sm:$0xf] %vm659, %v649
  %715 = vst.msk [vmem:[%s3 + $0xdc] sm:$0xf] %vm659, %v650
  %716 = vst.msk [vmem:[%s3 + $0xe0] sm:$0xf] %vm659, %v651
  %717 = vst.msk [vmem:[%s3 + $0xe4] sm:$0xf] %vm659, %v652
  %718 = vst.msk [vmem:[%s3 + $0xe8] sm:$0xf] %vm659, %v653
  %719 = vst.msk [vmem:[%s3 + $0xec] sm:$0xf] %vm659, %v654
  %720 = vst.msk [vmem:[%s3 + $0xf0] sm:$0xf] %vm659, %v655
  %721 = vst.msk [vmem:[%s3 + $0xf4] sm:$0xf] %vm659, %v656
  %722 = vst.msk [vmem:[%s3 + $0xf8] sm:$0xf] %vm659, %v657
  %723 = vst.msk [vmem:[%s3 + $0xfc] sm:$0xf] %vm659, %v658
  // Predicated region
  $region14: #{mobilenet_forward.15} parent=0 // pred_check
    _
  $region15: #{mobilenet_forward.15} parent=0 // pred_check_branch
    %725 = sbr.rel (0) target = $region17
  $region16: #{mobilenet_forward.15} parent=0 // pred_region
    _
  $region17: #{mobilenet_forward.15} parent=0 // pred_fallthru
    _
  // Predicated region
  $region18: #{mobilenet_forward.15} parent=0 // pred_check
    _
  $region19: #{mobilenet_forward.15} parent=0 // pred_check_branch
    %727 = sbr.rel (0) target = $region21
  $region20: #{mobilenet_forward.15} parent=0 // pred_region
    _
  $region21: #{mobilenet_forward.15} parent=0 // pred_fallthru
    _

// kernel: mobilenet_forward.16
$region0: #{mobilenet_forward.16}
  #allocation0 [shape = 'u32[]', space=smem, size = 0x4, offset = 0x4, fixed_abs, tag = 'smem constant byte address 0x4 - core index']
  #allocation1 [shape = 'u32[72,128]{1,0:T(1,128)}', space=vmem, size = 0x9000, scoped, tag = 'internal scratch']
  %s0 = inlined_call_operand.vmem [shape: bf16[2,1,326,8], index: 0, kind: input, shape index: {}]
  %s1 = inlined_call_operand.vmem [shape: f32[9,1,8], index: 1, kind: input, shape index: {}]
  %s2 = inlined_call_operand.vmem [shape: f32[1,8], index: 2, kind: input, shape index: {}]
  %s3 = inlined_call_operand.vmem [shape: bf16[8,16], index: 3, kind: input, shape index: {}]
  %s4 = inlined_call_operand.vmem [shape: f32[1,16], index: 4, kind: input, shape index: {}]
  %s5 = inlined_call_operand.vmem [shape: bf16[2,288,16], index: 5, kind: output, shape index: {}]
  %s6 = sld [smem:[#allocation0]]
  $region53: #{mobilenet_forward.16} parent=0
    _
  %s8 = ssub.s32 1, %s6
  %s9 = scalar_select 0, %s8, %s6
  loop: start=0, step=1, limit=4
  $region2: #{mobilenet_forward.16} parent=0 // loop_pre_header
    _
  $region3: #{mobilenet_forward.16} parent=0 // loop_header
    %s11 = sphi 0, %s15
    %p12 = scmp.ge.s32.totalorder %s11, 4
    %s21 = sphi 0, %s23
    %s24 = sphi 0, %s21
    %s25 = sphi 0, %s24
    %s41 = sphi 0, %s25
    %s45 = sphi 0, %s45
    %s47 = sphi 0, %s45
    %s48 = sphi 0, %s47
    %s62 = sphi 0, %s48
    %s66 = sphi 0, %s66
    %s68 = sphi 0, %s66
    %s69 = sphi 0, %s68
    %s83 = sphi 0, %s69
    %s87 = sphi 0, %s87
    %s89 = sphi 0, %s87
    %s90 = sphi 0, %s89
    %s104 = sphi 0, %s90
    %s108 = sphi 0, %s108
    %s110 = sphi 0, %s108
    %s111 = sphi 0, %s110
    %s125 = sphi 0, %s111
    %s131 = sphi 0, %s133
    %s134 = sphi 0, %s131
    %s135 = sphi 0, %s134
    %s151 = sphi 0, %s135
  $region4: #{mobilenet_forward.16} parent=0 // loop_header_branch
    %14 = sbr.rel (%p12) target = $region8
  $region5: #{mobilenet_forward.16} parent=0 // loop_body
    %s16 = ssub.s32 %s11, 1
    %s17 = ssub.s32 %s11, 2
    %s18 = sadd.s32 %s11, 1
    %s19 = ssub.s32 %s11, %s18
    %p20 = scmp.eq.s32.totalorder %s19, 0
    %s22 = sadd.s32 %s21, 1
    %s23 = scalar_select %p20, %s21, %s22
    %p26 = pneg %p20
    %p27 = scmp.eq.s32.totalorder %s11, 1
    %p28 = por %p26, %p27
    %p29 = scmp.ne.s32.totalorder %s21, %s24
    %p30 = scmp.eq.s32.totalorder %s11, 0
    %p31 = por %p29, %p30
    %p32 = scmp.ne.s32.totalorder %s21, %s24
    %p33 = scmp.eq.s32.totalorder %s16, 1
    %p34 = por %p32, %p33
    %p35 = scmp.ne.s32.totalorder %s24, %s25
    %p36 = scmp.eq.s32.totalorder %s16, 0
    %p37 = por %p35, %p36
    %p38 = scmp.ne.s32.totalorder %s24, %s25
    %p39 = scmp.eq.s32.totalorder %s17, 1
    %p40 = por %p38, %p39
    %p42 = scmp.ne.s32.totalorder %s25, %s41
    %p43 = scmp.eq.s32.totalorder %s17, 0
    %p44 = por %p42, %p43
    %s46 = sadd.s32 %s45, 1
    %p49 = scmp.eq.s32.totalorder %s11, 1
    %p50 = scmp.ne.s32.totalorder %s45, %s47
    %p51 = scmp.eq.s32.totalorder %s11, 0
    %p52 = por %p50, %p51
    %p53 = scmp.ne.s32.totalorder %s45, %s47
    %p54 = scmp.eq.s32.totalorder %s16, 1
    %p55 = por %p53, %p54
    %p56 = scmp.ne.s32.totalorder %s47, %s48
    %p57 = scmp.eq.s32.totalorder %s16, 0
    %p58 = por %p56, %p57
    %p59 = scmp.ne.s32.totalorder %s47, %s48
    %p60 = scmp.eq.s32.totalorder %s17, 1
    %p61 = por %p59, %p60
    %p63 = scmp.ne.s32.totalorder %s48, %s62
    %p64 = scmp.eq.s32.totalorder %s17, 0
    %p65 = por %p63, %p64
    %s67 = sadd.s32 %s66, 1
    %p70 = scmp.eq.s32.totalorder %s11, 1
    %p71 = scmp.ne.s32.totalorder %s66, %s68
    %p72 = scmp.eq.s32.totalorder %s11, 0
    %p73 = por %p71, %p72
    %p74 = scmp.ne.s32.totalorder %s66, %s68
    %p75 = scmp.eq.s32.totalorder %s16, 1
    %p76 = por %p74, %p75
    %p77 = scmp.ne.s32.totalorder %s68, %s69
    %p78 = scmp.eq.s32.totalorder %s16, 0
    %p79 = por %p77, %p78
    %p80 = scmp.ne.s32.totalorder %s68, %s69
    %p81 = scmp.eq.s32.totalorder %s17, 1
    %p82 = por %p80, %p81
    %p84 = scmp.ne.s32.totalorder %s69, %s83
    %p85 = scmp.eq.s32.totalorder %s17, 0
    %p86 = por %p84, %p85
    %s88 = sadd.s32 %s87, 1
    %p91 = scmp.eq.s32.totalorder %s11, 1
    %p92 = scmp.ne.s32.totalorder %s87, %s89
    %p93 = scmp.eq.s32.totalorder %s11, 0
    %p94 = por %p92, %p93
    %p95 = scmp.ne.s32.totalorder %s87, %s89
    %p96 = scmp.eq.s32.totalorder %s16, 1
    %p97 = por %p95, %p96
    %p98 = scmp.ne.s32.totalorder %s89, %s90
    %p99 = scmp.eq.s32.totalorder %s16, 0
    %p100 = por %p98, %p99
    %p101 = scmp.ne.s32.totalorder %s89, %s90
    %p102 = scmp.eq.s32.totalorder %s17, 1
    %p103 = por %p101, %p102
    %p105 = scmp.ne.s32.totalorder %s90, %s104
    %p106 = scmp.eq.s32.totalorder %s17, 0
    %p107 = por %p105, %p106
    %s109 = sadd.s32 %s108, 1
    %p112 = scmp.eq.s32.totalorder %s11, 1
    %p113 = scmp.ne.s32.totalorder %s108, %s110
    %p114 = scmp.eq.s32.totalorder %s11, 0
    %p115 = por %p113, %p114
    %p116 = scmp.ne.s32.totalorder %s108, %s110
    %p117 = scmp.eq.s32.totalorder %s16, 1
    %p118 = por %p116, %p117
    %p119 = scmp.ne.s32.totalorder %s110, %s111
    %p120 = scmp.eq.s32.totalorder %s16, 0
    %p121 = por %p119, %p120
    %p122 = scmp.ne.s32.totalorder %s110, %s111
    %p123 = scmp.eq.s32.totalorder %s17, 1
    %p124 = por %p122, %p123
    %p126 = scmp.ne.s32.totalorder %s111, %s125
    %p127 = scmp.eq.s32.totalorder %s17, 0
    %p128 = por %p126, %p127
    %s129 = ssub.s32 %s11, %s18
    %p130 = scmp.eq.s32.totalorder %s129, 0
    %s132 = sadd.s32 %s131, 1
    %s133 = scalar_select %p130, %s131, %s132
    %p136 = pneg %p130
    %p137 = scmp.eq.s32.totalorder %s11, 1
    %p138 = por %p136, %p137
    %p139 = scmp.ne.s32.totalorder %s131, %s134
    %p140 = scmp.eq.s32.totalorder %s11, 0
    %p141 = por %p139, %p140
    %p142 = scmp.ne.s32.totalorder %s131, %s134
    %p143 = scmp.eq.s32.totalorder %s16, 1
    %p144 = por %p142, %p143
    %p145 = scmp.ne.s32.totalorder %s134, %s135
    %p146 = scmp.eq.s32.totalorder %s16, 0
    %p147 = por %p145, %p146
    %p148 = scmp.ne.s32.totalorder %s134, %s135
    %p149 = scmp.eq.s32.totalorder %s17, 1
    %p150 = por %p148, %p149
    %p152 = scmp.ne.s32.totalorder %s135, %s151
    %p153 = scmp.eq.s32.totalorder %s17, 0
    %p154 = por %p152, %p153
    %p155 = scmp.le.s32.totalorder 1, %s11
    %p156 = scmp.lt.s32.totalorder %s11, 3
    %p157 = pnand %p155, %p156
    %p158 = pneg %p157
    // Predicated region
    $region9: #{mobilenet_forward.16} parent=5 // pred_check
      _
    $region10: #{mobilenet_forward.16} parent=5 // pred_check_branch
      %160 = sbr.rel (%p157) target = $region12
    $region11: #{mobilenet_forward.16} parent=5 // pred_region
      %s161 = ssub.s32 %s11, 1
      // Predicated region
      $region13: #{mobilenet_forward.16} parent=11 // pred_check
        %p162 = pneg %p58
      $region14: #{mobilenet_forward.16} parent=11 // pred_check_branch
        %164 = sbr.rel (%p162) target = $region16
      $region15: #{mobilenet_forward.16} parent=11 // pred_region
        _
      $region16: #{mobilenet_forward.16} parent=11 // pred_fallthru
        _
      // Predicated region
      $region17: #{mobilenet_forward.16} parent=11 // pred_check
        %p165 = pneg %p79
      $region18: #{mobilenet_forward.16} parent=11 // pred_check_branch
        %167 = sbr.rel (%p165) target = $region20
      $region19: #{mobilenet_forward.16} parent=11 // pred_region
        _
      $region20: #{mobilenet_forward.16} parent=11 // pred_fallthru
        _
      // Predicated region
      $region21: #{mobilenet_forward.16} parent=11 // pred_check
        %p168 = pneg %p100
      $region22: #{mobilenet_forward.16} parent=11 // pred_check_branch
        %170 = sbr.rel (%p168) target = $region24
      $region23: #{mobilenet_forward.16} parent=11 // pred_region
        _
      $region24: #{mobilenet_forward.16} parent=11 // pred_fallthru
        _
      // Predicated region
      $region25: #{mobilenet_forward.16} parent=11 // pred_check
        %p171 = pneg %p121
      $region26: #{mobilenet_forward.16} parent=11 // pred_check_branch
        %173 = sbr.rel (%p171) target = $region28
      $region27: #{mobilenet_forward.16} parent=11 // pred_region
        _
      $region28: #{mobilenet_forward.16} parent=11 // pred_fallthru
        _
    $region12: #{mobilenet_forward.16} parent=5 // pred_fallthru
      _
    %p174 = scmp.lt.s32.totalorder %s11, 2
    // Predicated region
    $region29: #{mobilenet_forward.16} parent=5 // pred_check
      %p175 = pneg %p174
    $region30: #{mobilenet_forward.16} parent=5 // pred_check_branch
      %177 = sbr.rel (%p175) target = $region32
    $region31: #{mobilenet_forward.16} parent=5 // pred_region
      // Predicated region
      $region33: #{mobilenet_forward.16} parent=31 // pred_check
        %p178 = pneg %p31
      $region34: #{mobilenet_forward.16} parent=31 // pred_check_branch
        %180 = sbr.rel (%p178) target = $region36
      $region35: #{mobilenet_forward.16} parent=31 // pred_region
        %p181 = scmp.lt.s32.totalorder %s11, 1
        %s182 = scalar_select %p181, %s11, 1
        %s183 = smul.addr %s182, 41
        %s184 = smul.addr %s183, 4
        %s185 = scalar_lea.vmem %s0, %s184
      $region36: #{mobilenet_forward.16} parent=31 // pred_fallthru
        _
    $region32: #{mobilenet_forward.16} parent=5 // pred_fallthru
      _
    %p186 = scmp.le.s32.totalorder 1, %s11
    %p187 = scmp.lt.s32.totalorder %s11, 3
    %p188 = pnand %p186, %p187
    %p189 = pneg %p188
    // Predicated region
    $region37: #{mobilenet_forward.16} parent=5 // pred_check
      _
    $region38: #{mobilenet_forward.16} parent=5 // pred_check_branch
      %191 = sbr.rel (%p188) target = $region40
    $region39: #{mobilenet_forward.16} parent=5 // pred_region
      %s192 = ssub.s32 %s11, 1
      %p193 = scmp.lt.s32.totalorder %s16, 1
      %s194 = scalar_select %p193, %s16, 1
      %s195 = smul.addr %s194, 41
      %s196 = smul.addr %s195, 4
      %s197 = scalar_lea.vmem %s0, %s196
      %p198 = pneg %p37
      %p199 = pneg %p34
      %p200 = pneg %p58
      %p201 = pneg %p55
      %p202 = pneg %p79
      %p203 = pneg %p76
      %p204 = pneg %p100
      %p205 = pneg %p97
      %p206 = pneg %p121
      %p207 = pneg %p118
      %p208 = pneg %p147
      %p209 = pneg %p144
      %p210 = scmp.lt.s32.totalorder %s16, 1
      %s211 = scalar_select %p210, %s16, 1
      %s212 = smul.addr %s211, 36
      %s213 = smul.addr %s212, 4
      %s214 = scalar_lea.vmem %s5, %s213
      %p215 = scmp.lt.s32.totalorder %s16, 1
      %s216 = scalar_select %p215, %s16, 1
      %s217 = smul.addr %s216, 41
      %s218 = smul.addr %s217, 4
      %s219 = scalar_lea.vmem %s0, %s218
      %p220 = scmp.lt.s32.totalorder %s16, 1
      %s221 = scalar_select %p220, %s16, 1
      %s222 = smul.addr %s221, 36
      %s223 = smul.addr %s222, 4
      %s224 = scalar_lea.vmem %s5, %s223
      %v226 = vld [vmem:[%s1] sm:$0x1]
      %v227 = vld [vmem:[%s1 + $0x1] sm:$0x1]
      %v228 = vld [vmem:[%s1 + $0x2] sm:$0x1]
      %v229 = vld [vmem:[%s1 + $0x3] sm:$0x1]
      %v230 = vld [vmem:[%s1 + $0x4] sm:$0x1]
      %v231 = vld [vmem:[%s1 + $0x5] sm:$0x1]
      %v232 = vld [vmem:[%s1 + $0x6] sm:$0x1]
      %v233 = vld [vmem:[%s1 + $0x7] sm:$0x1]
      %v234 = vld [vmem:[%s1 + $0x8] sm:$0x1]
      %v235 = vld [vmem:[%s2] sm:$0x1]
      %v237 = vperm.slane %v235, 0
      %v239 = vld [vmem:[%s219] sm:$0xf]
      %v240 = vld [vmem:[%s219 + $0x4] sm:$0xf]
      %v241 = vld [vmem:[%s219 + $0x8] sm:$0xf]
      %v242 = vld [vmem:[%s219 + $0xc] sm:$0xf]
      %v243 = vld [vmem:[%s219 + $0x10] sm:$0xf]
      %v244 = vld [vmem:[%s219 + $0x14] sm:$0xf]
      %v245 = vld [vmem:[%s219 + $0x18] sm:$0xf]
      %v246 = vld [vmem:[%s219 + $0x1c] sm:$0xf]
      %v247 = vld [vmem:[%s219 + $0x20] sm:$0xf]
      %v248 = vld [vmem:[%s219 + $0x24] sm:$0xf]
      %v249 = vld [vmem:[%s219 + $0x28] sm:$0xf]
      %v250 = vld [vmem:[%s219 + $0x2c] sm:$0xf]
      %v251 = vld [vmem:[%s219 + $0x30] sm:$0xf]
      %v252 = vld [vmem:[%s219 + $0x34] sm:$0xf]
      %v253 = vld [vmem:[%s219 + $0x38] sm:$0xf]
      %v254 = vld [vmem:[%s219 + $0x3c] sm:$0xf]
      %v255 = vld [vmem:[%s219 + $0x40] sm:$0xf]
      %v256 = vld [vmem:[%s219 + $0x44] sm:$0xf]
      %v257 = vld [vmem:[%s219 + $0x48] sm:$0xf]
      %v258 = vld [vmem:[%s219 + $0x4c] sm:$0xf]
      %v259 = vld [vmem:[%s219 + $0x50] sm:$0xf]
      %v260 = vld [vmem:[%s219 + $0x54] sm:$0xf]
      %v261 = vld [vmem:[%s219 + $0x58] sm:$0xf]
      %v262 = vld [vmem:[%s219 + $0x5c] sm:$0xf]
      %v263 = vld [vmem:[%s219 + $0x60] sm:$0xf]
      %v264 = vld [vmem:[%s219 + $0x64] sm:$0xf]
      %v265 = vld [vmem:[%s219 + $0x68] sm:$0xf]
      %v266 = vld [vmem:[%s219 + $0x6c] sm:$0xf]
      %v267 = vld [vmem:[%s219 + $0x70] sm:$0xf]
      %v268 = vld [vmem:[%s219 + $0x74] sm:$0xf]
      %v269 = vld [vmem:[%s219 + $0x78] sm:$0xf]
      %v270 = vld [vmem:[%s219 + $0x7c] sm:$0xf]
      %v271 = vld [vmem:[%s219 + $0x80] sm:$0xf]
      %v272 = vld [vmem:[%s219 + $0x84] sm:$0xf]
      %v273 = vld [vmem:[%s219 + $0x88] sm:$0xf]
      %v274 = vld [vmem:[%s219 + $0x8c] sm:$0xf]
      %v275 = vunpack.c.l.bf16 %v239
      %v276 = vunpack.c.l.bf16 %v240
      %v277 = vunpack.c.l.bf16 %v241
      %v278 = vunpack.c.l.bf16 %v242
      %v279 = vunpack.c.l.bf16 %v243
      %v280 = vunpack.c.l.bf16 %v244
      %v281 = vunpack.c.l.bf16 %v245
      %v282 = vunpack.c.l.bf16 %v246
      %v283 = vunpack.c.l.bf16 %v247
      %v284 = vunpack.c.l.bf16 %v248
      %v285 = vunpack.c.l.bf16 %v249
      %v286 = vunpack.c.l.bf16 %v250
      %v287 = vunpack.c.l.bf16 %v251
      %v288 = vunpack.c.l.bf16 %v252
      %v289 = vunpack.c.l.bf16 %v253
      %v290 = vunpack.c.l.bf16 %v254
      %v291 = vunpack.c.l.bf16 %v255
      %v292 = vunpack.c.l.bf16 %v256
      %v293 = vunpack.c.l.bf16 %v257
      %v294 = vunpack.c.l.bf16 %v258
      %v295 = vunpack.c.l.bf16 %v259
      %v296 = vunpack.c.l.bf16 %v260
      %v297 = vunpack.c.l.bf16 %v261
      %v298 = vunpack.c.l.bf16 %v262
      %v299 = vunpack.c.l.bf16 %v263
      %v300 = vunpack.c.l.bf16 %v264
      %v301 = vunpack.c.l.bf16 %v265
      %v302 = vunpack.c.l.bf16 %v266
      %v303 = vunpack.c.l.bf16 %v267
      %v304 = vunpack.c.l.bf16 %v268
      %v305 = vunpack.c.l.bf16 %v269
      %v306 = vunpack.c.l.bf16 %v270
      %v307 = vunpack.c.l.bf16 %v271
      %v308 = vunpack.c.l.bf16 %v272
      %v309 = vunpack.c.l.bf16 %v273
      %v310 = vunpack.c.l.bf16 %v274
      %v312 = vperm.slane %v226, 0
      %v314 = vmul.f32 %v275, %v312
      %v315 = vmul.f32 %v276, %v312
      %v316 = vmul.f32 %v277, %v312
      %v317 = vmul.f32 %v278, %v312
      %v318 = vmul.f32 %v279, %v312
      %v319 = vmul.f32 %v280, %v312
      %v320 = vmul.f32 %v281, %v312
      %v321 = vmul.f32 %v282, %v312
      %v322 = vmul.f32 %v283, %v312
      %v323 = vmul.f32 %v284, %v312
      %v324 = vmul.f32 %v285, %v312
      %v325 = vmul.f32 %v286, %v312
      %v326 = vmul.f32 %v287, %v312
      %v327 = vmul.f32 %v288, %v312
      %v328 = vmul.f32 %v289, %v312
      %v329 = vmul.f32 %v290, %v312
      %v330 = vmul.f32 %v291, %v312
      %v331 = vmul.f32 %v292, %v312
      %v332 = vmul.f32 %v293, %v312
      %v333 = vmul.f32 %v294, %v312
      %v334 = vmul.f32 %v295, %v312
      %v335 = vmul.f32 %v296, %v312
      %v336 = vmul.f32 %v297, %v312
      %v337 = vmul.f32 %v298, %v312
      %v338 = vmul.f32 %v299, %v312
      %v339 = vmul.f32 %v300, %v312
      %v340 = vmul.f32 %v301, %v312
      %v341 = vmul.f32 %v302, %v312
      %v342 = vmul.f32 %v303, %v312
      %v343 = vmul.f32 %v304, %v312
      %v344 = vmul.f32 %v305, %v312
      %v345 = vmul.f32 %v306, %v312
      %v346 = vmul.f32 %v307, %v312
      %v347 = vmul.f32 %v308, %v312
      %v348 = vmul.f32 %v309, %v312
      %v349 = vmul.f32 %v310, %v312
      %v350 = vadd.f32 %v237, %v314
      %v351 = vadd.f32 %v237, %v315
      %v352 = vadd.f32 %v237, %v316
      %v353 = vadd.f32 %v237, %v317
      %v354 = vadd.f32 %v237, %v318
      %v355 = vadd.f32 %v237, %v319
      %v356 = vadd.f32 %v237, %v320
      %v357 = vadd.f32 %v237, %v321
      %v358 = vadd.f32 %v237, %v322
      %v359 = vadd.f32 %v237, %v323
      %v360 = vadd.f32 %v237, %v324
      %v361 = vadd.f32 %v237, %v325
      %v362 = vadd.f32 %v237, %v326
      %v363 = vadd.f32 %v237, %v327
      %v364 = vadd.f32 %v237, %v328
      %v365 = vadd.f32 %v237, %v329
      %v366 = vadd.f32 %v237, %v330
      %v367 = vadd.f32 %v237, %v331
      %v368 = vadd.f32 %v237, %v332
      %v369 = vadd.f32 %v237, %v333
      %v370 = vadd.f32 %v237, %v334
      %v371 = vadd.f32 %v237, %v335
      %v372 = vadd.f32 %v237, %v336
      %v373 = vadd.f32 %v237, %v337
      %v374 = vadd.f32 %v237, %v338
      %v375 = vadd.f32 %v237, %v339
      %v376 = vadd.f32 %v237, %v340
      %v377 = vadd.f32 %v237, %v341
      %v378 = vadd.f32 %v237, %v342
      %v379 = vadd.f32 %v237, %v343
      %v380 = vadd.f32 %v237, %v344
      %v381 = vadd.f32 %v237, %v345
      %v382 = vadd.f32 %v237, %v346
      %v383 = vadd.f32 %v237, %v347
      %v384 = vadd.f32 %v237, %v348
      %v385 = vadd.f32 %v237, %v349
      %v386 = vld [vmem:[%s219 + $0x90] sm:$0x1]
      %v387 = vunpack.c.l.bf16 %v386
      %v389 = vperm.slane %v227, 0
      %v391 = vmul.f32 %v275, %v389
      %v392 = vmul.f32 %v276, %v389
      %v393 = vmul.f32 %v277, %v389
      %v394 = vmul.f32 %v278, %v389
      %v395 = vmul.f32 %v279, %v389
      %v396 = vmul.f32 %v280, %v389
      %v397 = vmul.f32 %v281, %v389
      %v398 = vmul.f32 %v282, %v389
      %v399 = vmul.f32 %v283, %v389
      %v400 = vmul.f32 %v284, %v389
      %v401 = vmul.f32 %v285, %v389
      %v402 = vmul.f32 %v286, %v389
      %v403 = vmul.f32 %v287, %v389
      %v404 = vmul.f32 %v288, %v389
      %v405 = vmul.f32 %v289, %v389
      %v406 = vmul.f32 %v290, %v389
      %v407 = vmul.f32 %v291, %v389
      %v408 = vmul.f32 %v292, %v389
      %v409 = vmul.f32 %v293, %v389
      %v410 = vmul.f32 %v294, %v389
      %v411 = vmul.f32 %v295, %v389
      %v412 = vmul.f32 %v296, %v389
      %v413 = vmul.f32 %v297, %v389
      %v414 = vmul.f32 %v298, %v389
      %v415 = vmul.f32 %v299, %v389
      %v416 = vmul.f32 %v300, %v389
      %v417 = vmul.f32 %v301, %v389
      %v418 = vmul.f32 %v302, %v389
      %v419 = vmul.f32 %v303, %v389
      %v420 = vmul.f32 %v304, %v389
      %v421 = vmul.f32 %v305, %v389
      %v422 = vmul.f32 %v306, %v389
      %v423 = vmul.f32 %v307, %v389
      %v424 = vmul.f32 %v308, %v389
      %v425 = vmul.f32 %v309, %v389
      %v426 = vmul.f32 %v310, %v389
      %v427 = vmul.f32 %v387, %v389
      %vm465 = vcmask 1046528
      %v466 = vrot.slane %v391, 1
      %v467 = vrot.slane %v392, 1
      %v468 = vsel %vm465, %v466, %v467
      %v469 = vrot.slane %v393, 1
      %v470 = vsel %vm465, %v467, %v469
      %v471 = vrot.slane %v394, 1
      %v472 = vsel %vm465, %v469, %v471
      %v473 = vrot.slane %v395, 1
      %v474 = vsel %vm465, %v471, %v473
      %v475 = vrot.slane %v396, 1
      %v476 = vsel %vm465, %v473, %v475
      %v477 = vrot.slane %v397, 1
      %v478 = vsel %vm465, %v475, %v477
      %v479 = vrot.slane %v398, 1
      %v480 = vsel %vm465, %v477, %v479
      %v481 = vrot.slane %v399, 1
      %v482 = vsel %vm465, %v479, %v481
      %v483 = vrot.slane %v400, 1
      %v484 = vsel %vm465, %v481, %v483
      %v485 = vrot.slane %v401, 1
      %v486 = vsel %vm465, %v483, %v485
      %v487 = vrot.slane %v402, 1
      %v488 = vsel %vm465, %v485, %v487
      %v489 = vrot.slane %v403, 1
      %v490 = vsel %vm465, %v487, %v489
      %v491 = vrot.slane %v404, 1
      %v492 = vsel %vm465, %v489, %v491
      %v493 = vrot.slane %v405, 1
      %v494 = vsel %vm465, %v491, %v493
      %v495 = vrot.slane %v406, 1
      %v496 = vsel %vm465, %v493, %v495
      %v497 = vrot.slane %v407, 1
      %v498 = vsel %vm465, %v495, %v497
      %v499 = vrot.slane %v408, 1
      %v500 = vsel %vm465, %v497, %v499
      %v501 = vrot.slane %v409, 1
      %v502 = vsel %vm465, %v499, %v501
      %v503 = vrot.slane %v410, 1
      %v504 = vsel %vm465, %v501, %v503
      %v505 = vrot.slane %v411, 1
      %v506 = vsel %vm465, %v503, %v505
      %v507 = vrot.slane %v412, 1
      %v508 = vsel %vm465, %v505, %v507
      %v509 = vrot.slane %v413, 1
      %v510 = vsel %vm465, %v507, %v509
      %v511 = vrot.slane %v414, 1
      %v512 = vsel %vm465, %v509, %v511
      %v513 = vrot.slane %v415, 1
      %v514 = vsel %vm465, %v511, %v513
      %v515 = vrot.slane %v416, 1
      %v516 = vsel %vm465, %v513, %v515
      %v517 = vrot.slane %v417, 1
      %v518 = vsel %vm465, %v515, %v517
      %v519 = vrot.slane %v418, 1
      %v520 = vsel %vm465, %v517, %v519
      %v521 = vrot.slane %v419, 1
      %v522 = vsel %vm465, %v519, %v521
      %v523 = vrot.slane %v420, 1
      %v524 = vsel %vm465, %v521, %v523
      %v525 = vrot.slane %v421, 1
      %v526 = vsel %vm465, %v523, %v525
      %v527 = vrot.slane %v422, 1
      %v528 = vsel %vm465, %v525, %v527
      %v529 = vrot.slane %v423, 1
      %v530 = vsel %vm465, %v527, %v529
      %v531 = vrot.slane %v424, 1
      %v532 = vsel %vm465, %v529, %v531
      %v533 = vrot.slane %v425, 1
      %v534 = vsel %vm465, %v531, %v533
      %v535 = vrot.slane %v426, 1
      %v536 = vsel %vm465, %v533, %v535
      %v537 = vrot.slane %v427, 1
      %v538 = vsel %vm465, %v535, %v537
      %v575 = vadd.f32 %v350, %v468
      %v576 = vadd.f32 %v351, %v470
      %v577 = vadd.f32 %v352, %v472
      %v578 = vadd.f32 %v353, %v474
      %v579 = vadd.f32 %v354, %v476
      %v580 = vadd.f32 %v355, %v478
      %v581 = vadd.f32 %v356, %v480
      %v582 = vadd.f32 %v357, %v482
      %v583 = vadd.f32 %v358, %v484
      %v584 = vadd.f32 %v359, %v486
      %v585 = vadd.f32 %v360, %v488
      %v586 = vadd.f32 %v361, %v490
      %v587 = vadd.f32 %v362, %v492
      %v588 = vadd.f32 %v363, %v494
      %v589 = vadd.f32 %v364, %v496
      %v590 = vadd.f32 %v365, %v498
      %v591 = vadd.f32 %v366, %v500
      %v592 = vadd.f32 %v367, %v502
      %v593 = vadd.f32 %v368, %v504
      %v594 = vadd.f32 %v369, %v506
      %v595 = vadd.f32 %v370, %v508
      %v596 = vadd.f32 %v371, %v510
      %v597 = vadd.f32 %v372, %v512
      %v598 = vadd.f32 %v373, %v514
      %v599 = vadd.f32 %v374, %v516
      %v600 = vadd.f32 %v375, %v518
      %v601 = vadd.f32 %v376, %v520
      %v602 = vadd.f32 %v377, %v522
      %v603 = vadd.f32 %v378, %v524
      %v604 = vadd.f32 %v379, %v526
      %v605 = vadd.f32 %v380, %v528
      %v606 = vadd.f32 %v381, %v530
      %v607 = vadd.f32 %v382, %v532
      %v608 = vadd.f32 %v383, %v534
      %v609 = vadd.f32 %v384, %v536
      %v610 = vadd.f32 %v385, %v538
      %v611 = vld [vmem:[%s219] sm:$0xe]
      %v612 = vunpack.c.l.bf16 %v611
      %v614 = vperm.slane %v228, 0
      %v616 = vmul.f32 %v612, %v614
      %v617 = vmul.f32 %v276, %v614
      %v618 = vmul.f32 %v277, %v614
      %v619 = vmul.f32 %v278, %v614
      %v620 = vmul.f32 %v279, %v614
      %v621 = vmul.f32 %v280, %v614
      %v622 = vmul.f32 %v281, %v614
      %v623 = vmul.f32 %v282, %v614
      %v624 = vmul.f32 %v283, %v614
      %v625 = vmul.f32 %v284, %v614
      %v626 = vmul.f32 %v285, %v614
      %v627 = vmul.f32 %v286, %v614
      %v628 = vmul.f32 %v287, %v614
      %v629 = vmul.f32 %v288, %v614
      %v630 = vmul.f32 %v289, %v614
      %v631 = vmul.f32 %v290, %v614
      %v632 = vmul.f32 %v291, %v614
      %v633 = vmul.f32 %v292, %v614
      %v634 = vmul.f32 %v293, %v614
      %v635 = vmul.f32 %v294, %v614
      %v636 = vmul.f32 %v295, %v614
      %v637 = vmul.f32 %v296, %v614
      %v638 = vmul.f32 %v297, %v614
      %v639 = vmul.f32 %v298, %v614
      %v640 = vmul.f32 %v299, %v614
      %v641 = vmul.f32 %v300, %v614
      %v642 = vmul.f32 %v301, %v614
      %v643 = vmul.f32 %v302, %v614
      %v644 = vmul.f32 %v303, %v614
      %v645 = vmul.f32 %v304, %v614
      %v646 = vmul.f32 %v305, %v614
      %v647 = vmul.f32 %v306, %v614
      %v648 = vmul.f32 %v307, %v614
      %v649 = vmul.f32 %v308, %v614
      %v650 = vmul.f32 %v309, %v614
      %v651 = vmul.f32 %v310, %v614
      %v652 = vmul.f32 %v387, %v614
      %vm690 = vcmask 1045504
      %v691 = vrot.slane %v616, 2
      %v692 = vrot.slane %v617, 2
      %v693 = vsel %vm690, %v691, %v692
      %v694 = vrot.slane %v618, 2
      %v695 = vsel %vm690, %v692, %v694
      %v696 = vrot.slane %v619, 2
      %v697 = vsel %vm690, %v694, %v696
      %v698 = vrot.slane %v620, 2
      %v699 = vsel %vm690, %v696, %v698
      %v700 = vrot.slane %v621, 2
      %v701 = vsel %vm690, %v698, %v700
      %v702 = vrot.slane %v622, 2
      %v703 = vsel %vm690, %v700, %v702
      %v704 = vrot.slane %v623, 2
      %v705 = vsel %vm690, %v702, %v704
      %v706 = vrot.slane %v624, 2
      %v707 = vsel %vm690, %v704, %v706
      %v708 = vrot.slane %v625, 2
      %v709 = vsel %vm690, %v706, %v708
      %v710 = vrot.slane %v626, 2
      %v711 = vsel %vm690, %v708, %v710
      %v712 = vrot.slane %v627, 2
      %v713 = vsel %vm690, %v710, %v712
      %v714 = vrot.slane %v628, 2
      %v715 = vsel %vm690, %v712, %v714
      %v716 = vrot.slane %v629, 2
      %v717 = vsel %vm690, %v714, %v716
      %v718 = vrot.slane %v630, 2
      %v719 = vsel %vm690, %v716, %v718
      %v720 = vrot.slane %v631, 2
      %v721 = vsel %vm690, %v718, %v720
      %v722 = vrot.slane %v632, 2
      %v723 = vsel %vm690, %v720, %v722
      %v724 = vrot.slane %v633, 2
      %v725 = vsel %vm690, %v722, %v724
      %v726 = vrot.slane %v634, 2
      %v727 = vsel %vm690, %v724, %v726
      %v728 = vrot.slane %v635, 2
      %v729 = vsel %vm690, %v726, %v728
      %v730 = vrot.slane %v636, 2
      %v731 = vsel %vm690, %v728, %v730
      %v732 = vrot.slane %v637, 2
      %v733 = vsel %vm690, %v730, %v732
      %v734 = vrot.slane %v638, 2
      %v735 = vsel %vm690, %v732, %v734
      %v736 = vrot.slane %v639, 2
      %v737 = vsel %vm690, %v734, %v736
      %v738 = vrot.slane %v640, 2
      %v739 = vsel %vm690, %v736, %v738
      %v740 = vrot.slane %v641, 2
      %v741 = vsel %vm690, %v738, %v740
      %v742 = vrot.slane %v642, 2
      %v743 = vsel %vm690, %v740, %v742
      %v744 = vrot.slane %v643, 2
      %v745 = vsel %vm690, %v742, %v744
      %v746 = vrot.slane %v644, 2
      %v747 = vsel %vm690, %v744, %v746
      %v748 = vrot.slane %v645, 2
      %v749 = vsel %vm690, %v746, %v748
      %v750 = vrot.slane %v646, 2
      %v751 = vsel %vm690, %v748, %v750
      %v752 = vrot.slane %v647, 2
      %v753 = vsel %vm690, %v750, %v752
      %v754 = vrot.slane %v648, 2
      %v755 = vsel %vm690, %v752, %v754
      %v756 = vrot.slane %v649, 2
      %v757 = vsel %vm690, %v754, %v756
      %v758 = vrot.slane %v650, 2
      %v759 = vsel %vm690, %v756, %v758
      %v760 = vrot.slane %v651, 2
      %v761 = vsel %vm690, %v758, %v760
      %v762 = vrot.slane %v652, 2
      %v763 = vsel %vm690, %v760, %v762
      %v800 = vadd.f32 %v575, %v693
      %v801 = vadd.f32 %v576, %v695
      %v802 = vadd.f32 %v577, %v697
      %v803 = vadd.f32 %v578, %v699
      %v804 = vadd.f32 %v579, %v701
      %v805 = vadd.f32 %v580, %v703
      %v806 = vadd.f32 %v581, %v705
      %v807 = vadd.f32 %v582, %v707
      %v808 = vadd.f32 %v583, %v709
      %v809 = vadd.f32 %v584, %v711
      %v810 = vadd.f32 %v585, %v713
      %v811 = vadd.f32 %v586, %v715
      %v812 = vadd.f32 %v587, %v717
      %v813 = vadd.f32 %v588, %v719
      %v814 = vadd.f32 %v589, %v721
      %v815 = vadd.f32 %v590, %v723
      %v816 = vadd.f32 %v591, %v725
      %v817 = vadd.f32 %v592, %v727
      %v818 = vadd.f32 %v593, %v729
      %v819 = vadd.f32 %v594, %v731
      %v820 = vadd.f32 %v595, %v733
      %v821 = vadd.f32 %v596, %v735
      %v822 = vadd.f32 %v597, %v737
      %v823 = vadd.f32 %v598, %v739
      %v824 = vadd.f32 %v599, %v741
      %v825 = vadd.f32 %v600, %v743
      %v826 = vadd.f32 %v601, %v745
      %v827 = vadd.f32 %v602, %v747
      %v828 = vadd.f32 %v603, %v749
      %v829 = vadd.f32 %v604, %v751
      %v830 = vadd.f32 %v605, %v753
      %v831 = vadd.f32 %v606, %v755
      %v832 = vadd.f32 %v607, %v757
      %v833 = vadd.f32 %v608, %v759
      %v834 = vadd.f32 %v609, %v761
      %v835 = vadd.f32 %v610, %v763
      %v836 = vld [vmem:[%s219 + $0x8] sm:$0xe]
      %v837 = vld [vmem:[%s219 + $0x90] sm:$0xf]
      %v838 = vld [vmem:[%s219 + $0x94] sm:$0xf]
      %v839 = vld [vmem:[%s219 + $0x98] sm:$0x1]
      %v840 = vunpack.c.l.bf16 %v836
      %v841 = vunpack.c.l.bf16 %v837
      %v842 = vunpack.c.l.bf16 %v838
      %v843 = vunpack.c.l.bf16 %v839
      %v845 = vperm.slane %v229, 0
      %v847 = vmul.f32 %v840, %v845
      %v848 = vmul.f32 %v278, %v845
      %v849 = vmul.f32 %v279, %v845
      %v850 = vmul.f32 %v280, %v845
      %v851 = vmul.f32 %v281, %v845
      %v852 = vmul.f32 %v282, %v845
      %v853 = vmul.f32 %v283, %v845
      %v854 = vmul.f32 %v284, %v845
      %v855 = vmul.f32 %v285, %v845
      %v856 = vmul.f32 %v286, %v845
      %v857 = vmul.f32 %v287, %v845
      %v858 = vmul.f32 %v288, %v845
      %v859 = vmul.f32 %v289, %v845
      %v860 = vmul.f32 %v290, %v845
      %v861 = vmul.f32 %v291, %v845
      %v862 = vmul.f32 %v292, %v845
      %v863 = vmul.f32 %v293, %v845
      %v864 = vmul.f32 %v294, %v845
      %v865 = vmul.f32 %v295, %v845
      %v866 = vmul.f32 %v296, %v845
      %v867 = vmul.f32 %v297, %v845
      %v868 = vmul.f32 %v298, %v845
      %v869 = vmul.f32 %v299, %v845
      %v870 = vmul.f32 %v300, %v845
      %v871 = vmul.f32 %v301, %v845
      %v872 = vmul.f32 %v302, %v845
      %v873 = vmul.f32 %v303, %v845
      %v874 = vmul.f32 %v304, %v845
      %v875 = vmul.f32 %v305, %v845
      %v876 = vmul.f32 %v306, %v845
      %v877 = vmul.f32 %v307, %v845
      %v878 = vmul.f32 %v308, %v845
      %v879 = vmul.f32 %v309, %v845
      %v880 = vmul.f32 %v310, %v845
      %v881 = vmul.f32 %v841, %v845
      %v882 = vmul.f32 %v842, %v845
      %v883 = vmul.f32 %v843, %v845
      %v921 = vrot.slane %v847, 2
      %v922 = vrot.slane %v848, 2
      %v923 = vsel %vm690, %v921, %v922
      %v924 = vrot.slane %v849, 2
      %v925 = vsel %vm690, %v922, %v924
      %v926 = vrot.slane %v850, 2
      %v927 = vsel %vm690, %v924, %v926
      %v928 = vrot.slane %v851, 2
      %v929 = vsel %vm690, %v926, %v928
      %v930 = vrot.slane %v852, 2
      %v931 = vsel %vm690, %v928, %v930
      %v932 = vrot.slane %v853, 2
      %v933 = vsel %vm690, %v930, %v932
      %v934 = vrot.slane %v854, 2
      %v935 = vsel %vm690, %v932, %v934
      %v936 = vrot.slane %v855, 2
      %v937 = vsel %vm690, %v934, %v936
      %v938 = vrot.slane %v856, 2
      %v939 = vsel %vm690, %v936, %v938
      %v940 = vrot.slane %v857, 2
      %v941 = vsel %vm690, %v938, %v940
      %v942 = vrot.slane %v858, 2
      %v943 = vsel %vm690, %v940, %v942
      %v944 = vrot.slane %v859, 2
      %v945 = vsel %vm690, %v942, %v944
      %v946 = vrot.slane %v860, 2
      %v947 = vsel %vm690, %v944, %v946
      %v948 = vrot.slane %v861, 2
      %v949 = vsel %vm690, %v946, %v948
      %v950 = vrot.slane %v862, 2
      %v951 = vsel %vm690, %v948, %v950
      %v952 = vrot.slane %v863, 2
      %v953 = vsel %vm690, %v950, %v952
      %v954 = vrot.slane %v864, 2
      %v955 = vsel %vm690, %v952, %v954
      %v956 = vrot.slane %v865, 2
      %v957 = vsel %vm690, %v954, %v956
      %v958 = vrot.slane %v866, 2
      %v959 = vsel %vm690, %v956, %v958
      %v960 = vrot.slane %v867, 2
      %v961 = vsel %vm690, %v958, %v960
      %v962 = vrot.slane %v868, 2
      %v963 = vsel %vm690, %v960, %v962
      %v964 = vrot.slane %v869, 2
      %v965 = vsel %vm690, %v962, %v964
      %v966 = vrot.slane %v870, 2
      %v967 = vsel %vm690, %v964, %v966
      %v968 = vrot.slane %v871, 2
      %v969 = vsel %vm690, %v966, %v968
      %v970 = vrot.slane %v872, 2
      %v971 = vsel %vm690, %v968, %v970
      %v972 = vrot.slane %v873, 2
      %v973 = vsel %vm690, %v970, %v972
      %v974 = vrot.slane %v874, 2
      %v975 = vsel %vm690, %v972, %v974
      %v976 = vrot.slane %v875, 2
      %v977 = vsel %vm690, %v974, %v976
      %v978 = vrot.slane %v876, 2
      %v979 = vsel %vm690, %v976, %v978
      %v980 = vrot.slane %v877, 2
      %v981 = vsel %vm690, %v978, %v980
      %v982 = vrot.slane %v878, 2
      %v983 = vsel %vm690, %v980, %v982
      %v984 = vrot.slane %v879, 2
      %v985 = vsel %vm690, %v982, %v984
      %v986 = vrot.slane %v880, 2
      %v987 = vsel %vm690, %v984, %v986
      %v988 = vrot.slane %v881, 2
      %v989 = vsel %vm690, %v986, %v988
      %v990 = vrot.slane %v882, 2
      %v991 = vsel %vm690, %v988, %v990
      %v992 = vrot.slane %v883, 2
      %v993 = vsel %vm690, %v990, %v992
      %v1030 = vadd.f32 %v800, %v923
      %v1031 = vadd.f32 %v801, %v925
      %v1032 = vadd.f32 %v802, %v927
      %v1033 = vadd.f32 %v803, %v929
      %v1034 = vadd.f32 %v804, %v931
      %v1035 = vadd.f32 %v805, %v933
      %v1036 = vadd.f32 %v806, %v935
      %v1037 = vadd.f32 %v807, %v937
      %v1038 = vadd.f32 %v808, %v939
      %v1039 = vadd.f32 %v809, %v941
      %v1040 = vadd.f32 %v810, %v943
      %v1041 = vadd.f32 %v811, %v945
      %v1042 = vadd.f32 %v812, %v947
      %v1043 = vadd.f32 %v813, %v949
      %v1044 = vadd.f32 %v814, %v951
      %v1045 = vadd.f32 %v815, %v953
      %v1046 = vadd.f32 %v816, %v955
      %v1047 = vadd.f32 %v817, %v957
      %v1048 = vadd.f32 %v818, %v959
      %v1049 = vadd.f32 %v819, %v961
      %v1050 = vadd.f32 %v820, %v963
      %v1051 = vadd.f32 %v821, %v965
      %v1052 = vadd.f32 %v822, %v967
      %v1053 = vadd.f32 %v823, %v969
      %v1054 = vadd.f32 %v824, %v971
      %v1055 = vadd.f32 %v825, %v973
      %v1056 = vadd.f32 %v826, %v975
      %v1057 = vadd.f32 %v827, %v977
      %v1058 = vadd.f32 %v828, %v979
      %v1059 = vadd.f32 %v829, %v981
      %v1060 = vadd.f32 %v830, %v983
      %v1061 = vadd.f32 %v831, %v985
      %v1062 = vadd.f32 %v832, %v987
      %v1063 = vadd.f32 %v833, %v989
      %v1064 = vadd.f32 %v834, %v991
      %v1065 = vadd.f32 %v835, %v993
      %v1066 = vld [vmem:[%s219 + $0x98] sm:$0x3]
      %v1067 = vunpack.c.l.bf16 %v1066
      %v1069 = vperm.slane %v230, 0
      %v1071 = vmul.f32 %v840, %v1069
      %v1072 = vmul.f32 %v278, %v1069
      %v1073 = vmul.f32 %v279, %v1069
      %v1074 = vmul.f32 %v280, %v1069
      %v1075 = vmul.f32 %v281, %v1069
      %v1076 = vmul.f32 %v282, %v1069
      %v1077 = vmul.f32 %v283, %v1069
      %v1078 = vmul.f32 %v284, %v1069
      %v1079 = vmul.f32 %v285, %v1069
      %v1080 = vmul.f32 %v286, %v1069
      %v1081 = vmul.f32 %v287, %v1069
      %v1082 = vmul.f32 %v288, %v1069
      %v1083 = vmul.f32 %v289, %v1069
      %v1084 = vmul.f32 %v290, %v1069
      %v1085 = vmul.f32 %v291, %v1069
      %v1086 = vmul.f32 %v292, %v1069
      %v1087 = vmul.f32 %v293, %v1069
      %v1088 = vmul.f32 %v294, %v1069
      %v1089 = vmul.f32 %v295, %v1069
      %v1090 = vmul.f32 %v296, %v1069
      %v1091 = vmul.f32 %v297, %v1069
      %v1092 = vmul.f32 %v298, %v1069
      %v1093 = vmul.f32 %v299, %v1069
      %v1094 = vmul.f32 %v300, %v1069
      %v1095 = vmul.f32 %v301, %v1069
      %v1096 = vmul.f32 %v302, %v1069
      %v1097 = vmul.f32 %v303, %v1069
      %v1098 = vmul.f32 %v304, %v1069
      %v1099 = vmul.f32 %v305, %v1069
      %v1100 = vmul.f32 %v306, %v1069
      %v1101 = vmul.f32 %v307, %v1069
      %v1102 = vmul.f32 %v308, %v1069
      %v1103 = vmul.f32 %v309, %v1069
      %v1104 = vmul.f32 %v310, %v1069
      %v1105 = vmul.f32 %v841, %v1069
      %v1106 = vmul.f32 %v842, %v1069
      %v1107 = vmul.f32 %v1067, %v1069
      %vm1145 = vcmask 1044480
      %v1146 = vrot.slane %v1071, 3
      %v1147 = vrot.slane %v1072, 3
      %v1148 = vsel %vm1145, %v1146, %v1147
      %v1149 = vrot.slane %v1073, 3
      %v1150 = vsel %vm1145, %v1147, %v1149
      %v1151 = vrot.slane %v1074, 3
      %v1152 = vsel %vm1145, %v1149, %v1151
      %v1153 = vrot.slane %v1075, 3
      %v1154 = vsel %vm1145, %v1151, %v1153
      %v1155 = vrot.slane %v1076, 3
      %v1156 = vsel %vm1145, %v1153, %v1155
      %v1157 = vrot.slane %v1077, 3
      %v1158 = vsel %vm1145, %v1155, %v1157
      %v1159 = vrot.slane %v1078, 3
      %v1160 = vsel %vm1145, %v1157, %v1159
      %v1161 = vrot.slane %v1079, 3
      %v1162 = vsel %vm1145, %v1159, %v1161
      %v1163 = vrot.slane %v1080, 3
      %v1164 = vsel %vm1145, %v1161, %v1163
      %v1165 = vrot.slane %v1081, 3
      %v1166 = vsel %vm1145, %v1163, %v1165
      %v1167 = vrot.slane %v1082, 3
      %v1168 = vsel %vm1145, %v1165, %v1167
      %v1169 = vrot.slane %v1083, 3
      %v1170 = vsel %vm1145, %v1167, %v1169
      %v1171 = vrot.slane %v1084, 3
      %v1172 = vsel %vm1145, %v1169, %v1171
      %v1173 = vrot.slane %v1085, 3
      %v1174 = vsel %vm1145, %v1171, %v1173
      %v1175 = vrot.slane %v1086, 3
      %v1176 = vsel %vm1145, %v1173, %v1175
      %v1177 = vrot.slane %v1087, 3
      %v1178 = vsel %vm1145, %v1175, %v1177
      %v1179 = vrot.slane %v1088, 3
      %v1180 = vsel %vm1145, %v1177, %v1179
      %v1181 = vrot.slane %v1089, 3
      %v1182 = vsel %vm1145, %v1179, %v1181
      %v1183 = vrot.slane %v1090, 3
      %v1184 = vsel %vm1145, %v1181, %v1183
      %v1185 = vrot.slane %v1091, 3
      %v1186 = vsel %vm1145, %v1183, %v1185
      %v1187 = vrot.slane %v1092, 3
      %v1188 = vsel %vm1145, %v1185, %v1187
      %v1189 = vrot.slane %v1093, 3
      %v1190 = vsel %vm1145, %v1187, %v1189
      %v1191 = vrot.slane %v1094, 3
      %v1192 = vsel %vm1145, %v1189, %v1191
      %v1193 = vrot.slane %v1095, 3
      %v1194 = vsel %vm1145, %v1191, %v1193
      %v1195 = vrot.slane %v1096, 3
      %v1196 = vsel %vm1145, %v1193, %v1195
      %v1197 = vrot.slane %v1097, 3
      %v1198 = vsel %vm1145, %v1195, %v1197
      %v1199 = vrot.slane %v1098, 3
      %v1200 = vsel %vm1145, %v1197, %v1199
      %v1201 = vrot.slane %v1099, 3
      %v1202 = vsel %vm1145, %v1199, %v1201
      %v1203 = vrot.slane %v1100, 3
      %v1204 = vsel %vm1145, %v1201, %v1203
      %v1205 = vrot.slane %v1101, 3
      %v1206 = vsel %vm1145, %v1203, %v1205
      %v1207 = vrot.slane %v1102, 3
      %v1208 = vsel %vm1145, %v1205, %v1207
      %v1209 = vrot.slane %v1103, 3
      %v1210 = vsel %vm1145, %v1207, %v1209
      %v1211 = vrot.slane %v1104, 3
      %v1212 = vsel %vm1145, %v1209, %v1211
      %v1213 = vrot.slane %v1105, 3
      %v1214 = vsel %vm1145, %v1211, %v1213
      %v1215 = vrot.slane %v1106, 3
      %v1216 = vsel %vm1145, %v1213, %v1215
      %v1217 = vrot.slane %v1107, 3
      %v1218 = vsel %vm1145, %v1215, %v1217
      %v1255 = vadd.f32 %v1030, %v1148
      %v1256 = vadd.f32 %v1031, %v1150
      %v1257 = vadd.f32 %v1032, %v1152
      %v1258 = vadd.f32 %v1033, %v1154
      %v1259 = vadd.f32 %v1034, %v1156
      %v1260 = vadd.f32 %v1035, %v1158
      %v1261 = vadd.f32 %v1036, %v1160
      %v1262 = vadd.f32 %v1037, %v1162
      %v1263 = vadd.f32 %v1038, %v1164
      %v1264 = vadd.f32 %v1039, %v1166
      %v1265 = vadd.f32 %v1040, %v1168
      %v1266 = vadd.f32 %v1041, %v1170
      %v1267 = vadd.f32 %v1042, %v1172
      %v1268 = vadd.f32 %v1043, %v1174
      %v1269 = vadd.f32 %v1044, %v1176
      %v1270 = vadd.f32 %v1045, %v1178
      %v1271 = vadd.f32 %v1046, %v1180
      %v1272 = vadd.f32 %v1047, %v1182
      %v1273 = vadd.f32 %v1048, %v1184
      %v1274 = vadd.f32 %v1049, %v1186
      %v1275 = vadd.f32 %v1050, %v1188
      %v1276 = vadd.f32 %v1051, %v1190
      %v1277 = vadd.f32 %v1052, %v1192
      %v1278 = vadd.f32 %v1053, %v1194
      %v1279 = vadd.f32 %v1054, %v1196
      %v1280 = vadd.f32 %v1055, %v1198
      %v1281 = vadd.f32 %v1056, %v1200
      %v1282 = vadd.f32 %v1057, %v1202
      %v1283 = vadd.f32 %v1058, %v1204
      %v1284 = vadd.f32 %v1059, %v1206
      %v1285 = vadd.f32 %v1060, %v1208
      %v1286 = vadd.f32 %v1061, %v1210
      %v1287 = vadd.f32 %v1062, %v1212
      %v1288 = vadd.f32 %v1063, %v1214
      %v1289 = vadd.f32 %v1064, %v1216
      %v1290 = vadd.f32 %v1065, %v1218
      %v1291 = vld [vmem:[%s219 + $0x8] sm:$0xc]
      %v1292 = vunpack.c.l.bf16 %v1291
      %v1294 = vperm.slane %v231, 0
      %v1296 = vmul.f32 %v1292, %v1294
      %v1297 = vmul.f32 %v278, %v1294
      %v1298 = vmul.f32 %v279, %v1294
      %v1299 = vmul.f32 %v280, %v1294
      %v1300 = vmul.f32 %v281, %v1294
      %v1301 = vmul.f32 %v282, %v1294
      %v1302 = vmul.f32 %v283, %v1294
      %v1303 = vmul.f32 %v284, %v1294
      %v1304 = vmul.f32 %v285, %v1294
      %v1305 = vmul.f32 %v286, %v1294
      %v1306 = vmul.f32 %v287, %v1294
      %v1307 = vmul.f32 %v288, %v1294
      %v1308 = vmul.f32 %v289, %v1294
      %v1309 = vmul.f32 %v290, %v1294
      %v1310 = vmul.f32 %v291, %v1294
      %v1311 = vmul.f32 %v292, %v1294
      %v1312 = vmul.f32 %v293, %v1294
      %v1313 = vmul.f32 %v294, %v1294
      %v1314 = vmul.f32 %v295, %v1294
      %v1315 = vmul.f32 %v296, %v1294
      %v1316 = vmul.f32 %v297, %v1294
      %v1317 = vmul.f32 %v298, %v1294
      %v1318 = vmul.f32 %v299, %v1294
      %v1319 = vmul.f32 %v300, %v1294
      %v1320 = vmul.f32 %v301, %v1294
      %v1321 = vmul.f32 %v302, %v1294
      %v1322 = vmul.f32 %v303, %v1294
      %v1323 = vmul.f32 %v304, %v1294
      %v1324 = vmul.f32 %v305, %v1294
      %v1325 = vmul.f32 %v306, %v1294
      %v1326 = vmul.f32 %v307, %v1294
      %v1327 = vmul.f32 %v308, %v1294
      %v1328 = vmul.f32 %v309, %v1294
      %v1329 = vmul.f32 %v310, %v1294
      %v1330 = vmul.f32 %v841, %v1294
      %v1331 = vmul.f32 %v842, %v1294
      %v1332 = vmul.f32 %v1067, %v1294
      %vm1370 = vcmask 1043456
      %v1371 = vrot.slane %v1296, 4
      %v1372 = vrot.slane %v1297, 4
      %v1373 = vsel %vm1370, %v1371, %v1372
      %v1374 = vrot.slane %v1298, 4
      %v1375 = vsel %vm1370, %v1372, %v1374
      %v1376 = vrot.slane %v1299, 4
      %v1377 = vsel %vm1370, %v1374, %v1376
      %v1378 = vrot.slane %v1300, 4
      %v1379 = vsel %vm1370, %v1376, %v1378
      %v1380 = vrot.slane %v1301, 4
      %v1381 = vsel %vm1370, %v1378, %v1380
      %v1382 = vrot.slane %v1302, 4
      %v1383 = vsel %vm1370, %v1380, %v1382
      %v1384 = vrot.slane %v1303, 4
      %v1385 = vsel %vm1370, %v1382, %v1384
      %v1386 = vrot.slane %v1304, 4
      %v1387 = vsel %vm1370, %v1384, %v1386
      %v1388 = vrot.slane %v1305, 4
      %v1389 = vsel %vm1370, %v1386, %v1388
      %v1390 = vrot.slane %v1306, 4
      %v1391 = vsel %vm1370, %v1388, %v1390
      %v1392 = vrot.slane %v1307, 4
      %v1393 = vsel %vm1370, %v1390, %v1392
      %v1394 = vrot.slane %v1308, 4
      %v1395 = vsel %vm1370, %v1392, %v1394
      %v1396 = vrot.slane %v1309, 4
      %v1397 = vsel %vm1370, %v1394, %v1396
      %v1398 = vrot.slane %v1310, 4
      %v1399 = vsel %vm1370, %v1396, %v1398
      %v1400 = vrot.slane %v1311, 4
      %v1401 = vsel %vm1370, %v1398, %v1400
      %v1402 = vrot.slane %v1312, 4
      %v1403 = vsel %vm1370, %v1400, %v1402
      %v1404 = vrot.slane %v1313, 4
      %v1405 = vsel %vm1370, %v1402, %v1404
      %v1406 = vrot.slane %v1314, 4
      %v1407 = vsel %vm1370, %v1404, %v1406
      %v1408 = vrot.slane %v1315, 4
      %v1409 = vsel %vm1370, %v1406, %v1408
      %v1410 = vrot.slane %v1316, 4
      %v1411 = vsel %vm1370, %v1408, %v1410
      %v1412 = vrot.slane %v1317, 4
      %v1413 = vsel %vm1370, %v1410, %v1412
      %v1414 = vrot.slane %v1318, 4
      %v1415 = vsel %vm1370, %v1412, %v1414
      %v1416 = vrot.slane %v1319, 4
      %v1417 = vsel %vm1370, %v1414, %v1416
      %v1418 = vrot.slane %v1320, 4
      %v1419 = vsel %vm1370, %v1416, %v1418
      %v1420 = vrot.slane %v1321, 4
      %v1421 = vsel %vm1370, %v1418, %v1420
      %v1422 = vrot.slane %v1322, 4
      %v1423 = vsel %vm1370, %v1420, %v1422
      %v1424 = vrot.slane %v1323, 4
      %v1425 = vsel %vm1370, %v1422, %v1424
      %v1426 = vrot.slane %v1324, 4
      %v1427 = vsel %vm1370, %v1424, %v1426
      %v1428 = vrot.slane %v1325, 4
      %v1429 = vsel %vm1370, %v1426, %v1428
      %v1430 = vrot.slane %v1326, 4
      %v1431 = vsel %vm1370, %v1428, %v1430
      %v1432 = vrot.slane %v1327, 4
      %v1433 = vsel %vm1370, %v1430, %v1432
      %v1434 = vrot.slane %v1328, 4
      %v1435 = vsel %vm1370, %v1432, %v1434
      %v1436 = vrot.slane %v1329, 4
      %v1437 = vsel %vm1370, %v1434, %v1436
      %v1438 = vrot.slane %v1330, 4
      %v1439 = vsel %vm1370, %v1436, %v1438
      %v1440 = vrot.slane %v1331, 4
      %v1441 = vsel %vm1370, %v1438, %v1440
      %v1442 = vrot.slane %v1332, 4
      %v1443 = vsel %vm1370, %v1440, %v1442
      %v1480 = vadd.f32 %v1255, %v1373
      %v1481 = vadd.f32 %v1256, %v1375
      %v1482 = vadd.f32 %v1257, %v1377
      %v1483 = vadd.f32 %v1258, %v1379
      %v1484 = vadd.f32 %v1259, %v1381
      %v1485 = vadd.f32 %v1260, %v1383
      %v1486 = vadd.f32 %v1261, %v1385
      %v1487 = vadd.f32 %v1262, %v1387
      %v1488 = vadd.f32 %v1263, %v1389
      %v1489 = vadd.f32 %v1264, %v1391
      %v1490 = vadd.f32 %v1265, %v1393
      %v1491 = vadd.f32 %v1266, %v1395
      %v1492 = vadd.f32 %v1267, %v1397
      %v1493 = vadd.f32 %v1268, %v1399
      %v1494 = vadd.f32 %v1269, %v1401
      %v1495 = vadd.f32 %v1270, %v1403
      %v1496 = vadd.f32 %v1271, %v1405
      %v1497 = vadd.f32 %v1272, %v1407
      %v1498 = vadd.f32 %v1273, %v1409
      %v1499 = vadd.f32 %v1274, %v1411
      %v1500 = vadd.f32 %v1275, %v1413
      %v1501 = vadd.f32 %v1276, %v1415
      %v1502 = vadd.f32 %v1277, %v1417
      %v1503 = vadd.f32 %v1278, %v1419
      %v1504 = vadd.f32 %v1279, %v1421
      %v1505 = vadd.f32 %v1280, %v1423
      %v1506 = vadd.f32 %v1281, %v1425
      %v1507 = vadd.f32 %v1282, %v1427
      %v1508 = vadd.f32 %v1283, %v1429
      %v1509 = vadd.f32 %v1284, %v1431
      %v1510 = vadd.f32 %v1285, %v1433
      %v1511 = vadd.f32 %v1286, %v1435
      %v1512 = vadd.f32 %v1287, %v1437
      %v1513 = vadd.f32 %v1288, %v1439
      %v1514 = vadd.f32 %v1289, %v1441
      %v1515 = vadd.f32 %v1290, %v1443
      %v1516 = vld [vmem:[%s219 + $0x10] sm:$0xc]
      %v1517 = vld [vmem:[%s219 + $0x98] sm:$0xf]
      %v1518 = vld [vmem:[%s219 + $0x9c] sm:$0xf]
      %v1519 = vld [vmem:[%s219 + $0xa0] sm:$0x3]
      %v1520 = vunpack.c.l.bf16 %v1516
      %v1521 = vunpack.c.l.bf16 %v1517
      %v1522 = vunpack.c.l.bf16 %v1518
      %v1523 = vunpack.c.l.bf16 %v1519
      %v1525 = vperm.slane %v232, 0
      %v1527 = vmul.f32 %v1520, %v1525
      %v1528 = vmul.f32 %v280, %v1525
      %v1529 = vmul.f32 %v281, %v1525
      %v1530 = vmul.f32 %v282, %v1525
      %v1531 = vmul.f32 %v283, %v1525
      %v1532 = vmul.f32 %v284, %v1525
      %v1533 = vmul.f32 %v285, %v1525
      %v1534 = vmul.f32 %v286, %v1525
      %v1535 = vmul.f32 %v287, %v1525
      %v1536 = vmul.f32 %v288, %v1525
      %v1537 = vmul.f32 %v289, %v1525
      %v1538 = vmul.f32 %v290, %v1525
      %v1539 = vmul.f32 %v291, %v1525
      %v1540 = vmul.f32 %v292, %v1525
      %v1541 = vmul.f32 %v293, %v1525
      %v1542 = vmul.f32 %v294, %v1525
      %v1543 = vmul.f32 %v295, %v1525
      %v1544 = vmul.f32 %v296, %v1525
      %v1545 = vmul.f32 %v297, %v1525
      %v1546 = vmul.f32 %v298, %v1525
      %v1547 = vmul.f32 %v299, %v1525
      %v1548 = vmul.f32 %v300, %v1525
      %v1549 = vmul.f32 %v301, %v1525
      %v1550 = vmul.f32 %v302, %v1525
      %v1551 = vmul.f32 %v303, %v1525
      %v1552 = vmul.f32 %v304, %v1525
      %v1553 = vmul.f32 %v305, %v1525
      %v1554 = vmul.f32 %v306, %v1525
      %v1555 = vmul.f32 %v307, %v1525
      %v1556 = vmul.f32 %v308, %v1525
      %v1557 = vmul.f32 %v309, %v1525
      %v1558 = vmul.f32 %v310, %v1525
      %v1559 = vmul.f32 %v841, %v1525
      %v1560 = vmul.f32 %v842, %v1525
      %v1561 = vmul.f32 %v1521, %v1525
      %v1562 = vmul.f32 %v1522, %v1525
      %v1563 = vmul.f32 %v1523, %v1525
      %v1601 = vrot.slane %v1527, 4
      %v1602 = vrot.slane %v1528, 4
      %v1603 = vsel %vm1370, %v1601, %v1602
      %v1604 = vrot.slane %v1529, 4
      %v1605 = vsel %vm1370, %v1602, %v1604
      %v1606 = vrot.slane %v1530, 4
      %v1607 = vsel %vm1370, %v1604, %v1606
      %v1608 = vrot.slane %v1531, 4
      %v1609 = vsel %vm1370, %v1606, %v1608
      %v1610 = vrot.slane %v1532, 4
      %v1611 = vsel %vm1370, %v1608, %v1610
      %v1612 = vrot.slane %v1533, 4
      %v1613 = vsel %vm1370, %v1610, %v1612
      %v1614 = vrot.slane %v1534, 4
      %v1615 = vsel %vm1370, %v1612, %v1614
      %v1616 = vrot.slane %v1535, 4
      %v1617 = vsel %vm1370, %v1614, %v1616
      %v1618 = vrot.slane %v1536, 4
      %v1619 = vsel %vm1370, %v1616, %v1618
      %v1620 = vrot.slane %v1537, 4
      %v1621 = vsel %vm1370, %v1618, %v1620
      %v1622 = vrot.slane %v1538, 4
      %v1623 = vsel %vm1370, %v1620, %v1622
      %v1624 = vrot.slane %v1539, 4
      %v1625 = vsel %vm1370, %v1622, %v1624
      %v1626 = vrot.slane %v1540, 4
      %v1627 = vsel %vm1370, %v1624, %v1626
      %v1628 = vrot.slane %v1541, 4
      %v1629 = vsel %vm1370, %v1626, %v1628
      %v1630 = vrot.slane %v1542, 4
      %v1631 = vsel %vm1370, %v1628, %v1630
      %v1632 = vrot.slane %v1543, 4
      %v1633 = vsel %vm1370, %v1630, %v1632
      %v1634 = vrot.slane %v1544, 4
      %v1635 = vsel %vm1370, %v1632, %v1634
      %v1636 = vrot.slane %v1545, 4
      %v1637 = vsel %vm1370, %v1634, %v1636
      %v1638 = vrot.slane %v1546, 4
      %v1639 = vsel %vm1370, %v1636, %v1638
      %v1640 = vrot.slane %v1547, 4
      %v1641 = vsel %vm1370, %v1638, %v1640
      %v1642 = vrot.slane %v1548, 4
      %v1643 = vsel %vm1370, %v1640, %v1642
      %v1644 = vrot.slane %v1549, 4
      %v1645 = vsel %vm1370, %v1642, %v1644
      %v1646 = vrot.slane %v1550, 4
      %v1647 = vsel %vm1370, %v1644, %v1646
      %v1648 = vrot.slane %v1551, 4
      %v1649 = vsel %vm1370, %v1646, %v1648
      %v1650 = vrot.slane %v1552, 4
      %v1651 = vsel %vm1370, %v1648, %v1650
      %v1652 = vrot.slane %v1553, 4
      %v1653 = vsel %vm1370, %v1650, %v1652
      %v1654 = vrot.slane %v1554, 4
      %v1655 = vsel %vm1370, %v1652, %v1654
      %v1656 = vrot.slane %v1555, 4
      %v1657 = vsel %vm1370, %v1654, %v1656
      %v1658 = vrot.slane %v1556, 4
      %v1659 = vsel %vm1370, %v1656, %v1658
      %v1660 = vrot.slane %v1557, 4
      %v1661 = vsel %vm1370, %v1658, %v1660
      %v1662 = vrot.slane %v1558, 4
      %v1663 = vsel %vm1370, %v1660, %v1662
      %v1664 = vrot.slane %v1559, 4
      %v1665 = vsel %vm1370, %v1662, %v1664
      %v1666 = vrot.slane %v1560, 4
      %v1667 = vsel %vm1370, %v1664, %v1666
      %v1668 = vrot.slane %v1561, 4
      %v1669 = vsel %vm1370, %v1666, %v1668
      %v1670 = vrot.slane %v1562, 4
      %v1671 = vsel %vm1370, %v1668, %v1670
      %v1672 = vrot.slane %v1563, 4
      %v1673 = vsel %vm1370, %v1670, %v1672
      %v1710 = vadd.f32 %v1480, %v1603
      %v1711 = vadd.f32 %v1481, %v1605
      %v1712 = vadd.f32 %v1482, %v1607
      %v1713 = vadd.f32 %v1483, %v1609
      %v1714 = vadd.f32 %v1484, %v1611
      %v1715 = vadd.f32 %v1485, %v1613
      %v1716 = vadd.f32 %v1486, %v1615
      %v1717 = vadd.f32 %v1487, %v1617
      %v1718 = vadd.f32 %v1488, %v1619
      %v1719 = vadd.f32 %v1489, %v1621
      %v1720 = vadd.f32 %v1490, %v1623
      %v1721 = vadd.f32 %v1491, %v1625
      %v1722 = vadd.f32 %v1492, %v1627
      %v1723 = vadd.f32 %v1493, %v1629
      %v1724 = vadd.f32 %v1494, %v1631
      %v1725 = vadd.f32 %v1495, %v1633
      %v1726 = vadd.f32 %v1496, %v1635
      %v1727 = vadd.f32 %v1497, %v1637
      %v1728 = vadd.f32 %v1498, %v1639
      %v1729 = vadd.f32 %v1499, %v1641
      %v1730 = vadd.f32 %v1500, %v1643
      %v1731 = vadd.f32 %v1501, %v1645
      %v1732 = vadd.f32 %v1502, %v1647
      %v1733 = vadd.f32 %v1503, %v1649
      %v1734 = vadd.f32 %v1504, %v1651
      %v1735 = vadd.f32 %v1505, %v1653
      %v1736 = vadd.f32 %v1506, %v1655
      %v1737 = vadd.f32 %v1507, %v1657
      %v1738 = vadd.f32 %v1508, %v1659
      %v1739 = vadd.f32 %v1509, %v1661
      %v1740 = vadd.f32 %v1510, %v1663
      %v1741 = vadd.f32 %v1511, %v1665
      %v1742 = vadd.f32 %v1512, %v1667
      %v1743 = vadd.f32 %v1513, %v1669
      %v1744 = vadd.f32 %v1514, %v1671
      %v1745 = vadd.f32 %v1515, %v1673
      %v1746 = vld [vmem:[%s219 + $0xa0] sm:$0x7]
      %v1747 = vunpack.c.l.bf16 %v1746
      %v1749 = vperm.slane %v233, 0
      %v1751 = vmul.f32 %v1520, %v1749
      %v1752 = vmul.f32 %v280, %v1749
      %v1753 = vmul.f32 %v281, %v1749
      %v1754 = vmul.f32 %v282, %v1749
      %v1755 = vmul.f32 %v283, %v1749
      %v1756 = vmul.f32 %v284, %v1749
      %v1757 = vmul.f32 %v285, %v1749
      %v1758 = vmul.f32 %v286, %v1749
      %v1759 = vmul.f32 %v287, %v1749
      %v1760 = vmul.f32 %v288, %v1749
      %v1761 = vmul.f32 %v289, %v1749
      %v1762 = vmul.f32 %v290, %v1749
      %v1763 = vmul.f32 %v291, %v1749
      %v1764 = vmul.f32 %v292, %v1749
      %v1765 = vmul.f32 %v293, %v1749
      %v1766 = vmul.f32 %v294, %v1749
      %v1767 = vmul.f32 %v295, %v1749
      %v1768 = vmul.f32 %v296, %v1749
      %v1769 = vmul.f32 %v297, %v1749
      %v1770 = vmul.f32 %v298, %v1749
      %v1771 = vmul.f32 %v299, %v1749
      %v1772 = vmul.f32 %v300, %v1749
      %v1773 = vmul.f32 %v301, %v1749
      %v1774 = vmul.f32 %v302, %v1749
      %v1775 = vmul.f32 %v303, %v1749
      %v1776 = vmul.f32 %v304, %v1749
      %v1777 = vmul.f32 %v305, %v1749
      %v1778 = vmul.f32 %v306, %v1749
      %v1779 = vmul.f32 %v307, %v1749
      %v1780 = vmul.f32 %v308, %v1749
      %v1781 = vmul.f32 %v309, %v1749
      %v1782 = vmul.f32 %v310, %v1749
      %v1783 = vmul.f32 %v841, %v1749
      %v1784 = vmul.f32 %v842, %v1749
      %v1785 = vmul.f32 %v1521, %v1749
      %v1786 = vmul.f32 %v1522, %v1749
      %v1787 = vmul.f32 %v1747, %v1749
      %vm1825 = vcmask 1042432
      %v1826 = vrot.slane %v1751, 5
      %v1827 = vrot.slane %v1752, 5
      %v1828 = vsel %vm1825, %v1826, %v1827
      %v1829 = vrot.slane %v1753, 5
      %v1830 = vsel %vm1825, %v1827, %v1829
      %v1831 = vrot.slane %v1754, 5
      %v1832 = vsel %vm1825, %v1829, %v1831
      %v1833 = vrot.slane %v1755, 5
      %v1834 = vsel %vm1825, %v1831, %v1833
      %v1835 = vrot.slane %v1756, 5
      %v1836 = vsel %vm1825, %v1833, %v1835
      %v1837 = vrot.slane %v1757, 5
      %v1838 = vsel %vm1825, %v1835, %v1837
      %v1839 = vrot.slane %v1758, 5
      %v1840 = vsel %vm1825, %v1837, %v1839
      %v1841 = vrot.slane %v1759, 5
      %v1842 = vsel %vm1825, %v1839, %v1841
      %v1843 = vrot.slane %v1760, 5
      %v1844 = vsel %vm1825, %v1841, %v1843
      %v1845 = vrot.slane %v1761, 5
      %v1846 = vsel %vm1825, %v1843, %v1845
      %v1847 = vrot.slane %v1762, 5
      %v1848 = vsel %vm1825, %v1845, %v1847
      %v1849 = vrot.slane %v1763, 5
      %v1850 = vsel %vm1825, %v1847, %v1849
      %v1851 = vrot.slane %v1764, 5
      %v1852 = vsel %vm1825, %v1849, %v1851
      %v1853 = vrot.slane %v1765, 5
      %v1854 = vsel %vm1825, %v1851, %v1853
      %v1855 = vrot.slane %v1766, 5
      %v1856 = vsel %vm1825, %v1853, %v1855
      %v1857 = vrot.slane %v1767, 5
      %v1858 = vsel %vm1825, %v1855, %v1857
      %v1859 = vrot.slane %v1768, 5
      %v1860 = vsel %vm1825, %v1857, %v1859
      %v1861 = vrot.slane %v1769, 5
      %v1862 = vsel %vm1825, %v1859, %v1861
      %v1863 = vrot.slane %v1770, 5
      %v1864 = vsel %vm1825, %v1861, %v1863
      %v1865 = vrot.slane %v1771, 5
      %v1866 = vsel %vm1825, %v1863, %v1865
      %v1867 = vrot.slane %v1772, 5
      %v1868 = vsel %vm1825, %v1865, %v1867
      %v1869 = vrot.slane %v1773, 5
      %v1870 = vsel %vm1825, %v1867, %v1869
      %v1871 = vrot.slane %v1774, 5
      %v1872 = vsel %vm1825, %v1869, %v1871
      %v1873 = vrot.slane %v1775, 5
      %v1874 = vsel %vm1825, %v1871, %v1873
      %v1875 = vrot.slane %v1776, 5
      %v1876 = vsel %vm1825, %v1873, %v1875
      %v1877 = vrot.slane %v1777, 5
      %v1878 = vsel %vm1825, %v1875, %v1877
      %v1879 = vrot.slane %v1778, 5
      %v1880 = vsel %vm1825, %v1877, %v1879
      %v1881 = vrot.slane %v1779, 5
      %v1882 = vsel %vm1825, %v1879, %v1881
      %v1883 = vrot.slane %v1780, 5
      %v1884 = vsel %vm1825, %v1881, %v1883
      %v1885 = vrot.slane %v1781, 5
      %v1886 = vsel %vm1825, %v1883, %v1885
      %v1887 = vrot.slane %v1782, 5
      %v1888 = vsel %vm1825, %v1885, %v1887
      %v1889 = vrot.slane %v1783, 5
      %v1890 = vsel %vm1825, %v1887, %v1889
      %v1891 = vrot.slane %v1784, 5
      %v1892 = vsel %vm1825, %v1889, %v1891
      %v1893 = vrot.slane %v1785, 5
      %v1894 = vsel %vm1825, %v1891, %v1893
      %v1895 = vrot.slane %v1786, 5
      %v1896 = vsel %vm1825, %v1893, %v1895
      %v1897 = vrot.slane %v1787, 5
      %v1898 = vsel %vm1825, %v1895, %v1897
      %v1935 = vadd.f32 %v1710, %v1828
      %v1936 = vadd.f32 %v1711, %v1830
      %v1937 = vadd.f32 %v1712, %v1832
      %v1938 = vadd.f32 %v1713, %v1834
      %v1939 = vadd.f32 %v1714, %v1836
      %v1940 = vadd.f32 %v1715, %v1838
      %v1941 = vadd.f32 %v1716, %v1840
      %v1942 = vadd.f32 %v1717, %v1842
      %v1943 = vadd.f32 %v1718, %v1844
      %v1944 = vadd.f32 %v1719, %v1846
      %v1945 = vadd.f32 %v1720, %v1848
      %v1946 = vadd.f32 %v1721, %v1850
      %v1947 = vadd.f32 %v1722, %v1852
      %v1948 = vadd.f32 %v1723, %v1854
      %v1949 = vadd.f32 %v1724, %v1856
      %v1950 = vadd.f32 %v1725, %v1858
      %v1951 = vadd.f32 %v1726, %v1860
      %v1952 = vadd.f32 %v1727, %v1862
      %v1953 = vadd.f32 %v1728, %v1864
      %v1954 = vadd.f32 %v1729, %v1866
      %v1955 = vadd.f32 %v1730, %v1868
      %v1956 = vadd.f32 %v1731, %v1870
      %v1957 = vadd.f32 %v1732, %v1872
      %v1958 = vadd.f32 %v1733, %v1874
      %v1959 = vadd.f32 %v1734, %v1876
      %v1960 = vadd.f32 %v1735, %v1878
      %v1961 = vadd.f32 %v1736, %v1880
      %v1962 = vadd.f32 %v1737, %v1882
      %v1963 = vadd.f32 %v1738, %v1884
      %v1964 = vadd.f32 %v1739, %v1886
      %v1965 = vadd.f32 %v1740, %v1888
      %v1966 = vadd.f32 %v1741, %v1890
      %v1967 = vadd.f32 %v1742, %v1892
      %v1968 = vadd.f32 %v1743, %v1894
      %v1969 = vadd.f32 %v1744, %v1896
      %v1970 = vadd.f32 %v1745, %v1898
      %v1971 = vld [vmem:[%s219 + $0x10] sm:$0x8]
      %v1972 = vunpack.c.l.bf16 %v1971
      %v1974 = vperm.slane %v234, 0
      %v1976 = vmul.f32 %v1972, %v1974
      %v1977 = vmul.f32 %v280, %v1974
      %v1978 = vmul.f32 %v281, %v1974
      %v1979 = vmul.f32 %v282, %v1974
      %v1980 = vmul.f32 %v283, %v1974
      %v1981 = vmul.f32 %v284, %v1974
      %v1982 = vmul.f32 %v285, %v1974
      %v1983 = vmul.f32 %v286, %v1974
      %v1984 = vmul.f32 %v287, %v1974
      %v1985 = vmul.f32 %v288, %v1974
      %v1986 = vmul.f32 %v289, %v1974
      %v1987 = vmul.f32 %v290, %v1974
      %v1988 = vmul.f32 %v291, %v1974
      %v1989 = vmul.f32 %v292, %v1974
      %v1990 = vmul.f32 %v293, %v1974
      %v1991 = vmul.f32 %v294, %v1974
      %v1992 = vmul.f32 %v295, %v1974
      %v1993 = vmul.f32 %v296, %v1974
      %v1994 = vmul.f32 %v297, %v1974
      %v1995 = vmul.f32 %v298, %v1974
      %v1996 = vmul.f32 %v299, %v1974
      %v1997 = vmul.f32 %v300, %v1974
      %v1998 = vmul.f32 %v301, %v1974
      %v1999 = vmul.f32 %v302, %v1974
      %v2000 = vmul.f32 %v303, %v1974
      %v2001 = vmul.f32 %v304, %v1974
      %v2002 = vmul.f32 %v305, %v1974
      %v2003 = vmul.f32 %v306, %v1974
      %v2004 = vmul.f32 %v307, %v1974
      %v2005 = vmul.f32 %v308, %v1974
      %v2006 = vmul.f32 %v309, %v1974
      %v2007 = vmul.f32 %v310, %v1974
      %v2008 = vmul.f32 %v841, %v1974
      %v2009 = vmul.f32 %v842, %v1974
      %v2010 = vmul.f32 %v1521, %v1974
      %v2011 = vmul.f32 %v1522, %v1974
      %v2012 = vmul.f32 %v1747, %v1974
      %vm2050 = vcmask 1041408
      %v2051 = vrot.slane %v1976, 6
      %v2052 = vrot.slane %v1977, 6
      %v2053 = vsel %vm2050, %v2051, %v2052
      %v2054 = vrot.slane %v1978, 6
      %v2055 = vsel %vm2050, %v2052, %v2054
      %v2056 = vrot.slane %v1979, 6
      %v2057 = vsel %vm2050, %v2054, %v2056
      %v2058 = vrot.slane %v1980, 6
      %v2059 = vsel %vm2050, %v2056, %v2058
      %v2060 = vrot.slane %v1981, 6
      %v2061 = vsel %vm2050, %v2058, %v2060
      %v2062 = vrot.slane %v1982, 6
      %v2063 = vsel %vm2050, %v2060, %v2062
      %v2064 = vrot.slane %v1983, 6
      %v2065 = vsel %vm2050, %v2062, %v2064
      %v2066 = vrot.slane %v1984, 6
      %v2067 = vsel %vm2050, %v2064, %v2066
      %v2068 = vrot.slane %v1985, 6
      %v2069 = vsel %vm2050, %v2066, %v2068
      %v2070 = vrot.slane %v1986, 6
      %v2071 = vsel %vm2050, %v2068, %v2070
      %v2072 = vrot.slane %v1987, 6
      %v2073 = vsel %vm2050, %v2070, %v2072
      %v2074 = vrot.slane %v1988, 6
      %v2075 = vsel %vm2050, %v2072, %v2074
      %v2076 = vrot.slane %v1989, 6
      %v2077 = vsel %vm2050, %v2074, %v2076
      %v2078 = vrot.slane %v1990, 6
      %v2079 = vsel %vm2050, %v2076, %v2078
      %v2080 = vrot.slane %v1991, 6
      %v2081 = vsel %vm2050, %v2078, %v2080
      %v2082 = vrot.slane %v1992, 6
      %v2083 = vsel %vm2050, %v2080, %v2082
      %v2084 = vrot.slane %v1993, 6
      %v2085 = vsel %vm2050, %v2082, %v2084
      %v2086 = vrot.slane %v1994, 6
      %v2087 = vsel %vm2050, %v2084, %v2086
      %v2088 = vrot.slane %v1995, 6
      %v2089 = vsel %vm2050, %v2086, %v2088
      %v2090 = vrot.slane %v1996, 6
      %v2091 = vsel %vm2050, %v2088, %v2090
      %v2092 = vrot.slane %v1997, 6
      %v2093 = vsel %vm2050, %v2090, %v2092
      %v2094 = vrot.slane %v1998, 6
      %v2095 = vsel %vm2050, %v2092, %v2094
      %v2096 = vrot.slane %v1999, 6
      %v2097 = vsel %vm2050, %v2094, %v2096
      %v2098 = vrot.slane %v2000, 6
      %v2099 = vsel %vm2050, %v2096, %v2098
      %v2100 = vrot.slane %v2001, 6
      %v2101 = vsel %vm2050, %v2098, %v2100
      %v2102 = vrot.slane %v2002, 6
      %v2103 = vsel %vm2050, %v2100, %v2102
      %v2104 = vrot.slane %v2003, 6
      %v2105 = vsel %vm2050, %v2102, %v2104
      %v2106 = vrot.slane %v2004, 6
      %v2107 = vsel %vm2050, %v2104, %v2106
      %v2108 = vrot.slane %v2005, 6
      %v2109 = vsel %vm2050, %v2106, %v2108
      %v2110 = vrot.slane %v2006, 6
      %v2111 = vsel %vm2050, %v2108, %v2110
      %v2112 = vrot.slane %v2007, 6
      %v2113 = vsel %vm2050, %v2110, %v2112
      %v2114 = vrot.slane %v2008, 6
      %v2115 = vsel %vm2050, %v2112, %v2114
      %v2116 = vrot.slane %v2009, 6
      %v2117 = vsel %vm2050, %v2114, %v2116
      %v2118 = vrot.slane %v2010, 6
      %v2119 = vsel %vm2050, %v2116, %v2118
      %v2120 = vrot.slane %v2011, 6
      %v2121 = vsel %vm2050, %v2118, %v2120
      %v2122 = vrot.slane %v2012, 6
      %v2123 = vsel %vm2050, %v2120, %v2122
      %v2160 = vadd.f32 %v1935, %v2053
      %v2161 = vadd.f32 %v1936, %v2055
      %v2162 = vadd.f32 %v1937, %v2057
      %v2163 = vadd.f32 %v1938, %v2059
      %v2164 = vadd.f32 %v1939, %v2061
      %v2165 = vadd.f32 %v1940, %v2063
      %v2166 = vadd.f32 %v1941, %v2065
      %v2167 = vadd.f32 %v1942, %v2067
      %v2168 = vadd.f32 %v1943, %v2069
      %v2169 = vadd.f32 %v1944, %v2071
      %v2170 = vadd.f32 %v1945, %v2073
      %v2171 = vadd.f32 %v1946, %v2075
      %v2172 = vadd.f32 %v1947, %v2077
      %v2173 = vadd.f32 %v1948, %v2079
      %v2174 = vadd.f32 %v1949, %v2081
      %v2175 = vadd.f32 %v1950, %v2083
      %v2176 = vadd.f32 %v1951, %v2085
      %v2177 = vadd.f32 %v1952, %v2087
      %v2178 = vadd.f32 %v1953, %v2089
      %v2179 = vadd.f32 %v1954, %v2091
      %v2180 = vadd.f32 %v1955, %v2093
      %v2181 = vadd.f32 %v1956, %v2095
      %v2182 = vadd.f32 %v1957, %v2097
      %v2183 = vadd.f32 %v1958, %v2099
      %v2184 = vadd.f32 %v1959, %v2101
      %v2185 = vadd.f32 %v1960, %v2103
      %v2186 = vadd.f32 %v1961, %v2105
      %v2187 = vadd.f32 %v1962, %v2107
      %v2188 = vadd.f32 %v1963, %v2109
      %v2189 = vadd.f32 %v1964, %v2111
      %v2190 = vadd.f32 %v1965, %v2113
      %v2191 = vadd.f32 %v1966, %v2115
      %v2192 = vadd.f32 %v1967, %v2117
      %v2193 = vadd.f32 %v1968, %v2119
      %v2194 = vadd.f32 %v1969, %v2121
      %v2195 = vadd.f32 %v1970, %v2123
      %v2196 = vmax.f32 %v2160, 0.0
      %v2197 = vmax.f32 %v2161, 0.0
      %v2198 = vmax.f32 %v2162, 0.0
      %v2199 = vmax.f32 %v2163, 0.0
      %v2200 = vmax.f32 %v2164, 0.0
      %v2201 = vmax.f32 %v2165, 0.0
      %v2202 = vmax.f32 %v2166, 0.0
      %v2203 = vmax.f32 %v2167, 0.0
      %v2204 = vmax.f32 %v2168, 0.0
      %v2205 = vmax.f32 %v2169, 0.0
      %v2206 = vmax.f32 %v2170, 0.0
      %v2207 = vmax.f32 %v2171, 0.0
      %v2208 = vmax.f32 %v2172, 0.0
      %v2209 = vmax.f32 %v2173, 0.0
      %v2210 = vmax.f32 %v2174, 0.0
      %v2211 = vmax.f32 %v2175, 0.0
      %v2212 = vmax.f32 %v2176, 0.0
      %v2213 = vmax.f32 %v2177, 0.0
      %v2214 = vmax.f32 %v2178, 0.0
      %v2215 = vmax.f32 %v2179, 0.0
      %v2216 = vmax.f32 %v2180, 0.0
      %v2217 = vmax.f32 %v2181, 0.0
      %v2218 = vmax.f32 %v2182, 0.0
      %v2219 = vmax.f32 %v2183, 0.0
      %v2220 = vmax.f32 %v2184, 0.0
      %v2221 = vmax.f32 %v2185, 0.0
      %v2222 = vmax.f32 %v2186, 0.0
      %v2223 = vmax.f32 %v2187, 0.0
      %v2224 = vmax.f32 %v2188, 0.0
      %v2225 = vmax.f32 %v2189, 0.0
      %v2226 = vmax.f32 %v2190, 0.0
      %v2227 = vmax.f32 %v2191, 0.0
      %v2228 = vmax.f32 %v2192, 0.0
      %v2229 = vmax.f32 %v2193, 0.0
      %v2230 = vmax.f32 %v2194, 0.0
      %v2231 = vmax.f32 %v2195, 0.0
      %v2232 = vpack.c.bf16 %v2197, %v2196
      %v2233 = vpack.c.bf16 %v2199, %v2198
      %v2234 = vpack.c.bf16 %v2201, %v2200
      %v2235 = vpack.c.bf16 %v2203, %v2202
      %v2236 = vpack.c.bf16 %v2205, %v2204
      %v2237 = vpack.c.bf16 %v2207, %v2206
      %v2238 = vpack.c.bf16 %v2209, %v2208
      %v2239 = vpack.c.bf16 %v2211, %v2210
      %v2240 = vpack.c.bf16 %v2213, %v2212
      %v2241 = vpack.c.bf16 %v2215, %v2214
      %v2242 = vpack.c.bf16 %v2217, %v2216
      %v2243 = vpack.c.bf16 %v2219, %v2218
      %v2244 = vpack.c.bf16 %v2221, %v2220
      %v2245 = vpack.c.bf16 %v2223, %v2222
      %v2246 = vpack.c.bf16 %v2225, %v2224
      %v2247 = vpack.c.bf16 %v2227, %v2226
      %v2248 = vpack.c.bf16 %v2229, %v2228
      %v2249 = vpack.c.bf16 %v2231, %v2230
      %v2250 = vld [vmem:[%s3] sm:$0xf]
      %v2251 = vld [vmem:[%s4] sm:$0x1]
      %v2253 = vperm.slane %v2251, 0
      %vm2255 = vcmask 64512
      %v2257 = vsel %vm2255, %v2232, 0
      %v2260 = vsel %vm2255, %v2233, 0
      %v2263 = vsel %vm2255, %v2234, 0
      %v2266 = vsel %vm2255, %v2235, 0
      %v2269 = vsel %vm2255, %v2236, 0
      %v2272 = vsel %vm2255, %v2237, 0
      %v2275 = vsel %vm2255, %v2238, 0
      %v2278 = vsel %vm2255, %v2239, 0
      %v2281 = vsel %vm2255, %v2240, 0
      %v2284 = vsel %vm2255, %v2241, 0
      %v2287 = vsel %vm2255, %v2242, 0
      %v2290 = vsel %vm2255, %v2243, 0
      %v2293 = vsel %vm2255, %v2244, 0
      %v2296 = vsel %vm2255, %v2245, 0
      %v2299 = vsel %vm2255, %v2246, 0
      %v2302 = vsel %vm2255, %v2247, 0
      %v2305 = vsel %vm2255, %v2248, 0
      %v2308 = vsel %vm2255, %v2249, 0
      %v2311 = vsel %vm1370, %v2250, 0
      %2313 = vmatpush.bf16.msra.mxu0 0
      %2314 = vmatpush.bf16.msra.mxu0 0
      %2315 = vmatpush.bf16.msra.mxu0 0
      %2316 = vmatpush.bf16.msra.mxu0 0
      %2317 = vmatpush.bf16.msra.mxu0 0
      %2318 = vmatpush.bf16.msra.mxu0 0
      %2319 = vmatpush.bf16.msra.mxu0 0
      %2320 = vmatpush.bf16.msra.mxu0 %v2311
      %2321 = vmatmul.bf16.gmra.mxu0 %v2257
      %v2322 = vpop.f32.mrf.mxu0
      %v2323 = vadd.f32 %v2253, %v2322
      %v2324 = vpop.f32.mrf.mxu0
      %v2325 = vadd.f32 %v2253, %v2324
      %2326 = vmatmul.bf16.gmra.mxu0 %v2260
      %v2327 = vpop.f32.mrf.mxu0
      %v2328 = vadd.f32 %v2253, %v2327
      %v2329 = vpop.f32.mrf.mxu0
      %v2330 = vadd.f32 %v2253, %v2329
      %2331 = vmatmul.bf16.gmra.mxu0 %v2263
      %v2332 = vpop.f32.mrf.mxu0
      %v2333 = vadd.f32 %v2253, %v2332
      %v2334 = vpop.f32.mrf.mxu0
      %v2335 = vadd.f32 %v2253, %v2334
      %2336 = vmatmul.bf16.gmra.mxu0 %v2266
      %v2337 = vpop.f32.mrf.mxu0
      %v2338 = vadd.f32 %v2253, %v2337
      %v2339 = vpop.f32.mrf.mxu0
      %v2340 = vadd.f32 %v2253, %v2339
      %2341 = vmatmul.bf16.gmra.mxu0 %v2269
      %v2342 = vpop.f32.mrf.mxu0
      %v2343 = vadd.f32 %v2253, %v2342
      %v2344 = vpop.f32.mrf.mxu0
      %v2345 = vadd.f32 %v2253, %v2344
      %2346 = vmatmul.bf16.gmra.mxu0 %v2272
      %v2347 = vpop.f32.mrf.mxu0
      %v2348 = vadd.f32 %v2253, %v2347
      %v2349 = vpop.f32.mrf.mxu0
      %v2350 = vadd.f32 %v2253, %v2349
      %2351 = vmatmul.bf16.gmra.mxu0 %v2275
      %v2352 = vpop.f32.mrf.mxu0
      %v2353 = vadd.f32 %v2253, %v2352
      %v2354 = vpop.f32.mrf.mxu0
      %v2355 = vadd.f32 %v2253, %v2354
      %2356 = vmatmul.bf16.gmra.mxu0 %v2278
      %v2357 = vpop.f32.mrf.mxu0
      %v2358 = vadd.f32 %v2253, %v2357
      %v2359 = vpop.f32.mrf.mxu0
      %v2360 = vadd.f32 %v2253, %v2359
      %2361 = vmatmul.bf16.gmra.mxu0 %v2281
      %v2362 = vpop.f32.mrf.mxu0
      %v2363 = vadd.f32 %v2253, %v2362
      %v2364 = vpop.f32.mrf.mxu0
      %v2365 = vadd.f32 %v2253, %v2364
      %2366 = vmatmul.bf16.gmra.mxu0 %v2284
      %v2367 = vpop.f32.mrf.mxu0
      %v2368 = vadd.f32 %v2253, %v2367
      %v2369 = vpop.f32.mrf.mxu0
      %v2370 = vadd.f32 %v2253, %v2369
      %2371 = vmatmul.bf16.gmra.mxu0 %v2287
      %v2372 = vpop.f32.mrf.mxu0
      %v2373 = vadd.f32 %v2253, %v2372
      %v2374 = vpop.f32.mrf.mxu0
      %v2375 = vadd.f32 %v2253, %v2374
      %2376 = vmatmul.bf16.gmra.mxu0 %v2290
      %v2377 = vpop.f32.mrf.mxu0
      %v2378 = vadd.f32 %v2253, %v2377
      %v2379 = vpop.f32.mrf.mxu0
      %v2380 = vadd.f32 %v2253, %v2379
      %2381 = vmatmul.bf16.gmra.mxu0 %v2293
      %v2382 = vpop.f32.mrf.mxu0
      %v2383 = vadd.f32 %v2253, %v2382
      %v2384 = vpop.f32.mrf.mxu0
      %v2385 = vadd.f32 %v2253, %v2384
      %2386 = vmatmul.bf16.gmra.mxu0 %v2296
      %v2387 = vpop.f32.mrf.mxu0
      %v2388 = vadd.f32 %v2253, %v2387
      %v2389 = vpop.f32.mrf.mxu0
      %v2390 = vadd.f32 %v2253, %v2389
      %2391 = vmatmul.bf16.gmra.mxu0 %v2299
      %v2392 = vpop.f32.mrf.mxu0
      %v2393 = vadd.f32 %v2253, %v2392
      %v2394 = vpop.f32.mrf.mxu0
      %v2395 = vadd.f32 %v2253, %v2394
      %2396 = vmatmul.bf16.gmra.mxu0 %v2302
      %v2397 = vpop.f32.mrf.mxu0
      %v2398 = vadd.f32 %v2253, %v2397
      %v2399 = vpop.f32.mrf.mxu0
      %v2400 = vadd.f32 %v2253, %v2399
      %2401 = vmatmul.bf16.gmra.mxu0 %v2305
      %v2402 = vpop.f32.mrf.mxu0
      %v2403 = vadd.f32 %v2253, %v2402
      %v2404 = vpop.f32.mrf.mxu0
      %v2405 = vadd.f32 %v2253, %v2404
      %2406 = vmatmul.bf16.gmra.mxu0 %v2308
      %v2407 = vpop.f32.mrf.mxu0
      %v2408 = vadd.f32 %v2253, %v2407
      %v2409 = vpop.f32.mrf.mxu0
      %v2410 = vadd.f32 %v2253, %v2409
      %2411 = vdwg.mxu0
      %v2412 = vmax.f32 %v2323, 0.0
      %v2413 = vmax.f32 %v2325, 0.0
      %v2414 = vmax.f32 %v2328, 0.0
      %v2415 = vmax.f32 %v2330, 0.0
      %v2416 = vmax.f32 %v2333, 0.0
      %v2417 = vmax.f32 %v2335, 0.0
      %v2418 = vmax.f32 %v2338, 0.0
      %v2419 = vmax.f32 %v2340, 0.0
      %v2420 = vmax.f32 %v2343, 0.0
      %v2421 = vmax.f32 %v2345, 0.0
      %v2422 = vmax.f32 %v2348, 0.0
      %v2423 = vmax.f32 %v2350, 0.0
      %v2424 = vmax.f32 %v2353, 0.0
      %v2425 = vmax.f32 %v2355, 0.0
      %v2426 = vmax.f32 %v2358, 0.0
      %v2427 = vmax.f32 %v2360, 0.0
      %v2428 = vmax.f32 %v2363, 0.0
      %v2429 = vmax.f32 %v2365, 0.0
      %v2430 = vmax.f32 %v2368, 0.0
      %v2431 = vmax.f32 %v2370, 0.0
      %v2432 = vmax.f32 %v2373, 0.0
      %v2433 = vmax.f32 %v2375, 0.0
      %v2434 = vmax.f32 %v2378, 0.0
      %v2435 = vmax.f32 %v2380, 0.0
      %v2436 = vmax.f32 %v2383, 0.0
      %v2437 = vmax.f32 %v2385, 0.0
      %v2438 = vmax.f32 %v2388, 0.0
      %v2439 = vmax.f32 %v2390, 0.0
      %v2440 = vmax.f32 %v2393, 0.0
      %v2441 = vmax.f32 %v2395, 0.0
      %v2442 = vmax.f32 %v2398, 0.0
      %v2443 = vmax.f32 %v2400, 0.0
      %v2444 = vmax.f32 %v2403, 0.0
      %v2445 = vmax.f32 %v2405, 0.0
      %v2446 = vmax.f32 %v2408, 0.0
      %v2447 = vmax.f32 %v2410, 0.0
      %v2448 = vpack.c.bf16 %v2412, %v2412
      %v2449 = vpack.c.bf16 %v2413, %v2413
      %v2450 = vpack.c.bf16 %v2414, %v2414
      %v2451 = vpack.c.bf16 %v2415, %v2415
      %v2452 = vpack.c.bf16 %v2416, %v2416
      %v2453 = vpack.c.bf16 %v2417, %v2417
      %v2454 = vpack.c.bf16 %v2418, %v2418
      %v2455 = vpack.c.bf16 %v2419, %v2419
      %v2456 = vpack.c.bf16 %v2420, %v2420
      %v2457 = vpack.c.bf16 %v2421, %v2421
      %v2458 = vpack.c.bf16 %v2422, %v2422
      %v2459 = vpack.c.bf16 %v2423, %v2423
      %v2460 = vpack.c.bf16 %v2424, %v2424
      %v2461 = vpack.c.bf16 %v2425, %v2425
      %v2462 = vpack.c.bf16 %v2426, %v2426
      %v2463 = vpack.c.bf16 %v2427, %v2427
      %v2464 = vpack.c.bf16 %v2428, %v2428
      %v2465 = vpack.c.bf16 %v2429, %v2429
      %v2466 = vpack.c.bf16 %v2430, %v2430
      %v2467 = vpack.c.bf16 %v2431, %v2431
      %v2468 = vpack.c.bf16 %v2432, %v2432
      %v2469 = vpack.c.bf16 %v2433, %v2433
      %v2470 = vpack.c.bf16 %v2434, %v2434
      %v2471 = vpack.c.bf16 %v2435, %v2435
      %v2472 = vpack.c.bf16 %v2436, %v2436
      %v2473 = vpack.c.bf16 %v2437, %v2437
      %v2474 = vpack.c.bf16 %v2438, %v2438
      %v2475 = vpack.c.bf16 %v2439, %v2439
      %v2476 = vpack.c.bf16 %v2440, %v2440
      %v2477 = vpack.c.bf16 %v2441, %v2441
      %v2478 = vpack.c.bf16 %v2442, %v2442
      %v2479 = vpack.c.bf16 %v2443, %v2443
      %v2480 = vpack.c.bf16 %v2444, %v2444
      %v2481 = vpack.c.bf16 %v2445, %v2445
      %v2482 = vpack.c.bf16 %v2446, %v2446
      %v2483 = vpack.c.bf16 %v2447, %v2447
      %vm2484 = vcmask 125952
      %2485 = vst.msk [vmem:[%s224] sm:$0xf] %vm2484, %v2448
      %2486 = vst.msk [vmem:[%s224 + $0x4] sm:$0xf] %vm2484, %v2449
      %2487 = vst.msk [vmem:[%s224 + $0x8] sm:$0xf] %vm2484, %v2450
      %2488 = vst.msk [vmem:[%s224 + $0xc] sm:$0xf] %vm2484, %v2451
      %2489 = vst.msk [vmem:[%s224 + $0x10] sm:$0xf] %vm2484, %v2452
      %2490 = vst.msk [vmem:[%s224 + $0x14] sm:$0xf] %vm2484, %v2453
      %2491 = vst.msk [vmem:[%s224 + $0x18] sm:$0xf] %vm2484, %v2454
      %2492 = vst.msk [vmem:[%s224 + $0x1c] sm:$0xf] %vm2484, %v2455
      %2493 = vst.msk [vmem:[%s224 + $0x20] sm:$0xf] %vm2484, %v2456
      %2494 = vst.msk [vmem:[%s224 + $0x24] sm:$0xf] %vm2484, %v2457
      %2495 = vst.msk [vmem:[%s224 + $0x28] sm:$0xf] %vm2484, %v2458
      %2496 = vst.msk [vmem:[%s224 + $0x2c] sm:$0xf] %vm2484, %v2459
      %2497 = vst.msk [vmem:[%s224 + $0x30] sm:$0xf] %vm2484, %v2460
      %2498 = vst.msk [vmem:[%s224 + $0x34] sm:$0xf] %vm2484, %v2461
      %2499 = vst.msk [vmem:[%s224 + $0x38] sm:$0xf] %vm2484, %v2462
      %2500 = vst.msk [vmem:[%s224 + $0x3c] sm:$0xf] %vm2484, %v2463
      %2501 = vst.msk [vmem:[%s224 + $0x40] sm:$0xf] %vm2484, %v2464
      %2502 = vst.msk [vmem:[%s224 + $0x44] sm:$0xf] %vm2484, %v2465
      %2503 = vst.msk [vmem:[%s224 + $0x48] sm:$0xf] %vm2484, %v2466
      %2504 = vst.msk [vmem:[%s224 + $0x4c] sm:$0xf] %vm2484, %v2467
      %2505 = vst.msk [vmem:[%s224 + $0x50] sm:$0xf] %vm2484, %v2468
      %2506 = vst.msk [vmem:[%s224 + $0x54] sm:$0xf] %vm2484, %v2469
      %2507 = vst.msk [vmem:[%s224 + $0x58] sm:$0xf] %vm2484, %v2470
      %2508 = vst.msk [vmem:[%s224 + $0x5c] sm:$0xf] %vm2484, %v2471
      %2509 = vst.msk [vmem:[%s224 + $0x60] sm:$0xf] %vm2484, %v2472
      %2510 = vst.msk [vmem:[%s224 + $0x64] sm:$0xf] %vm2484, %v2473
      %2511 = vst.msk [vmem:[%s224 + $0x68] sm:$0xf] %vm2484, %v2474
      %2512 = vst.msk [vmem:[%s224 + $0x6c] sm:$0xf] %vm2484, %v2475
      %2513 = vst.msk [vmem:[%s224 + $0x70] sm:$0xf] %vm2484, %v2476
      %2514 = vst.msk [vmem:[%s224 + $0x74] sm:$0xf] %vm2484, %v2477
      %2515 = vst.msk [vmem:[%s224 + $0x78] sm:$0xf] %vm2484, %v2478
      %2516 = vst.msk [vmem:[%s224 + $0x7c] sm:$0xf] %vm2484, %v2479
      %2517 = vst.msk [vmem:[%s224 + $0x80] sm:$0xf] %vm2484, %v2480
      %2518 = vst.msk [vmem:[%s224 + $0x84] sm:$0xf] %vm2484, %v2481
      %2519 = vst.msk [vmem:[%s224 + $0x88] sm:$0xf] %vm2484, %v2482
      %2520 = vst.msk [vmem:[%s224 + $0x8c] sm:$0xf] %vm2484, %v2483
      %p2521 = scmp.lt.s32.totalorder %s16, 1
      %s2522 = scalar_select %p2521, %s16, 1
      %s2523 = smul.addr %s2522, 36
      %s2524 = smul.addr %s2523, 4
      %s2525 = scalar_lea.vmem %s5, %s2524
      // Predicated region
      $region41: #{mobilenet_forward.16} parent=39 // pred_check
        %p2526 = pneg %p144
      $region42: #{mobilenet_forward.16} parent=39 // pred_check_branch
        %2528 = sbr.rel (%p2526) target = $region44
      $region43: #{mobilenet_forward.16} parent=39 // pred_region
        _
      $region44: #{mobilenet_forward.16} parent=39 // pred_fallthru
        _
    $region40: #{mobilenet_forward.16} parent=5 // pred_fallthru
      _
    %p2529 = scmp.le.s32.totalorder 2, %s11
    // Predicated region
    $region45: #{mobilenet_forward.16} parent=5 // pred_check
      %p2530 = pneg %p2529
    $region46: #{mobilenet_forward.16} parent=5 // pred_check_branch
      %2532 = sbr.rel (%p2530) target = $region48
    $region47: #{mobilenet_forward.16} parent=5 // pred_region
      %s2533 = ssub.s32 %s11, 2
      // Predicated region
      $region49: #{mobilenet_forward.16} parent=47 // pred_check
        %p2534 = pneg %p150
      $region50: #{mobilenet_forward.16} parent=47 // pred_check_branch
        %2536 = sbr.rel (%p2534) target = $region52
      $region51: #{mobilenet_forward.16} parent=47 // pred_region
        %p2537 = scmp.lt.s32.totalorder %s17, 1
        %s2538 = scalar_select %p2537, %s17, 1
        %s2539 = smul.addr %s2538, 36
        %s2540 = smul.addr %s2539, 4
        %s2541 = scalar_lea.vmem %s5, %s2540
      $region52: #{mobilenet_forward.16} parent=47 // pred_fallthru
        _
    $region48: #{mobilenet_forward.16} parent=5 // pred_fallthru
      _
  $region6: #{mobilenet_forward.16} parent=0 // loop_footer
    %s15 = sadd.s32 1, %s11
  $region7: #{mobilenet_forward.16} parent=0 // loop_footer_branch
    %10 = sbr.rel target = $region3
  $region8: #{mobilenet_forward.16} parent=0 // loop_exit
    _

// kernel: mobilenet_forward.17
$region0: #{mobilenet_forward.17}
  #allocation0 [shape = 'u32[]', space=smem, size = 0x4, offset = 0x4, fixed_abs, tag = 'smem constant byte address 0x4 - core index']
  #allocation1 [shape = 'u32[72,128]{1,0:T(1,128)}', space=vmem, size = 0x9000, scoped, tag = 'internal scratch']
  %s0 = inlined_call_operand.vmem [shape: bf16[2,4,83,16], index: 0, kind: input, shape index: {}]
  %s1 = inlined_call_operand.vmem [shape: f32[9,1,16], index: 1, kind: input, shape index: {}]
  %s2 = inlined_call_operand.vmem [shape: f32[1,16], index: 2, kind: input, shape index: {}]
  %s3 = inlined_call_operand.vmem [shape: bf16[16,32], index: 3, kind: input, shape index: {}]
  %s4 = inlined_call_operand.vmem [shape: f32[1,32], index: 4, kind: input, shape index: {}]
  %s5 = inlined_call_operand.vmem [shape: bf16[2,72,32], index: 5, kind: output, shape index: {}]
  %s6 = sld [smem:[#allocation0]]
  $region53: #{mobilenet_forward.17} parent=0
    _
  %s8 = ssub.s32 1, %s6
  %s9 = scalar_select 0, %s8, %s6
  loop: start=0, step=1, limit=4
  $region2: #{mobilenet_forward.17} parent=0 // loop_pre_header
    _
  $region3: #{mobilenet_forward.17} parent=0 // loop_header
    %s11 = sphi 0, %s15
    %p12 = scmp.ge.s32.totalorder %s11, 4
    %s21 = sphi 0, %s23
    %s24 = sphi 0, %s21
    %s25 = sphi 0, %s24
    %s41 = sphi 0, %s25
    %s45 = sphi 0, %s45
    %s47 = sphi 0, %s45
    %s48 = sphi 0, %s47
    %s62 = sphi 0, %s48
    %s66 = sphi 0, %s66
    %s68 = sphi 0, %s66
    %s69 = sphi 0, %s68
    %s83 = sphi 0, %s69
    %s87 = sphi 0, %s87
    %s89 = sphi 0, %s87
    %s90 = sphi 0, %s89
    %s104 = sphi 0, %s90
    %s108 = sphi 0, %s108
    %s110 = sphi 0, %s108
    %s111 = sphi 0, %s110
    %s125 = sphi 0, %s111
    %s131 = sphi 0, %s133
    %s134 = sphi 0, %s131
    %s135 = sphi 0, %s134
    %s151 = sphi 0, %s135
  $region4: #{mobilenet_forward.17} parent=0 // loop_header_branch
    %14 = sbr.rel (%p12) target = $region8
  $region5: #{mobilenet_forward.17} parent=0 // loop_body
    %s16 = ssub.s32 %s11, 1
    %s17 = ssub.s32 %s11, 2
    %s18 = sadd.s32 %s11, 1
    %s19 = ssub.s32 %s11, %s18
    %p20 = scmp.eq.s32.totalorder %s19, 0
    %s22 = sadd.s32 %s21, 1
    %s23 = scalar_select %p20, %s21, %s22
    %p26 = pneg %p20
    %p27 = scmp.eq.s32.totalorder %s11, 1
    %p28 = por %p26, %p27
    %p29 = scmp.ne.s32.totalorder %s21, %s24
    %p30 = scmp.eq.s32.totalorder %s11, 0
    %p31 = por %p29, %p30
    %p32 = scmp.ne.s32.totalorder %s21, %s24
    %p33 = scmp.eq.s32.totalorder %s16, 1
    %p34 = por %p32, %p33
    %p35 = scmp.ne.s32.totalorder %s24, %s25
    %p36 = scmp.eq.s32.totalorder %s16, 0
    %p37 = por %p35, %p36
    %p38 = scmp.ne.s32.totalorder %s24, %s25
    %p39 = scmp.eq.s32.totalorder %s17, 1
    %p40 = por %p38, %p39
    %p42 = scmp.ne.s32.totalorder %s25, %s41
    %p43 = scmp.eq.s32.totalorder %s17, 0
    %p44 = por %p42, %p43
    %s46 = sadd.s32 %s45, 1
    %p49 = scmp.eq.s32.totalorder %s11, 1
    %p50 = scmp.ne.s32.totalorder %s45, %s47
    %p51 = scmp.eq.s32.totalorder %s11, 0
    %p52 = por %p50, %p51
    %p53 = scmp.ne.s32.totalorder %s45, %s47
    %p54 = scmp.eq.s32.totalorder %s16, 1
    %p55 = por %p53, %p54
    %p56 = scmp.ne.s32.totalorder %s47, %s48
    %p57 = scmp.eq.s32.totalorder %s16, 0
    %p58 = por %p56, %p57
    %p59 = scmp.ne.s32.totalorder %s47, %s48
    %p60 = scmp.eq.s32.totalorder %s17, 1
    %p61 = por %p59, %p60
    %p63 = scmp.ne.s32.totalorder %s48, %s62
    %p64 = scmp.eq.s32.totalorder %s17, 0
    %p65 = por %p63, %p64
    %s67 = sadd.s32 %s66, 1
    %p70 = scmp.eq.s32.totalorder %s11, 1
    %p71 = scmp.ne.s32.totalorder %s66, %s68
    %p72 = scmp.eq.s32.totalorder %s11, 0
    %p73 = por %p71, %p72
    %p74 = scmp.ne.s32.totalorder %s66, %s68
    %p75 = scmp.eq.s32.totalorder %s16, 1
    %p76 = por %p74, %p75
    %p77 = scmp.ne.s32.totalorder %s68, %s69
    %p78 = scmp.eq.s32.totalorder %s16, 0
    %p79 = por %p77, %p78
    %p80 = scmp.ne.s32.totalorder %s68, %s69
    %p81 = scmp.eq.s32.totalorder %s17, 1
    %p82 = por %p80, %p81
    %p84 = scmp.ne.s32.totalorder %s69, %s83
    %p85 = scmp.eq.s32.totalorder %s17, 0
    %p86 = por %p84, %p85
    %s88 = sadd.s32 %s87, 1
    %p91 = scmp.eq.s32.totalorder %s11, 1
    %p92 = scmp.ne.s32.totalorder %s87, %s89
    %p93 = scmp.eq.s32.totalorder %s11, 0
    %p94 = por %p92, %p93
    %p95 = scmp.ne.s32.totalorder %s87, %s89
    %p96 = scmp.eq.s32.totalorder %s16, 1
    %p97 = por %p95, %p96
    %p98 = scmp.ne.s32.totalorder %s89, %s90
    %p99 = scmp.eq.s32.totalorder %s16, 0
    %p100 = por %p98, %p99
    %p101 = scmp.ne.s32.totalorder %s89, %s90
    %p102 = scmp.eq.s32.totalorder %s17, 1
    %p103 = por %p101, %p102
    %p105 = scmp.ne.s32.totalorder %s90, %s104
    %p106 = scmp.eq.s32.totalorder %s17, 0
    %p107 = por %p105, %p106
    %s109 = sadd.s32 %s108, 1
    %p112 = scmp.eq.s32.totalorder %s11, 1
    %p113 = scmp.ne.s32.totalorder %s108, %s110
    %p114 = scmp.eq.s32.totalorder %s11, 0
    %p115 = por %p113, %p114
    %p116 = scmp.ne.s32.totalorder %s108, %s110
    %p117 = scmp.eq.s32.totalorder %s16, 1
    %p118 = por %p116, %p117
    %p119 = scmp.ne.s32.totalorder %s110, %s111
    %p120 = scmp.eq.s32.totalorder %s16, 0
    %p121 = por %p119, %p120
    %p122 = scmp.ne.s32.totalorder %s110, %s111
    %p123 = scmp.eq.s32.totalorder %s17, 1
    %p124 = por %p122, %p123
    %p126 = scmp.ne.s32.totalorder %s111, %s125
    %p127 = scmp.eq.s32.totalorder %s17, 0
    %p128 = por %p126, %p127
    %s129 = ssub.s32 %s11, %s18
    %p130 = scmp.eq.s32.totalorder %s129, 0
    %s132 = sadd.s32 %s131, 1
    %s133 = scalar_select %p130, %s131, %s132
    %p136 = pneg %p130
    %p137 = scmp.eq.s32.totalorder %s11, 1
    %p138 = por %p136, %p137
    %p139 = scmp.ne.s32.totalorder %s131, %s134
    %p140 = scmp.eq.s32.totalorder %s11, 0
    %p141 = por %p139, %p140
    %p142 = scmp.ne.s32.totalorder %s131, %s134
    %p143 = scmp.eq.s32.totalorder %s16, 1
    %p144 = por %p142, %p143
    %p145 = scmp.ne.s32.totalorder %s134, %s135
    %p146 = scmp.eq.s32.totalorder %s16, 0
    %p147 = por %p145, %p146
    %p148 = scmp.ne.s32.totalorder %s134, %s135
    %p149 = scmp.eq.s32.totalorder %s17, 1
    %p150 = por %p148, %p149
    %p152 = scmp.ne.s32.totalorder %s135, %s151
    %p153 = scmp.eq.s32.totalorder %s17, 0
    %p154 = por %p152, %p153
    %p155 = scmp.le.s32.totalorder 1, %s11
    %p156 = scmp.lt.s32.totalorder %s11, 3
    %p157 = pnand %p155, %p156
    %p158 = pneg %p157
    // Predicated region
    $region9: #{mobilenet_forward.17} parent=5 // pred_check
      _
    $region10: #{mobilenet_forward.17} parent=5 // pred_check_branch
      %160 = sbr.rel (%p157) target = $region12
    $region11: #{mobilenet_forward.17} parent=5 // pred_region
      %s161 = ssub.s32 %s11, 1
      // Predicated region
      $region13: #{mobilenet_forward.17} parent=11 // pred_check
        %p162 = pneg %p58
      $region14: #{mobilenet_forward.17} parent=11 // pred_check_branch
        %164 = sbr.rel (%p162) target = $region16
      $region15: #{mobilenet_forward.17} parent=11 // pred_region
        _
      $region16: #{mobilenet_forward.17} parent=11 // pred_fallthru
        _
      // Predicated region
      $region17: #{mobilenet_forward.17} parent=11 // pred_check
        %p165 = pneg %p79
      $region18: #{mobilenet_forward.17} parent=11 // pred_check_branch
        %167 = sbr.rel (%p165) target = $region20
      $region19: #{mobilenet_forward.17} parent=11 // pred_region
        _
      $region20: #{mobilenet_forward.17} parent=11 // pred_fallthru
        _
      // Predicated region
      $region21: #{mobilenet_forward.17} parent=11 // pred_check
        %p168 = pneg %p100
      $region22: #{mobilenet_forward.17} parent=11 // pred_check_branch
        %170 = sbr.rel (%p168) target = $region24
      $region23: #{mobilenet_forward.17} parent=11 // pred_region
        _
      $region24: #{mobilenet_forward.17} parent=11 // pred_fallthru
        _
      // Predicated region
      $region25: #{mobilenet_forward.17} parent=11 // pred_check
        %p171 = pneg %p121
      $region26: #{mobilenet_forward.17} parent=11 // pred_check_branch
        %173 = sbr.rel (%p171) target = $region28
      $region27: #{mobilenet_forward.17} parent=11 // pred_region
        _
      $region28: #{mobilenet_forward.17} parent=11 // pred_fallthru
        _
    $region12: #{mobilenet_forward.17} parent=5 // pred_fallthru
      _
    %p174 = scmp.lt.s32.totalorder %s11, 2
    // Predicated region
    $region29: #{mobilenet_forward.17} parent=5 // pred_check
      %p175 = pneg %p174
    $region30: #{mobilenet_forward.17} parent=5 // pred_check_branch
      %177 = sbr.rel (%p175) target = $region32
    $region31: #{mobilenet_forward.17} parent=5 // pred_region
      // Predicated region
      $region33: #{mobilenet_forward.17} parent=31 // pred_check
        %p178 = pneg %p31
      $region34: #{mobilenet_forward.17} parent=31 // pred_check_branch
        %180 = sbr.rel (%p178) target = $region36
      $region35: #{mobilenet_forward.17} parent=31 // pred_region
        %p181 = scmp.lt.s32.totalorder %s11, 1
        %s182 = scalar_select %p181, %s11, 1
        %s183 = smul.addr %s182, 44
        %s184 = smul.addr %s183, 4
        %s185 = scalar_lea.vmem %s0, %s184
      $region36: #{mobilenet_forward.17} parent=31 // pred_fallthru
        _
    $region32: #{mobilenet_forward.17} parent=5 // pred_fallthru
      _
    %p186 = scmp.le.s32.totalorder 1, %s11
    %p187 = scmp.lt.s32.totalorder %s11, 3
    %p188 = pnand %p186, %p187
    %p189 = pneg %p188
    // Predicated region
    $region37: #{mobilenet_forward.17} parent=5 // pred_check
      _
    $region38: #{mobilenet_forward.17} parent=5 // pred_check_branch
      %191 = sbr.rel (%p188) target = $region40
    $region39: #{mobilenet_forward.17} parent=5 // pred_region
      %s192 = ssub.s32 %s11, 1
      %p193 = scmp.lt.s32.totalorder %s16, 1
      %s194 = scalar_select %p193, %s16, 1
      %s195 = smul.addr %s194, 44
      %s196 = smul.addr %s195, 4
      %s197 = scalar_lea.vmem %s0, %s196
      %p198 = pneg %p37
      %p199 = pneg %p34
      %p200 = pneg %p58
      %p201 = pneg %p55
      %p202 = pneg %p79
      %p203 = pneg %p76
      %p204 = pneg %p100
      %p205 = pneg %p97
      %p206 = pneg %p121
      %p207 = pneg %p118
      %p208 = pneg %p147
      %p209 = pneg %p144
      %p210 = scmp.lt.s32.totalorder %s16, 1
      %s211 = scalar_select %p210, %s16, 1
      %s212 = smul.addr %s211, 9
      %s213 = smul.addr %s212, 4
      %s214 = scalar_lea.vmem %s5, %s213
      %p215 = scmp.lt.s32.totalorder %s16, 1
      %s216 = scalar_select %p215, %s16, 1
      %s217 = smul.addr %s216, 44
      %s218 = smul.addr %s217, 4
      %s219 = scalar_lea.vmem %s0, %s218
      %p220 = scmp.lt.s32.totalorder %s16, 1
      %s221 = scalar_select %p220, %s16, 1
      %s222 = smul.addr %s221, 9
      %s223 = smul.addr %s222, 4
      %s224 = scalar_lea.vmem %s5, %s223
      %v226 = vld [vmem:[%s1] sm:$0x1]
      %v227 = vld [vmem:[%s1 + $0x1] sm:$0x1]
      %v228 = vld [vmem:[%s1 + $0x2] sm:$0x1]
      %v229 = vld [vmem:[%s1 + $0x3] sm:$0x1]
      %v230 = vld [vmem:[%s1 + $0x4] sm:$0x1]
      %v231 = vld [vmem:[%s1 + $0x5] sm:$0x1]
      %v232 = vld [vmem:[%s1 + $0x6] sm:$0x1]
      %v233 = vld [vmem:[%s1 + $0x7] sm:$0x1]
      %v234 = vld [vmem:[%s1 + $0x8] sm:$0x1]
      %v235 = vld [vmem:[%s2] sm:$0x1]
      %v237 = vperm.slane %v235, 0
      %v239 = vld [vmem:[%s219] sm:$0xf]
      %v240 = vld [vmem:[%s219 + $0x4] sm:$0xf]
      %v241 = vld [vmem:[%s219 + $0x8] sm:$0xf]
      %v242 = vld [vmem:[%s219 + $0xc] sm:$0xf]
      %v243 = vld [vmem:[%s219 + $0x10] sm:$0xf]
      %v244 = vld [vmem:[%s219 + $0x14] sm:$0xf]
      %v245 = vld [vmem:[%s219 + $0x18] sm:$0xf]
      %v246 = vld [vmem:[%s219 + $0x1c] sm:$0xf]
      %v247 = vld [vmem:[%s219 + $0x20] sm:$0xf]
      %v248 = vunpack.c.l.bf16 %v239
      %v249 = vunpack.c.l.bf16 %v240
      %v250 = vunpack.c.l.bf16 %v241
      %v251 = vunpack.c.l.bf16 %v242
      %v252 = vunpack.c.l.bf16 %v243
      %v253 = vunpack.c.l.bf16 %v244
      %v254 = vunpack.c.l.bf16 %v245
      %v255 = vunpack.c.l.bf16 %v246
      %v256 = vunpack.c.l.bf16 %v247
      %v258 = vperm.slane %v226, 0
      %v260 = vmul.f32 %v248, %v258
      %v261 = vmul.f32 %v249, %v258
      %v262 = vmul.f32 %v250, %v258
      %v263 = vmul.f32 %v251, %v258
      %v264 = vmul.f32 %v252, %v258
      %v265 = vmul.f32 %v253, %v258
      %v266 = vmul.f32 %v254, %v258
      %v267 = vmul.f32 %v255, %v258
      %v268 = vmul.f32 %v256, %v258
      %v269 = vadd.f32 %v237, %v260
      %v270 = vadd.f32 %v237, %v261
      %v271 = vadd.f32 %v237, %v262
      %v272 = vadd.f32 %v237, %v263
      %v273 = vadd.f32 %v237, %v264
      %v274 = vadd.f32 %v237, %v265
      %v275 = vadd.f32 %v237, %v266
      %v276 = vadd.f32 %v237, %v267
      %v277 = vadd.f32 %v237, %v268
      %s278 = scalar_lea.vmem %s219, 44
      %v279 = vld [vmem:[%s278] sm:$0xf]
      %v280 = vld [vmem:[%s278 + $0x4] sm:$0xf]
      %v281 = vld [vmem:[%s278 + $0x8] sm:$0xf]
      %v282 = vld [vmem:[%s278 + $0xc] sm:$0xf]
      %v283 = vld [vmem:[%s278 + $0x10] sm:$0xf]
      %v284 = vld [vmem:[%s278 + $0x14] sm:$0xf]
      %v285 = vld [vmem:[%s278 + $0x18] sm:$0xf]
      %v286 = vld [vmem:[%s278 + $0x1c] sm:$0xf]
      %v287 = vld [vmem:[%s278 + $0x20] sm:$0xf]
      %v288 = vunpack.c.l.bf16 %v279
      %v289 = vunpack.c.l.bf16 %v280
      %v290 = vunpack.c.l.bf16 %v281
      %v291 = vunpack.c.l.bf16 %v282
      %v292 = vunpack.c.l.bf16 %v283
      %v293 = vunpack.c.l.bf16 %v284
      %v294 = vunpack.c.l.bf16 %v285
      %v295 = vunpack.c.l.bf16 %v286
      %v296 = vunpack.c.l.bf16 %v287
      %v298 = vperm.slane %v227, 0
      %v300 = vmul.f32 %v288, %v298
      %v301 = vmul.f32 %v289, %v298
      %v302 = vmul.f32 %v290, %v298
      %v303 = vmul.f32 %v291, %v298
      %v304 = vmul.f32 %v292, %v298
      %v305 = vmul.f32 %v293, %v298
      %v306 = vmul.f32 %v294, %v298
      %v307 = vmul.f32 %v295, %v298
      %v308 = vmul.f32 %v296, %v298
      %v309 = vadd.f32 %v269, %v300
      %v310 = vadd.f32 %v270, %v301
      %v311 = vadd.f32 %v271, %v302
      %v312 = vadd.f32 %v272, %v303
      %v313 = vadd.f32 %v273, %v304
      %v314 = vadd.f32 %v274, %v305
      %v315 = vadd.f32 %v275, %v306
      %v316 = vadd.f32 %v276, %v307
      %v317 = vadd.f32 %v277, %v308
      %v318 = vld [vmem:[%s219 + $0x24] sm:$0x1]
      %v319 = vunpack.c.l.bf16 %v318
      %v321 = vperm.slane %v228, 0
      %v323 = vmul.f32 %v248, %v321
      %v324 = vmul.f32 %v249, %v321
      %v325 = vmul.f32 %v250, %v321
      %v326 = vmul.f32 %v251, %v321
      %v327 = vmul.f32 %v252, %v321
      %v328 = vmul.f32 %v253, %v321
      %v329 = vmul.f32 %v254, %v321
      %v330 = vmul.f32 %v255, %v321
      %v331 = vmul.f32 %v256, %v321
      %v332 = vmul.f32 %v319, %v321
      %vm343 = vcmask 1046528
      %v344 = vrot.slane %v323, 1
      %v345 = vrot.slane %v324, 1
      %v346 = vsel %vm343, %v344, %v345
      %v347 = vrot.slane %v325, 1
      %v348 = vsel %vm343, %v345, %v347
      %v349 = vrot.slane %v326, 1
      %v350 = vsel %vm343, %v347, %v349
      %v351 = vrot.slane %v327, 1
      %v352 = vsel %vm343, %v349, %v351
      %v353 = vrot.slane %v328, 1
      %v354 = vsel %vm343, %v351, %v353
      %v355 = vrot.slane %v329, 1
      %v356 = vsel %vm343, %v353, %v355
      %v357 = vrot.slane %v330, 1
      %v358 = vsel %vm343, %v355, %v357
      %v359 = vrot.slane %v331, 1
      %v360 = vsel %vm343, %v357, %v359
      %v361 = vrot.slane %v332, 1
      %v362 = vsel %vm343, %v359, %v361
      %v372 = vadd.f32 %v309, %v346
      %v373 = vadd.f32 %v310, %v348
      %v374 = vadd.f32 %v311, %v350
      %v375 = vadd.f32 %v312, %v352
      %v376 = vadd.f32 %v313, %v354
      %v377 = vadd.f32 %v314, %v356
      %v378 = vadd.f32 %v315, %v358
      %v379 = vadd.f32 %v316, %v360
      %v380 = vadd.f32 %v317, %v362
      %s381 = scalar_lea.vmem %s219, 88
      %v382 = vld [vmem:[%s381] sm:$0xf]
      %v383 = vld [vmem:[%s381 + $0x4] sm:$0xf]
      %v384 = vld [vmem:[%s381 + $0x8] sm:$0xf]
      %v385 = vld [vmem:[%s381 + $0xc] sm:$0xf]
      %v386 = vld [vmem:[%s381 + $0x10] sm:$0xf]
      %v387 = vld [vmem:[%s381 + $0x14] sm:$0xf]
      %v388 = vld [vmem:[%s381 + $0x18] sm:$0xf]
      %v389 = vld [vmem:[%s381 + $0x1c] sm:$0xf]
      %v390 = vld [vmem:[%s381 + $0x20] sm:$0xf]
      %v391 = vunpack.c.l.bf16 %v382
      %v392 = vunpack.c.l.bf16 %v383
      %v393 = vunpack.c.l.bf16 %v384
      %v394 = vunpack.c.l.bf16 %v385
      %v395 = vunpack.c.l.bf16 %v386
      %v396 = vunpack.c.l.bf16 %v387
      %v397 = vunpack.c.l.bf16 %v388
      %v398 = vunpack.c.l.bf16 %v389
      %v399 = vunpack.c.l.bf16 %v390
      %v401 = vperm.slane %v229, 0
      %v403 = vmul.f32 %v391, %v401
      %v404 = vmul.f32 %v392, %v401
      %v405 = vmul.f32 %v393, %v401
      %v406 = vmul.f32 %v394, %v401
      %v407 = vmul.f32 %v395, %v401
      %v408 = vmul.f32 %v396, %v401
      %v409 = vmul.f32 %v397, %v401
      %v410 = vmul.f32 %v398, %v401
      %v411 = vmul.f32 %v399, %v401
      %v412 = vadd.f32 %v372, %v403
      %v413 = vadd.f32 %v373, %v404
      %v414 = vadd.f32 %v374, %v405
      %v415 = vadd.f32 %v375, %v406
      %v416 = vadd.f32 %v376, %v407
      %v417 = vadd.f32 %v377, %v408
      %v418 = vadd.f32 %v378, %v409
      %v419 = vadd.f32 %v379, %v410
      %v420 = vadd.f32 %v380, %v411
      %s421 = scalar_lea.vmem %s219, 132
      %v422 = vld [vmem:[%s421] sm:$0xf]
      %v423 = vld [vmem:[%s421 + $0x4] sm:$0xf]
      %v424 = vld [vmem:[%s421 + $0x8] sm:$0xf]
      %v425 = vld [vmem:[%s421 + $0xc] sm:$0xf]
      %v426 = vld [vmem:[%s421 + $0x10] sm:$0xf]
      %v427 = vld [vmem:[%s421 + $0x14] sm:$0xf]
      %v428 = vld [vmem:[%s421 + $0x18] sm:$0xf]
      %v429 = vld [vmem:[%s421 + $0x1c] sm:$0xf]
      %v430 = vld [vmem:[%s421 + $0x20] sm:$0xf]
      %v431 = vunpack.c.l.bf16 %v422
      %v432 = vunpack.c.l.bf16 %v423
      %v433 = vunpack.c.l.bf16 %v424
      %v434 = vunpack.c.l.bf16 %v425
      %v435 = vunpack.c.l.bf16 %v426
      %v436 = vunpack.c.l.bf16 %v427
      %v437 = vunpack.c.l.bf16 %v428
      %v438 = vunpack.c.l.bf16 %v429
      %v439 = vunpack.c.l.bf16 %v430
      %v441 = vperm.slane %v230, 0
      %v443 = vmul.f32 %v431, %v441
      %v444 = vmul.f32 %v432, %v441
      %v445 = vmul.f32 %v433, %v441
      %v446 = vmul.f32 %v434, %v441
      %v447 = vmul.f32 %v435, %v441
      %v448 = vmul.f32 %v436, %v441
      %v449 = vmul.f32 %v437, %v441
      %v450 = vmul.f32 %v438, %v441
      %v451 = vmul.f32 %v439, %v441
      %v452 = vadd.f32 %v412, %v443
      %v453 = vadd.f32 %v413, %v444
      %v454 = vadd.f32 %v414, %v445
      %v455 = vadd.f32 %v415, %v446
      %v456 = vadd.f32 %v416, %v447
      %v457 = vadd.f32 %v417, %v448
      %v458 = vadd.f32 %v418, %v449
      %v459 = vadd.f32 %v419, %v450
      %v460 = vadd.f32 %v420, %v451
      %v461 = vld [vmem:[%s381 + $0x24] sm:$0x1]
      %v462 = vunpack.c.l.bf16 %v461
      %v464 = vperm.slane %v231, 0
      %v466 = vmul.f32 %v391, %v464
      %v467 = vmul.f32 %v392, %v464
      %v468 = vmul.f32 %v393, %v464
      %v469 = vmul.f32 %v394, %v464
      %v470 = vmul.f32 %v395, %v464
      %v471 = vmul.f32 %v396, %v464
      %v472 = vmul.f32 %v397, %v464
      %v473 = vmul.f32 %v398, %v464
      %v474 = vmul.f32 %v399, %v464
      %v475 = vmul.f32 %v462, %v464
      %v486 = vrot.slane %v466, 1
      %v487 = vrot.slane %v467, 1
      %v488 = vsel %vm343, %v486, %v487
      %v489 = vrot.slane %v468, 1
      %v490 = vsel %vm343, %v487, %v489
      %v491 = vrot.slane %v469, 1
      %v492 = vsel %vm343, %v489, %v491
      %v493 = vrot.slane %v470, 1
      %v494 = vsel %vm343, %v491, %v493
      %v495 = vrot.slane %v471, 1
      %v496 = vsel %vm343, %v493, %v495
      %v497 = vrot.slane %v472, 1
      %v498 = vsel %vm343, %v495, %v497
      %v499 = vrot.slane %v473, 1
      %v500 = vsel %vm343, %v497, %v499
      %v501 = vrot.slane %v474, 1
      %v502 = vsel %vm343, %v499, %v501
      %v503 = vrot.slane %v475, 1
      %v504 = vsel %vm343, %v501, %v503
      %v514 = vadd.f32 %v452, %v488
      %v515 = vadd.f32 %v453, %v490
      %v516 = vadd.f32 %v454, %v492
      %v517 = vadd.f32 %v455, %v494
      %v518 = vadd.f32 %v456, %v496
      %v519 = vadd.f32 %v457, %v498
      %v520 = vadd.f32 %v458, %v500
      %v521 = vadd.f32 %v459, %v502
      %v522 = vadd.f32 %v460, %v504
      %v523 = vld [vmem:[%s219 + $0x24] sm:$0xf]
      %v524 = vld [vmem:[%s219 + $0x28] sm:$0x1]
      %v525 = vunpack.c.l.bf16 %v523
      %v526 = vunpack.c.l.bf16 %v524
      %v528 = vperm.slane %v232, 0
      %v530 = vmul.f32 %v249, %v528
      %v531 = vmul.f32 %v250, %v528
      %v532 = vmul.f32 %v251, %v528
      %v533 = vmul.f32 %v252, %v528
      %v534 = vmul.f32 %v253, %v528
      %v535 = vmul.f32 %v254, %v528
      %v536 = vmul.f32 %v255, %v528
      %v537 = vmul.f32 %v256, %v528
      %v538 = vmul.f32 %v525, %v528
      %v539 = vmul.f32 %v526, %v528
      %v550 = vrot.slane %v530, 1
      %v551 = vrot.slane %v531, 1
      %v552 = vsel %vm343, %v550, %v551
      %v553 = vrot.slane %v532, 1
      %v554 = vsel %vm343, %v551, %v553
      %v555 = vrot.slane %v533, 1
      %v556 = vsel %vm343, %v553, %v555
      %v557 = vrot.slane %v534, 1
      %v558 = vsel %vm343, %v555, %v557
      %v559 = vrot.slane %v535, 1
      %v560 = vsel %vm343, %v557, %v559
      %v561 = vrot.slane %v536, 1
      %v562 = vsel %vm343, %v559, %v561
      %v563 = vrot.slane %v537, 1
      %v564 = vsel %vm343, %v561, %v563
      %v565 = vrot.slane %v538, 1
      %v566 = vsel %vm343, %v563, %v565
      %v567 = vrot.slane %v539, 1
      %v568 = vsel %vm343, %v565, %v567
      %v578 = vadd.f32 %v514, %v552
      %v579 = vadd.f32 %v515, %v554
      %v580 = vadd.f32 %v516, %v556
      %v581 = vadd.f32 %v517, %v558
      %v582 = vadd.f32 %v518, %v560
      %v583 = vadd.f32 %v519, %v562
      %v584 = vadd.f32 %v520, %v564
      %v585 = vadd.f32 %v521, %v566
      %v586 = vadd.f32 %v522, %v568
      %v587 = vld [vmem:[%s278 + $0x24] sm:$0xf]
      %v588 = vld [vmem:[%s278 + $0x28] sm:$0x1]
      %v589 = vunpack.c.l.bf16 %v587
      %v590 = vunpack.c.l.bf16 %v588
      %v592 = vperm.slane %v233, 0
      %v594 = vmul.f32 %v289, %v592
      %v595 = vmul.f32 %v290, %v592
      %v596 = vmul.f32 %v291, %v592
      %v597 = vmul.f32 %v292, %v592
      %v598 = vmul.f32 %v293, %v592
      %v599 = vmul.f32 %v294, %v592
      %v600 = vmul.f32 %v295, %v592
      %v601 = vmul.f32 %v296, %v592
      %v602 = vmul.f32 %v589, %v592
      %v603 = vmul.f32 %v590, %v592
      %v614 = vrot.slane %v594, 1
      %v615 = vrot.slane %v595, 1
      %v616 = vsel %vm343, %v614, %v615
      %v617 = vrot.slane %v596, 1
      %v618 = vsel %vm343, %v615, %v617
      %v619 = vrot.slane %v597, 1
      %v620 = vsel %vm343, %v617, %v619
      %v621 = vrot.slane %v598, 1
      %v622 = vsel %vm343, %v619, %v621
      %v623 = vrot.slane %v599, 1
      %v624 = vsel %vm343, %v621, %v623
      %v625 = vrot.slane %v600, 1
      %v626 = vsel %vm343, %v623, %v625
      %v627 = vrot.slane %v601, 1
      %v628 = vsel %vm343, %v625, %v627
      %v629 = vrot.slane %v602, 1
      %v630 = vsel %vm343, %v627, %v629
      %v631 = vrot.slane %v603, 1
      %v632 = vsel %vm343, %v629, %v631
      %v642 = vadd.f32 %v578, %v616
      %v643 = vadd.f32 %v579, %v618
      %v644 = vadd.f32 %v580, %v620
      %v645 = vadd.f32 %v581, %v622
      %v646 = vadd.f32 %v582, %v624
      %v647 = vadd.f32 %v583, %v626
      %v648 = vadd.f32 %v584, %v628
      %v649 = vadd.f32 %v585, %v630
      %v650 = vadd.f32 %v586, %v632
      %v651 = vld [vmem:[%s219 + $0x4] sm:$0xe]
      %v652 = vunpack.c.l.bf16 %v651
      %v654 = vperm.slane %v234, 0
      %v656 = vmul.f32 %v652, %v654
      %v657 = vmul.f32 %v250, %v654
      %v658 = vmul.f32 %v251, %v654
      %v659 = vmul.f32 %v252, %v654
      %v660 = vmul.f32 %v253, %v654
      %v661 = vmul.f32 %v254, %v654
      %v662 = vmul.f32 %v255, %v654
      %v663 = vmul.f32 %v256, %v654
      %v664 = vmul.f32 %v525, %v654
      %v665 = vmul.f32 %v526, %v654
      %vm676 = vcmask 1045504
      %v677 = vrot.slane %v656, 2
      %v678 = vrot.slane %v657, 2
      %v679 = vsel %vm676, %v677, %v678
      %v680 = vrot.slane %v658, 2
      %v681 = vsel %vm676, %v678, %v680
      %v682 = vrot.slane %v659, 2
      %v683 = vsel %vm676, %v680, %v682
      %v684 = vrot.slane %v660, 2
      %v685 = vsel %vm676, %v682, %v684
      %v686 = vrot.slane %v661, 2
      %v687 = vsel %vm676, %v684, %v686
      %v688 = vrot.slane %v662, 2
      %v689 = vsel %vm676, %v686, %v688
      %v690 = vrot.slane %v663, 2
      %v691 = vsel %vm676, %v688, %v690
      %v692 = vrot.slane %v664, 2
      %v693 = vsel %vm676, %v690, %v692
      %v694 = vrot.slane %v665, 2
      %v695 = vsel %vm676, %v692, %v694
      %v705 = vadd.f32 %v642, %v679
      %v706 = vadd.f32 %v643, %v681
      %v707 = vadd.f32 %v644, %v683
      %v708 = vadd.f32 %v645, %v685
      %v709 = vadd.f32 %v646, %v687
      %v710 = vadd.f32 %v647, %v689
      %v711 = vadd.f32 %v648, %v691
      %v712 = vadd.f32 %v649, %v693
      %v713 = vadd.f32 %v650, %v695
      %v714 = vmax.f32 %v705, 0.0
      %v715 = vmax.f32 %v706, 0.0
      %v716 = vmax.f32 %v707, 0.0
      %v717 = vmax.f32 %v708, 0.0
      %v718 = vmax.f32 %v709, 0.0
      %v719 = vmax.f32 %v710, 0.0
      %v720 = vmax.f32 %v711, 0.0
      %v721 = vmax.f32 %v712, 0.0
      %v722 = vmax.f32 %v713, 0.0
      %v723 = vpack.c.bf16 %v715, %v714
      %v724 = vpack.c.bf16 %v717, %v716
      %v725 = vpack.c.bf16 %v719, %v718
      %v726 = vpack.c.bf16 %v721, %v720
      %v727 = vpack.c.bf16 %v722, %v722
      %v728 = vld [vmem:[%s3] sm:$0xf]
      %v729 = vld [vmem:[%s3 + $0x4] sm:$0xf]
      %v730 = vld [vmem:[%s4] sm:$0x1]
      %v732 = vperm.slane %v730, 0
      %v736 = vunpack.c.l.b16 %v728
      %v737 = vunpack.c.l.b16 %v729
      %v738 = vpack.c.b16 %v737, %v736
      %vm740 = vcmask 130048
      %v742 = vsel %vm740, %v723, 0
      %v745 = vsel %vm740, %v724, 0
      %v748 = vsel %vm740, %v725, 0
      %v751 = vsel %vm740, %v726, 0
      %v754 = vsel %vm740, %v727, 0
      %756 = vmatpush.bf16.msra.mxu0 0
      %757 = vmatpush.bf16.msra.mxu0 0
      %758 = vmatpush.bf16.msra.mxu0 0
      %759 = vmatpush.bf16.msra.mxu0 0
      %760 = vmatpush.bf16.msra.mxu0 0
      %761 = vmatpush.bf16.msra.mxu0 0
      %762 = vmatpush.bf16.msra.mxu0 0
      %763 = vmatpush.bf16.msra.mxu0 %v738
      %764 = vmatmul.bf16.gmra.mxu0 %v742
      %v765 = vpop.f32.mrf.mxu0
      %v766 = vadd.f32 %v732, %v765
      %v767 = vpop.f32.mrf.mxu0
      %v768 = vadd.f32 %v732, %v767
      %769 = vmatmul.bf16.gmra.mxu0 %v745
      %v770 = vpop.f32.mrf.mxu0
      %v771 = vadd.f32 %v732, %v770
      %v772 = vpop.f32.mrf.mxu0
      %v773 = vadd.f32 %v732, %v772
      %774 = vmatmul.bf16.gmra.mxu0 %v748
      %v775 = vpop.f32.mrf.mxu0
      %v776 = vadd.f32 %v732, %v775
      %v777 = vpop.f32.mrf.mxu0
      %v778 = vadd.f32 %v732, %v777
      %779 = vmatmul.bf16.gmra.mxu0 %v751
      %v780 = vpop.f32.mrf.mxu0
      %v781 = vadd.f32 %v732, %v780
      %v782 = vpop.f32.mrf.mxu0
      %v783 = vadd.f32 %v732, %v782
      %784 = vmatmul.bf16.gmra.mxu0 %v754
      %v785 = vpop.f32.mrf.mxu0
      %v786 = vadd.f32 %v732, %v785
      %v787 = vpop.f32.mrf.mxu0
      %788 = vdwg.mxu0
      %v789 = vmax.f32 %v766, 0.0
      %v790 = vmax.f32 %v768, 0.0
      %v791 = vmax.f32 %v771, 0.0
      %v792 = vmax.f32 %v773, 0.0
      %v793 = vmax.f32 %v776, 0.0
      %v794 = vmax.f32 %v778, 0.0
      %v795 = vmax.f32 %v781, 0.0
      %v796 = vmax.f32 %v783, 0.0
      %v797 = vmax.f32 %v786, 0.0
      %v798 = vpack.c.bf16 %v789, %v789
      %v799 = vpack.c.bf16 %v790, %v790
      %v800 = vpack.c.bf16 %v791, %v791
      %v801 = vpack.c.bf16 %v792, %v792
      %v802 = vpack.c.bf16 %v793, %v793
      %v803 = vpack.c.bf16 %v794, %v794
      %v804 = vpack.c.bf16 %v795, %v795
      %v805 = vpack.c.bf16 %v796, %v796
      %v806 = vpack.c.bf16 %v797, %v797
      %vm807 = vcmask 257024
      %808 = vst.msk [vmem:[%s224] sm:$0xf] %vm807, %v798
      %809 = vst.msk [vmem:[%s224 + $0x4] sm:$0xf] %vm807, %v799
      %810 = vst.msk [vmem:[%s224 + $0x8] sm:$0xf] %vm807, %v800
      %811 = vst.msk [vmem:[%s224 + $0xc] sm:$0xf] %vm807, %v801
      %812 = vst.msk [vmem:[%s224 + $0x10] sm:$0xf] %vm807, %v802
      %813 = vst.msk [vmem:[%s224 + $0x14] sm:$0xf] %vm807, %v803
      %814 = vst.msk [vmem:[%s224 + $0x18] sm:$0xf] %vm807, %v804
      %815 = vst.msk [vmem:[%s224 + $0x1c] sm:$0xf] %vm807, %v805
      %816 = vst.msk [vmem:[%s224 + $0x20] sm:$0xf] %vm807, %v806
      %p817 = scmp.lt.s32.totalorder %s16, 1
      %s818 = scalar_select %p817, %s16, 1
      %s819 = smul.addr %s818, 9
      %s820 = smul.addr %s819, 4
      %s821 = scalar_lea.vmem %s5, %s820
      // Predicated region
      $region41: #{mobilenet_forward.17} parent=39 // pred_check
        %p822 = pneg %p144
      $region42: #{mobilenet_forward.17} parent=39 // pred_check_branch
        %824 = sbr.rel (%p822) target = $region44
      $region43: #{mobilenet_forward.17} parent=39 // pred_region
        _
      $region44: #{mobilenet_forward.17} parent=39 // pred_fallthru
        _
    $region40: #{mobilenet_forward.17} parent=5 // pred_fallthru
      _
    %p825 = scmp.le.s32.totalorder 2, %s11
    // Predicated region
    $region45: #{mobilenet_forward.17} parent=5 // pred_check
      %p826 = pneg %p825
    $region46: #{mobilenet_forward.17} parent=5 // pred_check_branch
      %828 = sbr.rel (%p826) target = $region48
    $region47: #{mobilenet_forward.17} parent=5 // pred_region
      %s829 = ssub.s32 %s11, 2
      // Predicated region
      $region49: #{mobilenet_forward.17} parent=47 // pred_check
        %p830 = pneg %p150
      $region50: #{mobilenet_forward.17} parent=47 // pred_check_branch
        %832 = sbr.rel (%p830) target = $region52
      $region51: #{mobilenet_forward.17} parent=47 // pred_region
        %p833 = scmp.lt.s32.totalorder %s17, 1
        %s834 = scalar_select %p833, %s17, 1
        %s835 = smul.addr %s834, 9
        %s836 = smul.addr %s835, 4
        %s837 = scalar_lea.vmem %s5, %s836
      $region52: #{mobilenet_forward.17} parent=47 // pred_fallthru
        _
    $region48: #{mobilenet_forward.17} parent=5 // pred_fallthru
      _
  $region6: #{mobilenet_forward.17} parent=0 // loop_footer
    %s15 = sadd.s32 1, %s11
  $region7: #{mobilenet_forward.17} parent=0 // loop_footer_branch
    %10 = sbr.rel target = $region3
  $region8: #{mobilenet_forward.17} parent=0 // loop_exit
    _

// kernel: mobilenet_forward.18
$region0: #{mobilenet_forward.18}
  #allocation0 [shape = 'u32[]', space=smem, size = 0x4, offset = 0x4, fixed_abs, tag = 'smem constant byte address 0x4 - core index']
  #allocation1 [shape = 'u32[72,128]{1,0:T(1,128)}', space=vmem, size = 0x9000, scoped, tag = 'internal scratch']
  %s0 = inlined_call_operand.vmem [shape: bf16[2,1,102,32], index: 0, kind: input, shape index: {}]
  %s1 = inlined_call_operand.vmem [shape: f32[9,1,32], index: 1, kind: input, shape index: {}]
  %s2 = inlined_call_operand.vmem [shape: f32[1,32], index: 2, kind: input, shape index: {}]
  %s3 = inlined_call_operand.vmem [shape: bf16[32,32], index: 3, kind: input, shape index: {}]
  %s4 = inlined_call_operand.vmem [shape: f32[1,32], index: 4, kind: input, shape index: {}]
  %s5 = inlined_call_operand.vmem [shape: bf16[2,80,32], index: 5, kind: output, shape index: {}]
  %s6 = sld [smem:[#allocation0]]
  $region53: #{mobilenet_forward.18} parent=0
    _
  %s8 = ssub.s32 1, %s6
  %s9 = scalar_select 0, %s8, %s6
  loop: start=0, step=1, limit=4
  $region2: #{mobilenet_forward.18} parent=0 // loop_pre_header
    _
  $region3: #{mobilenet_forward.18} parent=0 // loop_header
    %s11 = sphi 0, %s15
    %p12 = scmp.ge.s32.totalorder %s11, 4
    %s21 = sphi 0, %s23
    %s24 = sphi 0, %s21
    %s25 = sphi 0, %s24
    %s41 = sphi 0, %s25
    %s45 = sphi 0, %s45
    %s47 = sphi 0, %s45
    %s48 = sphi 0, %s47
    %s62 = sphi 0, %s48
    %s66 = sphi 0, %s66
    %s68 = sphi 0, %s66
    %s69 = sphi 0, %s68
    %s83 = sphi 0, %s69
    %s87 = sphi 0, %s87
    %s89 = sphi 0, %s87
    %s90 = sphi 0, %s89
    %s104 = sphi 0, %s90
    %s108 = sphi 0, %s108
    %s110 = sphi 0, %s108
    %s111 = sphi 0, %s110
    %s125 = sphi 0, %s111
    %s131 = sphi 0, %s133
    %s134 = sphi 0, %s131
    %s135 = sphi 0, %s134
    %s151 = sphi 0, %s135
  $region4: #{mobilenet_forward.18} parent=0 // loop_header_branch
    %14 = sbr.rel (%p12) target = $region8
  $region5: #{mobilenet_forward.18} parent=0 // loop_body
    %s16 = ssub.s32 %s11, 1
    %s17 = ssub.s32 %s11, 2
    %s18 = sadd.s32 %s11, 1
    %s19 = ssub.s32 %s11, %s18
    %p20 = scmp.eq.s32.totalorder %s19, 0
    %s22 = sadd.s32 %s21, 1
    %s23 = scalar_select %p20, %s21, %s22
    %p26 = pneg %p20
    %p27 = scmp.eq.s32.totalorder %s11, 1
    %p28 = por %p26, %p27
    %p29 = scmp.ne.s32.totalorder %s21, %s24
    %p30 = scmp.eq.s32.totalorder %s11, 0
    %p31 = por %p29, %p30
    %p32 = scmp.ne.s32.totalorder %s21, %s24
    %p33 = scmp.eq.s32.totalorder %s16, 1
    %p34 = por %p32, %p33
    %p35 = scmp.ne.s32.totalorder %s24, %s25
    %p36 = scmp.eq.s32.totalorder %s16, 0
    %p37 = por %p35, %p36
    %p38 = scmp.ne.s32.totalorder %s24, %s25
    %p39 = scmp.eq.s32.totalorder %s17, 1
    %p40 = por %p38, %p39
    %p42 = scmp.ne.s32.totalorder %s25, %s41
    %p43 = scmp.eq.s32.totalorder %s17, 0
    %p44 = por %p42, %p43
    %s46 = sadd.s32 %s45, 1
    %p49 = scmp.eq.s32.totalorder %s11, 1
    %p50 = scmp.ne.s32.totalorder %s45, %s47
    %p51 = scmp.eq.s32.totalorder %s11, 0
    %p52 = por %p50, %p51
    %p53 = scmp.ne.s32.totalorder %s45, %s47
    %p54 = scmp.eq.s32.totalorder %s16, 1
    %p55 = por %p53, %p54
    %p56 = scmp.ne.s32.totalorder %s47, %s48
    %p57 = scmp.eq.s32.totalorder %s16, 0
    %p58 = por %p56, %p57
    %p59 = scmp.ne.s32.totalorder %s47, %s48
    %p60 = scmp.eq.s32.totalorder %s17, 1
    %p61 = por %p59, %p60
    %p63 = scmp.ne.s32.totalorder %s48, %s62
    %p64 = scmp.eq.s32.totalorder %s17, 0
    %p65 = por %p63, %p64
    %s67 = sadd.s32 %s66, 1
    %p70 = scmp.eq.s32.totalorder %s11, 1
    %p71 = scmp.ne.s32.totalorder %s66, %s68
    %p72 = scmp.eq.s32.totalorder %s11, 0
    %p73 = por %p71, %p72
    %p74 = scmp.ne.s32.totalorder %s66, %s68
    %p75 = scmp.eq.s32.totalorder %s16, 1
    %p76 = por %p74, %p75
    %p77 = scmp.ne.s32.totalorder %s68, %s69
    %p78 = scmp.eq.s32.totalorder %s16, 0
    %p79 = por %p77, %p78
    %p80 = scmp.ne.s32.totalorder %s68, %s69
    %p81 = scmp.eq.s32.totalorder %s17, 1
    %p82 = por %p80, %p81
    %p84 = scmp.ne.s32.totalorder %s69, %s83
    %p85 = scmp.eq.s32.totalorder %s17, 0
    %p86 = por %p84, %p85
    %s88 = sadd.s32 %s87, 1
    %p91 = scmp.eq.s32.totalorder %s11, 1
    %p92 = scmp.ne.s32.totalorder %s87, %s89
    %p93 = scmp.eq.s32.totalorder %s11, 0
    %p94 = por %p92, %p93
    %p95 = scmp.ne.s32.totalorder %s87, %s89
    %p96 = scmp.eq.s32.totalorder %s16, 1
    %p97 = por %p95, %p96
    %p98 = scmp.ne.s32.totalorder %s89, %s90
    %p99 = scmp.eq.s32.totalorder %s16, 0
    %p100 = por %p98, %p99
    %p101 = scmp.ne.s32.totalorder %s89, %s90
    %p102 = scmp.eq.s32.totalorder %s17, 1
    %p103 = por %p101, %p102
    %p105 = scmp.ne.s32.totalorder %s90, %s104
    %p106 = scmp.eq.s32.totalorder %s17, 0
    %p107 = por %p105, %p106
    %s109 = sadd.s32 %s108, 1
    %p112 = scmp.eq.s32.totalorder %s11, 1
    %p113 = scmp.ne.s32.totalorder %s108, %s110
    %p114 = scmp.eq.s32.totalorder %s11, 0
    %p115 = por %p113, %p114
    %p116 = scmp.ne.s32.totalorder %s108, %s110
    %p117 = scmp.eq.s32.totalorder %s16, 1
    %p118 = por %p116, %p117
    %p119 = scmp.ne.s32.totalorder %s110, %s111
    %p120 = scmp.eq.s32.totalorder %s16, 0
    %p121 = por %p119, %p120
    %p122 = scmp.ne.s32.totalorder %s110, %s111
    %p123 = scmp.eq.s32.totalorder %s17, 1
    %p124 = por %p122, %p123
    %p126 = scmp.ne.s32.totalorder %s111, %s125
    %p127 = scmp.eq.s32.totalorder %s17, 0
    %p128 = por %p126, %p127
    %s129 = ssub.s32 %s11, %s18
    %p130 = scmp.eq.s32.totalorder %s129, 0
    %s132 = sadd.s32 %s131, 1
    %s133 = scalar_select %p130, %s131, %s132
    %p136 = pneg %p130
    %p137 = scmp.eq.s32.totalorder %s11, 1
    %p138 = por %p136, %p137
    %p139 = scmp.ne.s32.totalorder %s131, %s134
    %p140 = scmp.eq.s32.totalorder %s11, 0
    %p141 = por %p139, %p140
    %p142 = scmp.ne.s32.totalorder %s131, %s134
    %p143 = scmp.eq.s32.totalorder %s16, 1
    %p144 = por %p142, %p143
    %p145 = scmp.ne.s32.totalorder %s134, %s135
    %p146 = scmp.eq.s32.totalorder %s16, 0
    %p147 = por %p145, %p146
    %p148 = scmp.ne.s32.totalorder %s134, %s135
    %p149 = scmp.eq.s32.totalorder %s17, 1
    %p150 = por %p148, %p149
    %p152 = scmp.ne.s32.totalorder %s135, %s151
    %p153 = scmp.eq.s32.totalorder %s17, 0
    %p154 = por %p152, %p153
    %p155 = scmp.le.s32.totalorder 1, %s11
    %p156 = scmp.lt.s32.totalorder %s11, 3
    %p157 = pnand %p155, %p156
    %p158 = pneg %p157
    // Predicated region
    $region9: #{mobilenet_forward.18} parent=5 // pred_check
      _
    $region10: #{mobilenet_forward.18} parent=5 // pred_check_branch
      %160 = sbr.rel (%p157) target = $region12
    $region11: #{mobilenet_forward.18} parent=5 // pred_region
      %s161 = ssub.s32 %s11, 1
      // Predicated region
      $region13: #{mobilenet_forward.18} parent=11 // pred_check
        %p162 = pneg %p58
      $region14: #{mobilenet_forward.18} parent=11 // pred_check_branch
        %164 = sbr.rel (%p162) target = $region16
      $region15: #{mobilenet_forward.18} parent=11 // pred_region
        _
      $region16: #{mobilenet_forward.18} parent=11 // pred_fallthru
        _
      // Predicated region
      $region17: #{mobilenet_forward.18} parent=11 // pred_check
        %p165 = pneg %p79
      $region18: #{mobilenet_forward.18} parent=11 // pred_check_branch
        %167 = sbr.rel (%p165) target = $region20
      $region19: #{mobilenet_forward.18} parent=11 // pred_region
        _
      $region20: #{mobilenet_forward.18} parent=11 // pred_fallthru
        _
      // Predicated region
      $region21: #{mobilenet_forward.18} parent=11 // pred_check
        %p168 = pneg %p100
      $region22: #{mobilenet_forward.18} parent=11 // pred_check_branch
        %170 = sbr.rel (%p168) target = $region24
      $region23: #{mobilenet_forward.18} parent=11 // pred_region
        _
      $region24: #{mobilenet_forward.18} parent=11 // pred_fallthru
        _
      // Predicated region
      $region25: #{mobilenet_forward.18} parent=11 // pred_check
        %p171 = pneg %p121
      $region26: #{mobilenet_forward.18} parent=11 // pred_check_branch
        %173 = sbr.rel (%p171) target = $region28
      $region27: #{mobilenet_forward.18} parent=11 // pred_region
        _
      $region28: #{mobilenet_forward.18} parent=11 // pred_fallthru
        _
    $region12: #{mobilenet_forward.18} parent=5 // pred_fallthru
      _
    %p174 = scmp.lt.s32.totalorder %s11, 2
    // Predicated region
    $region29: #{mobilenet_forward.18} parent=5 // pred_check
      %p175 = pneg %p174
    $region30: #{mobilenet_forward.18} parent=5 // pred_check_branch
      %177 = sbr.rel (%p175) target = $region32
    $region31: #{mobilenet_forward.18} parent=5 // pred_region
      // Predicated region
      $region33: #{mobilenet_forward.18} parent=31 // pred_check
        %p178 = pneg %p31
      $region34: #{mobilenet_forward.18} parent=31 // pred_check_branch
        %180 = sbr.rel (%p178) target = $region36
      $region35: #{mobilenet_forward.18} parent=31 // pred_region
        %p181 = scmp.lt.s32.totalorder %s11, 1
        %s182 = scalar_select %p181, %s11, 1
        %s183 = smul.addr %s182, 13
        %s184 = smul.addr %s183, 4
        %s185 = scalar_lea.vmem %s0, %s184
      $region36: #{mobilenet_forward.18} parent=31 // pred_fallthru
        _
    $region32: #{mobilenet_forward.18} parent=5 // pred_fallthru
      _
    %p186 = scmp.le.s32.totalorder 1, %s11
    %p187 = scmp.lt.s32.totalorder %s11, 3
    %p188 = pnand %p186, %p187
    %p189 = pneg %p188
    // Predicated region
    $region37: #{mobilenet_forward.18} parent=5 // pred_check
      _
    $region38: #{mobilenet_forward.18} parent=5 // pred_check_branch
      %191 = sbr.rel (%p188) target = $region40
    $region39: #{mobilenet_forward.18} parent=5 // pred_region
      %s192 = ssub.s32 %s11, 1
      %p193 = scmp.lt.s32.totalorder %s16, 1
      %s194 = scalar_select %p193, %s16, 1
      %s195 = smul.addr %s194, 13
      %s196 = smul.addr %s195, 4
      %s197 = scalar_lea.vmem %s0, %s196
      %p198 = pneg %p37
      %p199 = pneg %p34
      %p200 = pneg %p58
      %p201 = pneg %p55
      %p202 = pneg %p79
      %p203 = pneg %p76
      %p204 = pneg %p100
      %p205 = pneg %p97
      %p206 = pneg %p121
      %p207 = pneg %p118
      %p208 = pneg %p147
      %p209 = pneg %p144
      %p210 = scmp.lt.s32.totalorder %s16, 1
      %s211 = scalar_select %p210, %s16, 1
      %s212 = smul.addr %s211, 10
      %s213 = smul.addr %s212, 4
      %s214 = scalar_lea.vmem %s5, %s213
      %p215 = scmp.lt.s32.totalorder %s16, 1
      %s216 = scalar_select %p215, %s16, 1
      %s217 = smul.addr %s216, 13
      %s218 = smul.addr %s217, 4
      %s219 = scalar_lea.vmem %s0, %s218
      %p220 = scmp.lt.s32.totalorder %s16, 1
      %s221 = scalar_select %p220, %s16, 1
      %s222 = smul.addr %s221, 10
      %s223 = smul.addr %s222, 4
      %s224 = scalar_lea.vmem %s5, %s223
      %v226 = vld [vmem:[%s1] sm:$0x1]
      %v227 = vld [vmem:[%s1 + $0x1] sm:$0x1]
      %v228 = vld [vmem:[%s1 + $0x2] sm:$0x1]
      %v229 = vld [vmem:[%s1 + $0x3] sm:$0x1]
      %v230 = vld [vmem:[%s1 + $0x4] sm:$0x1]
      %v231 = vld [vmem:[%s1 + $0x5] sm:$0x1]
      %v232 = vld [vmem:[%s1 + $0x6] sm:$0x1]
      %v233 = vld [vmem:[%s1 + $0x7] sm:$0x1]
      %v234 = vld [vmem:[%s1 + $0x8] sm:$0x1]
      %v235 = vld [vmem:[%s2] sm:$0x1]
      %v237 = vperm.slane %v235, 0
      %v239 = vld [vmem:[%s219] sm:$0xf]
      %v240 = vld [vmem:[%s219 + $0x4] sm:$0xf]
      %v241 = vld [vmem:[%s219 + $0x8] sm:$0xf]
      %v242 = vld [vmem:[%s219 + $0xc] sm:$0xf]
      %v243 = vld [vmem:[%s219 + $0x10] sm:$0xf]
      %v244 = vld [vmem:[%s219 + $0x14] sm:$0xf]
      %v245 = vld [vmem:[%s219 + $0x18] sm:$0xf]
      %v246 = vld [vmem:[%s219 + $0x1c] sm:$0xf]
      %v247 = vld [vmem:[%s219 + $0x20] sm:$0xf]
      %v248 = vld [vmem:[%s219 + $0x24] sm:$0xf]
      %v249 = vunpack.c.l.bf16 %v239
      %v250 = vunpack.c.l.bf16 %v240
      %v251 = vunpack.c.l.bf16 %v241
      %v252 = vunpack.c.l.bf16 %v242
      %v253 = vunpack.c.l.bf16 %v243
      %v254 = vunpack.c.l.bf16 %v244
      %v255 = vunpack.c.l.bf16 %v245
      %v256 = vunpack.c.l.bf16 %v246
      %v257 = vunpack.c.l.bf16 %v247
      %v258 = vunpack.c.l.bf16 %v248
      %v260 = vperm.slane %v226, 0
      %v262 = vmul.f32 %v249, %v260
      %v263 = vmul.f32 %v250, %v260
      %v264 = vmul.f32 %v251, %v260
      %v265 = vmul.f32 %v252, %v260
      %v266 = vmul.f32 %v253, %v260
      %v267 = vmul.f32 %v254, %v260
      %v268 = vmul.f32 %v255, %v260
      %v269 = vmul.f32 %v256, %v260
      %v270 = vmul.f32 %v257, %v260
      %v271 = vmul.f32 %v258, %v260
      %v272 = vadd.f32 %v237, %v262
      %v273 = vadd.f32 %v237, %v263
      %v274 = vadd.f32 %v237, %v264
      %v275 = vadd.f32 %v237, %v265
      %v276 = vadd.f32 %v237, %v266
      %v277 = vadd.f32 %v237, %v267
      %v278 = vadd.f32 %v237, %v268
      %v279 = vadd.f32 %v237, %v269
      %v280 = vadd.f32 %v237, %v270
      %v281 = vadd.f32 %v237, %v271
      %v282 = vld [vmem:[%s219 + $0x28] sm:$0x1]
      %v283 = vunpack.c.l.bf16 %v282
      %v285 = vperm.slane %v227, 0
      %v287 = vmul.f32 %v249, %v285
      %v288 = vmul.f32 %v250, %v285
      %v289 = vmul.f32 %v251, %v285
      %v290 = vmul.f32 %v252, %v285
      %v291 = vmul.f32 %v253, %v285
      %v292 = vmul.f32 %v254, %v285
      %v293 = vmul.f32 %v255, %v285
      %v294 = vmul.f32 %v256, %v285
      %v295 = vmul.f32 %v257, %v285
      %v296 = vmul.f32 %v258, %v285
      %v297 = vmul.f32 %v283, %v285
      %vm309 = vcmask 1046528
      %v310 = vrot.slane %v287, 1
      %v311 = vrot.slane %v288, 1
      %v312 = vsel %vm309, %v310, %v311
      %v313 = vrot.slane %v289, 1
      %v314 = vsel %vm309, %v311, %v313
      %v315 = vrot.slane %v290, 1
      %v316 = vsel %vm309, %v313, %v315
      %v317 = vrot.slane %v291, 1
      %v318 = vsel %vm309, %v315, %v317
      %v319 = vrot.slane %v292, 1
      %v320 = vsel %vm309, %v317, %v319
      %v321 = vrot.slane %v293, 1
      %v322 = vsel %vm309, %v319, %v321
      %v323 = vrot.slane %v294, 1
      %v324 = vsel %vm309, %v321, %v323
      %v325 = vrot.slane %v295, 1
      %v326 = vsel %vm309, %v323, %v325
      %v327 = vrot.slane %v296, 1
      %v328 = vsel %vm309, %v325, %v327
      %v329 = vrot.slane %v297, 1
      %v330 = vsel %vm309, %v327, %v329
      %v341 = vadd.f32 %v272, %v312
      %v342 = vadd.f32 %v273, %v314
      %v343 = vadd.f32 %v274, %v316
      %v344 = vadd.f32 %v275, %v318
      %v345 = vadd.f32 %v276, %v320
      %v346 = vadd.f32 %v277, %v322
      %v347 = vadd.f32 %v278, %v324
      %v348 = vadd.f32 %v279, %v326
      %v349 = vadd.f32 %v280, %v328
      %v350 = vadd.f32 %v281, %v330
      %v351 = vld [vmem:[%s219] sm:$0xe]
      %v352 = vunpack.c.l.bf16 %v351
      %v354 = vperm.slane %v228, 0
      %v356 = vmul.f32 %v352, %v354
      %v357 = vmul.f32 %v250, %v354
      %v358 = vmul.f32 %v251, %v354
      %v359 = vmul.f32 %v252, %v354
      %v360 = vmul.f32 %v253, %v354
      %v361 = vmul.f32 %v254, %v354
      %v362 = vmul.f32 %v255, %v354
      %v363 = vmul.f32 %v256, %v354
      %v364 = vmul.f32 %v257, %v354
      %v365 = vmul.f32 %v258, %v354
      %v366 = vmul.f32 %v283, %v354
      %vm378 = vcmask 1045504
      %v379 = vrot.slane %v356, 2
      %v380 = vrot.slane %v357, 2
      %v381 = vsel %vm378, %v379, %v380
      %v382 = vrot.slane %v358, 2
      %v383 = vsel %vm378, %v380, %v382
      %v384 = vrot.slane %v359, 2
      %v385 = vsel %vm378, %v382, %v384
      %v386 = vrot.slane %v360, 2
      %v387 = vsel %vm378, %v384, %v386
      %v388 = vrot.slane %v361, 2
      %v389 = vsel %vm378, %v386, %v388
      %v390 = vrot.slane %v362, 2
      %v391 = vsel %vm378, %v388, %v390
      %v392 = vrot.slane %v363, 2
      %v393 = vsel %vm378, %v390, %v392
      %v394 = vrot.slane %v364, 2
      %v395 = vsel %vm378, %v392, %v394
      %v396 = vrot.slane %v365, 2
      %v397 = vsel %vm378, %v394, %v396
      %v398 = vrot.slane %v366, 2
      %v399 = vsel %vm378, %v396, %v398
      %v410 = vadd.f32 %v341, %v381
      %v411 = vadd.f32 %v342, %v383
      %v412 = vadd.f32 %v343, %v385
      %v413 = vadd.f32 %v344, %v387
      %v414 = vadd.f32 %v345, %v389
      %v415 = vadd.f32 %v346, %v391
      %v416 = vadd.f32 %v347, %v393
      %v417 = vadd.f32 %v348, %v395
      %v418 = vadd.f32 %v349, %v397
      %v419 = vadd.f32 %v350, %v399
      %v420 = vld [vmem:[%s219 + $0x4] sm:$0xe]
      %v421 = vld [vmem:[%s219 + $0x28] sm:$0xf]
      %v422 = vld [vmem:[%s219 + $0x2c] sm:$0x1]
      %v423 = vunpack.c.l.bf16 %v420
      %v424 = vunpack.c.l.bf16 %v421
      %v425 = vunpack.c.l.bf16 %v422
      %v427 = vperm.slane %v229, 0
      %v429 = vmul.f32 %v423, %v427
      %v430 = vmul.f32 %v251, %v427
      %v431 = vmul.f32 %v252, %v427
      %v432 = vmul.f32 %v253, %v427
      %v433 = vmul.f32 %v254, %v427
      %v434 = vmul.f32 %v255, %v427
      %v435 = vmul.f32 %v256, %v427
      %v436 = vmul.f32 %v257, %v427
      %v437 = vmul.f32 %v258, %v427
      %v438 = vmul.f32 %v424, %v427
      %v439 = vmul.f32 %v425, %v427
      %v451 = vrot.slane %v429, 2
      %v452 = vrot.slane %v430, 2
      %v453 = vsel %vm378, %v451, %v452
      %v454 = vrot.slane %v431, 2
      %v455 = vsel %vm378, %v452, %v454
      %v456 = vrot.slane %v432, 2
      %v457 = vsel %vm378, %v454, %v456
      %v458 = vrot.slane %v433, 2
      %v459 = vsel %vm378, %v456, %v458
      %v460 = vrot.slane %v434, 2
      %v461 = vsel %vm378, %v458, %v460
      %v462 = vrot.slane %v435, 2
      %v463 = vsel %vm378, %v460, %v462
      %v464 = vrot.slane %v436, 2
      %v465 = vsel %vm378, %v462, %v464
      %v466 = vrot.slane %v437, 2
      %v467 = vsel %vm378, %v464, %v466
      %v468 = vrot.slane %v438, 2
      %v469 = vsel %vm378, %v466, %v468
      %v470 = vrot.slane %v439, 2
      %v471 = vsel %vm378, %v468, %v470
      %v482 = vadd.f32 %v410, %v453
      %v483 = vadd.f32 %v411, %v455
      %v484 = vadd.f32 %v412, %v457
      %v485 = vadd.f32 %v413, %v459
      %v486 = vadd.f32 %v414, %v461
      %v487 = vadd.f32 %v415, %v463
      %v488 = vadd.f32 %v416, %v465
      %v489 = vadd.f32 %v417, %v467
      %v490 = vadd.f32 %v418, %v469
      %v491 = vadd.f32 %v419, %v471
      %v492 = vld [vmem:[%s219 + $0x2c] sm:$0x3]
      %v493 = vunpack.c.l.bf16 %v492
      %v495 = vperm.slane %v230, 0
      %v497 = vmul.f32 %v423, %v495
      %v498 = vmul.f32 %v251, %v495
      %v499 = vmul.f32 %v252, %v495
      %v500 = vmul.f32 %v253, %v495
      %v501 = vmul.f32 %v254, %v495
      %v502 = vmul.f32 %v255, %v495
      %v503 = vmul.f32 %v256, %v495
      %v504 = vmul.f32 %v257, %v495
      %v505 = vmul.f32 %v258, %v495
      %v506 = vmul.f32 %v424, %v495
      %v507 = vmul.f32 %v493, %v495
      %vm519 = vcmask 1044480
      %v520 = vrot.slane %v497, 3
      %v521 = vrot.slane %v498, 3
      %v522 = vsel %vm519, %v520, %v521
      %v523 = vrot.slane %v499, 3
      %v524 = vsel %vm519, %v521, %v523
      %v525 = vrot.slane %v500, 3
      %v526 = vsel %vm519, %v523, %v525
      %v527 = vrot.slane %v501, 3
      %v528 = vsel %vm519, %v525, %v527
      %v529 = vrot.slane %v502, 3
      %v530 = vsel %vm519, %v527, %v529
      %v531 = vrot.slane %v503, 3
      %v532 = vsel %vm519, %v529, %v531
      %v533 = vrot.slane %v504, 3
      %v534 = vsel %vm519, %v531, %v533
      %v535 = vrot.slane %v505, 3
      %v536 = vsel %vm519, %v533, %v535
      %v537 = vrot.slane %v506, 3
      %v538 = vsel %vm519, %v535, %v537
      %v539 = vrot.slane %v507, 3
      %v540 = vsel %vm519, %v537, %v539
      %v551 = vadd.f32 %v482, %v522
      %v552 = vadd.f32 %v483, %v524
      %v553 = vadd.f32 %v484, %v526
      %v554 = vadd.f32 %v485, %v528
      %v555 = vadd.f32 %v486, %v530
      %v556 = vadd.f32 %v487, %v532
      %v557 = vadd.f32 %v488, %v534
      %v558 = vadd.f32 %v489, %v536
      %v559 = vadd.f32 %v490, %v538
      %v560 = vadd.f32 %v491, %v540
      %v561 = vld [vmem:[%s219 + $0x4] sm:$0xc]
      %v562 = vunpack.c.l.bf16 %v561
      %v564 = vperm.slane %v231, 0
      %v566 = vmul.f32 %v562, %v564
      %v567 = vmul.f32 %v251, %v564
      %v568 = vmul.f32 %v252, %v564
      %v569 = vmul.f32 %v253, %v564
      %v570 = vmul.f32 %v254, %v564
      %v571 = vmul.f32 %v255, %v564
      %v572 = vmul.f32 %v256, %v564
      %v573 = vmul.f32 %v257, %v564
      %v574 = vmul.f32 %v258, %v564
      %v575 = vmul.f32 %v424, %v564
      %v576 = vmul.f32 %v493, %v564
      %vm588 = vcmask 1043456
      %v589 = vrot.slane %v566, 4
      %v590 = vrot.slane %v567, 4
      %v591 = vsel %vm588, %v589, %v590
      %v592 = vrot.slane %v568, 4
      %v593 = vsel %vm588, %v590, %v592
      %v594 = vrot.slane %v569, 4
      %v595 = vsel %vm588, %v592, %v594
      %v596 = vrot.slane %v570, 4
      %v597 = vsel %vm588, %v594, %v596
      %v598 = vrot.slane %v571, 4
      %v599 = vsel %vm588, %v596, %v598
      %v600 = vrot.slane %v572, 4
      %v601 = vsel %vm588, %v598, %v600
      %v602 = vrot.slane %v573, 4
      %v603 = vsel %vm588, %v600, %v602
      %v604 = vrot.slane %v574, 4
      %v605 = vsel %vm588, %v602, %v604
      %v606 = vrot.slane %v575, 4
      %v607 = vsel %vm588, %v604, %v606
      %v608 = vrot.slane %v576, 4
      %v609 = vsel %vm588, %v606, %v608
      %v620 = vadd.f32 %v551, %v591
      %v621 = vadd.f32 %v552, %v593
      %v622 = vadd.f32 %v553, %v595
      %v623 = vadd.f32 %v554, %v597
      %v624 = vadd.f32 %v555, %v599
      %v625 = vadd.f32 %v556, %v601
      %v626 = vadd.f32 %v557, %v603
      %v627 = vadd.f32 %v558, %v605
      %v628 = vadd.f32 %v559, %v607
      %v629 = vadd.f32 %v560, %v609
      %v630 = vld [vmem:[%s219 + $0x8] sm:$0xc]
      %v631 = vld [vmem:[%s219 + $0x2c] sm:$0xf]
      %v632 = vld [vmem:[%s219 + $0x30] sm:$0x3]
      %v633 = vunpack.c.l.bf16 %v630
      %v634 = vunpack.c.l.bf16 %v631
      %v635 = vunpack.c.l.bf16 %v632
      %v637 = vperm.slane %v232, 0
      %v639 = vmul.f32 %v633, %v637
      %v640 = vmul.f32 %v252, %v637
      %v641 = vmul.f32 %v253, %v637
      %v642 = vmul.f32 %v254, %v637
      %v643 = vmul.f32 %v255, %v637
      %v644 = vmul.f32 %v256, %v637
      %v645 = vmul.f32 %v257, %v637
      %v646 = vmul.f32 %v258, %v637
      %v647 = vmul.f32 %v424, %v637
      %v648 = vmul.f32 %v634, %v637
      %v649 = vmul.f32 %v635, %v637
      %v661 = vrot.slane %v639, 4
      %v662 = vrot.slane %v640, 4
      %v663 = vsel %vm588, %v661, %v662
      %v664 = vrot.slane %v641, 4
      %v665 = vsel %vm588, %v662, %v664
      %v666 = vrot.slane %v642, 4
      %v667 = vsel %vm588, %v664, %v666
      %v668 = vrot.slane %v643, 4
      %v669 = vsel %vm588, %v666, %v668
      %v670 = vrot.slane %v644, 4
      %v671 = vsel %vm588, %v668, %v670
      %v672 = vrot.slane %v645, 4
      %v673 = vsel %vm588, %v670, %v672
      %v674 = vrot.slane %v646, 4
      %v675 = vsel %vm588, %v672, %v674
      %v676 = vrot.slane %v647, 4
      %v677 = vsel %vm588, %v674, %v676
      %v678 = vrot.slane %v648, 4
      %v679 = vsel %vm588, %v676, %v678
      %v680 = vrot.slane %v649, 4
      %v681 = vsel %vm588, %v678, %v680
      %v692 = vadd.f32 %v620, %v663
      %v693 = vadd.f32 %v621, %v665
      %v694 = vadd.f32 %v622, %v667
      %v695 = vadd.f32 %v623, %v669
      %v696 = vadd.f32 %v624, %v671
      %v697 = vadd.f32 %v625, %v673
      %v698 = vadd.f32 %v626, %v675
      %v699 = vadd.f32 %v627, %v677
      %v700 = vadd.f32 %v628, %v679
      %v701 = vadd.f32 %v629, %v681
      %v702 = vld [vmem:[%s219 + $0x30] sm:$0x7]
      %v703 = vunpack.c.l.bf16 %v702
      %v705 = vperm.slane %v233, 0
      %v707 = vmul.f32 %v633, %v705
      %v708 = vmul.f32 %v252, %v705
      %v709 = vmul.f32 %v253, %v705
      %v710 = vmul.f32 %v254, %v705
      %v711 = vmul.f32 %v255, %v705
      %v712 = vmul.f32 %v256, %v705
      %v713 = vmul.f32 %v257, %v705
      %v714 = vmul.f32 %v258, %v705
      %v715 = vmul.f32 %v424, %v705
      %v716 = vmul.f32 %v634, %v705
      %v717 = vmul.f32 %v703, %v705
      %vm729 = vcmask 1042432
      %v730 = vrot.slane %v707, 5
      %v731 = vrot.slane %v708, 5
      %v732 = vsel %vm729, %v730, %v731
      %v733 = vrot.slane %v709, 5
      %v734 = vsel %vm729, %v731, %v733
      %v735 = vrot.slane %v710, 5
      %v736 = vsel %vm729, %v733, %v735
      %v737 = vrot.slane %v711, 5
      %v738 = vsel %vm729, %v735, %v737
      %v739 = vrot.slane %v712, 5
      %v740 = vsel %vm729, %v737, %v739
      %v741 = vrot.slane %v713, 5
      %v742 = vsel %vm729, %v739, %v741
      %v743 = vrot.slane %v714, 5
      %v744 = vsel %vm729, %v741, %v743
      %v745 = vrot.slane %v715, 5
      %v746 = vsel %vm729, %v743, %v745
      %v747 = vrot.slane %v716, 5
      %v748 = vsel %vm729, %v745, %v747
      %v749 = vrot.slane %v717, 5
      %v750 = vsel %vm729, %v747, %v749
      %v761 = vadd.f32 %v692, %v732
      %v762 = vadd.f32 %v693, %v734
      %v763 = vadd.f32 %v694, %v736
      %v764 = vadd.f32 %v695, %v738
      %v765 = vadd.f32 %v696, %v740
      %v766 = vadd.f32 %v697, %v742
      %v767 = vadd.f32 %v698, %v744
      %v768 = vadd.f32 %v699, %v746
      %v769 = vadd.f32 %v700, %v748
      %v770 = vadd.f32 %v701, %v750
      %v771 = vld [vmem:[%s219 + $0x8] sm:$0x8]
      %v772 = vunpack.c.l.bf16 %v771
      %v774 = vperm.slane %v234, 0
      %v776 = vmul.f32 %v772, %v774
      %v777 = vmul.f32 %v252, %v774
      %v778 = vmul.f32 %v253, %v774
      %v779 = vmul.f32 %v254, %v774
      %v780 = vmul.f32 %v255, %v774
      %v781 = vmul.f32 %v256, %v774
      %v782 = vmul.f32 %v257, %v774
      %v783 = vmul.f32 %v258, %v774
      %v784 = vmul.f32 %v424, %v774
      %v785 = vmul.f32 %v634, %v774
      %v786 = vmul.f32 %v703, %v774
      %vm798 = vcmask 1041408
      %v799 = vrot.slane %v776, 6
      %v800 = vrot.slane %v777, 6
      %v801 = vsel %vm798, %v799, %v800
      %v802 = vrot.slane %v778, 6
      %v803 = vsel %vm798, %v800, %v802
      %v804 = vrot.slane %v779, 6
      %v805 = vsel %vm798, %v802, %v804
      %v806 = vrot.slane %v780, 6
      %v807 = vsel %vm798, %v804, %v806
      %v808 = vrot.slane %v781, 6
      %v809 = vsel %vm798, %v806, %v808
      %v810 = vrot.slane %v782, 6
      %v811 = vsel %vm798, %v808, %v810
      %v812 = vrot.slane %v783, 6
      %v813 = vsel %vm798, %v810, %v812
      %v814 = vrot.slane %v784, 6
      %v815 = vsel %vm798, %v812, %v814
      %v816 = vrot.slane %v785, 6
      %v817 = vsel %vm798, %v814, %v816
      %v818 = vrot.slane %v786, 6
      %v819 = vsel %vm798, %v816, %v818
      %v830 = vadd.f32 %v761, %v801
      %v831 = vadd.f32 %v762, %v803
      %v832 = vadd.f32 %v763, %v805
      %v833 = vadd.f32 %v764, %v807
      %v834 = vadd.f32 %v765, %v809
      %v835 = vadd.f32 %v766, %v811
      %v836 = vadd.f32 %v767, %v813
      %v837 = vadd.f32 %v768, %v815
      %v838 = vadd.f32 %v769, %v817
      %v839 = vadd.f32 %v770, %v819
      %v840 = vmax.f32 %v830, 0.0
      %v841 = vmax.f32 %v831, 0.0
      %v842 = vmax.f32 %v832, 0.0
      %v843 = vmax.f32 %v833, 0.0
      %v844 = vmax.f32 %v834, 0.0
      %v845 = vmax.f32 %v835, 0.0
      %v846 = vmax.f32 %v836, 0.0
      %v847 = vmax.f32 %v837, 0.0
      %v848 = vmax.f32 %v838, 0.0
      %v849 = vmax.f32 %v839, 0.0
      %v850 = vpack.c.bf16 %v841, %v840
      %v851 = vpack.c.bf16 %v843, %v842
      %v852 = vpack.c.bf16 %v845, %v844
      %v853 = vpack.c.bf16 %v847, %v846
      %v854 = vpack.c.bf16 %v849, %v848
      %v855 = vld [vmem:[%s3] sm:$0xf]
      %v856 = vld [vmem:[%s3 + $0x4] sm:$0xf]
      %v857 = vld [vmem:[%s3 + $0x8] sm:$0xf]
      %v858 = vld [vmem:[%s3 + $0xc] sm:$0xf]
      %v859 = vld [vmem:[%s4] sm:$0x1]
      %v861 = vperm.slane %v859, 0
      %v867 = vunpack.c.l.b16 %v855
      %v868 = vunpack.c.l.b16 %v856
      %v869 = vunpack.c.l.b16 %v857
      %v870 = vunpack.c.l.b16 %v858
      %v871 = vpack.c.b16 %v868, %v867
      %v872 = vpack.c.b16 %v870, %v869
      %vm875 = vcmask 261120
      %v877 = vsel %vm875, %v850, 0
      %v880 = vsel %vm875, %v851, 0
      %v883 = vsel %vm875, %v852, 0
      %v886 = vsel %vm875, %v853, 0
      %v889 = vsel %vm875, %v854, 0
      %891 = vmatpush.bf16.msra.mxu0 0
      %892 = vmatpush.bf16.msra.mxu0 0
      %893 = vmatpush.bf16.msra.mxu0 0
      %894 = vmatpush.bf16.msra.mxu0 0
      %895 = vmatpush.bf16.msra.mxu0 0
      %896 = vmatpush.bf16.msra.mxu0 0
      %897 = vmatpush.bf16.msra.mxu0 %v872
      %898 = vmatpush.bf16.msra.mxu0 %v871
      %899 = vmatmul.bf16.gmra.mxu0 %v877
      %v900 = vpop.f32.mrf.mxu0
      %v901 = vadd.f32 %v861, %v900
      %v902 = vpop.f32.mrf.mxu0
      %v903 = vadd.f32 %v861, %v902
      %904 = vmatmul.bf16.gmra.mxu0 %v880
      %v905 = vpop.f32.mrf.mxu0
      %v906 = vadd.f32 %v861, %v905
      %v907 = vpop.f32.mrf.mxu0
      %v908 = vadd.f32 %v861, %v907
      %909 = vmatmul.bf16.gmra.mxu0 %v883
      %v910 = vpop.f32.mrf.mxu0
      %v911 = vadd.f32 %v861, %v910
      %v912 = vpop.f32.mrf.mxu0
      %v913 = vadd.f32 %v861, %v912
      %914 = vmatmul.bf16.gmra.mxu0 %v886
      %v915 = vpop.f32.mrf.mxu0
      %v916 = vadd.f32 %v861, %v915
      %v917 = vpop.f32.mrf.mxu0
      %v918 = vadd.f32 %v861, %v917
      %919 = vmatmul.bf16.gmra.mxu0 %v889
      %v920 = vpop.f32.mrf.mxu0
      %v921 = vadd.f32 %v861, %v920
      %v922 = vpop.f32.mrf.mxu0
      %v923 = vadd.f32 %v861, %v922
      %924 = vdwg.mxu0
      %v925 = vmax.f32 %v901, 0.0
      %v926 = vmax.f32 %v903, 0.0
      %v927 = vmax.f32 %v906, 0.0
      %v928 = vmax.f32 %v908, 0.0
      %v929 = vmax.f32 %v911, 0.0
      %v930 = vmax.f32 %v913, 0.0
      %v931 = vmax.f32 %v916, 0.0
      %v932 = vmax.f32 %v918, 0.0
      %v933 = vmax.f32 %v921, 0.0
      %v934 = vmax.f32 %v923, 0.0
      %v935 = vpack.c.bf16 %v925, %v925
      %v936 = vpack.c.bf16 %v926, %v926
      %v937 = vpack.c.bf16 %v927, %v927
      %v938 = vpack.c.bf16 %v928, %v928
      %v939 = vpack.c.bf16 %v929, %v929
      %v940 = vpack.c.bf16 %v930, %v930
      %v941 = vpack.c.bf16 %v931, %v931
      %v942 = vpack.c.bf16 %v932, %v932
      %v943 = vpack.c.bf16 %v933, %v933
      %v944 = vpack.c.bf16 %v934, %v934
      %vm945 = vcmask 257024
      %946 = vst.msk [vmem:[%s224] sm:$0xf] %vm945, %v935
      %947 = vst.msk [vmem:[%s224 + $0x4] sm:$0xf] %vm945, %v936
      %948 = vst.msk [vmem:[%s224 + $0x8] sm:$0xf] %vm945, %v937
      %949 = vst.msk [vmem:[%s224 + $0xc] sm:$0xf] %vm945, %v938
      %950 = vst.msk [vmem:[%s224 + $0x10] sm:$0xf] %vm945, %v939
      %951 = vst.msk [vmem:[%s224 + $0x14] sm:$0xf] %vm945, %v940
      %952 = vst.msk [vmem:[%s224 + $0x18] sm:$0xf] %vm945, %v941
      %953 = vst.msk [vmem:[%s224 + $0x1c] sm:$0xf] %vm945, %v942
      %954 = vst.msk [vmem:[%s224 + $0x20] sm:$0xf] %vm945, %v943
      %955 = vst.msk [vmem:[%s224 + $0x24] sm:$0xf] %vm945, %v944
      %p956 = scmp.lt.s32.totalorder %s16, 1
      %s957 = scalar_select %p956, %s16, 1
      %s958 = smul.addr %s957, 10
      %s959 = smul.addr %s958, 4
      %s960 = scalar_lea.vmem %s5, %s959
      // Predicated region
      $region41: #{mobilenet_forward.18} parent=39 // pred_check
        %p961 = pneg %p144
      $region42: #{mobilenet_forward.18} parent=39 // pred_check_branch
        %963 = sbr.rel (%p961) target = $region44
      $region43: #{mobilenet_forward.18} parent=39 // pred_region
        _
      $region44: #{mobilenet_forward.18} parent=39 // pred_fallthru
        _
    $region40: #{mobilenet_forward.18} parent=5 // pred_fallthru
      _
    %p964 = scmp.le.s32.totalorder 2, %s11
    // Predicated region
    $region45: #{mobilenet_forward.18} parent=5 // pred_check
      %p965 = pneg %p964
    $region46: #{mobilenet_forward.18} parent=5 // pred_check_branch
      %967 = sbr.rel (%p965) target = $region48
    $region47: #{mobilenet_forward.18} parent=5 // pred_region
      %s968 = ssub.s32 %s11, 2
      // Predicated region
      $region49: #{mobilenet_forward.18} parent=47 // pred_check
        %p969 = pneg %p150
      $region50: #{mobilenet_forward.18} parent=47 // pred_check_branch
        %971 = sbr.rel (%p969) target = $region52
      $region51: #{mobilenet_forward.18} parent=47 // pred_region
        %p972 = scmp.lt.s32.totalorder %s17, 1
        %s973 = scalar_select %p972, %s17, 1
        %s974 = smul.addr %s973, 10
        %s975 = smul.addr %s974, 4
        %s976 = scalar_lea.vmem %s5, %s975
      $region52: #{mobilenet_forward.18} parent=47 // pred_fallthru
        _
    $region48: #{mobilenet_forward.18} parent=5 // pred_fallthru
      _
  $region6: #{mobilenet_forward.18} parent=0 // loop_footer
    %s15 = sadd.s32 1, %s11
  $region7: #{mobilenet_forward.18} parent=0 // loop_footer_branch
    %10 = sbr.rel target = $region3
  $region8: #{mobilenet_forward.18} parent=0 // loop_exit
    _

// kernel: mobilenet_forward.20
$region0: #{mobilenet_forward.20}
  #allocation0 [shape = 'u32[]', space=smem, size = 0x4, offset = 0x4, fixed_abs, tag = 'smem constant byte address 0x4 - core index']
  #allocation1 [shape = 'u32[72,128]{1,0:T(1,128)}', space=vmem, size = 0x9000, scoped, tag = 'internal scratch']
  %s0 = inlined_call_operand.vmem [shape: bf16[2,1,38,64], index: 0, kind: input, shape index: {}]
  %s1 = inlined_call_operand.vmem [shape: f32[9,1,64], index: 1, kind: input, shape index: {}]
  %s2 = inlined_call_operand.vmem [shape: f32[1,64], index: 2, kind: input, shape index: {}]
  %s3 = inlined_call_operand.vmem [shape: bf16[64,64], index: 3, kind: input, shape index: {}]
  %s4 = inlined_call_operand.vmem [shape: f32[1,64], index: 4, kind: input, shape index: {}]
  %s5 = inlined_call_operand.vmem [shape: bf16[2,24,64], index: 5, kind: output, shape index: {}]
  %s6 = sld [smem:[#allocation0]]
  $region53: #{mobilenet_forward.20} parent=0
    _
  %s8 = ssub.s32 1, %s6
  %s9 = scalar_select 0, %s8, %s6
  loop: start=0, step=1, limit=4
  $region2: #{mobilenet_forward.20} parent=0 // loop_pre_header
    _
  $region3: #{mobilenet_forward.20} parent=0 // loop_header
    %s11 = sphi 0, %s15
    %p12 = scmp.ge.s32.totalorder %s11, 4
    %s21 = sphi 0, %s23
    %s24 = sphi 0, %s21
    %s25 = sphi 0, %s24
    %s41 = sphi 0, %s25
    %s45 = sphi 0, %s45
    %s47 = sphi 0, %s45
    %s48 = sphi 0, %s47
    %s62 = sphi 0, %s48
    %s66 = sphi 0, %s66
    %s68 = sphi 0, %s66
    %s69 = sphi 0, %s68
    %s83 = sphi 0, %s69
    %s87 = sphi 0, %s87
    %s89 = sphi 0, %s87
    %s90 = sphi 0, %s89
    %s104 = sphi 0, %s90
    %s108 = sphi 0, %s108
    %s110 = sphi 0, %s108
    %s111 = sphi 0, %s110
    %s125 = sphi 0, %s111
    %s131 = sphi 0, %s133
    %s134 = sphi 0, %s131
    %s135 = sphi 0, %s134
    %s151 = sphi 0, %s135
  $region4: #{mobilenet_forward.20} parent=0 // loop_header_branch
    %14 = sbr.rel (%p12) target = $region8
  $region5: #{mobilenet_forward.20} parent=0 // loop_body
    %s16 = ssub.s32 %s11, 1
    %s17 = ssub.s32 %s11, 2
    %s18 = sadd.s32 %s11, 1
    %s19 = ssub.s32 %s11, %s18
    %p20 = scmp.eq.s32.totalorder %s19, 0
    %s22 = sadd.s32 %s21, 1
    %s23 = scalar_select %p20, %s21, %s22
    %p26 = pneg %p20
    %p27 = scmp.eq.s32.totalorder %s11, 1
    %p28 = por %p26, %p27
    %p29 = scmp.ne.s32.totalorder %s21, %s24
    %p30 = scmp.eq.s32.totalorder %s11, 0
    %p31 = por %p29, %p30
    %p32 = scmp.ne.s32.totalorder %s21, %s24
    %p33 = scmp.eq.s32.totalorder %s16, 1
    %p34 = por %p32, %p33
    %p35 = scmp.ne.s32.totalorder %s24, %s25
    %p36 = scmp.eq.s32.totalorder %s16, 0
    %p37 = por %p35, %p36
    %p38 = scmp.ne.s32.totalorder %s24, %s25
    %p39 = scmp.eq.s32.totalorder %s17, 1
    %p40 = por %p38, %p39
    %p42 = scmp.ne.s32.totalorder %s25, %s41
    %p43 = scmp.eq.s32.totalorder %s17, 0
    %p44 = por %p42, %p43
    %s46 = sadd.s32 %s45, 1
    %p49 = scmp.eq.s32.totalorder %s11, 1
    %p50 = scmp.ne.s32.totalorder %s45, %s47
    %p51 = scmp.eq.s32.totalorder %s11, 0
    %p52 = por %p50, %p51
    %p53 = scmp.ne.s32.totalorder %s45, %s47
    %p54 = scmp.eq.s32.totalorder %s16, 1
    %p55 = por %p53, %p54
    %p56 = scmp.ne.s32.totalorder %s47, %s48
    %p57 = scmp.eq.s32.totalorder %s16, 0
    %p58 = por %p56, %p57
    %p59 = scmp.ne.s32.totalorder %s47, %s48
    %p60 = scmp.eq.s32.totalorder %s17, 1
    %p61 = por %p59, %p60
    %p63 = scmp.ne.s32.totalorder %s48, %s62
    %p64 = scmp.eq.s32.totalorder %s17, 0
    %p65 = por %p63, %p64
    %s67 = sadd.s32 %s66, 1
    %p70 = scmp.eq.s32.totalorder %s11, 1
    %p71 = scmp.ne.s32.totalorder %s66, %s68
    %p72 = scmp.eq.s32.totalorder %s11, 0
    %p73 = por %p71, %p72
    %p74 = scmp.ne.s32.totalorder %s66, %s68
    %p75 = scmp.eq.s32.totalorder %s16, 1
    %p76 = por %p74, %p75
    %p77 = scmp.ne.s32.totalorder %s68, %s69
    %p78 = scmp.eq.s32.totalorder %s16, 0
    %p79 = por %p77, %p78
    %p80 = scmp.ne.s32.totalorder %s68, %s69
    %p81 = scmp.eq.s32.totalorder %s17, 1
    %p82 = por %p80, %p81
    %p84 = scmp.ne.s32.totalorder %s69, %s83
    %p85 = scmp.eq.s32.totalorder %s17, 0
    %p86 = por %p84, %p85
    %s88 = sadd.s32 %s87, 1
    %p91 = scmp.eq.s32.totalorder %s11, 1
    %p92 = scmp.ne.s32.totalorder %s87, %s89
    %p93 = scmp.eq.s32.totalorder %s11, 0
    %p94 = por %p92, %p93
    %p95 = scmp.ne.s32.totalorder %s87, %s89
    %p96 = scmp.eq.s32.totalorder %s16, 1
    %p97 = por %p95, %p96
    %p98 = scmp.ne.s32.totalorder %s89, %s90
    %p99 = scmp.eq.s32.totalorder %s16, 0
    %p100 = por %p98, %p99
    %p101 = scmp.ne.s32.totalorder %s89, %s90
    %p102 = scmp.eq.s32.totalorder %s17, 1
    %p103 = por %p101, %p102
    %p105 = scmp.ne.s32.totalorder %s90, %s104
    %p106 = scmp.eq.s32.totalorder %s17, 0
    %p107 = por %p105, %p106
    %s109 = sadd.s32 %s108, 1
    %p112 = scmp.eq.s32.totalorder %s11, 1
    %p113 = scmp.ne.s32.totalorder %s108, %s110
    %p114 = scmp.eq.s32.totalorder %s11, 0
    %p115 = por %p113, %p114
    %p116 = scmp.ne.s32.totalorder %s108, %s110
    %p117 = scmp.eq.s32.totalorder %s16, 1
    %p118 = por %p116, %p117
    %p119 = scmp.ne.s32.totalorder %s110, %s111
    %p120 = scmp.eq.s32.totalorder %s16, 0
    %p121 = por %p119, %p120
    %p122 = scmp.ne.s32.totalorder %s110, %s111
    %p123 = scmp.eq.s32.totalorder %s17, 1
    %p124 = por %p122, %p123
    %p126 = scmp.ne.s32.totalorder %s111, %s125
    %p127 = scmp.eq.s32.totalorder %s17, 0
    %p128 = por %p126, %p127
    %s129 = ssub.s32 %s11, %s18
    %p130 = scmp.eq.s32.totalorder %s129, 0
    %s132 = sadd.s32 %s131, 1
    %s133 = scalar_select %p130, %s131, %s132
    %p136 = pneg %p130
    %p137 = scmp.eq.s32.totalorder %s11, 1
    %p138 = por %p136, %p137
    %p139 = scmp.ne.s32.totalorder %s131, %s134
    %p140 = scmp.eq.s32.totalorder %s11, 0
    %p141 = por %p139, %p140
    %p142 = scmp.ne.s32.totalorder %s131, %s134
    %p143 = scmp.eq.s32.totalorder %s16, 1
    %p144 = por %p142, %p143
    %p145 = scmp.ne.s32.totalorder %s134, %s135
    %p146 = scmp.eq.s32.totalorder %s16, 0
    %p147 = por %p145, %p146
    %p148 = scmp.ne.s32.totalorder %s134, %s135
    %p149 = scmp.eq.s32.totalorder %s17, 1
    %p150 = por %p148, %p149
    %p152 = scmp.ne.s32.totalorder %s135, %s151
    %p153 = scmp.eq.s32.totalorder %s17, 0
    %p154 = por %p152, %p153
    %p155 = scmp.le.s32.totalorder 1, %s11
    %p156 = scmp.lt.s32.totalorder %s11, 3
    %p157 = pnand %p155, %p156
    %p158 = pneg %p157
    // Predicated region
    $region9: #{mobilenet_forward.20} parent=5 // pred_check
      _
    $region10: #{mobilenet_forward.20} parent=5 // pred_check_branch
      %160 = sbr.rel (%p157) target = $region12
    $region11: #{mobilenet_forward.20} parent=5 // pred_region
      %s161 = ssub.s32 %s11, 1
      // Predicated region
      $region13: #{mobilenet_forward.20} parent=11 // pred_check
        %p162 = pneg %p58
      $region14: #{mobilenet_forward.20} parent=11 // pred_check_branch
        %164 = sbr.rel (%p162) target = $region16
      $region15: #{mobilenet_forward.20} parent=11 // pred_region
        _
      $region16: #{mobilenet_forward.20} parent=11 // pred_fallthru
        _
      // Predicated region
      $region17: #{mobilenet_forward.20} parent=11 // pred_check
        %p165 = pneg %p79
      $region18: #{mobilenet_forward.20} parent=11 // pred_check_branch
        %167 = sbr.rel (%p165) target = $region20
      $region19: #{mobilenet_forward.20} parent=11 // pred_region
        _
      $region20: #{mobilenet_forward.20} parent=11 // pred_fallthru
        _
      // Predicated region
      $region21: #{mobilenet_forward.20} parent=11 // pred_check
        %p168 = pneg %p100
      $region22: #{mobilenet_forward.20} parent=11 // pred_check_branch
        %170 = sbr.rel (%p168) target = $region24
      $region23: #{mobilenet_forward.20} parent=11 // pred_region
        _
      $region24: #{mobilenet_forward.20} parent=11 // pred_fallthru
        _
      // Predicated region
      $region25: #{mobilenet_forward.20} parent=11 // pred_check
        %p171 = pneg %p121
      $region26: #{mobilenet_forward.20} parent=11 // pred_check_branch
        %173 = sbr.rel (%p171) target = $region28
      $region27: #{mobilenet_forward.20} parent=11 // pred_region
        _
      $region28: #{mobilenet_forward.20} parent=11 // pred_fallthru
        _
    $region12: #{mobilenet_forward.20} parent=5 // pred_fallthru
      _
    %p174 = scmp.lt.s32.totalorder %s11, 2
    // Predicated region
    $region29: #{mobilenet_forward.20} parent=5 // pred_check
      %p175 = pneg %p174
    $region30: #{mobilenet_forward.20} parent=5 // pred_check_branch
      %177 = sbr.rel (%p175) target = $region32
    $region31: #{mobilenet_forward.20} parent=5 // pred_region
      // Predicated region
      $region33: #{mobilenet_forward.20} parent=31 // pred_check
        %p178 = pneg %p31
      $region34: #{mobilenet_forward.20} parent=31 // pred_check_branch
        %180 = sbr.rel (%p178) target = $region36
      $region35: #{mobilenet_forward.20} parent=31 // pred_region
        %p181 = scmp.lt.s32.totalorder %s11, 1
        %s182 = scalar_select %p181, %s11, 1
        %s183 = smul.addr %s182, 5
        %s184 = smul.addr %s183, 4
        %s185 = scalar_lea.vmem %s0, %s184
      $region36: #{mobilenet_forward.20} parent=31 // pred_fallthru
        _
    $region32: #{mobilenet_forward.20} parent=5 // pred_fallthru
      _
    %p186 = scmp.le.s32.totalorder 1, %s11
    %p187 = scmp.lt.s32.totalorder %s11, 3
    %p188 = pnand %p186, %p187
    %p189 = pneg %p188
    // Predicated region
    $region37: #{mobilenet_forward.20} parent=5 // pred_check
      _
    $region38: #{mobilenet_forward.20} parent=5 // pred_check_branch
      %191 = sbr.rel (%p188) target = $region40
    $region39: #{mobilenet_forward.20} parent=5 // pred_region
      %s192 = ssub.s32 %s11, 1
      %p193 = scmp.lt.s32.totalorder %s16, 1
      %s194 = scalar_select %p193, %s16, 1
      %s195 = smul.addr %s194, 5
      %s196 = smul.addr %s195, 4
      %s197 = scalar_lea.vmem %s0, %s196
      %p198 = pneg %p37
      %p199 = pneg %p34
      %p200 = pneg %p58
      %p201 = pneg %p55
      %p202 = pneg %p79
      %p203 = pneg %p76
      %p204 = pneg %p100
      %p205 = pneg %p97
      %p206 = pneg %p121
      %p207 = pneg %p118
      %p208 = pneg %p147
      %p209 = pneg %p144
      %p210 = scmp.lt.s32.totalorder %s16, 1
      %s211 = scalar_select %p210, %s16, 1
      %s212 = smul.addr %s211, 3
      %s213 = smul.addr %s212, 4
      %s214 = scalar_lea.vmem %s5, %s213
      %p215 = scmp.lt.s32.totalorder %s16, 1
      %s216 = scalar_select %p215, %s16, 1
      %s217 = smul.addr %s216, 5
      %s218 = smul.addr %s217, 4
      %s219 = scalar_lea.vmem %s0, %s218
      %p220 = scmp.lt.s32.totalorder %s16, 1
      %s221 = scalar_select %p220, %s16, 1
      %s222 = smul.addr %s221, 3
      %s223 = smul.addr %s222, 4
      %s224 = scalar_lea.vmem %s5, %s223
      %v226 = vld [vmem:[%s1] sm:$0x1]
      %v227 = vld [vmem:[%s1 + $0x1] sm:$0x1]
      %v228 = vld [vmem:[%s1 + $0x2] sm:$0x1]
      %v229 = vld [vmem:[%s1 + $0x3] sm:$0x1]
      %v230 = vld [vmem:[%s1 + $0x4] sm:$0x1]
      %v231 = vld [vmem:[%s1 + $0x5] sm:$0x1]
      %v232 = vld [vmem:[%s1 + $0x6] sm:$0x1]
      %v233 = vld [vmem:[%s1 + $0x7] sm:$0x1]
      %v234 = vld [vmem:[%s1 + $0x8] sm:$0x1]
      %v235 = vld [vmem:[%s2] sm:$0x1]
      %v237 = vperm.slane %v235, 0
      %v239 = vld [vmem:[%s219] sm:$0xf]
      %v240 = vld [vmem:[%s219 + $0x4] sm:$0xf]
      %v241 = vld [vmem:[%s219 + $0x8] sm:$0xf]
      %v242 = vunpack.c.l.bf16 %v239
      %v243 = vunpack.c.l.bf16 %v240
      %v244 = vunpack.c.l.bf16 %v241
      %v246 = vperm.slane %v226, 0
      %v248 = vmul.f32 %v242, %v246
      %v249 = vmul.f32 %v243, %v246
      %v250 = vmul.f32 %v244, %v246
      %v251 = vadd.f32 %v237, %v248
      %v252 = vadd.f32 %v237, %v249
      %v253 = vadd.f32 %v237, %v250
      %v254 = vld [vmem:[%s219 + $0xc] sm:$0x1]
      %v255 = vunpack.c.l.bf16 %v254
      %v257 = vperm.slane %v227, 0
      %v259 = vmul.f32 %v242, %v257
      %v260 = vmul.f32 %v243, %v257
      %v261 = vmul.f32 %v244, %v257
      %v262 = vmul.f32 %v255, %v257
      %vm267 = vcmask 1046528
      %v268 = vrot.slane %v259, 1
      %v269 = vrot.slane %v260, 1
      %v270 = vsel %vm267, %v268, %v269
      %v271 = vrot.slane %v261, 1
      %v272 = vsel %vm267, %v269, %v271
      %v273 = vrot.slane %v262, 1
      %v274 = vsel %vm267, %v271, %v273
      %v278 = vadd.f32 %v251, %v270
      %v279 = vadd.f32 %v252, %v272
      %v280 = vadd.f32 %v253, %v274
      %v281 = vld [vmem:[%s219] sm:$0xe]
      %v282 = vunpack.c.l.bf16 %v281
      %v284 = vperm.slane %v228, 0
      %v286 = vmul.f32 %v282, %v284
      %v287 = vmul.f32 %v243, %v284
      %v288 = vmul.f32 %v244, %v284
      %v289 = vmul.f32 %v255, %v284
      %vm294 = vcmask 1045504
      %v295 = vrot.slane %v286, 2
      %v296 = vrot.slane %v287, 2
      %v297 = vsel %vm294, %v295, %v296
      %v298 = vrot.slane %v288, 2
      %v299 = vsel %vm294, %v296, %v298
      %v300 = vrot.slane %v289, 2
      %v301 = vsel %vm294, %v298, %v300
      %v305 = vadd.f32 %v278, %v297
      %v306 = vadd.f32 %v279, %v299
      %v307 = vadd.f32 %v280, %v301
      %v308 = vld [vmem:[%s219] sm:$0x8]
      %v309 = vld [vmem:[%s219 + $0xc] sm:$0x7]
      %v310 = vunpack.c.l.bf16 %v308
      %v311 = vunpack.c.l.bf16 %v309
      %v313 = vperm.slane %v229, 0
      %v315 = vmul.f32 %v310, %v313
      %v316 = vmul.f32 %v243, %v313
      %v317 = vmul.f32 %v244, %v313
      %v318 = vmul.f32 %v311, %v313
      %vm323 = vcmask 1041408
      %v324 = vrot.slane %v315, 6
      %v325 = vrot.slane %v316, 6
      %v326 = vsel %vm323, %v324, %v325
      %v327 = vrot.slane %v317, 6
      %v328 = vsel %vm323, %v325, %v327
      %v329 = vrot.slane %v318, 6
      %v330 = vsel %vm323, %v327, %v329
      %v334 = vadd.f32 %v305, %v326
      %v335 = vadd.f32 %v306, %v328
      %v336 = vadd.f32 %v307, %v330
      %v337 = vld [vmem:[%s219 + $0xc] sm:$0xf]
      %v338 = vunpack.c.l.bf16 %v337
      %v340 = vperm.slane %v230, 0
      %v342 = vmul.f32 %v310, %v340
      %v343 = vmul.f32 %v243, %v340
      %v344 = vmul.f32 %v244, %v340
      %v345 = vmul.f32 %v338, %v340
      %vm350 = vcmask 1040384
      %v351 = vrot.slane %v342, 7
      %v352 = vrot.slane %v343, 7
      %v353 = vsel %vm350, %v351, %v352
      %v354 = vrot.slane %v344, 7
      %v355 = vsel %vm350, %v352, %v354
      %v356 = vrot.slane %v345, 7
      %v357 = vsel %vm350, %v354, %v356
      %v361 = vadd.f32 %v334, %v353
      %v362 = vadd.f32 %v335, %v355
      %v363 = vadd.f32 %v336, %v357
      %v365 = vperm.slane %v231, 0
      %v367 = vmul.f32 %v243, %v365
      %v368 = vmul.f32 %v244, %v365
      %v369 = vmul.f32 %v338, %v365
      %v370 = vadd.f32 %v361, %v367
      %v371 = vadd.f32 %v362, %v368
      %v372 = vadd.f32 %v363, %v369
      %v373 = vld [vmem:[%s219 + $0x4] sm:$0xc]
      %v374 = vld [vmem:[%s219 + $0x10] sm:$0x3]
      %v375 = vunpack.c.l.bf16 %v373
      %v376 = vunpack.c.l.bf16 %v374
      %v378 = vperm.slane %v232, 0
      %v380 = vmul.f32 %v375, %v378
      %v381 = vmul.f32 %v244, %v378
      %v382 = vmul.f32 %v338, %v378
      %v383 = vmul.f32 %v376, %v378
      %vm388 = vcmask 1043456
      %v389 = vrot.slane %v380, 4
      %v390 = vrot.slane %v381, 4
      %v391 = vsel %vm388, %v389, %v390
      %v392 = vrot.slane %v382, 4
      %v393 = vsel %vm388, %v390, %v392
      %v394 = vrot.slane %v383, 4
      %v395 = vsel %vm388, %v392, %v394
      %v399 = vadd.f32 %v370, %v391
      %v400 = vadd.f32 %v371, %v393
      %v401 = vadd.f32 %v372, %v395
      %v402 = vld [vmem:[%s219 + $0x10] sm:$0x7]
      %v403 = vunpack.c.l.bf16 %v402
      %v405 = vperm.slane %v233, 0
      %v407 = vmul.f32 %v375, %v405
      %v408 = vmul.f32 %v244, %v405
      %v409 = vmul.f32 %v338, %v405
      %v410 = vmul.f32 %v403, %v405
      %vm415 = vcmask 1042432
      %v416 = vrot.slane %v407, 5
      %v417 = vrot.slane %v408, 5
      %v418 = vsel %vm415, %v416, %v417
      %v419 = vrot.slane %v409, 5
      %v420 = vsel %vm415, %v417, %v419
      %v421 = vrot.slane %v410, 5
      %v422 = vsel %vm415, %v419, %v421
      %v426 = vadd.f32 %v399, %v418
      %v427 = vadd.f32 %v400, %v420
      %v428 = vadd.f32 %v401, %v422
      %v429 = vld [vmem:[%s219 + $0x4] sm:$0x8]
      %v430 = vunpack.c.l.bf16 %v429
      %v432 = vperm.slane %v234, 0
      %v434 = vmul.f32 %v430, %v432
      %v435 = vmul.f32 %v244, %v432
      %v436 = vmul.f32 %v338, %v432
      %v437 = vmul.f32 %v403, %v432
      %v442 = vrot.slane %v434, 6
      %v443 = vrot.slane %v435, 6
      %v444 = vsel %vm323, %v442, %v443
      %v445 = vrot.slane %v436, 6
      %v446 = vsel %vm323, %v443, %v445
      %v447 = vrot.slane %v437, 6
      %v448 = vsel %vm323, %v445, %v447
      %v452 = vadd.f32 %v426, %v444
      %v453 = vadd.f32 %v427, %v446
      %v454 = vadd.f32 %v428, %v448
      %v455 = vmax.f32 %v452, 0.0
      %v456 = vmax.f32 %v453, 0.0
      %v457 = vmax.f32 %v454, 0.0
      %v458 = vpack.c.bf16 %v456, %v455
      %v459 = vpack.c.bf16 %v457, %v457
      %v460 = vld [vmem:[%s3] sm:$0xf]
      %v461 = vld [vmem:[%s3 + $0x4] sm:$0xf]
      %v462 = vld [vmem:[%s3 + $0x8] sm:$0xf]
      %v463 = vld [vmem:[%s3 + $0xc] sm:$0xf]
      %v464 = vld [vmem:[%s3 + $0x10] sm:$0xf]
      %v465 = vld [vmem:[%s3 + $0x14] sm:$0xf]
      %v466 = vld [vmem:[%s3 + $0x18] sm:$0xf]
      %v467 = vld [vmem:[%s3 + $0x1c] sm:$0xf]
      %v468 = vld [vmem:[%s4] sm:$0x1]
      %v470 = vperm.slane %v468, 0
      %v480 = vunpack.c.l.b16 %v460
      %v481 = vunpack.c.l.b16 %v461
      %v482 = vunpack.c.l.b16 %v462
      %v483 = vunpack.c.l.b16 %v463
      %v484 = vunpack.c.l.b16 %v464
      %v485 = vunpack.c.l.b16 %v465
      %v486 = vunpack.c.l.b16 %v466
      %v487 = vunpack.c.l.b16 %v467
      %v488 = vpack.c.b16 %v481, %v480
      %v489 = vpack.c.b16 %v483, %v482
      %v490 = vpack.c.b16 %v485, %v484
      %v491 = vpack.c.b16 %v487, %v486
      %vm496 = vcmask 523264
      %v498 = vsel %vm496, %v458, 0
      %v501 = vsel %vm496, %v459, 0
      %503 = vmatpush.bf16.msra.mxu0 0
      %504 = vmatpush.bf16.msra.mxu0 0
      %505 = vmatpush.bf16.msra.mxu0 0
      %506 = vmatpush.bf16.msra.mxu0 0
      %507 = vmatpush.bf16.msra.mxu0 %v491
      %508 = vmatpush.bf16.msra.mxu0 %v490
      %509 = vmatpush.bf16.msra.mxu0 %v489
      %510 = vmatpush.bf16.msra.mxu0 %v488
      %511 = vmatmul.bf16.gmra.mxu0 %v498
      %v512 = vpop.f32.mrf.mxu0
      %v513 = vadd.f32 %v470, %v512
      %v514 = vpop.f32.mrf.mxu0
      %v515 = vadd.f32 %v470, %v514
      %516 = vmatmul.bf16.gmra.mxu0 %v501
      %v517 = vpop.f32.mrf.mxu0
      %v518 = vadd.f32 %v470, %v517
      %v519 = vpop.f32.mrf.mxu0
      %520 = vdwg.mxu0
      %v521 = vmax.f32 %v513, 0.0
      %v522 = vmax.f32 %v515, 0.0
      %v523 = vmax.f32 %v518, 0.0
      %v524 = vpack.c.bf16 %v521, %v521
      %v525 = vpack.c.bf16 %v522, %v522
      %v526 = vpack.c.bf16 %v523, %v523
      %vm527 = vcmask 519168
      %528 = vst.msk [vmem:[%s224] sm:$0xf] %vm527, %v524
      %529 = vst.msk [vmem:[%s224 + $0x4] sm:$0xf] %vm527, %v525
      %530 = vst.msk [vmem:[%s224 + $0x8] sm:$0xf] %vm527, %v526
      %p531 = scmp.lt.s32.totalorder %s16, 1
      %s532 = scalar_select %p531, %s16, 1
      %s533 = smul.addr %s532, 3
      %s534 = smul.addr %s533, 4
      %s535 = scalar_lea.vmem %s5, %s534
      // Predicated region
      $region41: #{mobilenet_forward.20} parent=39 // pred_check
        %p536 = pneg %p144
      $region42: #{mobilenet_forward.20} parent=39 // pred_check_branch
        %538 = sbr.rel (%p536) target = $region44
      $region43: #{mobilenet_forward.20} parent=39 // pred_region
        _
      $region44: #{mobilenet_forward.20} parent=39 // pred_fallthru
        _
    $region40: #{mobilenet_forward.20} parent=5 // pred_fallthru
      _
    %p539 = scmp.le.s32.totalorder 2, %s11
    // Predicated region
    $region45: #{mobilenet_forward.20} parent=5 // pred_check
      %p540 = pneg %p539
    $region46: #{mobilenet_forward.20} parent=5 // pred_check_branch
      %542 = sbr.rel (%p540) target = $region48
    $region47: #{mobilenet_forward.20} parent=5 // pred_region
      %s543 = ssub.s32 %s11, 2
      // Predicated region
      $region49: #{mobilenet_forward.20} parent=47 // pred_check
        %p544 = pneg %p150
      $region50: #{mobilenet_forward.20} parent=47 // pred_check_branch
        %546 = sbr.rel (%p544) target = $region52
      $region51: #{mobilenet_forward.20} parent=47 // pred_region
        %p547 = scmp.lt.s32.totalorder %s17, 1
        %s548 = scalar_select %p547, %s17, 1
        %s549 = smul.addr %s548, 3
        %s550 = smul.addr %s549, 4
        %s551 = scalar_lea.vmem %s5, %s550
      $region52: #{mobilenet_forward.20} parent=47 // pred_fallthru
        _
    $region48: #{mobilenet_forward.20} parent=5 // pred_fallthru
      _
  $region6: #{mobilenet_forward.20} parent=0 // loop_footer
    %s15 = sadd.s32 1, %s11
  $region7: #{mobilenet_forward.20} parent=0 // loop_footer_branch
    %10 = sbr.rel target = $region3
  $region8: #{mobilenet_forward.20} parent=0 // loop_exit
    _

// kernel: mobilenet_forward.19
$region0: #{mobilenet_forward.19}
  #allocation0 [shape = 'u32[]', space=smem, size = 0x4, offset = 0x4, fixed_abs, tag = 'smem constant byte address 0x4 - core index']
  #allocation1 [shape = 'u32[72,128]{1,0:T(1,128)}', space=vmem, size = 0x9000, scoped, tag = 'internal scratch']
  %s0 = inlined_call_operand.vmem [shape: bf16[2,4,31,32], index: 0, kind: input, shape index: {}]
  %s1 = inlined_call_operand.vmem [shape: f32[9,1,32], index: 1, kind: input, shape index: {}]
  %s2 = inlined_call_operand.vmem [shape: f32[1,32], index: 2, kind: input, shape index: {}]
  %s3 = inlined_call_operand.vmem [shape: bf16[32,64], index: 3, kind: input, shape index: {}]
  %s4 = inlined_call_operand.vmem [shape: f32[1,64], index: 4, kind: input, shape index: {}]
  %s5 = inlined_call_operand.vmem [shape: bf16[2,24,64], index: 5, kind: output, shape index: {}]
  %s6 = sld [smem:[#allocation0]]
  $region53: #{mobilenet_forward.19} parent=0
    _
  %s8 = ssub.s32 1, %s6
  %s9 = scalar_select 0, %s8, %s6
  loop: start=0, step=1, limit=4
  $region2: #{mobilenet_forward.19} parent=0 // loop_pre_header
    _
  $region3: #{mobilenet_forward.19} parent=0 // loop_header
    %s11 = sphi 0, %s15
    %p12 = scmp.ge.s32.totalorder %s11, 4
    %s21 = sphi 0, %s23
    %s24 = sphi 0, %s21
    %s25 = sphi 0, %s24
    %s41 = sphi 0, %s25
    %s45 = sphi 0, %s45
    %s47 = sphi 0, %s45
    %s48 = sphi 0, %s47
    %s62 = sphi 0, %s48
    %s66 = sphi 0, %s66
    %s68 = sphi 0, %s66
    %s69 = sphi 0, %s68
    %s83 = sphi 0, %s69
    %s87 = sphi 0, %s87
    %s89 = sphi 0, %s87
    %s90 = sphi 0, %s89
    %s104 = sphi 0, %s90
    %s108 = sphi 0, %s108
    %s110 = sphi 0, %s108
    %s111 = sphi 0, %s110
    %s125 = sphi 0, %s111
    %s131 = sphi 0, %s133
    %s134 = sphi 0, %s131
    %s135 = sphi 0, %s134
    %s151 = sphi 0, %s135
  $region4: #{mobilenet_forward.19} parent=0 // loop_header_branch
    %14 = sbr.rel (%p12) target = $region8
  $region5: #{mobilenet_forward.19} parent=0 // loop_body
    %s16 = ssub.s32 %s11, 1
    %s17 = ssub.s32 %s11, 2
    %s18 = sadd.s32 %s11, 1
    %s19 = ssub.s32 %s11, %s18
    %p20 = scmp.eq.s32.totalorder %s19, 0
    %s22 = sadd.s32 %s21, 1
    %s23 = scalar_select %p20, %s21, %s22
    %p26 = pneg %p20
    %p27 = scmp.eq.s32.totalorder %s11, 1
    %p28 = por %p26, %p27
    %p29 = scmp.ne.s32.totalorder %s21, %s24
    %p30 = scmp.eq.s32.totalorder %s11, 0
    %p31 = por %p29, %p30
    %p32 = scmp.ne.s32.totalorder %s21, %s24
    %p33 = scmp.eq.s32.totalorder %s16, 1
    %p34 = por %p32, %p33
    %p35 = scmp.ne.s32.totalorder %s24, %s25
    %p36 = scmp.eq.s32.totalorder %s16, 0
    %p37 = por %p35, %p36
    %p38 = scmp.ne.s32.totalorder %s24, %s25
    %p39 = scmp.eq.s32.totalorder %s17, 1
    %p40 = por %p38, %p39
    %p42 = scmp.ne.s32.totalorder %s25, %s41
    %p43 = scmp.eq.s32.totalorder %s17, 0
    %p44 = por %p42, %p43
    %s46 = sadd.s32 %s45, 1
    %p49 = scmp.eq.s32.totalorder %s11, 1
    %p50 = scmp.ne.s32.totalorder %s45, %s47
    %p51 = scmp.eq.s32.totalorder %s11, 0
    %p52 = por %p50, %p51
    %p53 = scmp.ne.s32.totalorder %s45, %s47
    %p54 = scmp.eq.s32.totalorder %s16, 1
    %p55 = por %p53, %p54
    %p56 = scmp.ne.s32.totalorder %s47, %s48
    %p57 = scmp.eq.s32.totalorder %s16, 0
    %p58 = por %p56, %p57
    %p59 = scmp.ne.s32.totalorder %s47, %s48
    %p60 = scmp.eq.s32.totalorder %s17, 1
    %p61 = por %p59, %p60
    %p63 = scmp.ne.s32.totalorder %s48, %s62
    %p64 = scmp.eq.s32.totalorder %s17, 0
    %p65 = por %p63, %p64
    %s67 = sadd.s32 %s66, 1
    %p70 = scmp.eq.s32.totalorder %s11, 1
    %p71 = scmp.ne.s32.totalorder %s66, %s68
    %p72 = scmp.eq.s32.totalorder %s11, 0
    %p73 = por %p71, %p72
    %p74 = scmp.ne.s32.totalorder %s66, %s68
    %p75 = scmp.eq.s32.totalorder %s16, 1
    %p76 = por %p74, %p75
    %p77 = scmp.ne.s32.totalorder %s68, %s69
    %p78 = scmp.eq.s32.totalorder %s16, 0
    %p79 = por %p77, %p78
    %p80 = scmp.ne.s32.totalorder %s68, %s69
    %p81 = scmp.eq.s32.totalorder %s17, 1
    %p82 = por %p80, %p81
    %p84 = scmp.ne.s32.totalorder %s69, %s83
    %p85 = scmp.eq.s32.totalorder %s17, 0
    %p86 = por %p84, %p85
    %s88 = sadd.s32 %s87, 1
    %p91 = scmp.eq.s32.totalorder %s11, 1
    %p92 = scmp.ne.s32.totalorder %s87, %s89
    %p93 = scmp.eq.s32.totalorder %s11, 0
    %p94 = por %p92, %p93
    %p95 = scmp.ne.s32.totalorder %s87, %s89
    %p96 = scmp.eq.s32.totalorder %s16, 1
    %p97 = por %p95, %p96
    %p98 = scmp.ne.s32.totalorder %s89, %s90
    %p99 = scmp.eq.s32.totalorder %s16, 0
    %p100 = por %p98, %p99
    %p101 = scmp.ne.s32.totalorder %s89, %s90
    %p102 = scmp.eq.s32.totalorder %s17, 1
    %p103 = por %p101, %p102
    %p105 = scmp.ne.s32.totalorder %s90, %s104
    %p106 = scmp.eq.s32.totalorder %s17, 0
    %p107 = por %p105, %p106
    %s109 = sadd.s32 %s108, 1
    %p112 = scmp.eq.s32.totalorder %s11, 1
    %p113 = scmp.ne.s32.totalorder %s108, %s110
    %p114 = scmp.eq.s32.totalorder %s11, 0
    %p115 = por %p113, %p114
    %p116 = scmp.ne.s32.totalorder %s108, %s110
    %p117 = scmp.eq.s32.totalorder %s16, 1
    %p118 = por %p116, %p117
    %p119 = scmp.ne.s32.totalorder %s110, %s111
    %p120 = scmp.eq.s32.totalorder %s16, 0
    %p121 = por %p119, %p120
    %p122 = scmp.ne.s32.totalorder %s110, %s111
    %p123 = scmp.eq.s32.totalorder %s17, 1
    %p124 = por %p122, %p123
    %p126 = scmp.ne.s32.totalorder %s111, %s125
    %p127 = scmp.eq.s32.totalorder %s17, 0
    %p128 = por %p126, %p127
    %s129 = ssub.s32 %s11, %s18
    %p130 = scmp.eq.s32.totalorder %s129, 0
    %s132 = sadd.s32 %s131, 1
    %s133 = scalar_select %p130, %s131, %s132
    %p136 = pneg %p130
    %p137 = scmp.eq.s32.totalorder %s11, 1
    %p138 = por %p136, %p137
    %p139 = scmp.ne.s32.totalorder %s131, %s134
    %p140 = scmp.eq.s32.totalorder %s11, 0
    %p141 = por %p139, %p140
    %p142 = scmp.ne.s32.totalorder %s131, %s134
    %p143 = scmp.eq.s32.totalorder %s16, 1
    %p144 = por %p142, %p143
    %p145 = scmp.ne.s32.totalorder %s134, %s135
    %p146 = scmp.eq.s32.totalorder %s16, 0
    %p147 = por %p145, %p146
    %p148 = scmp.ne.s32.totalorder %s134, %s135
    %p149 = scmp.eq.s32.totalorder %s17, 1
    %p150 = por %p148, %p149
    %p152 = scmp.ne.s32.totalorder %s135, %s151
    %p153 = scmp.eq.s32.totalorder %s17, 0
    %p154 = por %p152, %p153
    %p155 = scmp.le.s32.totalorder 1, %s11
    %p156 = scmp.lt.s32.totalorder %s11, 3
    %p157 = pnand %p155, %p156
    %p158 = pneg %p157
    // Predicated region
    $region9: #{mobilenet_forward.19} parent=5 // pred_check
      _
    $region10: #{mobilenet_forward.19} parent=5 // pred_check_branch
      %160 = sbr.rel (%p157) target = $region12
    $region11: #{mobilenet_forward.19} parent=5 // pred_region
      %s161 = ssub.s32 %s11, 1
      // Predicated region
      $region13: #{mobilenet_forward.19} parent=11 // pred_check
        %p162 = pneg %p58
      $region14: #{mobilenet_forward.19} parent=11 // pred_check_branch
        %164 = sbr.rel (%p162) target = $region16
      $region15: #{mobilenet_forward.19} parent=11 // pred_region
        _
      $region16: #{mobilenet_forward.19} parent=11 // pred_fallthru
        _
      // Predicated region
      $region17: #{mobilenet_forward.19} parent=11 // pred_check
        %p165 = pneg %p79
      $region18: #{mobilenet_forward.19} parent=11 // pred_check_branch
        %167 = sbr.rel (%p165) target = $region20
      $region19: #{mobilenet_forward.19} parent=11 // pred_region
        _
      $region20: #{mobilenet_forward.19} parent=11 // pred_fallthru
        _
      // Predicated region
      $region21: #{mobilenet_forward.19} parent=11 // pred_check
        %p168 = pneg %p100
      $region22: #{mobilenet_forward.19} parent=11 // pred_check_branch
        %170 = sbr.rel (%p168) target = $region24
      $region23: #{mobilenet_forward.19} parent=11 // pred_region
        _
      $region24: #{mobilenet_forward.19} parent=11 // pred_fallthru
        _
      // Predicated region
      $region25: #{mobilenet_forward.19} parent=11 // pred_check
        %p171 = pneg %p121
      $region26: #{mobilenet_forward.19} parent=11 // pred_check_branch
        %173 = sbr.rel (%p171) target = $region28
      $region27: #{mobilenet_forward.19} parent=11 // pred_region
        _
      $region28: #{mobilenet_forward.19} parent=11 // pred_fallthru
        _
    $region12: #{mobilenet_forward.19} parent=5 // pred_fallthru
      _
    %p174 = scmp.lt.s32.totalorder %s11, 2
    // Predicated region
    $region29: #{mobilenet_forward.19} parent=5 // pred_check
      %p175 = pneg %p174
    $region30: #{mobilenet_forward.19} parent=5 // pred_check_branch
      %177 = sbr.rel (%p175) target = $region32
    $region31: #{mobilenet_forward.19} parent=5 // pred_region
      // Predicated region
      $region33: #{mobilenet_forward.19} parent=31 // pred_check
        %p178 = pneg %p31
      $region34: #{mobilenet_forward.19} parent=31 // pred_check_branch
        %180 = sbr.rel (%p178) target = $region36
      $region35: #{mobilenet_forward.19} parent=31 // pred_region
        %p181 = scmp.lt.s32.totalorder %s11, 1
        %s182 = scalar_select %p181, %s11, 1
        %s183 = smul.addr %s182, 16
        %s184 = smul.addr %s183, 4
        %s185 = scalar_lea.vmem %s0, %s184
      $region36: #{mobilenet_forward.19} parent=31 // pred_fallthru
        _
    $region32: #{mobilenet_forward.19} parent=5 // pred_fallthru
      _
    %p186 = scmp.le.s32.totalorder 1, %s11
    %p187 = scmp.lt.s32.totalorder %s11, 3
    %p188 = pnand %p186, %p187
    %p189 = pneg %p188
    // Predicated region
    $region37: #{mobilenet_forward.19} parent=5 // pred_check
      _
    $region38: #{mobilenet_forward.19} parent=5 // pred_check_branch
      %191 = sbr.rel (%p188) target = $region40
    $region39: #{mobilenet_forward.19} parent=5 // pred_region
      %s192 = ssub.s32 %s11, 1
      %p193 = scmp.lt.s32.totalorder %s16, 1
      %s194 = scalar_select %p193, %s16, 1
      %s195 = smul.addr %s194, 16
      %s196 = smul.addr %s195, 4
      %s197 = scalar_lea.vmem %s0, %s196
      %p198 = pneg %p37
      %p199 = pneg %p34
      %p200 = pneg %p58
      %p201 = pneg %p55
      %p202 = pneg %p79
      %p203 = pneg %p76
      %p204 = pneg %p100
      %p205 = pneg %p97
      %p206 = pneg %p121
      %p207 = pneg %p118
      %p208 = pneg %p147
      %p209 = pneg %p144
      %p210 = scmp.lt.s32.totalorder %s16, 1
      %s211 = scalar_select %p210, %s16, 1
      %s212 = smul.addr %s211, 3
      %s213 = smul.addr %s212, 4
      %s214 = scalar_lea.vmem %s5, %s213
      %p215 = scmp.lt.s32.totalorder %s16, 1
      %s216 = scalar_select %p215, %s16, 1
      %s217 = smul.addr %s216, 16
      %s218 = smul.addr %s217, 4
      %s219 = scalar_lea.vmem %s0, %s218
      %p220 = scmp.lt.s32.totalorder %s16, 1
      %s221 = scalar_select %p220, %s16, 1
      %s222 = smul.addr %s221, 3
      %s223 = smul.addr %s222, 4
      %s224 = scalar_lea.vmem %s5, %s223
      %v226 = vld [vmem:[%s1] sm:$0x1]
      %v227 = vld [vmem:[%s1 + $0x1] sm:$0x1]
      %v228 = vld [vmem:[%s1 + $0x2] sm:$0x1]
      %v229 = vld [vmem:[%s1 + $0x3] sm:$0x1]
      %v230 = vld [vmem:[%s1 + $0x4] sm:$0x1]
      %v231 = vld [vmem:[%s1 + $0x5] sm:$0x1]
      %v232 = vld [vmem:[%s1 + $0x6] sm:$0x1]
      %v233 = vld [vmem:[%s1 + $0x7] sm:$0x1]
      %v234 = vld [vmem:[%s1 + $0x8] sm:$0x1]
      %v235 = vld [vmem:[%s2] sm:$0x1]
      %v237 = vperm.slane %v235, 0
      %v239 = vld [vmem:[%s219] sm:$0xf]
      %v240 = vld [vmem:[%s219 + $0x4] sm:$0xf]
      %v241 = vld [vmem:[%s219 + $0x8] sm:$0xf]
      %v242 = vunpack.c.l.bf16 %v239
      %v243 = vunpack.c.l.bf16 %v240
      %v244 = vunpack.c.l.bf16 %v241
      %v246 = vperm.slane %v226, 0
      %v248 = vmul.f32 %v242, %v246
      %v249 = vmul.f32 %v243, %v246
      %v250 = vmul.f32 %v244, %v246
      %v251 = vadd.f32 %v237, %v248
      %v252 = vadd.f32 %v237, %v249
      %v253 = vadd.f32 %v237, %v250
      %s254 = scalar_lea.vmem %s219, 16
      %v255 = vld [vmem:[%s254] sm:$0xf]
      %v256 = vld [vmem:[%s254 + $0x4] sm:$0xf]
      %v257 = vld [vmem:[%s254 + $0x8] sm:$0xf]
      %v258 = vunpack.c.l.bf16 %v255
      %v259 = vunpack.c.l.bf16 %v256
      %v260 = vunpack.c.l.bf16 %v257
      %v262 = vperm.slane %v227, 0
      %v264 = vmul.f32 %v258, %v262
      %v265 = vmul.f32 %v259, %v262
      %v266 = vmul.f32 %v260, %v262
      %v267 = vadd.f32 %v251, %v264
      %v268 = vadd.f32 %v252, %v265
      %v269 = vadd.f32 %v253, %v266
      %v270 = vld [vmem:[%s219 + $0xc] sm:$0x1]
      %v271 = vunpack.c.l.bf16 %v270
      %v273 = vperm.slane %v228, 0
      %v275 = vmul.f32 %v242, %v273
      %v276 = vmul.f32 %v243, %v273
      %v277 = vmul.f32 %v244, %v273
      %v278 = vmul.f32 %v271, %v273
      %vm283 = vcmask 1046528
      %v284 = vrot.slane %v275, 1
      %v285 = vrot.slane %v276, 1
      %v286 = vsel %vm283, %v284, %v285
      %v287 = vrot.slane %v277, 1
      %v288 = vsel %vm283, %v285, %v287
      %v289 = vrot.slane %v278, 1
      %v290 = vsel %vm283, %v287, %v289
      %v294 = vadd.f32 %v267, %v286
      %v295 = vadd.f32 %v268, %v288
      %v296 = vadd.f32 %v269, %v290
      %s297 = scalar_lea.vmem %s219, 32
      %v298 = vld [vmem:[%s297] sm:$0xf]
      %v299 = vld [vmem:[%s297 + $0x4] sm:$0xf]
      %v300 = vld [vmem:[%s297 + $0x8] sm:$0xf]
      %v301 = vunpack.c.l.bf16 %v298
      %v302 = vunpack.c.l.bf16 %v299
      %v303 = vunpack.c.l.bf16 %v300
      %v305 = vperm.slane %v229, 0
      %v307 = vmul.f32 %v301, %v305
      %v308 = vmul.f32 %v302, %v305
      %v309 = vmul.f32 %v303, %v305
      %v310 = vadd.f32 %v294, %v307
      %v311 = vadd.f32 %v295, %v308
      %v312 = vadd.f32 %v296, %v309
      %s313 = scalar_lea.vmem %s219, 48
      %v314 = vld [vmem:[%s313] sm:$0xf]
      %v315 = vld [vmem:[%s313 + $0x4] sm:$0xf]
      %v316 = vld [vmem:[%s313 + $0x8] sm:$0xf]
      %v317 = vunpack.c.l.bf16 %v314
      %v318 = vunpack.c.l.bf16 %v315
      %v319 = vunpack.c.l.bf16 %v316
      %v321 = vperm.slane %v230, 0
      %v323 = vmul.f32 %v317, %v321
      %v324 = vmul.f32 %v318, %v321
      %v325 = vmul.f32 %v319, %v321
      %v326 = vadd.f32 %v310, %v323
      %v327 = vadd.f32 %v311, %v324
      %v328 = vadd.f32 %v312, %v325
      %v329 = vld [vmem:[%s297 + $0xc] sm:$0x1]
      %v330 = vunpack.c.l.bf16 %v329
      %v332 = vperm.slane %v231, 0
      %v334 = vmul.f32 %v301, %v332
      %v335 = vmul.f32 %v302, %v332
      %v336 = vmul.f32 %v303, %v332
      %v337 = vmul.f32 %v330, %v332
      %v342 = vrot.slane %v334, 1
      %v343 = vrot.slane %v335, 1
      %v344 = vsel %vm283, %v342, %v343
      %v345 = vrot.slane %v336, 1
      %v346 = vsel %vm283, %v343, %v345
      %v347 = vrot.slane %v337, 1
      %v348 = vsel %vm283, %v345, %v347
      %v352 = vadd.f32 %v326, %v344
      %v353 = vadd.f32 %v327, %v346
      %v354 = vadd.f32 %v328, %v348
      %v355 = vld [vmem:[%s219] sm:$0xc]
      %v356 = vld [vmem:[%s219 + $0xc] sm:$0x7]
      %v357 = vunpack.c.l.bf16 %v355
      %v358 = vunpack.c.l.bf16 %v356
      %v360 = vperm.slane %v232, 0
      %v362 = vmul.f32 %v357, %v360
      %v363 = vmul.f32 %v243, %v360
      %v364 = vmul.f32 %v244, %v360
      %v365 = vmul.f32 %v358, %v360
      %vm370 = vcmask 1042432
      %v371 = vrot.slane %v362, 5
      %v372 = vrot.slane %v363, 5
      %v373 = vsel %vm370, %v371, %v372
      %v374 = vrot.slane %v364, 5
      %v375 = vsel %vm370, %v372, %v374
      %v376 = vrot.slane %v365, 5
      %v377 = vsel %vm370, %v374, %v376
      %v381 = vadd.f32 %v352, %v373
      %v382 = vadd.f32 %v353, %v375
      %v383 = vadd.f32 %v354, %v377
      %v384 = vld [vmem:[%s254] sm:$0xc]
      %v385 = vld [vmem:[%s254 + $0xc] sm:$0x7]
      %v386 = vunpack.c.l.bf16 %v384
      %v387 = vunpack.c.l.bf16 %v385
      %v389 = vperm.slane %v233, 0
      %v391 = vmul.f32 %v386, %v389
      %v392 = vmul.f32 %v259, %v389
      %v393 = vmul.f32 %v260, %v389
      %v394 = vmul.f32 %v387, %v389
      %v399 = vrot.slane %v391, 5
      %v400 = vrot.slane %v392, 5
      %v401 = vsel %vm370, %v399, %v400
      %v402 = vrot.slane %v393, 5
      %v403 = vsel %vm370, %v400, %v402
      %v404 = vrot.slane %v394, 5
      %v405 = vsel %vm370, %v402, %v404
      %v409 = vadd.f32 %v381, %v401
      %v410 = vadd.f32 %v382, %v403
      %v411 = vadd.f32 %v383, %v405
      %v412 = vld [vmem:[%s219] sm:$0x8]
      %v413 = vunpack.c.l.bf16 %v412
      %v415 = vperm.slane %v234, 0
      %v417 = vmul.f32 %v413, %v415
      %v418 = vmul.f32 %v243, %v415
      %v419 = vmul.f32 %v244, %v415
      %v420 = vmul.f32 %v358, %v415
      %vm425 = vcmask 1041408
      %v426 = vrot.slane %v417, 6
      %v427 = vrot.slane %v418, 6
      %v428 = vsel %vm425, %v426, %v427
      %v429 = vrot.slane %v419, 6
      %v430 = vsel %vm425, %v427, %v429
      %v431 = vrot.slane %v420, 6
      %v432 = vsel %vm425, %v429, %v431
      %v436 = vadd.f32 %v409, %v428
      %v437 = vadd.f32 %v410, %v430
      %v438 = vadd.f32 %v411, %v432
      %v439 = vmax.f32 %v436, 0.0
      %v440 = vmax.f32 %v437, 0.0
      %v441 = vmax.f32 %v438, 0.0
      %v442 = vpack.c.bf16 %v440, %v439
      %v443 = vpack.c.bf16 %v441, %v441
      %v444 = vld [vmem:[%s3] sm:$0xf]
      %v445 = vld [vmem:[%s3 + $0x4] sm:$0xf]
      %v446 = vld [vmem:[%s3 + $0x8] sm:$0xf]
      %v447 = vld [vmem:[%s3 + $0xc] sm:$0xf]
      %v448 = vld [vmem:[%s4] sm:$0x1]
      %v450 = vperm.slane %v448, 0
      %v456 = vunpack.c.l.b16 %v444
      %v457 = vunpack.c.l.b16 %v445
      %v458 = vunpack.c.l.b16 %v446
      %v459 = vunpack.c.l.b16 %v447
      %v460 = vpack.c.b16 %v457, %v456
      %v461 = vpack.c.b16 %v459, %v458
      %vm464 = vcmask 261120
      %v466 = vsel %vm464, %v442, 0
      %v469 = vsel %vm464, %v443, 0
      %471 = vmatpush.bf16.msra.mxu0 0
      %472 = vmatpush.bf16.msra.mxu0 0
      %473 = vmatpush.bf16.msra.mxu0 0
      %474 = vmatpush.bf16.msra.mxu0 0
      %475 = vmatpush.bf16.msra.mxu0 0
      %476 = vmatpush.bf16.msra.mxu0 0
      %477 = vmatpush.bf16.msra.mxu0 %v461
      %478 = vmatpush.bf16.msra.mxu0 %v460
      %479 = vmatmul.bf16.gmra.mxu0 %v466
      %v480 = vpop.f32.mrf.mxu0
      %v481 = vadd.f32 %v450, %v480
      %v482 = vpop.f32.mrf.mxu0
      %v483 = vadd.f32 %v450, %v482
      %484 = vmatmul.bf16.gmra.mxu0 %v469
      %v485 = vpop.f32.mrf.mxu0
      %v486 = vadd.f32 %v450, %v485
      %v487 = vpop.f32.mrf.mxu0
      %488 = vdwg.mxu0
      %v489 = vmax.f32 %v481, 0.0
      %v490 = vmax.f32 %v483, 0.0
      %v491 = vmax.f32 %v486, 0.0
      %v492 = vpack.c.bf16 %v489, %v489
      %v493 = vpack.c.bf16 %v490, %v490
      %v494 = vpack.c.bf16 %v491, %v491
      %vm495 = vcmask 519168
      %496 = vst.msk [vmem:[%s224] sm:$0xf] %vm495, %v492
      %497 = vst.msk [vmem:[%s224 + $0x4] sm:$0xf] %vm495, %v493
      %498 = vst.msk [vmem:[%s224 + $0x8] sm:$0xf] %vm495, %v494
      %p499 = scmp.lt.s32.totalorder %s16, 1
      %s500 = scalar_select %p499, %s16, 1
      %s501 = smul.addr %s500, 3
      %s502 = smul.addr %s501, 4
      %s503 = scalar_lea.vmem %s5, %s502
      // Predicated region
      $region41: #{mobilenet_forward.19} parent=39 // pred_check
        %p504 = pneg %p144
      $region42: #{mobilenet_forward.19} parent=39 // pred_check_branch
        %506 = sbr.rel (%p504) target = $region44
      $region43: #{mobilenet_forward.19} parent=39 // pred_region
        _
      $region44: #{mobilenet_forward.19} parent=39 // pred_fallthru
        _
    $region40: #{mobilenet_forward.19} parent=5 // pred_fallthru
      _
    %p507 = scmp.le.s32.totalorder 2, %s11
    // Predicated region
    $region45: #{mobilenet_forward.19} parent=5 // pred_check
      %p508 = pneg %p507
    $region46: #{mobilenet_forward.19} parent=5 // pred_check_branch
      %510 = sbr.rel (%p508) target = $region48
    $region47: #{mobilenet_forward.19} parent=5 // pred_region
      %s511 = ssub.s32 %s11, 2
      // Predicated region
      $region49: #{mobilenet_forward.19} parent=47 // pred_check
        %p512 = pneg %p150
      $region50: #{mobilenet_forward.19} parent=47 // pred_check_branch
        %514 = sbr.rel (%p512) target = $region52
      $region51: #{mobilenet_forward.19} parent=47 // pred_region
        %p515 = scmp.lt.s32.totalorder %s17, 1
        %s516 = scalar_select %p515, %s17, 1
        %s517 = smul.addr %s516, 3
        %s518 = smul.addr %s517, 4
        %s519 = scalar_lea.vmem %s5, %s518
      $region52: #{mobilenet_forward.19} parent=47 // pred_fallthru
        _
    $region48: #{mobilenet_forward.19} parent=5 // pred_fallthru
      _
  $region6: #{mobilenet_forward.19} parent=0 // loop_footer
    %s15 = sadd.s32 1, %s11
  $region7: #{mobilenet_forward.19} parent=0 // loop_footer_branch
    %10 = sbr.rel target = $region3
  $region8: #{mobilenet_forward.19} parent=0 // loop_exit
    _

// kernel: mobilenet_forward.21
$region0: #{mobilenet_forward.21}
  #allocation0 [shape = 'u32[]', space=smem, size = 0x4, offset = 0x4, fixed_abs, tag = 'smem constant byte address 0x4 - core index']
  #allocation1 [shape = 'u32[72,128]{1,0:T(1,128)}', space=vmem, size = 0x9000, scoped, tag = 'internal scratch']
  %s0 = inlined_call_operand.vmem [shape: bf16[2,4,13,64], index: 0, kind: input, shape index: {}]
  %s1 = inlined_call_operand.vmem [shape: f32[9,1,64], index: 1, kind: input, shape index: {}]
  %s2 = inlined_call_operand.vmem [shape: f32[1,64], index: 2, kind: input, shape index: {}]
  %s3 = inlined_call_operand.vmem [shape: bf16[64,128], index: 3, kind: input, shape index: {}]
  %s4 = inlined_call_operand.vmem [shape: f32[1,128], index: 4, kind: input, shape index: {}]
  %s5 = inlined_call_operand.vmem [shape: bf16[2,8,128], index: 5, kind: output, shape index: {}]
  %s6 = sld [smem:[#allocation0]]
  $region53: #{mobilenet_forward.21} parent=0
    _
  %s8 = ssub.s32 1, %s6
  %s9 = scalar_select 0, %s8, %s6
  loop: start=0, step=1, limit=4
  $region2: #{mobilenet_forward.21} parent=0 // loop_pre_header
    _
  $region3: #{mobilenet_forward.21} parent=0 // loop_header
    %s11 = sphi 0, %s15
    %p12 = scmp.ge.s32.totalorder %s11, 4
    %s21 = sphi 0, %s23
    %s24 = sphi 0, %s21
    %s25 = sphi 0, %s24
    %s41 = sphi 0, %s25
    %s45 = sphi 0, %s45
    %s47 = sphi 0, %s45
    %s48 = sphi 0, %s47
    %s62 = sphi 0, %s48
    %s66 = sphi 0, %s66
    %s68 = sphi 0, %s66
    %s69 = sphi 0, %s68
    %s83 = sphi 0, %s69
    %s87 = sphi 0, %s87
    %s89 = sphi 0, %s87
    %s90 = sphi 0, %s89
    %s104 = sphi 0, %s90
    %s108 = sphi 0, %s108
    %s110 = sphi 0, %s108
    %s111 = sphi 0, %s110
    %s125 = sphi 0, %s111
    %s131 = sphi 0, %s133
    %s134 = sphi 0, %s131
    %s135 = sphi 0, %s134
    %s151 = sphi 0, %s135
  $region4: #{mobilenet_forward.21} parent=0 // loop_header_branch
    %14 = sbr.rel (%p12) target = $region8
  $region5: #{mobilenet_forward.21} parent=0 // loop_body
    %s16 = ssub.s32 %s11, 1
    %s17 = ssub.s32 %s11, 2
    %s18 = sadd.s32 %s11, 1
    %s19 = ssub.s32 %s11, %s18
    %p20 = scmp.eq.s32.totalorder %s19, 0
    %s22 = sadd.s32 %s21, 1
    %s23 = scalar_select %p20, %s21, %s22
    %p26 = pneg %p20
    %p27 = scmp.eq.s32.totalorder %s11, 1
    %p28 = por %p26, %p27
    %p29 = scmp.ne.s32.totalorder %s21, %s24
    %p30 = scmp.eq.s32.totalorder %s11, 0
    %p31 = por %p29, %p30
    %p32 = scmp.ne.s32.totalorder %s21, %s24
    %p33 = scmp.eq.s32.totalorder %s16, 1
    %p34 = por %p32, %p33
    %p35 = scmp.ne.s32.totalorder %s24, %s25
    %p36 = scmp.eq.s32.totalorder %s16, 0
    %p37 = por %p35, %p36
    %p38 = scmp.ne.s32.totalorder %s24, %s25
    %p39 = scmp.eq.s32.totalorder %s17, 1
    %p40 = por %p38, %p39
    %p42 = scmp.ne.s32.totalorder %s25, %s41
    %p43 = scmp.eq.s32.totalorder %s17, 0
    %p44 = por %p42, %p43
    %s46 = sadd.s32 %s45, 1
    %p49 = scmp.eq.s32.totalorder %s11, 1
    %p50 = scmp.ne.s32.totalorder %s45, %s47
    %p51 = scmp.eq.s32.totalorder %s11, 0
    %p52 = por %p50, %p51
    %p53 = scmp.ne.s32.totalorder %s45, %s47
    %p54 = scmp.eq.s32.totalorder %s16, 1
    %p55 = por %p53, %p54
    %p56 = scmp.ne.s32.totalorder %s47, %s48
    %p57 = scmp.eq.s32.totalorder %s16, 0
    %p58 = por %p56, %p57
    %p59 = scmp.ne.s32.totalorder %s47, %s48
    %p60 = scmp.eq.s32.totalorder %s17, 1
    %p61 = por %p59, %p60
    %p63 = scmp.ne.s32.totalorder %s48, %s62
    %p64 = scmp.eq.s32.totalorder %s17, 0
    %p65 = por %p63, %p64
    %s67 = sadd.s32 %s66, 1
    %p70 = scmp.eq.s32.totalorder %s11, 1
    %p71 = scmp.ne.s32.totalorder %s66, %s68
    %p72 = scmp.eq.s32.totalorder %s11, 0
    %p73 = por %p71, %p72
    %p74 = scmp.ne.s32.totalorder %s66, %s68
    %p75 = scmp.eq.s32.totalorder %s16, 1
    %p76 = por %p74, %p75
    %p77 = scmp.ne.s32.totalorder %s68, %s69
    %p78 = scmp.eq.s32.totalorder %s16, 0
    %p79 = por %p77, %p78
    %p80 = scmp.ne.s32.totalorder %s68, %s69
    %p81 = scmp.eq.s32.totalorder %s17, 1
    %p82 = por %p80, %p81
    %p84 = scmp.ne.s32.totalorder %s69, %s83
    %p85 = scmp.eq.s32.totalorder %s17, 0
    %p86 = por %p84, %p85
    %s88 = sadd.s32 %s87, 1
    %p91 = scmp.eq.s32.totalorder %s11, 1
    %p92 = scmp.ne.s32.totalorder %s87, %s89
    %p93 = scmp.eq.s32.totalorder %s11, 0
    %p94 = por %p92, %p93
    %p95 = scmp.ne.s32.totalorder %s87, %s89
    %p96 = scmp.eq.s32.totalorder %s16, 1
    %p97 = por %p95, %p96
    %p98 = scmp.ne.s32.totalorder %s89, %s90
    %p99 = scmp.eq.s32.totalorder %s16, 0
    %p100 = por %p98, %p99
    %p101 = scmp.ne.s32.totalorder %s89, %s90
    %p102 = scmp.eq.s32.totalorder %s17, 1
    %p103 = por %p101, %p102
    %p105 = scmp.ne.s32.totalorder %s90, %s104
    %p106 = scmp.eq.s32.totalorder %s17, 0
    %p107 = por %p105, %p106
    %s109 = sadd.s32 %s108, 1
    %p112 = scmp.eq.s32.totalorder %s11, 1
    %p113 = scmp.ne.s32.totalorder %s108, %s110
    %p114 = scmp.eq.s32.totalorder %s11, 0
    %p115 = por %p113, %p114
    %p116 = scmp.ne.s32.totalorder %s108, %s110
    %p117 = scmp.eq.s32.totalorder %s16, 1
    %p118 = por %p116, %p117
    %p119 = scmp.ne.s32.totalorder %s110, %s111
    %p120 = scmp.eq.s32.totalorder %s16, 0
    %p121 = por %p119, %p120
    %p122 = scmp.ne.s32.totalorder %s110, %s111
    %p123 = scmp.eq.s32.totalorder %s17, 1
    %p124 = por %p122, %p123
    %p126 = scmp.ne.s32.totalorder %s111, %s125
    %p127 = scmp.eq.s32.totalorder %s17, 0
    %p128 = por %p126, %p127
    %s129 = ssub.s32 %s11, %s18
    %p130 = scmp.eq.s32.totalorder %s129, 0
    %s132 = sadd.s32 %s131, 1
    %s133 = scalar_select %p130, %s131, %s132
    %p136 = pneg %p130
    %p137 = scmp.eq.s32.totalorder %s11, 1
    %p138 = por %p136, %p137
    %p139 = scmp.ne.s32.totalorder %s131, %s134
    %p140 = scmp.eq.s32.totalorder %s11, 0
    %p141 = por %p139, %p140
    %p142 = scmp.ne.s32.totalorder %s131, %s134
    %p143 = scmp.eq.s32.totalorder %s16, 1
    %p144 = por %p142, %p143
    %p145 = scmp.ne.s32.totalorder %s134, %s135
    %p146 = scmp.eq.s32.totalorder %s16, 0
    %p147 = por %p145, %p146
    %p148 = scmp.ne.s32.totalorder %s134, %s135
    %p149 = scmp.eq.s32.totalorder %s17, 1
    %p150 = por %p148, %p149
    %p152 = scmp.ne.s32.totalorder %s135, %s151
    %p153 = scmp.eq.s32.totalorder %s17, 0
    %p154 = por %p152, %p153
    %p155 = scmp.le.s32.totalorder 1, %s11
    %p156 = scmp.lt.s32.totalorder %s11, 3
    %p157 = pnand %p155, %p156
    %p158 = pneg %p157
    // Predicated region
    $region9: #{mobilenet_forward.21} parent=5 // pred_check
      _
    $region10: #{mobilenet_forward.21} parent=5 // pred_check_branch
      %160 = sbr.rel (%p157) target = $region12
    $region11: #{mobilenet_forward.21} parent=5 // pred_region
      %s161 = ssub.s32 %s11, 1
      // Predicated region
      $region13: #{mobilenet_forward.21} parent=11 // pred_check
        %p162 = pneg %p58
      $region14: #{mobilenet_forward.21} parent=11 // pred_check_branch
        %164 = sbr.rel (%p162) target = $region16
      $region15: #{mobilenet_forward.21} parent=11 // pred_region
        _
      $region16: #{mobilenet_forward.21} parent=11 // pred_fallthru
        _
      // Predicated region
      $region17: #{mobilenet_forward.21} parent=11 // pred_check
        %p165 = pneg %p79
      $region18: #{mobilenet_forward.21} parent=11 // pred_check_branch
        %167 = sbr.rel (%p165) target = $region20
      $region19: #{mobilenet_forward.21} parent=11 // pred_region
        _
      $region20: #{mobilenet_forward.21} parent=11 // pred_fallthru
        _
      // Predicated region
      $region21: #{mobilenet_forward.21} parent=11 // pred_check
        %p168 = pneg %p100
      $region22: #{mobilenet_forward.21} parent=11 // pred_check_branch
        %170 = sbr.rel (%p168) target = $region24
      $region23: #{mobilenet_forward.21} parent=11 // pred_region
        _
      $region24: #{mobilenet_forward.21} parent=11 // pred_fallthru
        _
      // Predicated region
      $region25: #{mobilenet_forward.21} parent=11 // pred_check
        %p171 = pneg %p121
      $region26: #{mobilenet_forward.21} parent=11 // pred_check_branch
        %173 = sbr.rel (%p171) target = $region28
      $region27: #{mobilenet_forward.21} parent=11 // pred_region
        _
      $region28: #{mobilenet_forward.21} parent=11 // pred_fallthru
        _
    $region12: #{mobilenet_forward.21} parent=5 // pred_fallthru
      _
    %p174 = scmp.lt.s32.totalorder %s11, 2
    // Predicated region
    $region29: #{mobilenet_forward.21} parent=5 // pred_check
      %p175 = pneg %p174
    $region30: #{mobilenet_forward.21} parent=5 // pred_check_branch
      %177 = sbr.rel (%p175) target = $region32
    $region31: #{mobilenet_forward.21} parent=5 // pred_region
      // Predicated region
      $region33: #{mobilenet_forward.21} parent=31 // pred_check
        %p178 = pneg %p31
      $region34: #{mobilenet_forward.21} parent=31 // pred_check_branch
        %180 = sbr.rel (%p178) target = $region36
      $region35: #{mobilenet_forward.21} parent=31 // pred_region
        %p181 = scmp.lt.s32.totalorder %s11, 1
        %s182 = scalar_select %p181, %s11, 1
        %s183 = smul.addr %s182, 8
        %s184 = smul.addr %s183, 4
        %s185 = scalar_lea.vmem %s0, %s184
      $region36: #{mobilenet_forward.21} parent=31 // pred_fallthru
        _
    $region32: #{mobilenet_forward.21} parent=5 // pred_fallthru
      _
    %p186 = scmp.le.s32.totalorder 1, %s11
    %p187 = scmp.lt.s32.totalorder %s11, 3
    %p188 = pnand %p186, %p187
    %p189 = pneg %p188
    // Predicated region
    $region37: #{mobilenet_forward.21} parent=5 // pred_check
      _
    $region38: #{mobilenet_forward.21} parent=5 // pred_check_branch
      %191 = sbr.rel (%p188) target = $region40
    $region39: #{mobilenet_forward.21} parent=5 // pred_region
      %s192 = ssub.s32 %s11, 1
      %p193 = scmp.lt.s32.totalorder %s16, 1
      %s194 = scalar_select %p193, %s16, 1
      %s195 = smul.addr %s194, 8
      %s196 = smul.addr %s195, 4
      %s197 = scalar_lea.vmem %s0, %s196
      %p198 = pneg %p37
      %p199 = pneg %p34
      %p200 = pneg %p58
      %p201 = pneg %p55
      %p202 = pneg %p79
      %p203 = pneg %p76
      %p204 = pneg %p100
      %p205 = pneg %p97
      %p206 = pneg %p121
      %p207 = pneg %p118
      %p208 = pneg %p147
      %p209 = pneg %p144
      %p210 = scmp.lt.s32.totalorder %s16, 1
      %s211 = scalar_select %p210, %s16, 1
      %s212 = smul.addr %s211, 4
      %s213 = scalar_lea.vmem %s5, %s212
      %p214 = scmp.lt.s32.totalorder %s16, 1
      %s215 = scalar_select %p214, %s16, 1
      %s216 = smul.addr %s215, 8
      %s217 = smul.addr %s216, 4
      %s218 = scalar_lea.vmem %s0, %s217
      %p219 = scmp.lt.s32.totalorder %s16, 1
      %s220 = scalar_select %p219, %s16, 1
      %s221 = smul.addr %s220, 4
      %s222 = scalar_lea.vmem %s5, %s221
      %v224 = vld [vmem:[%s1] sm:$0x1]
      %v225 = vld [vmem:[%s1 + $0x1] sm:$0x1]
      %v226 = vld [vmem:[%s1 + $0x2] sm:$0x1]
      %v227 = vld [vmem:[%s1 + $0x3] sm:$0x1]
      %v228 = vld [vmem:[%s1 + $0x4] sm:$0x1]
      %v229 = vld [vmem:[%s1 + $0x5] sm:$0x1]
      %v230 = vld [vmem:[%s1 + $0x6] sm:$0x1]
      %v231 = vld [vmem:[%s1 + $0x7] sm:$0x1]
      %v232 = vld [vmem:[%s1 + $0x8] sm:$0x1]
      %v233 = vld [vmem:[%s2] sm:$0x1]
      %v235 = vperm.slane %v233, 0
      %v237 = vld [vmem:[%s218] sm:$0xf]
      %v238 = vunpack.c.l.bf16 %v237
      %v240 = vperm.slane %v224, 0
      %v242 = vmul.f32 %v238, %v240
      %v243 = vadd.f32 %v235, %v242
      %s244 = scalar_lea.vmem %s218, 8
      %v245 = vld [vmem:[%s244] sm:$0xf]
      %v246 = vunpack.c.l.bf16 %v245
      %v248 = vperm.slane %v225, 0
      %v250 = vmul.f32 %v246, %v248
      %v251 = vadd.f32 %v243, %v250
      %v252 = vld [vmem:[%s218 + $0x4] sm:$0x1]
      %v253 = vunpack.c.l.bf16 %v252
      %v255 = vperm.slane %v226, 0
      %v257 = vmul.f32 %v238, %v255
      %v258 = vmul.f32 %v253, %v255
      %vm261 = vcmask 1046528
      %v262 = vrot.slane %v257, 1
      %v263 = vrot.slane %v258, 1
      %v264 = vsel %vm261, %v262, %v263
      %v266 = vadd.f32 %v251, %v264
      %s267 = scalar_lea.vmem %s218, 16
      %v268 = vld [vmem:[%s267] sm:$0xf]
      %v269 = vunpack.c.l.bf16 %v268
      %v271 = vperm.slane %v227, 0
      %v273 = vmul.f32 %v269, %v271
      %v274 = vadd.f32 %v266, %v273
      %s275 = scalar_lea.vmem %s218, 24
      %v276 = vld [vmem:[%s275] sm:$0xf]
      %v277 = vunpack.c.l.bf16 %v276
      %v279 = vperm.slane %v228, 0
      %v281 = vmul.f32 %v277, %v279
      %v282 = vadd.f32 %v274, %v281
      %v283 = vld [vmem:[%s267 + $0x4] sm:$0x1]
      %v284 = vunpack.c.l.bf16 %v283
      %v286 = vperm.slane %v229, 0
      %v288 = vmul.f32 %v269, %v286
      %v289 = vmul.f32 %v284, %v286
      %v292 = vrot.slane %v288, 1
      %v293 = vrot.slane %v289, 1
      %v294 = vsel %vm261, %v292, %v293
      %v296 = vadd.f32 %v282, %v294
      %v297 = vld [vmem:[%s218] sm:$0xe]
      %v298 = vld [vmem:[%s218 + $0x4] sm:$0x3]
      %v299 = vunpack.c.l.bf16 %v297
      %v300 = vunpack.c.l.bf16 %v298
      %v302 = vperm.slane %v230, 0
      %v304 = vmul.f32 %v299, %v302
      %v305 = vmul.f32 %v300, %v302
      %vm308 = vcmask 1044480
      %v309 = vrot.slane %v304, 3
      %v310 = vrot.slane %v305, 3
      %v311 = vsel %vm308, %v309, %v310
      %v313 = vadd.f32 %v296, %v311
      %v314 = vld [vmem:[%s244] sm:$0xe]
      %v315 = vld [vmem:[%s244 + $0x4] sm:$0x3]
      %v316 = vunpack.c.l.bf16 %v314
      %v317 = vunpack.c.l.bf16 %v315
      %v319 = vperm.slane %v231, 0
      %v321 = vmul.f32 %v316, %v319
      %v322 = vmul.f32 %v317, %v319
      %v325 = vrot.slane %v321, 3
      %v326 = vrot.slane %v322, 3
      %v327 = vsel %vm308, %v325, %v326
      %v329 = vadd.f32 %v313, %v327
      %v330 = vld [vmem:[%s218] sm:$0xc]
      %v331 = vunpack.c.l.bf16 %v330
      %v333 = vperm.slane %v232, 0
      %v335 = vmul.f32 %v331, %v333
      %v336 = vmul.f32 %v300, %v333
      %vm339 = vcmask 1043456
      %v340 = vrot.slane %v335, 4
      %v341 = vrot.slane %v336, 4
      %v342 = vsel %vm339, %v340, %v341
      %v344 = vadd.f32 %v329, %v342
      %v345 = vmax.f32 %v344, 0.0
      %v346 = vpack.c.bf16 %v345, %v345
      %v347 = vld [vmem:[%s3] sm:$0xf]
      %v348 = vld [vmem:[%s3 + $0x4] sm:$0xf]
      %v349 = vld [vmem:[%s3 + $0x8] sm:$0xf]
      %v350 = vld [vmem:[%s3 + $0xc] sm:$0xf]
      %v351 = vld [vmem:[%s3 + $0x10] sm:$0xf]
      %v352 = vld [vmem:[%s3 + $0x14] sm:$0xf]
      %v353 = vld [vmem:[%s3 + $0x18] sm:$0xf]
      %v354 = vld [vmem:[%s3 + $0x1c] sm:$0xf]
      %v355 = vld [vmem:[%s4] sm:$0x1]
      %v357 = vperm.slane %v355, 0
      %v367 = vunpack.c.l.b16 %v347
      %v368 = vunpack.c.l.b16 %v348
      %v369 = vunpack.c.l.b16 %v349
      %v370 = vunpack.c.l.b16 %v350
      %v371 = vunpack.c.l.b16 %v351
      %v372 = vunpack.c.l.b16 %v352
      %v373 = vunpack.c.l.b16 %v353
      %v374 = vunpack.c.l.b16 %v354
      %v375 = vpack.c.b16 %v368, %v367
      %v376 = vpack.c.b16 %v370, %v369
      %v377 = vpack.c.b16 %v372, %v371
      %v378 = vpack.c.b16 %v374, %v373
      %vm383 = vcmask 523264
      %v385 = vsel %vm383, %v346, 0
      %387 = vmatpush.bf16.msra.mxu0 0
      %388 = vmatpush.bf16.msra.mxu0 0
      %389 = vmatpush.bf16.msra.mxu0 0
      %390 = vmatpush.bf16.msra.mxu0 0
      %391 = vmatpush.bf16.msra.mxu0 %v378
      %392 = vmatpush.bf16.msra.mxu0 %v377
      %393 = vmatpush.bf16.msra.mxu0 %v376
      %394 = vmatpush.bf16.msra.mxu0 %v375
      %395 = vmatmul.bf16.gmra.mxu0 %v385
      %v396 = vpop.f32.mrf.mxu0
      %v397 = vadd.f32 %v357, %v396
      %v398 = vpop.f32.mrf.mxu0
      %399 = vdwg.mxu0
      %v400 = vmax.f32 %v397, 0.0
      %v401 = vpack.c.bf16 %v400, %v400
      %402 = vst [vmem:[%s222] sm:$0xf] %v401
      %p403 = scmp.lt.s32.totalorder %s16, 1
      %s404 = scalar_select %p403, %s16, 1
      %s405 = smul.addr %s404, 4
      %s406 = scalar_lea.vmem %s5, %s405
      // Predicated region
      $region41: #{mobilenet_forward.21} parent=39 // pred_check
        %p407 = pneg %p144
      $region42: #{mobilenet_forward.21} parent=39 // pred_check_branch
        %409 = sbr.rel (%p407) target = $region44
      $region43: #{mobilenet_forward.21} parent=39 // pred_region
        _
      $region44: #{mobilenet_forward.21} parent=39 // pred_fallthru
        _
    $region40: #{mobilenet_forward.21} parent=5 // pred_fallthru
      _
    %p410 = scmp.le.s32.totalorder 2, %s11
    // Predicated region
    $region45: #{mobilenet_forward.21} parent=5 // pred_check
      %p411 = pneg %p410
    $region46: #{mobilenet_forward.21} parent=5 // pred_check_branch
      %413 = sbr.rel (%p411) target = $region48
    $region47: #{mobilenet_forward.21} parent=5 // pred_region
      %s414 = ssub.s32 %s11, 2
      // Predicated region
      $region49: #{mobilenet_forward.21} parent=47 // pred_check
        %p415 = pneg %p150
      $region50: #{mobilenet_forward.21} parent=47 // pred_check_branch
        %417 = sbr.rel (%p415) target = $region52
      $region51: #{mobilenet_forward.21} parent=47 // pred_region
        %p418 = scmp.lt.s32.totalorder %s17, 1
        %s419 = scalar_select %p418, %s17, 1
        %s420 = smul.addr %s419, 4
        %s421 = scalar_lea.vmem %s5, %s420
      $region52: #{mobilenet_forward.21} parent=47 // pred_fallthru
        _
    $region48: #{mobilenet_forward.21} parent=5 // pred_fallthru
      _
  $region6: #{mobilenet_forward.21} parent=0 // loop_footer
    %s15 = sadd.s32 1, %s11
  $region7: #{mobilenet_forward.21} parent=0 // loop_footer_branch
    %10 = sbr.rel target = $region3
  $region8: #{mobilenet_forward.21} parent=0 // loop_exit
    _

// kernel: mobilenet_forward.22
$region0: #{mobilenet_forward.22}
  #allocation0 [shape = 'u32[]', space=smem, size = 0x4, offset = 0x4, fixed_abs, tag = 'smem constant byte address 0x4 - core index']
  #allocation1 [shape = 'u32[72,128]{1,0:T(1,128)}', space=vmem, size = 0x9000, scoped, tag = 'internal scratch']
  %s0 = inlined_call_operand.vmem [shape: bf16[2,1,18,128], index: 0, kind: input, shape index: {}]
  %s1 = inlined_call_operand.vmem [shape: f32[9,1,128], index: 1, kind: input, shape index: {}]
  %s2 = inlined_call_operand.vmem [shape: f32[1,128], index: 2, kind: input, shape index: {}]
  %s3 = inlined_call_operand.vmem [shape: bf16[128,128], index: 3, kind: input, shape index: {}]
  %s4 = inlined_call_operand.vmem [shape: f32[1,128], index: 4, kind: input, shape index: {}]
  %s5 = inlined_call_operand.vmem [shape: bf16[2,8,128], index: 5, kind: output, shape index: {}]
  %s6 = sld [smem:[#allocation0]]
  $region53: #{mobilenet_forward.22} parent=0
    _
  %s8 = ssub.s32 1, %s6
  %s9 = scalar_select 0, %s8, %s6
  loop: start=0, step=1, limit=4
  $region2: #{mobilenet_forward.22} parent=0 // loop_pre_header
    _
  $region3: #{mobilenet_forward.22} parent=0 // loop_header
    %s11 = sphi 0, %s15
    %p12 = scmp.ge.s32.totalorder %s11, 4
    %s21 = sphi 0, %s23
    %s24 = sphi 0, %s21
    %s25 = sphi 0, %s24
    %s41 = sphi 0, %s25
    %s45 = sphi 0, %s45
    %s47 = sphi 0, %s45
    %s48 = sphi 0, %s47
    %s62 = sphi 0, %s48
    %s66 = sphi 0, %s66
    %s68 = sphi 0, %s66
    %s69 = sphi 0, %s68
    %s83 = sphi 0, %s69
    %s87 = sphi 0, %s87
    %s89 = sphi 0, %s87
    %s90 = sphi 0, %s89
    %s104 = sphi 0, %s90
    %s108 = sphi 0, %s108
    %s110 = sphi 0, %s108
    %s111 = sphi 0, %s110
    %s125 = sphi 0, %s111
    %s131 = sphi 0, %s133
    %s134 = sphi 0, %s131
    %s135 = sphi 0, %s134
    %s151 = sphi 0, %s135
  $region4: #{mobilenet_forward.22} parent=0 // loop_header_branch
    %14 = sbr.rel (%p12) target = $region8
  $region5: #{mobilenet_forward.22} parent=0 // loop_body
    %s16 = ssub.s32 %s11, 1
    %s17 = ssub.s32 %s11, 2
    %s18 = sadd.s32 %s11, 1
    %s19 = ssub.s32 %s11, %s18
    %p20 = scmp.eq.s32.totalorder %s19, 0
    %s22 = sadd.s32 %s21, 1
    %s23 = scalar_select %p20, %s21, %s22
    %p26 = pneg %p20
    %p27 = scmp.eq.s32.totalorder %s11, 1
    %p28 = por %p26, %p27
    %p29 = scmp.ne.s32.totalorder %s21, %s24
    %p30 = scmp.eq.s32.totalorder %s11, 0
    %p31 = por %p29, %p30
    %p32 = scmp.ne.s32.totalorder %s21, %s24
    %p33 = scmp.eq.s32.totalorder %s16, 1
    %p34 = por %p32, %p33
    %p35 = scmp.ne.s32.totalorder %s24, %s25
    %p36 = scmp.eq.s32.totalorder %s16, 0
    %p37 = por %p35, %p36
    %p38 = scmp.ne.s32.totalorder %s24, %s25
    %p39 = scmp.eq.s32.totalorder %s17, 1
    %p40 = por %p38, %p39
    %p42 = scmp.ne.s32.totalorder %s25, %s41
    %p43 = scmp.eq.s32.totalorder %s17, 0
    %p44 = por %p42, %p43
    %s46 = sadd.s32 %s45, 1
    %p49 = scmp.eq.s32.totalorder %s11, 1
    %p50 = scmp.ne.s32.totalorder %s45, %s47
    %p51 = scmp.eq.s32.totalorder %s11, 0
    %p52 = por %p50, %p51
    %p53 = scmp.ne.s32.totalorder %s45, %s47
    %p54 = scmp.eq.s32.totalorder %s16, 1
    %p55 = por %p53, %p54
    %p56 = scmp.ne.s32.totalorder %s47, %s48
    %p57 = scmp.eq.s32.totalorder %s16, 0
    %p58 = por %p56, %p57
    %p59 = scmp.ne.s32.totalorder %s47, %s48
    %p60 = scmp.eq.s32.totalorder %s17, 1
    %p61 = por %p59, %p60
    %p63 = scmp.ne.s32.totalorder %s48, %s62
    %p64 = scmp.eq.s32.totalorder %s17, 0
    %p65 = por %p63, %p64
    %s67 = sadd.s32 %s66, 1
    %p70 = scmp.eq.s32.totalorder %s11, 1
    %p71 = scmp.ne.s32.totalorder %s66, %s68
    %p72 = scmp.eq.s32.totalorder %s11, 0
    %p73 = por %p71, %p72
    %p74 = scmp.ne.s32.totalorder %s66, %s68
    %p75 = scmp.eq.s32.totalorder %s16, 1
    %p76 = por %p74, %p75
    %p77 = scmp.ne.s32.totalorder %s68, %s69
    %p78 = scmp.eq.s32.totalorder %s16, 0
    %p79 = por %p77, %p78
    %p80 = scmp.ne.s32.totalorder %s68, %s69
    %p81 = scmp.eq.s32.totalorder %s17, 1
    %p82 = por %p80, %p81
    %p84 = scmp.ne.s32.totalorder %s69, %s83
    %p85 = scmp.eq.s32.totalorder %s17, 0
    %p86 = por %p84, %p85
    %s88 = sadd.s32 %s87, 1
    %p91 = scmp.eq.s32.totalorder %s11, 1
    %p92 = scmp.ne.s32.totalorder %s87, %s89
    %p93 = scmp.eq.s32.totalorder %s11, 0
    %p94 = por %p92, %p93
    %p95 = scmp.ne.s32.totalorder %s87, %s89
    %p96 = scmp.eq.s32.totalorder %s16, 1
    %p97 = por %p95, %p96
    %p98 = scmp.ne.s32.totalorder %s89, %s90
    %p99 = scmp.eq.s32.totalorder %s16, 0
    %p100 = por %p98, %p99
    %p101 = scmp.ne.s32.totalorder %s89, %s90
    %p102 = scmp.eq.s32.totalorder %s17, 1
    %p103 = por %p101, %p102
    %p105 = scmp.ne.s32.totalorder %s90, %s104
    %p106 = scmp.eq.s32.totalorder %s17, 0
    %p107 = por %p105, %p106
    %s109 = sadd.s32 %s108, 1
    %p112 = scmp.eq.s32.totalorder %s11, 1
    %p113 = scmp.ne.s32.totalorder %s108, %s110
    %p114 = scmp.eq.s32.totalorder %s11, 0
    %p115 = por %p113, %p114
    %p116 = scmp.ne.s32.totalorder %s108, %s110
    %p117 = scmp.eq.s32.totalorder %s16, 1
    %p118 = por %p116, %p117
    %p119 = scmp.ne.s32.totalorder %s110, %s111
    %p120 = scmp.eq.s32.totalorder %s16, 0
    %p121 = por %p119, %p120
    %p122 = scmp.ne.s32.totalorder %s110, %s111
    %p123 = scmp.eq.s32.totalorder %s17, 1
    %p124 = por %p122, %p123
    %p126 = scmp.ne.s32.totalorder %s111, %s125
    %p127 = scmp.eq.s32.totalorder %s17, 0
    %p128 = por %p126, %p127
    %s129 = ssub.s32 %s11, %s18
    %p130 = scmp.eq.s32.totalorder %s129, 0
    %s132 = sadd.s32 %s131, 1
    %s133 = scalar_select %p130, %s131, %s132
    %p136 = pneg %p130
    %p137 = scmp.eq.s32.totalorder %s11, 1
    %p138 = por %p136, %p137
    %p139 = scmp.ne.s32.totalorder %s131, %s134
    %p140 = scmp.eq.s32.totalorder %s11, 0
    %p141 = por %p139, %p140
    %p142 = scmp.ne.s32.totalorder %s131, %s134
    %p143 = scmp.eq.s32.totalorder %s16, 1
    %p144 = por %p142, %p143
    %p145 = scmp.ne.s32.totalorder %s134, %s135
    %p146 = scmp.eq.s32.totalorder %s16, 0
    %p147 = por %p145, %p146
    %p148 = scmp.ne.s32.totalorder %s134, %s135
    %p149 = scmp.eq.s32.totalorder %s17, 1
    %p150 = por %p148, %p149
    %p152 = scmp.ne.s32.totalorder %s135, %s151
    %p153 = scmp.eq.s32.totalorder %s17, 0
    %p154 = por %p152, %p153
    %p155 = scmp.le.s32.totalorder 1, %s11
    %p156 = scmp.lt.s32.totalorder %s11, 3
    %p157 = pnand %p155, %p156
    %p158 = pneg %p157
    // Predicated region
    $region9: #{mobilenet_forward.22} parent=5 // pred_check
      _
    $region10: #{mobilenet_forward.22} parent=5 // pred_check_branch
      %160 = sbr.rel (%p157) target = $region12
    $region11: #{mobilenet_forward.22} parent=5 // pred_region
      %s161 = ssub.s32 %s11, 1
      // Predicated region
      $region13: #{mobilenet_forward.22} parent=11 // pred_check
        %p162 = pneg %p58
      $region14: #{mobilenet_forward.22} parent=11 // pred_check_branch
        %164 = sbr.rel (%p162) target = $region16
      $region15: #{mobilenet_forward.22} parent=11 // pred_region
        _
      $region16: #{mobilenet_forward.22} parent=11 // pred_fallthru
        _
      // Predicated region
      $region17: #{mobilenet_forward.22} parent=11 // pred_check
        %p165 = pneg %p79
      $region18: #{mobilenet_forward.22} parent=11 // pred_check_branch
        %167 = sbr.rel (%p165) target = $region20
      $region19: #{mobilenet_forward.22} parent=11 // pred_region
        _
      $region20: #{mobilenet_forward.22} parent=11 // pred_fallthru
        _
      // Predicated region
      $region21: #{mobilenet_forward.22} parent=11 // pred_check
        %p168 = pneg %p100
      $region22: #{mobilenet_forward.22} parent=11 // pred_check_branch
        %170 = sbr.rel (%p168) target = $region24
      $region23: #{mobilenet_forward.22} parent=11 // pred_region
        _
      $region24: #{mobilenet_forward.22} parent=11 // pred_fallthru
        _
      // Predicated region
      $region25: #{mobilenet_forward.22} parent=11 // pred_check
        %p171 = pneg %p121
      $region26: #{mobilenet_forward.22} parent=11 // pred_check_branch
        %173 = sbr.rel (%p171) target = $region28
      $region27: #{mobilenet_forward.22} parent=11 // pred_region
        _
      $region28: #{mobilenet_forward.22} parent=11 // pred_fallthru
        _
    $region12: #{mobilenet_forward.22} parent=5 // pred_fallthru
      _
    %p174 = scmp.lt.s32.totalorder %s11, 2
    // Predicated region
    $region29: #{mobilenet_forward.22} parent=5 // pred_check
      %p175 = pneg %p174
    $region30: #{mobilenet_forward.22} parent=5 // pred_check_branch
      %177 = sbr.rel (%p175) target = $region32
    $region31: #{mobilenet_forward.22} parent=5 // pred_region
      // Predicated region
      $region33: #{mobilenet_forward.22} parent=31 // pred_check
        %p178 = pneg %p31
      $region34: #{mobilenet_forward.22} parent=31 // pred_check_branch
        %180 = sbr.rel (%p178) target = $region36
      $region35: #{mobilenet_forward.22} parent=31 // pred_region
        %p181 = scmp.lt.s32.totalorder %s11, 1
        %s182 = scalar_select %p181, %s11, 1
        %s183 = smul.addr %s182, 3
        %s184 = smul.addr %s183, 4
        %s185 = scalar_lea.vmem %s0, %s184
      $region36: #{mobilenet_forward.22} parent=31 // pred_fallthru
        _
    $region32: #{mobilenet_forward.22} parent=5 // pred_fallthru
      _
    %p186 = scmp.le.s32.totalorder 1, %s11
    %p187 = scmp.lt.s32.totalorder %s11, 3
    %p188 = pnand %p186, %p187
    %p189 = pneg %p188
    // Predicated region
    $region37: #{mobilenet_forward.22} parent=5 // pred_check
      _
    $region38: #{mobilenet_forward.22} parent=5 // pred_check_branch
      %191 = sbr.rel (%p188) target = $region40
    $region39: #{mobilenet_forward.22} parent=5 // pred_region
      %s192 = ssub.s32 %s11, 1
      %p193 = scmp.lt.s32.totalorder %s16, 1
      %s194 = scalar_select %p193, %s16, 1
      %s195 = smul.addr %s194, 3
      %s196 = smul.addr %s195, 4
      %s197 = scalar_lea.vmem %s0, %s196
      %p198 = pneg %p37
      %p199 = pneg %p34
      %p200 = pneg %p58
      %p201 = pneg %p55
      %p202 = pneg %p79
      %p203 = pneg %p76
      %p204 = pneg %p100
      %p205 = pneg %p97
      %p206 = pneg %p121
      %p207 = pneg %p118
      %p208 = pneg %p147
      %p209 = pneg %p144
      %p210 = scmp.lt.s32.totalorder %s16, 1
      %s211 = scalar_select %p210, %s16, 1
      %s212 = smul.addr %s211, 4
      %s213 = scalar_lea.vmem %s5, %s212
      %p214 = scmp.lt.s32.totalorder %s16, 1
      %s215 = scalar_select %p214, %s16, 1
      %s216 = smul.addr %s215, 3
      %s217 = smul.addr %s216, 4
      %s218 = scalar_lea.vmem %s0, %s217
      %p219 = scmp.lt.s32.totalorder %s16, 1
      %s220 = scalar_select %p219, %s16, 1
      %s221 = smul.addr %s220, 4
      %s222 = scalar_lea.vmem %s5, %s221
      %v223 = vld [vmem:[%s1] sm:$0x1]
      %v224 = vld [vmem:[%s1 + $0x1] sm:$0x1]
      %v225 = vld [vmem:[%s1 + $0x2] sm:$0x1]
      %v226 = vld [vmem:[%s1 + $0x3] sm:$0x1]
      %v227 = vld [vmem:[%s1 + $0x4] sm:$0x1]
      %v228 = vld [vmem:[%s1 + $0x5] sm:$0x1]
      %v229 = vld [vmem:[%s1 + $0x6] sm:$0x1]
      %v230 = vld [vmem:[%s1 + $0x7] sm:$0x1]
      %v231 = vld [vmem:[%s1 + $0x8] sm:$0x1]
      %v232 = vld [vmem:[%s2] sm:$0x1]
      %v234 = vperm.slane %v232, 0
      %v236 = vld [vmem:[%s218] sm:$0xf]
      %v237 = vunpack.c.l.bf16 %v236
      %v239 = vperm.slane %v223, 0
      %v241 = vmul.f32 %v237, %v239
      %v242 = vadd.f32 %v234, %v241
      %v243 = vld [vmem:[%s218 + $0x4] sm:$0x1]
      %v244 = vunpack.c.l.bf16 %v243
      %v246 = vperm.slane %v224, 0
      %v248 = vmul.f32 %v237, %v246
      %v249 = vmul.f32 %v244, %v246
      %vm252 = vcmask 1046528
      %v253 = vrot.slane %v248, 1
      %v254 = vrot.slane %v249, 1
      %v255 = vsel %vm252, %v253, %v254
      %v257 = vadd.f32 %v242, %v255
      %v258 = vld [vmem:[%s218] sm:$0xe]
      %v259 = vunpack.c.l.bf16 %v258
      %v261 = vperm.slane %v225, 0
      %v263 = vmul.f32 %v259, %v261
      %v264 = vmul.f32 %v244, %v261
      %vm267 = vcmask 1045504
      %v268 = vrot.slane %v263, 2
      %v269 = vrot.slane %v264, 2
      %v270 = vsel %vm267, %v268, %v269
      %v272 = vadd.f32 %v257, %v270
      %v273 = vld [vmem:[%s218] sm:$0xc]
      %v274 = vld [vmem:[%s218 + $0x4] sm:$0x3]
      %v275 = vunpack.c.l.bf16 %v273
      %v276 = vunpack.c.l.bf16 %v274
      %v278 = vperm.slane %v226, 0
      %v280 = vmul.f32 %v275, %v278
      %v281 = vmul.f32 %v276, %v278
      %vm284 = vcmask 1043456
      %v285 = vrot.slane %v280, 4
      %v286 = vrot.slane %v281, 4
      %v287 = vsel %vm284, %v285, %v286
      %v289 = vadd.f32 %v272, %v287
      %v290 = vld [vmem:[%s218 + $0x4] sm:$0x7]
      %v291 = vunpack.c.l.bf16 %v290
      %v293 = vperm.slane %v227, 0
      %v295 = vmul.f32 %v275, %v293
      %v296 = vmul.f32 %v291, %v293
      %vm299 = vcmask 1042432
      %v300 = vrot.slane %v295, 5
      %v301 = vrot.slane %v296, 5
      %v302 = vsel %vm299, %v300, %v301
      %v304 = vadd.f32 %v289, %v302
      %v305 = vld [vmem:[%s218] sm:$0x8]
      %v306 = vunpack.c.l.bf16 %v305
      %v308 = vperm.slane %v228, 0
      %v310 = vmul.f32 %v306, %v308
      %v311 = vmul.f32 %v291, %v308
      %vm314 = vcmask 1041408
      %v315 = vrot.slane %v310, 6
      %v316 = vrot.slane %v311, 6
      %v317 = vsel %vm314, %v315, %v316
      %v319 = vadd.f32 %v304, %v317
      %v320 = vld [vmem:[%s218 + $0x4] sm:$0xf]
      %v321 = vunpack.c.l.bf16 %v320
      %v323 = vperm.slane %v229, 0
      %v325 = vmul.f32 %v321, %v323
      %v326 = vadd.f32 %v319, %v325
      %v327 = vld [vmem:[%s218 + $0x8] sm:$0x1]
      %v328 = vunpack.c.l.bf16 %v327
      %v330 = vperm.slane %v230, 0
      %v332 = vmul.f32 %v321, %v330
      %v333 = vmul.f32 %v328, %v330
      %v336 = vrot.slane %v332, 1
      %v337 = vrot.slane %v333, 1
      %v338 = vsel %vm252, %v336, %v337
      %v340 = vadd.f32 %v326, %v338
      %v341 = vld [vmem:[%s218 + $0x4] sm:$0xe]
      %v342 = vunpack.c.l.bf16 %v341
      %v344 = vperm.slane %v231, 0
      %v346 = vmul.f32 %v342, %v344
      %v347 = vmul.f32 %v328, %v344
      %v350 = vrot.slane %v346, 2
      %v351 = vrot.slane %v347, 2
      %v352 = vsel %vm267, %v350, %v351
      %v354 = vadd.f32 %v340, %v352
      %v355 = vmax.f32 %v354, 0.0
      %v356 = vpack.c.bf16 %v355, %v355
      %v357 = vld [vmem:[%s3] sm:$0xf]
      %v358 = vld [vmem:[%s3 + $0x4] sm:$0xf]
      %v359 = vld [vmem:[%s3 + $0x8] sm:$0xf]
      %v360 = vld [vmem:[%s3 + $0xc] sm:$0xf]
      %v361 = vld [vmem:[%s3 + $0x10] sm:$0xf]
      %v362 = vld [vmem:[%s3 + $0x14] sm:$0xf]
      %v363 = vld [vmem:[%s3 + $0x18] sm:$0xf]
      %v364 = vld [vmem:[%s3 + $0x1c] sm:$0xf]
      %v365 = vld [vmem:[%s3 + $0x20] sm:$0xf]
      %v366 = vld [vmem:[%s3 + $0x24] sm:$0xf]
      %v367 = vld [vmem:[%s3 + $0x28] sm:$0xf]
      %v368 = vld [vmem:[%s3 + $0x2c] sm:$0xf]
      %v369 = vld [vmem:[%s3 + $0x30] sm:$0xf]
      %v370 = vld [vmem:[%s3 + $0x34] sm:$0xf]
      %v371 = vld [vmem:[%s3 + $0x38] sm:$0xf]
      %v372 = vld [vmem:[%s3 + $0x3c] sm:$0xf]
      %v373 = vld [vmem:[%s4] sm:$0x1]
      %v375 = vperm.slane %v373, 0
      %v393 = vunpack.c.l.b16 %v357
      %v394 = vunpack.c.l.b16 %v358
      %v395 = vunpack.c.l.b16 %v359
      %v396 = vunpack.c.l.b16 %v360
      %v397 = vunpack.c.l.b16 %v361
      %v398 = vunpack.c.l.b16 %v362
      %v399 = vunpack.c.l.b16 %v363
      %v400 = vunpack.c.l.b16 %v364
      %v401 = vunpack.c.l.b16 %v365
      %v402 = vunpack.c.l.b16 %v366
      %v403 = vunpack.c.l.b16 %v367
      %v404 = vunpack.c.l.b16 %v368
      %v405 = vunpack.c.l.b16 %v369
      %v406 = vunpack.c.l.b16 %v370
      %v407 = vunpack.c.l.b16 %v371
      %v408 = vunpack.c.l.b16 %v372
      %v409 = vpack.c.b16 %v394, %v393
      %v410 = vpack.c.b16 %v396, %v395
      %v411 = vpack.c.b16 %v398, %v397
      %v412 = vpack.c.b16 %v400, %v399
      %v413 = vpack.c.b16 %v402, %v401
      %v414 = vpack.c.b16 %v404, %v403
      %v415 = vpack.c.b16 %v406, %v405
      %v416 = vpack.c.b16 %v408, %v407
      %425 = vmatpush.bf16.msra.mxu0 %v416
      %426 = vmatpush.bf16.msra.mxu0 %v415
      %427 = vmatpush.bf16.msra.mxu0 %v414
      %428 = vmatpush.bf16.msra.mxu0 %v413
      %429 = vmatpush.bf16.msra.mxu0 %v412
      %430 = vmatpush.bf16.msra.mxu0 %v411
      %431 = vmatpush.bf16.msra.mxu0 %v410
      %432 = vmatpush.bf16.msra.mxu0 %v409
      %433 = vmatmul.bf16.gmra.mxu0 %v356
      %v434 = vpop.f32.mrf.mxu0
      %v435 = vadd.f32 %v375, %v434
      %v436 = vpop.f32.mrf.mxu0
      %437 = vdwg.mxu0
      %v438 = vmax.f32 %v435, 0.0
      %v439 = vpack.c.bf16 %v438, %v438
      %440 = vst [vmem:[%s222] sm:$0xf] %v439
      %p441 = scmp.lt.s32.totalorder %s16, 1
      %s442 = scalar_select %p441, %s16, 1
      %s443 = smul.addr %s442, 4
      %s444 = scalar_lea.vmem %s5, %s443
      // Predicated region
      $region41: #{mobilenet_forward.22} parent=39 // pred_check
        %p445 = pneg %p144
      $region42: #{mobilenet_forward.22} parent=39 // pred_check_branch
        %447 = sbr.rel (%p445) target = $region44
      $region43: #{mobilenet_forward.22} parent=39 // pred_region
        _
      $region44: #{mobilenet_forward.22} parent=39 // pred_fallthru
        _
    $region40: #{mobilenet_forward.22} parent=5 // pred_fallthru
      _
    %p448 = scmp.le.s32.totalorder 2, %s11
    // Predicated region
    $region45: #{mobilenet_forward.22} parent=5 // pred_check
      %p449 = pneg %p448
    $region46: #{mobilenet_forward.22} parent=5 // pred_check_branch
      %451 = sbr.rel (%p449) target = $region48
    $region47: #{mobilenet_forward.22} parent=5 // pred_region
      %s452 = ssub.s32 %s11, 2
      // Predicated region
      $region49: #{mobilenet_forward.22} parent=47 // pred_check
        %p453 = pneg %p150
      $region50: #{mobilenet_forward.22} parent=47 // pred_check_branch
        %455 = sbr.rel (%p453) target = $region52
      $region51: #{mobilenet_forward.22} parent=47 // pred_region
        %p456 = scmp.lt.s32.totalorder %s17, 1
        %s457 = scalar_select %p456, %s17, 1
        %s458 = smul.addr %s457, 4
        %s459 = scalar_lea.vmem %s5, %s458
      $region52: #{mobilenet_forward.22} parent=47 // pred_fallthru
        _
    $region48: #{mobilenet_forward.22} parent=5 // pred_fallthru
      _
  $region6: #{mobilenet_forward.22} parent=0 // loop_footer
    %s15 = sadd.s32 1, %s11
  $region7: #{mobilenet_forward.22} parent=0 // loop_footer_branch
    %10 = sbr.rel target = $region3
  $region8: #{mobilenet_forward.22} parent=0 // loop_exit
    _

// kernel: mobilenet_forward.27
$region0: #{mobilenet_forward.27}
  #allocation0 [shape = 'u32[]', space=smem, size = 0x4, offset = 0x4, fixed_abs, tag = 'smem constant byte address 0x4 - core index']
  #allocation1 [shape = 'u32[72,128]{1,0:T(1,128)}', space=vmem, size = 0x9000, scoped, tag = 'internal scratch']
  %s0 = inlined_call_operand.vmem [shape: bf16[2,4,12,128], index: 0, kind: input, shape index: {}]
  %s1 = inlined_call_operand.vmem [shape: f32[9,1,128], index: 1, kind: input, shape index: {}]
  %s2 = inlined_call_operand.vmem [shape: f32[1,128], index: 2, kind: input, shape index: {}]
  %s3 = inlined_call_operand.vmem [shape: bf16[128,256], index: 3, kind: input, shape index: {}]
  %s4 = inlined_call_operand.vmem [shape: f32[1,256], index: 4, kind: input, shape index: {}]
  %s5 = inlined_call_operand.vmem [shape: bf16[2,8,256], index: 5, kind: output, shape index: {}]
  %s6 = sld [smem:[#allocation0]]
  $region53: #{mobilenet_forward.27} parent=0
    _
  %s8 = ssub.s32 1, %s6
  %s9 = scalar_select 0, %s8, %s6
  loop: start=0, step=1, limit=4
  $region2: #{mobilenet_forward.27} parent=0 // loop_pre_header
    _
  $region3: #{mobilenet_forward.27} parent=0 // loop_header
    %s11 = sphi 0, %s15
    %p12 = scmp.ge.s32.totalorder %s11, 4
    %s21 = sphi 0, %s23
    %s24 = sphi 0, %s21
    %s25 = sphi 0, %s24
    %s41 = sphi 0, %s25
    %s45 = sphi 0, %s45
    %s47 = sphi 0, %s45
    %s48 = sphi 0, %s47
    %s62 = sphi 0, %s48
    %s66 = sphi 0, %s66
    %s68 = sphi 0, %s66
    %s69 = sphi 0, %s68
    %s83 = sphi 0, %s69
    %s87 = sphi 0, %s87
    %s89 = sphi 0, %s87
    %s90 = sphi 0, %s89
    %s104 = sphi 0, %s90
    %s108 = sphi 0, %s108
    %s110 = sphi 0, %s108
    %s111 = sphi 0, %s110
    %s125 = sphi 0, %s111
    %s131 = sphi 0, %s133
    %s134 = sphi 0, %s131
    %s135 = sphi 0, %s134
    %s151 = sphi 0, %s135
  $region4: #{mobilenet_forward.27} parent=0 // loop_header_branch
    %14 = sbr.rel (%p12) target = $region8
  $region5: #{mobilenet_forward.27} parent=0 // loop_body
    %s16 = ssub.s32 %s11, 1
    %s17 = ssub.s32 %s11, 2
    %s18 = sadd.s32 %s11, 1
    %s19 = ssub.s32 %s11, %s18
    %p20 = scmp.eq.s32.totalorder %s19, 0
    %s22 = sadd.s32 %s21, 1
    %s23 = scalar_select %p20, %s21, %s22
    %p26 = pneg %p20
    %p27 = scmp.eq.s32.totalorder %s11, 1
    %p28 = por %p26, %p27
    %p29 = scmp.ne.s32.totalorder %s21, %s24
    %p30 = scmp.eq.s32.totalorder %s11, 0
    %p31 = por %p29, %p30
    %p32 = scmp.ne.s32.totalorder %s21, %s24
    %p33 = scmp.eq.s32.totalorder %s16, 1
    %p34 = por %p32, %p33
    %p35 = scmp.ne.s32.totalorder %s24, %s25
    %p36 = scmp.eq.s32.totalorder %s16, 0
    %p37 = por %p35, %p36
    %p38 = scmp.ne.s32.totalorder %s24, %s25
    %p39 = scmp.eq.s32.totalorder %s17, 1
    %p40 = por %p38, %p39
    %p42 = scmp.ne.s32.totalorder %s25, %s41
    %p43 = scmp.eq.s32.totalorder %s17, 0
    %p44 = por %p42, %p43
    %s46 = sadd.s32 %s45, 1
    %p49 = scmp.eq.s32.totalorder %s11, 1
    %p50 = scmp.ne.s32.totalorder %s45, %s47
    %p51 = scmp.eq.s32.totalorder %s11, 0
    %p52 = por %p50, %p51
    %p53 = scmp.ne.s32.totalorder %s45, %s47
    %p54 = scmp.eq.s32.totalorder %s16, 1
    %p55 = por %p53, %p54
    %p56 = scmp.ne.s32.totalorder %s47, %s48
    %p57 = scmp.eq.s32.totalorder %s16, 0
    %p58 = por %p56, %p57
    %p59 = scmp.ne.s32.totalorder %s47, %s48
    %p60 = scmp.eq.s32.totalorder %s17, 1
    %p61 = por %p59, %p60
    %p63 = scmp.ne.s32.totalorder %s48, %s62
    %p64 = scmp.eq.s32.totalorder %s17, 0
    %p65 = por %p63, %p64
    %s67 = sadd.s32 %s66, 1
    %p70 = scmp.eq.s32.totalorder %s11, 1
    %p71 = scmp.ne.s32.totalorder %s66, %s68
    %p72 = scmp.eq.s32.totalorder %s11, 0
    %p73 = por %p71, %p72
    %p74 = scmp.ne.s32.totalorder %s66, %s68
    %p75 = scmp.eq.s32.totalorder %s16, 1
    %p76 = por %p74, %p75
    %p77 = scmp.ne.s32.totalorder %s68, %s69
    %p78 = scmp.eq.s32.totalorder %s16, 0
    %p79 = por %p77, %p78
    %p80 = scmp.ne.s32.totalorder %s68, %s69
    %p81 = scmp.eq.s32.totalorder %s17, 1
    %p82 = por %p80, %p81
    %p84 = scmp.ne.s32.totalorder %s69, %s83
    %p85 = scmp.eq.s32.totalorder %s17, 0
    %p86 = por %p84, %p85
    %s88 = sadd.s32 %s87, 1
    %p91 = scmp.eq.s32.totalorder %s11, 1
    %p92 = scmp.ne.s32.totalorder %s87, %s89
    %p93 = scmp.eq.s32.totalorder %s11, 0
    %p94 = por %p92, %p93
    %p95 = scmp.ne.s32.totalorder %s87, %s89
    %p96 = scmp.eq.s32.totalorder %s16, 1
    %p97 = por %p95, %p96
    %p98 = scmp.ne.s32.totalorder %s89, %s90
    %p99 = scmp.eq.s32.totalorder %s16, 0
    %p100 = por %p98, %p99
    %p101 = scmp.ne.s32.totalorder %s89, %s90
    %p102 = scmp.eq.s32.totalorder %s17, 1
    %p103 = por %p101, %p102
    %p105 = scmp.ne.s32.totalorder %s90, %s104
    %p106 = scmp.eq.s32.totalorder %s17, 0
    %p107 = por %p105, %p106
    %s109 = sadd.s32 %s108, 1
    %p112 = scmp.eq.s32.totalorder %s11, 1
    %p113 = scmp.ne.s32.totalorder %s108, %s110
    %p114 = scmp.eq.s32.totalorder %s11, 0
    %p115 = por %p113, %p114
    %p116 = scmp.ne.s32.totalorder %s108, %s110
    %p117 = scmp.eq.s32.totalorder %s16, 1
    %p118 = por %p116, %p117
    %p119 = scmp.ne.s32.totalorder %s110, %s111
    %p120 = scmp.eq.s32.totalorder %s16, 0
    %p121 = por %p119, %p120
    %p122 = scmp.ne.s32.totalorder %s110, %s111
    %p123 = scmp.eq.s32.totalorder %s17, 1
    %p124 = por %p122, %p123
    %p126 = scmp.ne.s32.totalorder %s111, %s125
    %p127 = scmp.eq.s32.totalorder %s17, 0
    %p128 = por %p126, %p127
    %s129 = ssub.s32 %s11, %s18
    %p130 = scmp.eq.s32.totalorder %s129, 0
    %s132 = sadd.s32 %s131, 1
    %s133 = scalar_select %p130, %s131, %s132
    %p136 = pneg %p130
    %p137 = scmp.eq.s32.totalorder %s11, 1
    %p138 = por %p136, %p137
    %p139 = scmp.ne.s32.totalorder %s131, %s134
    %p140 = scmp.eq.s32.totalorder %s11, 0
    %p141 = por %p139, %p140
    %p142 = scmp.ne.s32.totalorder %s131, %s134
    %p143 = scmp.eq.s32.totalorder %s16, 1
    %p144 = por %p142, %p143
    %p145 = scmp.ne.s32.totalorder %s134, %s135
    %p146 = scmp.eq.s32.totalorder %s16, 0
    %p147 = por %p145, %p146
    %p148 = scmp.ne.s32.totalorder %s134, %s135
    %p149 = scmp.eq.s32.totalorder %s17, 1
    %p150 = por %p148, %p149
    %p152 = scmp.ne.s32.totalorder %s135, %s151
    %p153 = scmp.eq.s32.totalorder %s17, 0
    %p154 = por %p152, %p153
    %p155 = scmp.le.s32.totalorder 1, %s11
    %p156 = scmp.lt.s32.totalorder %s11, 3
    %p157 = pnand %p155, %p156
    %p158 = pneg %p157
    // Predicated region
    $region9: #{mobilenet_forward.27} parent=5 // pred_check
      _
    $region10: #{mobilenet_forward.27} parent=5 // pred_check_branch
      %160 = sbr.rel (%p157) target = $region12
    $region11: #{mobilenet_forward.27} parent=5 // pred_region
      %s161 = ssub.s32 %s11, 1
      // Predicated region
      $region13: #{mobilenet_forward.27} parent=11 // pred_check
        %p162 = pneg %p58
      $region14: #{mobilenet_forward.27} parent=11 // pred_check_branch
        %164 = sbr.rel (%p162) target = $region16
      $region15: #{mobilenet_forward.27} parent=11 // pred_region
        _
      $region16: #{mobilenet_forward.27} parent=11 // pred_fallthru
        _
      // Predicated region
      $region17: #{mobilenet_forward.27} parent=11 // pred_check
        %p165 = pneg %p79
      $region18: #{mobilenet_forward.27} parent=11 // pred_check_branch
        %167 = sbr.rel (%p165) target = $region20
      $region19: #{mobilenet_forward.27} parent=11 // pred_region
        _
      $region20: #{mobilenet_forward.27} parent=11 // pred_fallthru
        _
      // Predicated region
      $region21: #{mobilenet_forward.27} parent=11 // pred_check
        %p168 = pneg %p100
      $region22: #{mobilenet_forward.27} parent=11 // pred_check_branch
        %170 = sbr.rel (%p168) target = $region24
      $region23: #{mobilenet_forward.27} parent=11 // pred_region
        _
      $region24: #{mobilenet_forward.27} parent=11 // pred_fallthru
        _
      // Predicated region
      $region25: #{mobilenet_forward.27} parent=11 // pred_check
        %p171 = pneg %p121
      $region26: #{mobilenet_forward.27} parent=11 // pred_check_branch
        %173 = sbr.rel (%p171) target = $region28
      $region27: #{mobilenet_forward.27} parent=11 // pred_region
        _
      $region28: #{mobilenet_forward.27} parent=11 // pred_fallthru
        _
    $region12: #{mobilenet_forward.27} parent=5 // pred_fallthru
      _
    %p174 = scmp.lt.s32.totalorder %s11, 2
    // Predicated region
    $region29: #{mobilenet_forward.27} parent=5 // pred_check
      %p175 = pneg %p174
    $region30: #{mobilenet_forward.27} parent=5 // pred_check_branch
      %177 = sbr.rel (%p175) target = $region32
    $region31: #{mobilenet_forward.27} parent=5 // pred_region
      // Predicated region
      $region33: #{mobilenet_forward.27} parent=31 // pred_check
        %p178 = pneg %p31
      $region34: #{mobilenet_forward.27} parent=31 // pred_check_branch
        %180 = sbr.rel (%p178) target = $region36
      $region35: #{mobilenet_forward.27} parent=31 // pred_region
        %p181 = scmp.lt.s32.totalorder %s11, 1
        %s182 = scalar_select %p181, %s11, 1
        %s183 = smul.addr %s182, 8
        %s184 = smul.addr %s183, 4
        %s185 = scalar_lea.vmem %s0, %s184
      $region36: #{mobilenet_forward.27} parent=31 // pred_fallthru
        _
    $region32: #{mobilenet_forward.27} parent=5 // pred_fallthru
      _
    %p186 = scmp.le.s32.totalorder 1, %s11
    %p187 = scmp.lt.s32.totalorder %s11, 3
    %p188 = pnand %p186, %p187
    %p189 = pneg %p188
    // Predicated region
    $region37: #{mobilenet_forward.27} parent=5 // pred_check
      _
    $region38: #{mobilenet_forward.27} parent=5 // pred_check_branch
      %191 = sbr.rel (%p188) target = $region40
    $region39: #{mobilenet_forward.27} parent=5 // pred_region
      %s192 = ssub.s32 %s11, 1
      %p193 = scmp.lt.s32.totalorder %s16, 1
      %s194 = scalar_select %p193, %s16, 1
      %s195 = smul.addr %s194, 8
      %s196 = smul.addr %s195, 4
      %s197 = scalar_lea.vmem %s0, %s196
      %p198 = pneg %p37
      %p199 = pneg %p34
      %p200 = pneg %p58
      %p201 = pneg %p55
      %p202 = pneg %p79
      %p203 = pneg %p76
      %p204 = pneg %p100
      %p205 = pneg %p97
      %p206 = pneg %p121
      %p207 = pneg %p118
      %p208 = pneg %p147
      %p209 = pneg %p144
      %p210 = scmp.lt.s32.totalorder %s16, 1
      %s211 = scalar_select %p210, %s16, 1
      %s212 = smul.addr %s211, 2
      %s213 = smul.addr %s212, 4
      %s214 = scalar_lea.vmem %s5, %s213
      %p215 = scmp.lt.s32.totalorder %s16, 1
      %s216 = scalar_select %p215, %s16, 1
      %s217 = smul.addr %s216, 8
      %s218 = smul.addr %s217, 4
      %s219 = scalar_lea.vmem %s0, %s218
      %p220 = scmp.lt.s32.totalorder %s16, 1
      %s221 = scalar_select %p220, %s16, 1
      %s222 = smul.addr %s221, 2
      %s223 = smul.addr %s222, 4
      %s224 = scalar_lea.vmem %s5, %s223
      %v225 = vld [vmem:[%s1] sm:$0x1]
      %v226 = vld [vmem:[%s1 + $0x1] sm:$0x1]
      %v227 = vld [vmem:[%s1 + $0x2] sm:$0x1]
      %v228 = vld [vmem:[%s1 + $0x3] sm:$0x1]
      %v229 = vld [vmem:[%s1 + $0x4] sm:$0x1]
      %v230 = vld [vmem:[%s1 + $0x5] sm:$0x1]
      %v231 = vld [vmem:[%s1 + $0x6] sm:$0x1]
      %v232 = vld [vmem:[%s1 + $0x7] sm:$0x1]
      %v233 = vld [vmem:[%s1 + $0x8] sm:$0x1]
      %v234 = vld [vmem:[%s2] sm:$0x1]
      %v236 = vperm.slane %v234, 0
      %v238 = vld [vmem:[%s219] sm:$0xf]
      %v239 = vunpack.c.l.bf16 %v238
      %v241 = vperm.slane %v225, 0
      %v243 = vmul.f32 %v239, %v241
      %v244 = vadd.f32 %v236, %v243
      %s245 = scalar_lea.vmem %s219, 8
      %v246 = vld [vmem:[%s245] sm:$0xf]
      %v247 = vunpack.c.l.bf16 %v246
      %v249 = vperm.slane %v226, 0
      %v251 = vmul.f32 %v247, %v249
      %v252 = vadd.f32 %v244, %v251
      %v253 = vld [vmem:[%s219 + $0x4] sm:$0x1]
      %v254 = vunpack.c.l.bf16 %v253
      %v256 = vperm.slane %v227, 0
      %v258 = vmul.f32 %v239, %v256
      %v259 = vmul.f32 %v254, %v256
      %vm262 = vcmask 1046528
      %v263 = vrot.slane %v258, 1
      %v264 = vrot.slane %v259, 1
      %v265 = vsel %vm262, %v263, %v264
      %v267 = vadd.f32 %v252, %v265
      %s268 = scalar_lea.vmem %s219, 16
      %v269 = vld [vmem:[%s268] sm:$0xf]
      %v270 = vunpack.c.l.bf16 %v269
      %v272 = vperm.slane %v228, 0
      %v274 = vmul.f32 %v270, %v272
      %v275 = vadd.f32 %v267, %v274
      %s276 = scalar_lea.vmem %s219, 24
      %v277 = vld [vmem:[%s276] sm:$0xf]
      %v278 = vunpack.c.l.bf16 %v277
      %v280 = vperm.slane %v229, 0
      %v282 = vmul.f32 %v278, %v280
      %v283 = vadd.f32 %v275, %v282
      %v284 = vld [vmem:[%s268 + $0x4] sm:$0x1]
      %v285 = vunpack.c.l.bf16 %v284
      %v287 = vperm.slane %v230, 0
      %v289 = vmul.f32 %v270, %v287
      %v290 = vmul.f32 %v285, %v287
      %v293 = vrot.slane %v289, 1
      %v294 = vrot.slane %v290, 1
      %v295 = vsel %vm262, %v293, %v294
      %v297 = vadd.f32 %v283, %v295
      %v298 = vld [vmem:[%s219] sm:$0xe]
      %v299 = vunpack.c.l.bf16 %v298
      %v301 = vperm.slane %v231, 0
      %v303 = vmul.f32 %v299, %v301
      %v304 = vmul.f32 %v254, %v301
      %vm307 = vcmask 1045504
      %v308 = vrot.slane %v303, 2
      %v309 = vrot.slane %v304, 2
      %v310 = vsel %vm307, %v308, %v309
      %v312 = vadd.f32 %v297, %v310
      %v313 = vld [vmem:[%s245] sm:$0xe]
      %v314 = vld [vmem:[%s245 + $0x4] sm:$0x1]
      %v315 = vunpack.c.l.bf16 %v313
      %v316 = vunpack.c.l.bf16 %v314
      %v318 = vperm.slane %v232, 0
      %v320 = vmul.f32 %v315, %v318
      %v321 = vmul.f32 %v316, %v318
      %v324 = vrot.slane %v320, 2
      %v325 = vrot.slane %v321, 2
      %v326 = vsel %vm307, %v324, %v325
      %v328 = vadd.f32 %v312, %v326
      %v329 = vld [vmem:[%s219 + $0x4] sm:$0x3]
      %v330 = vunpack.c.l.bf16 %v329
      %v332 = vperm.slane %v233, 0
      %v334 = vmul.f32 %v299, %v332
      %v335 = vmul.f32 %v330, %v332
      %vm338 = vcmask 1044480
      %v339 = vrot.slane %v334, 3
      %v340 = vrot.slane %v335, 3
      %v341 = vsel %vm338, %v339, %v340
      %v343 = vadd.f32 %v328, %v341
      %v344 = vmax.f32 %v343, 0.0
      %v345 = vpack.c.bf16 %v344, %v344
      %v346 = vld [vmem:[%s3] sm:$0xff]
      %v347 = vld [vmem:[%s3 + $0x8] sm:$0xff]
      %v348 = vld [vmem:[%s3 + $0x10] sm:$0xff]
      %v349 = vld [vmem:[%s3 + $0x18] sm:$0xff]
      %v350 = vld [vmem:[%s3 + $0x20] sm:$0xff]
      %v351 = vld [vmem:[%s3 + $0x28] sm:$0xff]
      %v352 = vld [vmem:[%s3 + $0x30] sm:$0xff]
      %v353 = vld [vmem:[%s3 + $0x38] sm:$0xff]
      %v354 = vld [vmem:[%s3 + $0x40] sm:$0xff]
      %v355 = vld [vmem:[%s3 + $0x48] sm:$0xff]
      %v356 = vld [vmem:[%s3 + $0x50] sm:$0xff]
      %v357 = vld [vmem:[%s3 + $0x58] sm:$0xff]
      %v358 = vld [vmem:[%s3 + $0x60] sm:$0xff]
      %v359 = vld [vmem:[%s3 + $0x68] sm:$0xff]
      %v360 = vld [vmem:[%s3 + $0x70] sm:$0xff]
      %v361 = vld [vmem:[%s3 + $0x78] sm:$0xff]
      %v362 = vld [vmem:[%s4] sm:$0x3]
      %v364 = vperm.slane %v362, 0
      %v365 = vperm.slane %v362, 1
      %v384 = vunpack.c.l.b16 %v346
      %v385 = vunpack.c.h.b16 %v346
      %v386 = vunpack.c.l.b16 %v347
      %v387 = vunpack.c.h.b16 %v347
      %v388 = vunpack.c.l.b16 %v348
      %v389 = vunpack.c.h.b16 %v348
      %v390 = vunpack.c.l.b16 %v349
      %v391 = vunpack.c.h.b16 %v349
      %v392 = vunpack.c.l.b16 %v350
      %v393 = vunpack.c.h.b16 %v350
      %v394 = vunpack.c.l.b16 %v351
      %v395 = vunpack.c.h.b16 %v351
      %v396 = vunpack.c.l.b16 %v352
      %v397 = vunpack.c.h.b16 %v352
      %v398 = vunpack.c.l.b16 %v353
      %v399 = vunpack.c.h.b16 %v353
      %v400 = vunpack.c.l.b16 %v354
      %v401 = vunpack.c.h.b16 %v354
      %v402 = vunpack.c.l.b16 %v355
      %v403 = vunpack.c.h.b16 %v355
      %v404 = vunpack.c.l.b16 %v356
      %v405 = vunpack.c.h.b16 %v356
      %v406 = vunpack.c.l.b16 %v357
      %v407 = vunpack.c.h.b16 %v357
      %v408 = vunpack.c.l.b16 %v358
      %v409 = vunpack.c.h.b16 %v358
      %v410 = vunpack.c.l.b16 %v359
      %v411 = vunpack.c.h.b16 %v359
      %v412 = vunpack.c.l.b16 %v360
      %v413 = vunpack.c.h.b16 %v360
      %v414 = vunpack.c.l.b16 %v361
      %v415 = vunpack.c.h.b16 %v361
      %v416 = vpack.c.b16 %v386, %v384
      %v417 = vpack.c.b16 %v387, %v385
      %v418 = vpack.c.b16 %v390, %v388
      %v419 = vpack.c.b16 %v391, %v389
      %v420 = vpack.c.b16 %v394, %v392
      %v421 = vpack.c.b16 %v395, %v393
      %v422 = vpack.c.b16 %v398, %v396
      %v423 = vpack.c.b16 %v399, %v397
      %v424 = vpack.c.b16 %v402, %v400
      %v425 = vpack.c.b16 %v403, %v401
      %v426 = vpack.c.b16 %v406, %v404
      %v427 = vpack.c.b16 %v407, %v405
      %v428 = vpack.c.b16 %v410, %v408
      %v429 = vpack.c.b16 %v411, %v409
      %v430 = vpack.c.b16 %v414, %v412
      %v431 = vpack.c.b16 %v415, %v413
      %448 = vmatpush.bf16.msra.mxu0 %v430
      %449 = vmatpush.bf16.msra.mxu0 %v428
      %450 = vmatpush.bf16.msra.mxu0 %v426
      %451 = vmatpush.bf16.msra.mxu0 %v424
      %452 = vmatpush.bf16.msra.mxu0 %v422
      %453 = vmatpush.bf16.msra.mxu0 %v420
      %454 = vmatpush.bf16.msra.mxu0 %v418
      %455 = vmatpush.bf16.msra.mxu0 %v416
      %456 = vmatmul.bf16.gmra.mxu0 %v345
      %v457 = vpop.f32.mrf.mxu0
      %v458 = vadd.f32 %v364, %v457
      %v459 = vpop.f32.mrf.mxu0
      %460 = vdwg.mxu0
      %461 = vmatpush.bf16.msra.mxu0 %v431
      %462 = vmatpush.bf16.msra.mxu0 %v429
      %463 = vmatpush.bf16.msra.mxu0 %v427
      %464 = vmatpush.bf16.msra.mxu0 %v425
      %465 = vmatpush.bf16.msra.mxu0 %v423
      %466 = vmatpush.bf16.msra.mxu0 %v421
      %467 = vmatpush.bf16.msra.mxu0 %v419
      %468 = vmatpush.bf16.msra.mxu0 %v417
      %469 = vmatmul.bf16.gmra.mxu0 %v345
      %v470 = vpop.f32.mrf.mxu0
      %v471 = vadd.f32 %v365, %v470
      %v472 = vpop.f32.mrf.mxu0
      %473 = vdwg.mxu0
      %v474 = vmax.f32 %v458, 0.0
      %v475 = vmax.f32 %v471, 0.0
      %v476 = vpack.c.bf16 %v475, %v474
      %477 = vst [vmem:[%s224] sm:$0xff] %v476
      %p478 = scmp.lt.s32.totalorder %s16, 1
      %s479 = scalar_select %p478, %s16, 1
      %s480 = smul.addr %s479, 2
      %s481 = smul.addr %s480, 4
      %s482 = scalar_lea.vmem %s5, %s481
      // Predicated region
      $region41: #{mobilenet_forward.27} parent=39 // pred_check
        %p483 = pneg %p144
      $region42: #{mobilenet_forward.27} parent=39 // pred_check_branch
        %485 = sbr.rel (%p483) target = $region44
      $region43: #{mobilenet_forward.27} parent=39 // pred_region
        _
      $region44: #{mobilenet_forward.27} parent=39 // pred_fallthru
        _
    $region40: #{mobilenet_forward.27} parent=5 // pred_fallthru
      _
    %p486 = scmp.le.s32.totalorder 2, %s11
    // Predicated region
    $region45: #{mobilenet_forward.27} parent=5 // pred_check
      %p487 = pneg %p486
    $region46: #{mobilenet_forward.27} parent=5 // pred_check_branch
      %489 = sbr.rel (%p487) target = $region48
    $region47: #{mobilenet_forward.27} parent=5 // pred_region
      %s490 = ssub.s32 %s11, 2
      // Predicated region
      $region49: #{mobilenet_forward.27} parent=47 // pred_check
        %p491 = pneg %p150
      $region50: #{mobilenet_forward.27} parent=47 // pred_check_branch
        %493 = sbr.rel (%p491) target = $region52
      $region51: #{mobilenet_forward.27} parent=47 // pred_region
        %p494 = scmp.lt.s32.totalorder %s17, 1
        %s495 = scalar_select %p494, %s17, 1
        %s496 = smul.addr %s495, 2
        %s497 = smul.addr %s496, 4
        %s498 = scalar_lea.vmem %s5, %s497
      $region52: #{mobilenet_forward.27} parent=47 // pred_fallthru
        _
    $region48: #{mobilenet_forward.27} parent=5 // pred_fallthru
      _
  $region6: #{mobilenet_forward.27} parent=0 // loop_footer
    %s15 = sadd.s32 1, %s11
  $region7: #{mobilenet_forward.27} parent=0 // loop_footer_branch
    %10 = sbr.rel target = $region3
  $region8: #{mobilenet_forward.27} parent=0 // loop_exit
    _

// kernel: mobilenet_forward.29
$region0: #{mobilenet_forward.29}
  #allocation0 [shape = 'u32[]', space=smem, size = 0x4, offset = 0x4, fixed_abs, tag = 'smem constant byte address 0x4 - core index']
  #allocation1 [shape = 'u32[72,128]{1,0:T(1,128)}', space=vmem, size = 0x9000, scoped, tag = 'internal scratch']
  %s0 = inlined_call_operand.vmem [shape: bf16[2,1,256], index: 0, kind: input, shape index: {}]
  %s1 = inlined_call_operand.hbm [shape: f32[2,1,256], index: 1, kind: output, shape index: {}]
  %s2 = sld [smem:[#allocation0]]
  $region37: #{mobilenet_forward.29} parent=0
    _
  %s4 = ssub.s32 1, %s2
  %s5 = scalar_select 0, %s4, %s2
  $region1: #{mobilenet_forward.29} parent=0
    #allocation2 [shape = 'u8[2048]{0}', space=vmem, size = 0x800, scoped, tag = 'output window, operand 0']
    #allocation3 [shape = 's32[2]{0}', space=sflag, size = 0x8, scoped, tag = 'scoped memory for mobilenet_forward.29']
    %6 = vsyncpa [#allocation3], 0
    %s7 = scalar_lea.sflag [#allocation3], 1
    %8 = vsyncpa %s7, 0
    loop: start=0, step=1, limit=4
    $region2: #{mobilenet_forward.29} parent=1 // loop_pre_header
      _
    $region3: #{mobilenet_forward.29} parent=1 // loop_header
      %s10 = sphi 0, %s14
      %p11 = scmp.ge.s32.totalorder %s10, 4
      %s20 = sphi 0, %s22
      %s23 = sphi 0, %s20
      %s24 = sphi 0, %s23
      %s40 = sphi 0, %s24
      %s46 = sphi 0, %s48
      %s49 = sphi 0, %s46
      %s50 = sphi 0, %s49
      %s66 = sphi 0, %s50
    $region4: #{mobilenet_forward.29} parent=1 // loop_header_branch
      %13 = sbr.rel (%p11) target = $region8
    $region5: #{mobilenet_forward.29} parent=1 // loop_body
      %s15 = ssub.s32 %s10, 1
      %s16 = ssub.s32 %s10, 2
      %s17 = sadd.s32 %s10, 1
      %s18 = ssub.s32 %s10, %s17
      %p19 = scmp.eq.s32.totalorder %s18, 0
      %s21 = sadd.s32 %s20, 1
      %s22 = scalar_select %p19, %s20, %s21
      %p25 = pneg %p19
      %p26 = scmp.eq.s32.totalorder %s10, 1
      %p27 = por %p25, %p26
      %p28 = scmp.ne.s32.totalorder %s20, %s23
      %p29 = scmp.eq.s32.totalorder %s10, 0
      %p30 = por %p28, %p29
      %p31 = scmp.ne.s32.totalorder %s20, %s23
      %p32 = scmp.eq.s32.totalorder %s15, 1
      %p33 = por %p31, %p32
      %p34 = scmp.ne.s32.totalorder %s23, %s24
      %p35 = scmp.eq.s32.totalorder %s15, 0
      %p36 = por %p34, %p35
      %p37 = scmp.ne.s32.totalorder %s23, %s24
      %p38 = scmp.eq.s32.totalorder %s16, 1
      %p39 = por %p37, %p38
      %p41 = scmp.ne.s32.totalorder %s24, %s40
      %p42 = scmp.eq.s32.totalorder %s16, 0
      %p43 = por %p41, %p42
      %s44 = ssub.s32 %s10, %s17
      %p45 = scmp.eq.s32.totalorder %s44, 0
      %s47 = sadd.s32 %s46, 1
      %s48 = scalar_select %p45, %s46, %s47
      %p51 = pneg %p45
      %p52 = scmp.eq.s32.totalorder %s10, 1
      %p53 = por %p51, %p52
      %p54 = scmp.ne.s32.totalorder %s46, %s49
      %p55 = scmp.eq.s32.totalorder %s10, 0
      %p56 = por %p54, %p55
      %p57 = scmp.ne.s32.totalorder %s46, %s49
      %p58 = scmp.eq.s32.totalorder %s15, 1
      %p59 = por %p57, %p58
      %p60 = scmp.ne.s32.totalorder %s49, %s50
      %p61 = scmp.eq.s32.totalorder %s15, 0
      %p62 = por %p60, %p61
      %p63 = scmp.ne.s32.totalorder %s49, %s50
      %p64 = scmp.eq.s32.totalorder %s16, 1
      %p65 = por %p63, %p64
      %p67 = scmp.ne.s32.totalorder %s50, %s66
      %p68 = scmp.eq.s32.totalorder %s16, 0
      %p69 = por %p67, %p68
      %p70 = scmp.le.s32.totalorder 1, %s10
      %p71 = scmp.lt.s32.totalorder %s10, 3
      %p72 = pnand %p70, %p71
      %p73 = pneg %p72
      // Predicated region
      $region9: #{mobilenet_forward.29} parent=5 // pred_check
        _
      $region10: #{mobilenet_forward.29} parent=5 // pred_check_branch
        %75 = sbr.rel (%p72) target = $region12
      $region11: #{mobilenet_forward.29} parent=5 // pred_region
        %s76 = ssub.s32 %s10, 1
      $region12: #{mobilenet_forward.29} parent=5 // pred_fallthru
        _
      %p77 = scmp.lt.s32.totalorder %s10, 2
      // Predicated region
      $region13: #{mobilenet_forward.29} parent=5 // pred_check
        %p78 = pneg %p77
      $region14: #{mobilenet_forward.29} parent=5 // pred_check_branch
        %80 = sbr.rel (%p78) target = $region16
      $region15: #{mobilenet_forward.29} parent=5 // pred_region
        // Predicated region
        $region17: #{mobilenet_forward.29} parent=15 // pred_check
          %p81 = pneg %p30
        $region18: #{mobilenet_forward.29} parent=15 // pred_check_branch
          %83 = sbr.rel (%p81) target = $region20
        $region19: #{mobilenet_forward.29} parent=15 // pred_region
          %p84 = scmp.lt.s32.totalorder %s10, 1
          %s85 = scalar_select %p84, %s10, 1
          %s86 = smul.addr %s85, 2
          %s87 = scalar_lea.vmem %s0, %s86
        $region20: #{mobilenet_forward.29} parent=15 // pred_fallthru
          _
      $region16: #{mobilenet_forward.29} parent=5 // pred_fallthru
        _
      %p88 = scmp.le.s32.totalorder 1, %s10
      %p89 = scmp.lt.s32.totalorder %s10, 3
      %p90 = pnand %p88, %p89
      %p91 = pneg %p90
      // Predicated region
      $region21: #{mobilenet_forward.29} parent=5 // pred_check
        _
      $region22: #{mobilenet_forward.29} parent=5 // pred_check_branch
        %93 = sbr.rel (%p90) target = $region24
      $region23: #{mobilenet_forward.29} parent=5 // pred_region
        %s94 = ssub.s32 %s10, 1
        %p95 = scmp.lt.s32.totalorder %s15, 1
        %s96 = scalar_select %p95, %s15, 1
        %s97 = smul.addr %s96, 2
        %s98 = scalar_lea.vmem %s0, %s97
        %p99 = pneg %p36
        %p100 = pneg %p33
        %p101 = pneg %p62
        %p102 = pneg %p59
        %s103 = sand.u32 %s49, 1
        %s104 = scalar_lea.sflag [#allocation3], %s103
        %s105 = sand.u32 %s49, 1
        %s106 = smul.addr %s105, 2
        %s107 = scalar_lea.vmem [#allocation2], %s106
        %p108 = scmp.lt.s32.totalorder %s15, 1
        %s109 = scalar_select %p108, %s15, 1
        %s110 = smul.addr %s109, 2
        %s111 = scalar_lea.vmem %s0, %s110
        %v112 = vld [vmem:[%s111] sm:$0x3]
        %v113 = vunpack.c.l.bf16 %v112
        %v114 = vadd.f32 %v113, 0.0
        %v116 = vrot.slane %v114, 1
        %v117 = vrot.slane %v114, 2
        %v118 = vrot.slane %v114, 3
        %vm119 = vcmask 1040384
        %v120 = vsel %vm119, %v114, %v116
        %vm121 = vcmask 1042434
        %v122 = vsel %vm121, %v117, %v118
        %vm123 = vcmask 1041408
        %v124 = vsel %vm123, %v120, %v122
        %v126 = vlaneseq
        %vm127 = vcmp.ge.s32.totalorder %v126, 0
        %vm128 = vcmp.lt.s32.totalorder %v126, 256
        %vm129 = vmand %vm127, %vm128
        %130 = vst.msk [vmem:[%s107] sm:$0x3] %vm129, %v124
        %s131 = sand.u32 %s49, 1
        %s132 = scalar_lea.sflag [#allocation3], %s131
        %s133 = sand.u32 %s49, 1
        %s134 = smul.addr %s133, 2
        %s135 = scalar_lea.vmem [#allocation2], %s134
        // Predicated region
        $region25: #{mobilenet_forward.29} parent=23 // pred_check
          %p136 = pneg %p59
        $region26: #{mobilenet_forward.29} parent=23 // pred_check_branch
          %138 = sbr.rel (%p136) target = $region28
        $region27: #{mobilenet_forward.29} parent=23 // pred_region
          %140 = vsyncadd %s132, 0
          %s141 = smul.addr %s15, 2
          %s142 = scalar_lea.hbm %s1, %s141
          %s144 = sshll.u32 %s135, 4
          %s145 = int_to_ptr.vmem [resolvable:$true] %s144
          %s146 = sshll.u32 %s142, 4
          %s147 = int_to_ptr.hbm [resolvable:$true] %s146
          %149 = dma.vmem_to_hbm [thread:$0]  %s145, 32, %s147, %s132
        $region28: #{mobilenet_forward.29} parent=23 // pred_fallthru
          _
      $region24: #{mobilenet_forward.29} parent=5 // pred_fallthru
        _
      %p150 = scmp.le.s32.totalorder 2, %s10
      // Predicated region
      $region29: #{mobilenet_forward.29} parent=5 // pred_check
        %p151 = pneg %p150
      $region30: #{mobilenet_forward.29} parent=5 // pred_check_branch
        %153 = sbr.rel (%p151) target = $region32
      $region31: #{mobilenet_forward.29} parent=5 // pred_region
        %s154 = ssub.s32 %s10, 2
        // Predicated region
        $region33: #{mobilenet_forward.29} parent=31 // pred_check
          %p155 = pneg %p65
        $region34: #{mobilenet_forward.29} parent=31 // pred_check_branch
          %157 = sbr.rel (%p155) target = $region36
        $region35: #{mobilenet_forward.29} parent=31 // pred_region
          %s158 = sand.u32 %s50, 1
          %s159 = scalar_lea.sflag [#allocation3], %s158
          %s160 = sand.u32 %s50, 1
          %s161 = smul.addr %s160, 2
          %s162 = scalar_lea.vmem [#allocation2], %s161
          %164 = dma.done %s159, 32
        $region36: #{mobilenet_forward.29} parent=31 // pred_fallthru
          _
      $region32: #{mobilenet_forward.29} parent=5 // pred_fallthru
        _
    $region6: #{mobilenet_forward.29} parent=1 // loop_footer
      %s14 = sadd.s32 1, %s10
    $region7: #{mobilenet_forward.29} parent=1 // loop_footer_branch
      %9 = sbr.rel target = $region3
    $region8: #{mobilenet_forward.29} parent=1 // loop_exit
      _
    %165 = vsyncpa [#allocation3], 1
    %s166 = scalar_lea.sflag [#allocation3], 1
    %167 = vsyncpa %s166, 1

// kernel: mobilenet_forward.28
$region0: #{mobilenet_forward.28}
  #allocation0 [shape = 'u32[]', space=smem, size = 0x4, offset = 0x4, fixed_abs, tag = 'smem constant byte address 0x4 - core index']
  #allocation1 [shape = 'u32[72,128]{1,0:T(1,128)}', space=vmem, size = 0x9000, scoped, tag = 'internal scratch']
  %s0 = inlined_call_operand.vmem [shape: bf16[2,4,12,256], index: 0, kind: input, shape index: {}]
  %s1 = inlined_call_operand.vmem [shape: f32[9,1,256], index: 1, kind: input, shape index: {}]
  %s2 = inlined_call_operand.vmem [shape: f32[1,256], index: 2, kind: input, shape index: {}]
  %s3 = inlined_call_operand.vmem [shape: bf16[2,8,256], index: 3, kind: output, shape index: {}]
  %s4 = sld [smem:[#allocation0]]
  $region45: #{mobilenet_forward.28} parent=0
    _
  %s6 = ssub.s32 1, %s4
  %s7 = scalar_select 0, %s6, %s4
  loop: start=0, step=1, limit=4
  $region2: #{mobilenet_forward.28} parent=0 // loop_pre_header
    _
  $region3: #{mobilenet_forward.28} parent=0 // loop_header
    %s9 = sphi 0, %s13
    %p10 = scmp.ge.s32.totalorder %s9, 4
    %s19 = sphi 0, %s21
    %s22 = sphi 0, %s19
    %s23 = sphi 0, %s22
    %s39 = sphi 0, %s23
    %s43 = sphi 0, %s43
    %s45 = sphi 0, %s43
    %s46 = sphi 0, %s45
    %s60 = sphi 0, %s46
    %s64 = sphi 0, %s64
    %s66 = sphi 0, %s64
    %s67 = sphi 0, %s66
    %s81 = sphi 0, %s67
    %s87 = sphi 0, %s89
    %s90 = sphi 0, %s87
    %s91 = sphi 0, %s90
    %s107 = sphi 0, %s91
  $region4: #{mobilenet_forward.28} parent=0 // loop_header_branch
    %12 = sbr.rel (%p10) target = $region8
  $region5: #{mobilenet_forward.28} parent=0 // loop_body
    %s14 = ssub.s32 %s9, 1
    %s15 = ssub.s32 %s9, 2
    %s16 = sadd.s32 %s9, 1
    %s17 = ssub.s32 %s9, %s16
    %p18 = scmp.eq.s32.totalorder %s17, 0
    %s20 = sadd.s32 %s19, 1
    %s21 = scalar_select %p18, %s19, %s20
    %p24 = pneg %p18
    %p25 = scmp.eq.s32.totalorder %s9, 1
    %p26 = por %p24, %p25
    %p27 = scmp.ne.s32.totalorder %s19, %s22
    %p28 = scmp.eq.s32.totalorder %s9, 0
    %p29 = por %p27, %p28
    %p30 = scmp.ne.s32.totalorder %s19, %s22
    %p31 = scmp.eq.s32.totalorder %s14, 1
    %p32 = por %p30, %p31
    %p33 = scmp.ne.s32.totalorder %s22, %s23
    %p34 = scmp.eq.s32.totalorder %s14, 0
    %p35 = por %p33, %p34
    %p36 = scmp.ne.s32.totalorder %s22, %s23
    %p37 = scmp.eq.s32.totalorder %s15, 1
    %p38 = por %p36, %p37
    %p40 = scmp.ne.s32.totalorder %s23, %s39
    %p41 = scmp.eq.s32.totalorder %s15, 0
    %p42 = por %p40, %p41
    %s44 = sadd.s32 %s43, 1
    %p47 = scmp.eq.s32.totalorder %s9, 1
    %p48 = scmp.ne.s32.totalorder %s43, %s45
    %p49 = scmp.eq.s32.totalorder %s9, 0
    %p50 = por %p48, %p49
    %p51 = scmp.ne.s32.totalorder %s43, %s45
    %p52 = scmp.eq.s32.totalorder %s14, 1
    %p53 = por %p51, %p52
    %p54 = scmp.ne.s32.totalorder %s45, %s46
    %p55 = scmp.eq.s32.totalorder %s14, 0
    %p56 = por %p54, %p55
    %p57 = scmp.ne.s32.totalorder %s45, %s46
    %p58 = scmp.eq.s32.totalorder %s15, 1
    %p59 = por %p57, %p58
    %p61 = scmp.ne.s32.totalorder %s46, %s60
    %p62 = scmp.eq.s32.totalorder %s15, 0
    %p63 = por %p61, %p62
    %s65 = sadd.s32 %s64, 1
    %p68 = scmp.eq.s32.totalorder %s9, 1
    %p69 = scmp.ne.s32.totalorder %s64, %s66
    %p70 = scmp.eq.s32.totalorder %s9, 0
    %p71 = por %p69, %p70
    %p72 = scmp.ne.s32.totalorder %s64, %s66
    %p73 = scmp.eq.s32.totalorder %s14, 1
    %p74 = por %p72, %p73
    %p75 = scmp.ne.s32.totalorder %s66, %s67
    %p76 = scmp.eq.s32.totalorder %s14, 0
    %p77 = por %p75, %p76
    %p78 = scmp.ne.s32.totalorder %s66, %s67
    %p79 = scmp.eq.s32.totalorder %s15, 1
    %p80 = por %p78, %p79
    %p82 = scmp.ne.s32.totalorder %s67, %s81
    %p83 = scmp.eq.s32.totalorder %s15, 0
    %p84 = por %p82, %p83
    %s85 = ssub.s32 %s9, %s16
    %p86 = scmp.eq.s32.totalorder %s85, 0
    %s88 = sadd.s32 %s87, 1
    %s89 = scalar_select %p86, %s87, %s88
    %p92 = pneg %p86
    %p93 = scmp.eq.s32.totalorder %s9, 1
    %p94 = por %p92, %p93
    %p95 = scmp.ne.s32.totalorder %s87, %s90
    %p96 = scmp.eq.s32.totalorder %s9, 0
    %p97 = por %p95, %p96
    %p98 = scmp.ne.s32.totalorder %s87, %s90
    %p99 = scmp.eq.s32.totalorder %s14, 1
    %p100 = por %p98, %p99
    %p101 = scmp.ne.s32.totalorder %s90, %s91
    %p102 = scmp.eq.s32.totalorder %s14, 0
    %p103 = por %p101, %p102
    %p104 = scmp.ne.s32.totalorder %s90, %s91
    %p105 = scmp.eq.s32.totalorder %s15, 1
    %p106 = por %p104, %p105
    %p108 = scmp.ne.s32.totalorder %s91, %s107
    %p109 = scmp.eq.s32.totalorder %s15, 0
    %p110 = por %p108, %p109
    %p111 = scmp.le.s32.totalorder 1, %s9
    %p112 = scmp.lt.s32.totalorder %s9, 3
    %p113 = pnand %p111, %p112
    %p114 = pneg %p113
    // Predicated region
    $region9: #{mobilenet_forward.28} parent=5 // pred_check
      _
    $region10: #{mobilenet_forward.28} parent=5 // pred_check_branch
      %116 = sbr.rel (%p113) target = $region12
    $region11: #{mobilenet_forward.28} parent=5 // pred_region
      %s117 = ssub.s32 %s9, 1
      // Predicated region
      $region13: #{mobilenet_forward.28} parent=11 // pred_check
        %p118 = pneg %p56
      $region14: #{mobilenet_forward.28} parent=11 // pred_check_branch
        %120 = sbr.rel (%p118) target = $region16
      $region15: #{mobilenet_forward.28} parent=11 // pred_region
        _
      $region16: #{mobilenet_forward.28} parent=11 // pred_fallthru
        _
      // Predicated region
      $region17: #{mobilenet_forward.28} parent=11 // pred_check
        %p121 = pneg %p77
      $region18: #{mobilenet_forward.28} parent=11 // pred_check_branch
        %123 = sbr.rel (%p121) target = $region20
      $region19: #{mobilenet_forward.28} parent=11 // pred_region
        _
      $region20: #{mobilenet_forward.28} parent=11 // pred_fallthru
        _
    $region12: #{mobilenet_forward.28} parent=5 // pred_fallthru
      _
    %p124 = scmp.lt.s32.totalorder %s9, 2
    // Predicated region
    $region21: #{mobilenet_forward.28} parent=5 // pred_check
      %p125 = pneg %p124
    $region22: #{mobilenet_forward.28} parent=5 // pred_check_branch
      %127 = sbr.rel (%p125) target = $region24
    $region23: #{mobilenet_forward.28} parent=5 // pred_region
      // Predicated region
      $region25: #{mobilenet_forward.28} parent=23 // pred_check
        %p128 = pneg %p29
      $region26: #{mobilenet_forward.28} parent=23 // pred_check_branch
        %130 = sbr.rel (%p128) target = $region28
      $region27: #{mobilenet_forward.28} parent=23 // pred_region
        %p131 = scmp.lt.s32.totalorder %s9, 1
        %s132 = scalar_select %p131, %s9, 1
        %s133 = smul.addr %s132, 16
        %s134 = smul.addr %s133, 4
        %s135 = scalar_lea.vmem %s0, %s134
      $region28: #{mobilenet_forward.28} parent=23 // pred_fallthru
        _
    $region24: #{mobilenet_forward.28} parent=5 // pred_fallthru
      _
    %p136 = scmp.le.s32.totalorder 1, %s9
    %p137 = scmp.lt.s32.totalorder %s9, 3
    %p138 = pnand %p136, %p137
    %p139 = pneg %p138
    // Predicated region
    $region29: #{mobilenet_forward.28} parent=5 // pred_check
      _
    $region30: #{mobilenet_forward.28} parent=5 // pred_check_branch
      %141 = sbr.rel (%p138) target = $region32
    $region31: #{mobilenet_forward.28} parent=5 // pred_region
      %s142 = ssub.s32 %s9, 1
      %p143 = scmp.lt.s32.totalorder %s14, 1
      %s144 = scalar_select %p143, %s14, 1
      %s145 = smul.addr %s144, 16
      %s146 = smul.addr %s145, 4
      %s147 = scalar_lea.vmem %s0, %s146
      %p148 = pneg %p35
      %p149 = pneg %p32
      %p150 = pneg %p56
      %p151 = pneg %p53
      %p152 = pneg %p77
      %p153 = pneg %p74
      %p154 = pneg %p103
      %p155 = pneg %p100
      %p156 = scmp.lt.s32.totalorder %s14, 1
      %s157 = scalar_select %p156, %s14, 1
      %s158 = smul.addr %s157, 2
      %s159 = smul.addr %s158, 4
      %s160 = scalar_lea.vmem %s3, %s159
      %p161 = scmp.lt.s32.totalorder %s14, 1
      %s162 = scalar_select %p161, %s14, 1
      %s163 = smul.addr %s162, 16
      %s164 = smul.addr %s163, 4
      %s165 = scalar_lea.vmem %s0, %s164
      %p166 = scmp.lt.s32.totalorder %s14, 1
      %s167 = scalar_select %p166, %s14, 1
      %s168 = smul.addr %s167, 2
      %s169 = smul.addr %s168, 4
      %s170 = scalar_lea.vmem %s3, %s169
      %v171 = vld [vmem:[%s1] sm:$0x3]
      %v172 = vld [vmem:[%s1 + $0x2] sm:$0x3]
      %v173 = vld [vmem:[%s1 + $0x4] sm:$0x3]
      %v174 = vld [vmem:[%s1 + $0x6] sm:$0x3]
      %v175 = vld [vmem:[%s1 + $0x8] sm:$0x3]
      %v176 = vld [vmem:[%s1 + $0xa] sm:$0x3]
      %v177 = vld [vmem:[%s1 + $0xc] sm:$0x3]
      %v178 = vld [vmem:[%s1 + $0xe] sm:$0x3]
      %v179 = vld [vmem:[%s1 + $0x10] sm:$0x3]
      %v180 = vld [vmem:[%s2] sm:$0x3]
      %v182 = vperm.slane %v180, 0
      %v183 = vperm.slane %v180, 1
      %v186 = vld [vmem:[%s165] sm:$0xff]
      %v187 = vunpack.c.l.bf16 %v186
      %v188 = vunpack.c.h.bf16 %v186
      %v190 = vperm.slane %v171, 0
      %v191 = vperm.slane %v171, 1
      %v194 = vmul.f32 %v187, %v190
      %v195 = vmul.f32 %v188, %v191
      %v196 = vadd.f32 %v182, %v194
      %v197 = vadd.f32 %v183, %v195
      %s198 = scalar_lea.vmem %s165, 16
      %v199 = vld [vmem:[%s198] sm:$0xff]
      %v200 = vunpack.c.l.bf16 %v199
      %v201 = vunpack.c.h.bf16 %v199
      %v203 = vperm.slane %v172, 0
      %v204 = vperm.slane %v172, 1
      %v207 = vmul.f32 %v200, %v203
      %v208 = vmul.f32 %v201, %v204
      %v209 = vadd.f32 %v196, %v207
      %v210 = vadd.f32 %v197, %v208
      %v211 = vld [vmem:[%s165 + $0x8] sm:$0x11]
      %v212 = vunpack.c.l.bf16 %v211
      %v213 = vunpack.c.h.bf16 %v211
      %v215 = vperm.slane %v173, 0
      %v216 = vperm.slane %v173, 1
      %v219 = vmul.f32 %v187, %v215
      %v220 = vmul.f32 %v188, %v216
      %v221 = vmul.f32 %v212, %v215
      %v222 = vmul.f32 %v213, %v216
      %vm227 = vcmask 1046528
      %v228 = vrot.slane %v219, 1
      %v229 = vrot.slane %v221, 1
      %v230 = vsel %vm227, %v228, %v229
      %v231 = vrot.slane %v220, 1
      %v232 = vrot.slane %v222, 1
      %v233 = vsel %vm227, %v231, %v232
      %v236 = vadd.f32 %v209, %v230
      %v237 = vadd.f32 %v210, %v233
      %s238 = scalar_lea.vmem %s165, 32
      %v239 = vld [vmem:[%s238] sm:$0xff]
      %v240 = vunpack.c.l.bf16 %v239
      %v241 = vunpack.c.h.bf16 %v239
      %v243 = vperm.slane %v174, 0
      %v244 = vperm.slane %v174, 1
      %v247 = vmul.f32 %v240, %v243
      %v248 = vmul.f32 %v241, %v244
      %v249 = vadd.f32 %v236, %v247
      %v250 = vadd.f32 %v237, %v248
      %s251 = scalar_lea.vmem %s165, 48
      %v252 = vld [vmem:[%s251] sm:$0xff]
      %v253 = vunpack.c.l.bf16 %v252
      %v254 = vunpack.c.h.bf16 %v252
      %v256 = vperm.slane %v175, 0
      %v257 = vperm.slane %v175, 1
      %v260 = vmul.f32 %v253, %v256
      %v261 = vmul.f32 %v254, %v257
      %v262 = vadd.f32 %v249, %v260
      %v263 = vadd.f32 %v250, %v261
      %v264 = vld [vmem:[%s238 + $0x8] sm:$0x11]
      %v265 = vunpack.c.l.bf16 %v264
      %v266 = vunpack.c.h.bf16 %v264
      %v268 = vperm.slane %v176, 0
      %v269 = vperm.slane %v176, 1
      %v272 = vmul.f32 %v240, %v268
      %v273 = vmul.f32 %v241, %v269
      %v274 = vmul.f32 %v265, %v268
      %v275 = vmul.f32 %v266, %v269
      %v280 = vrot.slane %v272, 1
      %v281 = vrot.slane %v274, 1
      %v282 = vsel %vm227, %v280, %v281
      %v283 = vrot.slane %v273, 1
      %v284 = vrot.slane %v275, 1
      %v285 = vsel %vm227, %v283, %v284
      %v288 = vadd.f32 %v262, %v282
      %v289 = vadd.f32 %v263, %v285
      %v290 = vld [vmem:[%s165] sm:$0xee]
      %v291 = vunpack.c.l.bf16 %v290
      %v292 = vunpack.c.h.bf16 %v290
      %v294 = vperm.slane %v177, 0
      %v295 = vperm.slane %v177, 1
      %v298 = vmul.f32 %v291, %v294
      %v299 = vmul.f32 %v292, %v295
      %v300 = vmul.f32 %v212, %v294
      %v301 = vmul.f32 %v213, %v295
      %vm306 = vcmask 1045504
      %v307 = vrot.slane %v298, 2
      %v308 = vrot.slane %v300, 2
      %v309 = vsel %vm306, %v307, %v308
      %v310 = vrot.slane %v299, 2
      %v311 = vrot.slane %v301, 2
      %v312 = vsel %vm306, %v310, %v311
      %v315 = vadd.f32 %v288, %v309
      %v316 = vadd.f32 %v289, %v312
      %v317 = vld [vmem:[%s198] sm:$0xee]
      %v318 = vld [vmem:[%s198 + $0x8] sm:$0x11]
      %v319 = vunpack.c.l.bf16 %v317
      %v320 = vunpack.c.h.bf16 %v317
      %v321 = vunpack.c.l.bf16 %v318
      %v322 = vunpack.c.h.bf16 %v318
      %v324 = vperm.slane %v178, 0
      %v325 = vperm.slane %v178, 1
      %v328 = vmul.f32 %v319, %v324
      %v329 = vmul.f32 %v320, %v325
      %v330 = vmul.f32 %v321, %v324
      %v331 = vmul.f32 %v322, %v325
      %v336 = vrot.slane %v328, 2
      %v337 = vrot.slane %v330, 2
      %v338 = vsel %vm306, %v336, %v337
      %v339 = vrot.slane %v329, 2
      %v340 = vrot.slane %v331, 2
      %v341 = vsel %vm306, %v339, %v340
      %v344 = vadd.f32 %v315, %v338
      %v345 = vadd.f32 %v316, %v341
      %v346 = vld [vmem:[%s165 + $0x8] sm:$0x33]
      %v347 = vunpack.c.l.bf16 %v346
      %v348 = vunpack.c.h.bf16 %v346
      %v350 = vperm.slane %v179, 0
      %v351 = vperm.slane %v179, 1
      %v354 = vmul.f32 %v291, %v350
      %v355 = vmul.f32 %v292, %v351
      %v356 = vmul.f32 %v347, %v350
      %v357 = vmul.f32 %v348, %v351
      %vm362 = vcmask 1044480
      %v363 = vrot.slane %v354, 3
      %v364 = vrot.slane %v356, 3
      %v365 = vsel %vm362, %v363, %v364
      %v366 = vrot.slane %v355, 3
      %v367 = vrot.slane %v357, 3
      %v368 = vsel %vm362, %v366, %v367
      %v371 = vadd.f32 %v344, %v365
      %v372 = vadd.f32 %v345, %v368
      %v373 = vmax.f32 %v371, 0.0
      %v374 = vmax.f32 %v372, 0.0
      %v375 = vpack.c.bf16 %v374, %v373
      %376 = vst [vmem:[%s170] sm:$0xff] %v375
      %p377 = scmp.lt.s32.totalorder %s14, 1
      %s378 = scalar_select %p377, %s14, 1
      %s379 = smul.addr %s378, 2
      %s380 = smul.addr %s379, 4
      %s381 = scalar_lea.vmem %s3, %s380
      // Predicated region
      $region33: #{mobilenet_forward.28} parent=31 // pred_check
        %p382 = pneg %p100
      $region34: #{mobilenet_forward.28} parent=31 // pred_check_branch
        %384 = sbr.rel (%p382) target = $region36
      $region35: #{mobilenet_forward.28} parent=31 // pred_region
        _
      $region36: #{mobilenet_forward.28} parent=31 // pred_fallthru
        _
    $region32: #{mobilenet_forward.28} parent=5 // pred_fallthru
      _
    %p385 = scmp.le.s32.totalorder 2, %s9
    // Predicated region
    $region37: #{mobilenet_forward.28} parent=5 // pred_check
      %p386 = pneg %p385
    $region38: #{mobilenet_forward.28} parent=5 // pred_check_branch
      %388 = sbr.rel (%p386) target = $region40
    $region39: #{mobilenet_forward.28} parent=5 // pred_region
      %s389 = ssub.s32 %s9, 2
      // Predicated region
      $region41: #{mobilenet_forward.28} parent=39 // pred_check
        %p390 = pneg %p106
      $region42: #{mobilenet_forward.28} parent=39 // pred_check_branch
        %392 = sbr.rel (%p390) target = $region44
      $region43: #{mobilenet_forward.28} parent=39 // pred_region
        %p393 = scmp.lt.s32.totalorder %s15, 1
        %s394 = scalar_select %p393, %s15, 1
        %s395 = smul.addr %s394, 2
        %s396 = smul.addr %s395, 4
        %s397 = scalar_lea.vmem %s3, %s396
      $region44: #{mobilenet_forward.28} parent=39 // pred_fallthru
        _
    $region40: #{mobilenet_forward.28} parent=5 // pred_fallthru
      _
  $region6: #{mobilenet_forward.28} parent=0 // loop_footer
    %s13 = sadd.s32 1, %s9
  $region7: #{mobilenet_forward.28} parent=0 // loop_footer_branch
    %8 = sbr.rel target = $region3
  $region8: #{mobilenet_forward.28} parent=0 // loop_exit
    _

</llo_original>
